<compile_context>
chip_gen: v5e
topology: v5e:2x2
jax: 0.10.0
libtpu: 0.0.40
codegen_flags: <defaults>
</compile_context>

<pallas_src>
import jax
import jax.numpy as jnp
from jax import lax
from jax.experimental import pallas as pl
from jax.experimental.pallas import tpu as pltpu

CP = 128  # conv input channels are zero-padded to the 128-lane width


# ------------------------------- Pallas kernel -------------------------------

def _make_context_path_kernel(H32, W32, H16, W16, H8, W8, FUSE):
    P32, P16 = H32 * W32, H16 * W16

    def zero_halo(pad_ref, H, W, C):
        # Halo-only zeroing: O(perimeter) stores; interior is fully overwritten
        # (channel dim == buffer width) before every tap read.
        dt = pad_ref.dtype
        zrow = jnp.zeros((1, W + 2, C), dt)
        pad_ref[0:1, :, :] = zrow
        pad_ref[H + 1:H + 2, :, :] = zrow
        zcol = jnp.zeros((H + 2, 1, C), dt)
        pad_ref[:, 0:1, :] = zcol
        pad_ref[:, W + 1:W + 2, :] = zcol

    def conv3x3_bn_relu(pad_ref, x_hwc, H, W, w_ref, sb_ref):
        """3x3 conv (stride 1, pad 1) + folded BN + ReLU.

        Direct 9-tap accumulation (no im2col slab): each tap is one bf16 MXU
        matmul from a shifted view of the pad buffer, accumulated in f32.

        x_hwc  : (H, W, Ci) bf16 activation (written into the pad interior)
        w_ref  : (9, Ci, Co) bf16, tap index t = dy*3 + dx
        sb_ref : (2, Co) f32, row 0 = BN scale, row 1 = BN bias
        """
        Ci = x_hwc.shape[-1]
        Co = sb_ref.shape[-1]
        pad_ref[1:H + 1, 1:W + 1, :] = x_hwc
        acc = jnp.zeros((H * W, Co), jnp.float32)
        for t in range(9):
            dy, dx = t // 3, t % 3
            win = pad_ref[dy:dy + H, dx:dx + W, :].reshape(H * W, Ci)
            acc = acc + jnp.dot(win, w_ref[t], preferred_element_type=jnp.float32)
        sb = sb_ref[...]
        return jnp.maximum(acc * sb[0:1, :] + sb[1:2, :], 0.0)      # (H*W, Co) f32

    def conv1x1_bn(x_f32, w_ref, sb_ref, relu):
        """1x1 conv (pure channel matmul, bf16 MXU) + folded BN (+ optional ReLU)."""
        y = jnp.dot(x_f32.astype(jnp.bfloat16), w_ref[...],
                    preferred_element_type=jnp.float32)
        sb = sb_ref[...]
        y = y * sb[0:1, :] + sb[1:2, :]
        return jnp.maximum(y, 0.0) if relu else y

    def gap(x_flat_f32, P):
        # Global average pool as a ones-row matmul (rides the MXU, keeps XLU free).
        ones = jnp.ones((1, P), jnp.bfloat16)
        s = jnp.dot(ones, x_flat_f32.astype(jnp.bfloat16),
                    preferred_element_type=jnp.float32)
        return s * (1.0 / P)                                         # (1, C) f32

    def up2_nearest(x_flat_f32, H, W):
        # Nearest x2 upsample as a pure layout op: (H*W, C) f32 -> (2H, 2W, C) bf16.
        C = x_flat_f32.shape[-1]
        x = x_flat_f32.astype(jnp.bfloat16).reshape(H, W, C)
        x = jnp.broadcast_to(x[:, :, None, :], (H, W, 2, C)).reshape(H, 2 * W, C)
        x = jnp.broadcast_to(x[:, None, :, :], (H, 2, 2 * W, C)).reshape(2 * H, 2 * W, C)
        return x

    def sigmoid(x):
        return 1.0 / (1.0 + jnp.exp(-x))

    def kernel(f32_ref, f16_ref,
               wce_ref, sbce_ref,
               wa32_ref, sba32_ref, wt32_ref, sbt32_ref, wu32_ref, sbu32_ref,
               wa16_ref, sba16_ref, wt16_ref, sbt16_ref, wu16_ref, sbu16_ref,
               out_ref,
               pad_s32, pad_a16, pad_u32, pad_s8):
        zero_halo(pad_s32, H32, W32, CP)
        zero_halo(pad_a16, H16, W16, CP)
        zero_halo(pad_u32, H16, W16, FUSE)
        zero_halo(pad_s8, H8, W8, FUSE)

        # ---- arm16 conv first: independent of the f32 chain, own scratch ----
        x16 = conv3x3_bn_relu(pad_a16, f16_ref[0], H16, W16, wa16_ref, sba16_ref)
        a16 = sigmoid(conv1x1_bn(gap(x16, P16), wt16_ref, sbt16_ref, relu=False))

        # ---- ContextEmbedding(feat32): GAP -> 1x1 ConvBNReLU ----
        # (nearest-up of a 1x1 map == row broadcast over the spatial axis)
        f32_flat = f32_ref[0].reshape(P32, CP)
        ce = conv1x1_bn(gap(f32_flat, P32), wce_ref, sbce_ref, relu=True)

        # ---- arm32 ----
        x32 = conv3x3_bn_relu(pad_s32, f32_ref[0], H32, W32, wa32_ref, sba32_ref)
        a32 = sigmoid(conv1x1_bn(gap(x32, P32), wt32_ref, sbt32_ref, relu=False))
        f32_arm = x32 * a32 + ce                                      # (P32, FUSE)

        # ---- upsample32: nearest x2 (layout op) -> 3x3 ConvBNReLU ----
        f32_up = conv3x3_bn_relu(pad_u32, up2_nearest(f32_arm, H32, W32),
                                 H16, W16, wu32_ref, sbu32_ref)

        # ---- fuse with the arm16 branch ----
        f16_arm = x16 * a16 + f32_up                                  # (P16, FUSE)

        # ---- upsample16: nearest x2 -> 3x3 ConvBNReLU ----
        f16_up = conv3x3_bn_relu(pad_s8, up2_nearest(f16_arm, H16, W16),
                                 H8, W8, wu16_ref, sbu16_ref)

        # Single lane-dense store: last dim FUSE (=128) on the lane axis.
        out_ref[0] = f16_up.reshape(H8, W8, FUSE)

    return kernel


# ------------------------------ wrapper / glue -------------------------------

def _full_spec(arr):
    nd = arr.ndim
    return pl.BlockSpec(arr.shape, lambda n, _z=(0,) * nd: _z)


def _pack_1x1(p, ci_pad):
    co, ci = p["w"].shape[:2]
    w = p["w"].reshape(co, ci).T                                      # (ci, co)
    w = jnp.pad(w, ((0, ci_pad - ci), (0, 0)))
    sb = jnp.stack([p["scale"], p["bias"]], axis=0).astype(jnp.float32)
    return w.astype(jnp.bfloat16), sb


def _pack_3x3(p, ci_pad):
    co, ci = p["w"].shape[:2]
    # torch OIHW -> (dy, dx, ci, co) -> (9, ci_pad, co), tap index t = dy*3 + dx
    w = jnp.transpose(p["w"], (2, 3, 1, 0)).reshape(9, ci, co)
    w = jnp.pad(w, ((0, 0), (0, ci_pad - ci), (0, 0)))
    sb = jnp.stack([p["scale"], p["bias"]], axis=0).astype(jnp.float32)
    return w.astype(jnp.bfloat16), sb


def _to_nhwc_padded(x):
    """NCHW f32 -> NHWC bf16 with channels zero-padded to CP (lane-aligned taps)."""
    n, c, h, w = x.shape
    assert c <= CP, f"channels {c} > {CP} not supported by this packing"
    y = jnp.transpose(x, (0, 2, 3, 1))
    return jnp.pad(y, ((0, 0), (0, 0), (0, 0), (0, CP - c))).astype(jnp.bfloat16)


def context_path_forward(feat8, feat16, feat32, params, use_aux_heads=False):
    """ContextPath.forward on backbone features.  NCHW in / NCHW out."""
    N, C32, H32, W32 = feat32.shape
    _, C16, H16, W16 = feat16.shape
    assert feat16.shape[0] == N
    assert (H16, W16) == (2 * H32, 2 * W32), "feat16 must be 2x the feat32 resolution"
    H8o, W8o = 2 * H16, 2 * W16
    FUSE = params["ce"]["w"].shape[0]

    wce, sbce = _pack_1x1(params["ce"], CP)
    wa32, sba32 = _pack_3x3(params["arm32_conv"], CP)
    wt32, sbt32 = _pack_1x1(params["arm32_att"], FUSE)
    wu32, sbu32 = _pack_3x3(params["up32"], FUSE)
    wa16, sba16 = _pack_3x3(params["arm16_conv"], CP)
    wt16, sbt16 = _pack_1x1(params["arm16_att"], FUSE)
    wu16, sbu16 = _pack_3x3(params["up16"], FUSE)
    consts = [wce, sbce, wa32, sba32, wt32, sbt32, wu32, sbu32,
              wa16, sba16, wt16, sbt16, wu16, sbu16]

    f32_l = _to_nhwc_padded(feat32)          # (N, H32, W32, CP) bf16
    f16_l = _to_nhwc_padded(feat16)          # (N, H16, W16, CP) bf16

    kernel = _make_context_path_kernel(H32, W32, H16, W16, H8o, W8o, FUSE)

    grid_spec = pltpu.PrefetchScalarGridSpec(
        num_scalar_prefetch=0,
        grid=(N,),                           # one image per step, sharded across cores
        in_specs=[
            pl.BlockSpec((1, H32, W32, CP), lambda n: (n, 0, 0, 0)),
            pl.BlockSpec((1, H16, W16, CP), lambda n: (n, 0, 0, 0)),
        ] + [_full_spec(c) for c in consts],
        out_specs=pl.BlockSpec((1, H8o, W8o, FUSE), lambda n: (n, 0, 0, 0)),
        scratch_shapes=[
            pltpu.VMEM((H32 + 2, W32 + 2, CP), jnp.bfloat16),    # pad: arm32 conv
            pltpu.VMEM((H16 + 2, W16 + 2, CP), jnp.bfloat16),    # pad: arm16 conv (own)
            pltpu.VMEM((H16 + 2, W16 + 2, FUSE), jnp.bfloat16),  # pad: up32 conv
            pltpu.VMEM((H8o + 2, W8o + 2, FUSE), jnp.bfloat16),  # pad: up16 conv
        ],
    )

    out = pl.pallas_call(
        kernel,
        out_shape=jax.ShapeDtypeStruct((N, H8o, W8o, FUSE), jnp.float32),
        grid_spec=grid_spec,
        compiler_params=pltpu.CompilerParams(
            dimension_semantics=("parallel",),
            vmem_limit_bytes=48 * 1024 * 1024,   # safe on v5e/v6e/v7x
        ),
    )(f32_l, f16_l, *consts)

    feat16_up = jnp.transpose(out, (0, 3, 1, 2))                 # NHWC -> NCHW
    if use_aux_heads:
        return feat8, feat16_up, feat16, feat32
    return feat8, feat16_up


# --------------------- parameters (Conv + eval-mode BN fold) ------------------

def make_conv_bn_params(key, ci, co, k):
    """Conv (no bias, torch OIHW layout) + eval-mode BatchNorm folded to (scale, bias)."""
    kw, kg, kb, km, kv = jax.random.split(key, 5)
    w = jax.random.normal(kw, (co, ci, k, k), jnp.float32) / jnp.sqrt(ci * k * k)
    gamma = 1.0 + 0.1 * jax.random.normal(kg, (co,), jnp.float32)
    beta = 0.1 * jax.random.normal(kb, (co,), jnp.float32)
    mean = 0.05 * jax.random.normal(km, (co,), jnp.float32)
    var = jnp.abs(jax.random.normal(kv, (co,), jnp.float32)) + 0.5
    scale = gamma * lax.rsqrt(var + 1e-5)
    bias = beta - mean * scale
    return dict(w=w, scale=scale, bias=bias)


# ----------------------- pure-JAX reference (verification) -------------------

def ref_context_path(feat16, feat32, params):
    """f32 XLA reference for the fused context branch -> feat16_up (NCHW)."""
    def cbr(x, p, relu=True):
        y = lax.conv_general_dilated(x, p["w"], (1, 1), "SAME",
                                     dimension_numbers=("NCHW", "OIHW", "NCHW"))
        y = y * p["scale"].reshape(1, -1, 1, 1) + p["bias"].reshape(1, -1, 1, 1)
        return jnp.maximum(y, 0.0) if relu else y

    def arm(x, conv_p, att_p):
        xa = cbr(x, conv_p)
        a = cbr(jnp.mean(xa, axis=(2, 3), keepdims=True), att_p, relu=False)
        return xa * (1.0 / (1.0 + jnp.exp(-a)))

    def up2(x):
        return jnp.repeat(jnp.repeat(x, 2, axis=2), 2, axis=3)

    N, _, H32, W32 = feat32.shape
    ce = cbr(jnp.mean(feat32, axis=(2, 3), keepdims=True), params["ce"])
    ce = jnp.broadcast_to(ce, (N, ce.shape[1], H32, W32))
    f32_arm = arm(feat32, params["arm32_conv"], params["arm32_att"]) + ce
    f32_up = cbr(up2(f32_arm), params["up32"])
    f16_arm = arm(feat16, params["arm16_conv"], params["arm16_att"]) + f32_up
    f16_up = cbr(up2(f16_arm), params["up16"])
    return f16_up


if __name__ == "__main__":
    key = jax.random.PRNGKey(0)
    # Small ContextPath configuration: backbone stage channels (16, 32, 64),
    # fuse_channels = 128 (real STDC fuse width -> lane-dense), feature
    # resolutions 16 / 8 / 4 (i.e. a 128x128 input image, down ratios 8/16/32).
    N = 2
    C8, C16, C32, FUSE = 16, 32, 64, 128
    H8 = W8 = 16
    H16 = W16 = 8
    H32 = W32 = 4

    k8, k16, k32, kp = jax.random.split(key, 4)
    feat8 = jax.random.normal(k8, (N, C8, H8, W8), jnp.float32)
    feat16 = jax.random.normal(k16, (N, C16, H16, W16), jnp.float32)
    feat32 = jax.random.normal(k32, (N, C32, H32, W32), jnp.float32)

    kce, ka32c, ka32a, ku32, ka16c, ka16a, ku16 = jax.random.split(kp, 7)
    params = dict(
        ce=make_conv_bn_params(kce, C32, FUSE, 1),
        arm32_conv=make_conv_bn_params(ka32c, C32, FUSE, 3),
        arm32_att=make_conv_bn_params(ka32a, FUSE, FUSE, 1),
        up32=make_conv_bn_params(ku32, FUSE, FUSE, 3),
        arm16_conv=make_conv_bn_params(ka16c, C16, FUSE, 3),
        arm16_att=make_conv_bn_params(ka16a, FUSE, FUSE, 1),
        up16=make_conv_bn_params(ku16, FUSE, FUSE, 3),
    )

    out_feat8, feat16_up = context_path_forward(feat8, feat16, feat32, params)
    feat16_up = jax.block_until_ready(feat16_up)

    ref = jax.block_until_ready(ref_context_path(feat16, feat32, params))
    assert out_feat8.shape == feat8.shape
    assert feat16_up.shape == (N, FUSE, H8, W8), feat16_up.shape
    max_diff = jnp.max(jnp.abs(feat16_up - ref))
    # bf16 MXU operands (f32 accumulation) vs f32 XLA reference -> looser tolerance.
    assert jnp.allclose(feat16_up, ref, rtol=5e-2, atol=5e-2), f"max abs diff {max_diff}"

    print("KERNEL_OK")
</pallas_src>

<mosaic_0001>
module attributes {stable_mosaic.version = 11 : i64} {
  func.func @kernel(%arg0: i32, %arg1: memref<1x4x4x128xbf16, #tpu.memory_space<vmem>>, %arg2: memref<1x8x8x128xbf16, #tpu.memory_space<vmem>>, %arg3: memref<128x128xbf16, #tpu.memory_space<vmem>>, %arg4: memref<2x128xf32, #tpu.memory_space<vmem>>, %arg5: memref<9x128x128xbf16, #tpu.memory_space<vmem>>, %arg6: memref<2x128xf32, #tpu.memory_space<vmem>>, %arg7: memref<128x128xbf16, #tpu.memory_space<vmem>>, %arg8: memref<2x128xf32, #tpu.memory_space<vmem>>, %arg9: memref<9x128x128xbf16, #tpu.memory_space<vmem>>, %arg10: memref<2x128xf32, #tpu.memory_space<vmem>>, %arg11: memref<9x128x128xbf16, #tpu.memory_space<vmem>>, %arg12: memref<2x128xf32, #tpu.memory_space<vmem>>, %arg13: memref<128x128xbf16, #tpu.memory_space<vmem>>, %arg14: memref<2x128xf32, #tpu.memory_space<vmem>>, %arg15: memref<9x128x128xbf16, #tpu.memory_space<vmem>>, %arg16: memref<2x128xf32, #tpu.memory_space<vmem>>, %arg17: memref<1x16x16x128xf32, #tpu.memory_space<vmem>>, %arg18: memref<6x6x128xbf16, #tpu.memory_space<vmem>>, %arg19: memref<10x10x128xbf16, #tpu.memory_space<vmem>>, %arg20: memref<10x10x128xbf16, #tpu.memory_space<vmem>>, %arg21: memref<18x18x128xbf16, #tpu.memory_space<vmem>>) attributes {dimension_semantics = [#tpu.dimension_semantics<parallel>], iteration_bounds = array<i64: 2>, scalar_prefetch = 0 : i64, scratch_operands = 4 : i64, tpu.core_type = #tpu.core_type<tc>, window_params = [{transform_indices = @transform_0, window_bounds = array<i64: 1, 4, 4, 128>}, {transform_indices = @transform_1, window_bounds = array<i64: 1, 8, 8, 128>}, {pipeline_mode = #tpu.pipeline_mode<synchronous>, transform_indices = @transform_2, window_bounds = array<i64: 128, 128>}, {pipeline_mode = #tpu.pipeline_mode<synchronous>, transform_indices = @transform_3, window_bounds = array<i64: 2, 128>}, {pipeline_mode = #tpu.pipeline_mode<synchronous>, transform_indices = @transform_4, window_bounds = array<i64: 9, 128, 128>}, {pipeline_mode = #tpu.pipeline_mode<synchronous>, transform_indices = @transform_5, window_bounds = array<i64: 2, 128>}, {pipeline_mode = #tpu.pipeline_mode<synchronous>, transform_indices = @transform_6, window_bounds = array<i64: 128, 128>}, {pipeline_mode = #tpu.pipeline_mode<synchronous>, transform_indices = @transform_7, window_bounds = array<i64: 2, 128>}, {pipeline_mode = #tpu.pipeline_mode<synchronous>, transform_indices = @transform_8, window_bounds = array<i64: 9, 128, 128>}, {pipeline_mode = #tpu.pipeline_mode<synchronous>, transform_indices = @transform_9, window_bounds = array<i64: 2, 128>}, {pipeline_mode = #tpu.pipeline_mode<synchronous>, transform_indices = @transform_10, window_bounds = array<i64: 9, 128, 128>}, {pipeline_mode = #tpu.pipeline_mode<synchronous>, transform_indices = @transform_11, window_bounds = array<i64: 2, 128>}, {pipeline_mode = #tpu.pipeline_mode<synchronous>, transform_indices = @transform_12, window_bounds = array<i64: 128, 128>}, {pipeline_mode = #tpu.pipeline_mode<synchronous>, transform_indices = @transform_13, window_bounds = array<i64: 2, 128>}, {pipeline_mode = #tpu.pipeline_mode<synchronous>, transform_indices = @transform_14, window_bounds = array<i64: 9, 128, 128>}, {pipeline_mode = #tpu.pipeline_mode<synchronous>, transform_indices = @transform_15, window_bounds = array<i64: 2, 128>}, {transform_indices = @transform_16, window_bounds = array<i64: 1, 16, 16, 128>}]} {
    %cst = arith.constant 0.000000e+00 : bf16
    %0 = vector.broadcast %cst : bf16 to vector<1x6x128xbf16>
    %c0 = arith.constant 0 : index
    %c0_0 = arith.constant 0 : index
    %c0_1 = arith.constant 0 : index
    %1 = vector.load %arg18[%c0, %c0_0, %c0_1] : memref<6x6x128xbf16, #tpu.memory_space<vmem>>, vector<1x6x128xbf16>
    tpu.vector_store %arg18[%c0, %c0_0, %c0_1], %0 {strides = array<i32>} : memref<6x6x128xbf16, #tpu.memory_space<vmem>>, vector<1x6x128xbf16>,
    %c5 = arith.constant 5 : index
    %c0_2 = arith.constant 0 : index
    %c0_3 = arith.constant 0 : index
    %2 = vector.load %arg18[%c5, %c0_2, %c0_3] : memref<6x6x128xbf16, #tpu.memory_space<vmem>>, vector<1x6x128xbf16>
    tpu.vector_store %arg18[%c5, %c0_2, %c0_3], %0 {strides = array<i32>} : memref<6x6x128xbf16, #tpu.memory_space<vmem>>, vector<1x6x128xbf16>,
    %cst_4 = arith.constant 0.000000e+00 : bf16
    %3 = vector.broadcast %cst_4 : bf16 to vector<6x1x128xbf16>
    %c0_5 = arith.constant 0 : index
    %c0_6 = arith.constant 0 : index
    %c0_7 = arith.constant 0 : index
    %4 = vector.load %arg18[%c0_5, %c0_6, %c0_7] : memref<6x6x128xbf16, #tpu.memory_space<vmem>>, vector<6x1x128xbf16>
    tpu.vector_store %arg18[%c0_5, %c0_6, %c0_7], %3 {strides = array<i32>} : memref<6x6x128xbf16, #tpu.memory_space<vmem>>, vector<6x1x128xbf16>,
    %c0_8 = arith.constant 0 : index
    %c5_9 = arith.constant 5 : index
    %c0_10 = arith.constant 0 : index
    %5 = vector.load %arg18[%c0_8, %c5_9, %c0_10] : memref<6x6x128xbf16, #tpu.memory_space<vmem>>, vector<6x1x128xbf16>
    tpu.vector_store %arg18[%c0_8, %c5_9, %c0_10], %3 {strides = array<i32>} : memref<6x6x128xbf16, #tpu.memory_space<vmem>>, vector<6x1x128xbf16>,
    %cst_11 = arith.constant 0.000000e+00 : bf16
    %6 = vector.broadcast %cst_11 : bf16 to vector<1x10x128xbf16>
    %c0_12 = arith.constant 0 : index
    %c0_13 = arith.constant 0 : index
    %c0_14 = arith.constant 0 : index
    %7 = vector.load %arg19[%c0_12, %c0_13, %c0_14] : memref<10x10x128xbf16, #tpu.memory_space<vmem>>, vector<1x10x128xbf16>
    tpu.vector_store %arg19[%c0_12, %c0_13, %c0_14], %6 {strides = array<i32>} : memref<10x10x128xbf16, #tpu.memory_space<vmem>>, vector<1x10x128xbf16>,
    %c9 = arith.constant 9 : index
    %c0_15 = arith.constant 0 : index
    %c0_16 = arith.constant 0 : index
    %8 = vector.load %arg19[%c9, %c0_15, %c0_16] : memref<10x10x128xbf16, #tpu.memory_space<vmem>>, vector<1x10x128xbf16>
    tpu.vector_store %arg19[%c9, %c0_15, %c0_16], %6 {strides = array<i32>} : memref<10x10x128xbf16, #tpu.memory_space<vmem>>, vector<1x10x128xbf16>,
    %cst_17 = arith.constant 0.000000e+00 : bf16
    %9 = vector.broadcast %cst_17 : bf16 to vector<10x1x128xbf16>
    %c0_18 = arith.constant 0 : index
    %c0_19 = arith.constant 0 : index
    %c0_20 = arith.constant 0 : index
    %10 = vector.load %arg19[%c0_18, %c0_19, %c0_20] : memref<10x10x128xbf16, #tpu.memory_space<vmem>>, vector<10x1x128xbf16>
    tpu.vector_store %arg19[%c0_18, %c0_19, %c0_20], %9 {strides = array<i32>} : memref<10x10x128xbf16, #tpu.memory_space<vmem>>, vector<10x1x128xbf16>,
    %c0_21 = arith.constant 0 : index
    %c9_22 = arith.constant 9 : index
    %c0_23 = arith.constant 0 : index
    %11 = vector.load %arg19[%c0_21, %c9_22, %c0_23] : memref<10x10x128xbf16, #tpu.memory_space<vmem>>, vector<10x1x128xbf16>
    tpu.vector_store %arg19[%c0_21, %c9_22, %c0_23], %9 {strides = array<i32>} : memref<10x10x128xbf16, #tpu.memory_space<vmem>>, vector<10x1x128xbf16>,
    %cst_24 = arith.constant 0.000000e+00 : bf16
    %12 = vector.broadcast %cst_24 : bf16 to vector<1x10x128xbf16>
    %c0_25 = arith.constant 0 : index
    %c0_26 = arith.constant 0 : index
    %c0_27 = arith.constant 0 : index
    %13 = vector.load %arg20[%c0_25, %c0_26, %c0_27] : memref<10x10x128xbf16, #tpu.memory_space<vmem>>, vector<1x10x128xbf16>
    tpu.vector_store %arg20[%c0_25, %c0_26, %c0_27], %12 {strides = array<i32>} : memref<10x10x128xbf16, #tpu.memory_space<vmem>>, vector<1x10x128xbf16>,
    %c9_28 = arith.constant 9 : index
    %c0_29 = arith.constant 0 : index
    %c0_30 = arith.constant 0 : index
    %14 = vector.load %arg20[%c9_28, %c0_29, %c0_30] : memref<10x10x128xbf16, #tpu.memory_space<vmem>>, vector<1x10x128xbf16>
    tpu.vector_store %arg20[%c9_28, %c0_29, %c0_30], %12 {strides = array<i32>} : memref<10x10x128xbf16, #tpu.memory_space<vmem>>, vector<1x10x128xbf16>,
    %cst_31 = arith.constant 0.000000e+00 : bf16
    %15 = vector.broadcast %cst_31 : bf16 to vector<10x1x128xbf16>
    %c0_32 = arith.constant 0 : index
    %c0_33 = arith.constant 0 : index
    %c0_34 = arith.constant 0 : index
    %16 = vector.load %arg20[%c0_32, %c0_33, %c0_34] : memref<10x10x128xbf16, #tpu.memory_space<vmem>>, vector<10x1x128xbf16>
    tpu.vector_store %arg20[%c0_32, %c0_33, %c0_34], %15 {strides = array<i32>} : memref<10x10x128xbf16, #tpu.memory_space<vmem>>, vector<10x1x128xbf16>,
    %c0_35 = arith.constant 0 : index
    %c9_36 = arith.constant 9 : index
    %c0_37 = arith.constant 0 : index
    %17 = vector.load %arg20[%c0_35, %c9_36, %c0_37] : memref<10x10x128xbf16, #tpu.memory_space<vmem>>, vector<10x1x128xbf16>
    tpu.vector_store %arg20[%c0_35, %c9_36, %c0_37], %15 {strides = array<i32>} : memref<10x10x128xbf16, #tpu.memory_space<vmem>>, vector<10x1x128xbf16>,
    %cst_38 = arith.constant 0.000000e+00 : bf16
    %18 = vector.broadcast %cst_38 : bf16 to vector<1x18x128xbf16>
    %c0_39 = arith.constant 0 : index
    %c0_40 = arith.constant 0 : index
    %c0_41 = arith.constant 0 : index
    %19 = vector.load %arg21[%c0_39, %c0_40, %c0_41] : memref<18x18x128xbf16, #tpu.memory_space<vmem>>, vector<1x18x128xbf16>
    tpu.vector_store %arg21[%c0_39, %c0_40, %c0_41], %18 {strides = array<i32>} : memref<18x18x128xbf16, #tpu.memory_space<vmem>>, vector<1x18x128xbf16>,
    %c17 = arith.constant 17 : index
    %c0_42 = arith.constant 0 : index
    %c0_43 = arith.constant 0 : index
    %20 = vector.load %arg21[%c17, %c0_42, %c0_43] : memref<18x18x128xbf16, #tpu.memory_space<vmem>>, vector<1x18x128xbf16>
    tpu.vector_store %arg21[%c17, %c0_42, %c0_43], %18 {strides = array<i32>} : memref<18x18x128xbf16, #tpu.memory_space<vmem>>, vector<1x18x128xbf16>,
    %cst_44 = arith.constant 0.000000e+00 : bf16
    %21 = vector.broadcast %cst_44 : bf16 to vector<18x1x128xbf16>
    %c0_45 = arith.constant 0 : index
    %c0_46 = arith.constant 0 : index
    %c0_47 = arith.constant 0 : index
    %22 = vector.load %arg21[%c0_45, %c0_46, %c0_47] : memref<18x18x128xbf16, #tpu.memory_space<vmem>>, vector<18x1x128xbf16>
    tpu.vector_store %arg21[%c0_45, %c0_46, %c0_47], %21 {strides = array<i32>} : memref<18x18x128xbf16, #tpu.memory_space<vmem>>, vector<18x1x128xbf16>,
    %c0_48 = arith.constant 0 : index
    %c17_49 = arith.constant 17 : index
    %c0_50 = arith.constant 0 : index
    %23 = vector.load %arg21[%c0_48, %c17_49, %c0_50] : memref<18x18x128xbf16, #tpu.memory_space<vmem>>, vector<18x1x128xbf16>
    tpu.vector_store %arg21[%c0_48, %c17_49, %c0_50], %21 {strides = array<i32>} : memref<18x18x128xbf16, #tpu.memory_space<vmem>>, vector<18x1x128xbf16>,
    %c0_51 = arith.constant 0 : index
    %c0_52 = arith.constant 0 : index
    %c0_53 = arith.constant 0 : index
    %c0_54 = arith.constant 0 : index
    %24 = vector.load %arg2[%c0_51, %c0_52, %c0_53, %c0_54] : memref<1x8x8x128xbf16, #tpu.memory_space<vmem>>, vector<1x8x8x128xbf16>
    %25 = vector.shape_cast %24 : vector<1x8x8x128xbf16> to vector<8x8x128xbf16>
    %c1 = arith.constant 1 : index
    %c1_55 = arith.constant 1 : index
    %c0_56 = arith.constant 0 : index
    %26 = vector.load %arg19[%c1, %c1_55, %c0_56] : memref<10x10x128xbf16, #tpu.memory_space<vmem>>, vector<8x8x128xbf16>
    tpu.vector_store %arg19[%c1, %c1_55, %c0_56], %25 {strides = array<i32>} : memref<10x10x128xbf16, #tpu.memory_space<vmem>>, vector<8x8x128xbf16>,
    %cst_57 = arith.constant 0.000000e+00 : f32
    %27 = vector.broadcast %cst_57 : f32 to vector<64x128xf32>
    %c0_58 = arith.constant 0 : index
    %c0_59 = arith.constant 0 : index
    %c0_60 = arith.constant 0 : index
    %28 = vector.load %arg19[%c0_58, %c0_59, %c0_60] : memref<10x10x128xbf16, #tpu.memory_space<vmem>>, vector<8x8x128xbf16>
    %29 = vector.shape_cast %28 : vector<8x8x128xbf16> to vector<64x128xbf16>
    %c0_61 = arith.constant 0 : index
    %c0_62 = arith.constant 0 : index
    %c0_63 = arith.constant 0 : index
    %30 = vector.load %arg11[%c0_61, %c0_62, %c0_63] : memref<9x128x128xbf16, #tpu.memory_space<vmem>>, vector<1x128x128xbf16>
    %31 = vector.shape_cast %30 : vector<1x128x128xbf16> to vector<128x128xbf16>
    %cst_64 = arith.constant dense<0.000000e+00> : vector<64x128xf32>
    %32 = tpu.matmul %29, %31, %cst_64 {dimension_numbers = #tpu.dot_dimension_numbers<[1], [0], [0], [1], [0, 0, 1, 1], [], []>} : vector<64x128xbf16>, vector<128x128xbf16>, vector<64x128xf32> -> vector<64x128xf32>
    %33 = arith.addf %27, %32 : vector<64x128xf32>
    %c0_65 = arith.constant 0 : index
    %c1_66 = arith.constant 1 : index
    %c0_67 = arith.constant 0 : index
    %34 = vector.load %arg19[%c0_65, %c1_66, %c0_67] : memref<10x10x128xbf16, #tpu.memory_space<vmem>>, vector<8x8x128xbf16>
    %35 = vector.shape_cast %34 : vector<8x8x128xbf16> to vector<64x128xbf16>
    %c1_68 = arith.constant 1 : index
    %c0_69 = arith.constant 0 : index
    %c0_70 = arith.constant 0 : index
    %36 = vector.load %arg11[%c1_68, %c0_69, %c0_70] : memref<9x128x128xbf16, #tpu.memory_space<vmem>>, vector<1x128x128xbf16>
    %37 = vector.shape_cast %36 : vector<1x128x128xbf16> to vector<128x128xbf16>
    %cst_71 = arith.constant dense<0.000000e+00> : vector<64x128xf32>
    %38 = tpu.matmul %35, %37, %cst_71 {dimension_numbers = #tpu.dot_dimension_numbers<[1], [0], [0], [1], [0, 0, 1, 1], [], []>} : vector<64x128xbf16>, vector<128x128xbf16>, vector<64x128xf32> -> vector<64x128xf32>
    %39 = arith.addf %33, %38 : vector<64x128xf32>
    %c0_72 = arith.constant 0 : index
    %c2 = arith.constant 2 : index
    %c0_73 = arith.constant 0 : index
    %40 = vector.load %arg19[%c0_72, %c2, %c0_73] : memref<10x10x128xbf16, #tpu.memory_space<vmem>>, vector<8x8x128xbf16>
    %41 = vector.shape_cast %40 : vector<8x8x128xbf16> to vector<64x128xbf16>
    %c2_74 = arith.constant 2 : index
    %c0_75 = arith.constant 0 : index
    %c0_76 = arith.constant 0 : index
    %42 = vector.load %arg11[%c2_74, %c0_75, %c0_76] : memref<9x128x128xbf16, #tpu.memory_space<vmem>>, vector<1x128x128xbf16>
    %43 = vector.shape_cast %42 : vector<1x128x128xbf16> to vector<128x128xbf16>
    %cst_77 = arith.constant dense<0.000000e+00> : vector<64x128xf32>
    %44 = tpu.matmul %41, %43, %cst_77 {dimension_numbers = #tpu.dot_dimension_numbers<[1], [0], [0], [1], [0, 0, 1, 1], [], []>} : vector<64x128xbf16>, vector<128x128xbf16>, vector<64x128xf32> -> vector<64x128xf32>
    %45 = arith.addf %39, %44 : vector<64x128xf32>
    %c1_78 = arith.constant 1 : index
    %c0_79 = arith.constant 0 : index
    %c0_80 = arith.constant 0 : index
    %46 = vector.load %arg19[%c1_78, %c0_79, %c0_80] : memref<10x10x128xbf16, #tpu.memory_space<vmem>>, vector<8x8x128xbf16>
    %47 = vector.shape_cast %46 : vector<8x8x128xbf16> to vector<64x128xbf16>
    %c3 = arith.constant 3 : index
    %c0_81 = arith.constant 0 : index
    %c0_82 = arith.constant 0 : index
    %48 = vector.load %arg11[%c3, %c0_81, %c0_82] : memref<9x128x128xbf16, #tpu.memory_space<vmem>>, vector<1x128x128xbf16>
    %49 = vector.shape_cast %48 : vector<1x128x128xbf16> to vector<128x128xbf16>
    %cst_83 = arith.constant dense<0.000000e+00> : vector<64x128xf32>
    %50 = tpu.matmul %47, %49, %cst_83 {dimension_numbers = #tpu.dot_dimension_numbers<[1], [0], [0], [1], [0, 0, 1, 1], [], []>} : vector<64x128xbf16>, vector<128x128xbf16>, vector<64x128xf32> -> vector<64x128xf32>
    %51 = arith.addf %45, %50 : vector<64x128xf32>
    %c1_84 = arith.constant 1 : index
    %c1_85 = arith.constant 1 : index
    %c0_86 = arith.constant 0 : index
    %52 = vector.load %arg19[%c1_84, %c1_85, %c0_86] : memref<10x10x128xbf16, #tpu.memory_space<vmem>>, vector<8x8x128xbf16>
    %53 = vector.shape_cast %52 : vector<8x8x128xbf16> to vector<64x128xbf16>
    %c4 = arith.constant 4 : index
    %c0_87 = arith.constant 0 : index
    %c0_88 = arith.constant 0 : index
    %54 = vector.load %arg11[%c4, %c0_87, %c0_88] : memref<9x128x128xbf16, #tpu.memory_space<vmem>>, vector<1x128x128xbf16>
    %55 = vector.shape_cast %54 : vector<1x128x128xbf16> to vector<128x128xbf16>
    %cst_89 = arith.constant dense<0.000000e+00> : vector<64x128xf32>
    %56 = tpu.matmul %53, %55, %cst_89 {dimension_numbers = #tpu.dot_dimension_numbers<[1], [0], [0], [1], [0, 0, 1, 1], [], []>} : vector<64x128xbf16>, vector<128x128xbf16>, vector<64x128xf32> -> vector<64x128xf32>
    %57 = arith.addf %51, %56 : vector<64x128xf32>
    %c1_90 = arith.constant 1 : index
    %c2_91 = arith.constant 2 : index
    %c0_92 = arith.constant 0 : index
    %58 = vector.load %arg19[%c1_90, %c2_91, %c0_92] : memref<10x10x128xbf16, #tpu.memory_space<vmem>>, vector<8x8x128xbf16>
    %59 = vector.shape_cast %58 : vector<8x8x128xbf16> to vector<64x128xbf16>
    %c5_93 = arith.constant 5 : index
    %c0_94 = arith.constant 0 : index
    %c0_95 = arith.constant 0 : index
    %60 = vector.load %arg11[%c5_93, %c0_94, %c0_95] : memref<9x128x128xbf16, #tpu.memory_space<vmem>>, vector<1x128x128xbf16>
    %61 = vector.shape_cast %60 : vector<1x128x128xbf16> to vector<128x128xbf16>
    %cst_96 = arith.constant dense<0.000000e+00> : vector<64x128xf32>
    %62 = tpu.matmul %59, %61, %cst_96 {dimension_numbers = #tpu.dot_dimension_numbers<[1], [0], [0], [1], [0, 0, 1, 1], [], []>} : vector<64x128xbf16>, vector<128x128xbf16>, vector<64x128xf32> -> vector<64x128xf32>
    %63 = arith.addf %57, %62 : vector<64x128xf32>
    %c2_97 = arith.constant 2 : index
    %c0_98 = arith.constant 0 : index
    %c0_99 = arith.constant 0 : index
    %64 = vector.load %arg19[%c2_97, %c0_98, %c0_99] : memref<10x10x128xbf16, #tpu.memory_space<vmem>>, vector<8x8x128xbf16>
    %65 = vector.shape_cast %64 : vector<8x8x128xbf16> to vector<64x128xbf16>
    %c6 = arith.constant 6 : index
    %c0_100 = arith.constant 0 : index
    %c0_101 = arith.constant 0 : index
    %66 = vector.load %arg11[%c6, %c0_100, %c0_101] : memref<9x128x128xbf16, #tpu.memory_space<vmem>>, vector<1x128x128xbf16>
    %67 = vector.shape_cast %66 : vector<1x128x128xbf16> to vector<128x128xbf16>
    %cst_102 = arith.constant dense<0.000000e+00> : vector<64x128xf32>
    %68 = tpu.matmul %65, %67, %cst_102 {dimension_numbers = #tpu.dot_dimension_numbers<[1], [0], [0], [1], [0, 0, 1, 1], [], []>} : vector<64x128xbf16>, vector<128x128xbf16>, vector<64x128xf32> -> vector<64x128xf32>
    %69 = arith.addf %63, %68 : vector<64x128xf32>
    %c2_103 = arith.constant 2 : index
    %c1_104 = arith.constant 1 : index
    %c0_105 = arith.constant 0 : index
    %70 = vector.load %arg19[%c2_103, %c1_104, %c0_105] : memref<10x10x128xbf16, #tpu.memory_space<vmem>>, vector<8x8x128xbf16>
    %71 = vector.shape_cast %70 : vector<8x8x128xbf16> to vector<64x128xbf16>
    %c7 = arith.constant 7 : index
    %c0_106 = arith.constant 0 : index
    %c0_107 = arith.constant 0 : index
    %72 = vector.load %arg11[%c7, %c0_106, %c0_107] : memref<9x128x128xbf16, #tpu.memory_space<vmem>>, vector<1x128x128xbf16>
    %73 = vector.shape_cast %72 : vector<1x128x128xbf16> to vector<128x128xbf16>
    %cst_108 = arith.constant dense<0.000000e+00> : vector<64x128xf32>
    %74 = tpu.matmul %71, %73, %cst_108 {dimension_numbers = #tpu.dot_dimension_numbers<[1], [0], [0], [1], [0, 0, 1, 1], [], []>} : vector<64x128xbf16>, vector<128x128xbf16>, vector<64x128xf32> -> vector<64x128xf32>
    %75 = arith.addf %69, %74 : vector<64x128xf32>
    %c2_109 = arith.constant 2 : index
    %c2_110 = arith.constant 2 : index
    %c0_111 = arith.constant 0 : index
    %76 = vector.load %arg19[%c2_109, %c2_110, %c0_111] : memref<10x10x128xbf16, #tpu.memory_space<vmem>>, vector<8x8x128xbf16>
    %77 = vector.shape_cast %76 : vector<8x8x128xbf16> to vector<64x128xbf16>
    %c8 = arith.constant 8 : index
    %c0_112 = arith.constant 0 : index
    %c0_113 = arith.constant 0 : index
    %78 = vector.load %arg11[%c8, %c0_112, %c0_113] : memref<9x128x128xbf16, #tpu.memory_space<vmem>>, vector<1x128x128xbf16>
    %79 = vector.shape_cast %78 : vector<1x128x128xbf16> to vector<128x128xbf16>
    %cst_114 = arith.constant dense<0.000000e+00> : vector<64x128xf32>
    %80 = tpu.matmul %77, %79, %cst_114 {dimension_numbers = #tpu.dot_dimension_numbers<[1], [0], [0], [1], [0, 0, 1, 1], [], []>} : vector<64x128xbf16>, vector<128x128xbf16>, vector<64x128xf32> -> vector<64x128xf32>
    %81 = arith.addf %75, %80 : vector<64x128xf32>
    %c0_115 = arith.constant 0 : index
    %c0_116 = arith.constant 0 : index
    %82 = vector.load %arg12[%c0_115, %c0_116] : memref<2x128xf32, #tpu.memory_space<vmem>>, vector<2x128xf32>
    %83 = vector.extract_strided_slice %82 {offsets = [0, 0], sizes = [1, 128], strides = [1, 1]} : vector<2x128xf32> to vector<1x128xf32>
    %84 = vector.broadcast %83 : vector<1x128xf32> to vector<64x128xf32>
    %85 = arith.mulf %81, %84 : vector<64x128xf32>
    %86 = vector.extract_strided_slice %82 {offsets = [1, 0], sizes = [1, 128], strides = [1, 1]} : vector<2x128xf32> to vector<1x128xf32>
    %87 = vector.broadcast %86 : vector<1x128xf32> to vector<64x128xf32>
    %88 = arith.addf %85, %87 : vector<64x128xf32>
    %cst_117 = arith.constant 0.000000e+00 : f32
    %89 = vector.broadcast %cst_117 : f32 to vector<64x128xf32>
    %90 = arith.maximumf %88, %89 : vector<64x128xf32>
    %cst_118 = arith.constant 1.000000e+00 : bf16
    %91 = vector.broadcast %cst_118 : bf16 to vector<1x64xbf16>
    %92 = arith.truncf %90 : vector<64x128xf32> to vector<64x128xbf16>
    %cst_119 = arith.constant dense<0.000000e+00> : vector<1x128xf32>
    %93 = tpu.matmul %91, %92, %cst_119 {dimension_numbers = #tpu.dot_dimension_numbers<[1], [0], [0], [1], [0, 0, 1, 1], [], []>} : vector<1x64xbf16>, vector<64x128xbf16>, vector<1x128xf32> -> vector<1x128xf32>
    %cst_120 = arith.constant 1.562500e-02 : f32
    %94 = vector.broadcast %cst_120 : f32 to vector<1x128xf32>
    %95 = arith.mulf %93, %94 : vector<1x128xf32>
    %96 = arith.truncf %95 : vector<1x128xf32> to vector<1x128xbf16>
    %c0_121 = arith.constant 0 : index
    %c0_122 = arith.constant 0 : index
    %97 = vector.load %arg13[%c0_121, %c0_122] : memref<128x128xbf16, #tpu.memory_space<vmem>>, vector<128x128xbf16>
    %cst_123 = arith.constant dense<0.000000e+00> : vector<1x128xf32>
    %98 = tpu.matmul %96, %97, %cst_123 {dimension_numbers = #tpu.dot_dimension_numbers<[1], [0], [0], [1], [0, 0, 1, 1], [], []>} : vector<1x128xbf16>, vector<128x128xbf16>, vector<1x128xf32> -> vector<1x128xf32>
    %c0_124 = arith.constant 0 : index
    %c0_125 = arith.constant 0 : index
    %99 = vector.load %arg14[%c0_124, %c0_125] : memref<2x128xf32, #tpu.memory_space<vmem>>, vector<2x128xf32>
    %100 = vector.extract_strided_slice %99 {offsets = [0, 0], sizes = [1, 128], strides = [1, 1]} : vector<2x128xf32> to vector<1x128xf32>
    %101 = arith.mulf %98, %100 : vector<1x128xf32>
    %102 = vector.extract_strided_slice %99 {offsets = [1, 0], sizes = [1, 128], strides = [1, 1]} : vector<2x128xf32> to vector<1x128xf32>
    %103 = arith.addf %101, %102 : vector<1x128xf32>
    %cst_126 = arith.constant 0.000000e+00 : f32
    %104 = vector.broadcast %cst_126 : f32 to vector<1x128xf32>
    %105 = arith.subf %104, %103 : vector<1x128xf32>
    %106 = math.exp %105 : vector<1x128xf32>
    %cst_127 = arith.constant 1.000000e+00 : f32
    %107 = vector.broadcast %cst_127 : f32 to vector<1x128xf32>
    %108 = arith.addf %107, %106 : vector<1x128xf32>
    %cst_128 = arith.constant 1.000000e+00 : f32
    %109 = vector.broadcast %cst_128 : f32 to vector<1x128xf32>
    %110 = arith.divf %109, %108 : vector<1x128xf32>
    %c0_129 = arith.constant 0 : index
    %c0_130 = arith.constant 0 : index
    %c0_131 = arith.constant 0 : index
    %c0_132 = arith.constant 0 : index
    %111 = vector.load %arg1[%c0_129, %c0_130, %c0_131, %c0_132] : memref<1x4x4x128xbf16, #tpu.memory_space<vmem>>, vector<1x4x4x128xbf16>
    %112 = vector.shape_cast %111 : vector<1x4x4x128xbf16> to vector<4x4x128xbf16>
    %113 = vector.shape_cast %112 : vector<4x4x128xbf16> to vector<16x128xbf16>
    %cst_133 = arith.constant 1.000000e+00 : bf16
    %114 = vector.broadcast %cst_133 : bf16 to vector<1x16xbf16>
    %cst_134 = arith.constant dense<0.000000e+00> : vector<1x128xf32>
    %115 = tpu.matmul %114, %113, %cst_134 {dimension_numbers = #tpu.dot_dimension_numbers<[1], [0], [0], [1], [0, 0, 1, 1], [], []>} : vector<1x16xbf16>, vector<16x128xbf16>, vector<1x128xf32> -> vector<1x128xf32>
    %cst_135 = arith.constant 6.250000e-02 : f32
    %116 = vector.broadcast %cst_135 : f32 to vector<1x128xf32>
    %117 = arith.mulf %115, %116 : vector<1x128xf32>
    %118 = arith.truncf %117 : vector<1x128xf32> to vector<1x128xbf16>
    %c0_136 = arith.constant 0 : index
    %c0_137 = arith.constant 0 : index
    %119 = vector.load %arg3[%c0_136, %c0_137] : memref<128x128xbf16, #tpu.memory_space<vmem>>, vector<128x128xbf16>
    %cst_138 = arith.constant dense<0.000000e+00> : vector<1x128xf32>
    %120 = tpu.matmul %118, %119, %cst_138 {dimension_numbers = #tpu.dot_dimension_numbers<[1], [0], [0], [1], [0, 0, 1, 1], [], []>} : vector<1x128xbf16>, vector<128x128xbf16>, vector<1x128xf32> -> vector<1x128xf32>
    %c0_139 = arith.constant 0 : index
    %c0_140 = arith.constant 0 : index
    %121 = vector.load %arg4[%c0_139, %c0_140] : memref<2x128xf32, #tpu.memory_space<vmem>>, vector<2x128xf32>
    %122 = vector.extract_strided_slice %121 {offsets = [0, 0], sizes = [1, 128], strides = [1, 1]} : vector<2x128xf32> to vector<1x128xf32>
    %123 = arith.mulf %120, %122 : vector<1x128xf32>
    %124 = vector.extract_strided_slice %121 {offsets = [1, 0], sizes = [1, 128], strides = [1, 1]} : vector<2x128xf32> to vector<1x128xf32>
    %125 = arith.addf %123, %124 : vector<1x128xf32>
    %cst_141 = arith.constant 0.000000e+00 : f32
    %126 = vector.broadcast %cst_141 : f32 to vector<1x128xf32>
    %127 = arith.maximumf %125, %126 : vector<1x128xf32>
    %c0_142 = arith.constant 0 : index
    %c0_143 = arith.constant 0 : index
    %c0_144 = arith.constant 0 : index
    %c0_145 = arith.constant 0 : index
    %128 = vector.load %arg1[%c0_142, %c0_143, %c0_144, %c0_145] : memref<1x4x4x128xbf16, #tpu.memory_space<vmem>>, vector<1x4x4x128xbf16>
    %129 = vector.shape_cast %128 : vector<1x4x4x128xbf16> to vector<4x4x128xbf16>
    %c1_146 = arith.constant 1 : index
    %c1_147 = arith.constant 1 : index
    %c0_148 = arith.constant 0 : index
    %130 = vector.load %arg18[%c1_146, %c1_147, %c0_148] : memref<6x6x128xbf16, #tpu.memory_space<vmem>>, vector<4x4x128xbf16>
    tpu.vector_store %arg18[%c1_146, %c1_147, %c0_148], %129 {strides = array<i32>} : memref<6x6x128xbf16, #tpu.memory_space<vmem>>, vector<4x4x128xbf16>,
    %cst_149 = arith.constant 0.000000e+00 : f32
    %131 = vector.broadcast %cst_149 : f32 to vector<16x128xf32>
    %c0_150 = arith.constant 0 : index
    %c0_151 = arith.constant 0 : index
    %c0_152 = arith.constant 0 : index
    %132 = vector.load %arg18[%c0_150, %c0_151, %c0_152] : memref<6x6x128xbf16, #tpu.memory_space<vmem>>, vector<4x4x128xbf16>
    %133 = vector.shape_cast %132 : vector<4x4x128xbf16> to vector<16x128xbf16>
    %c0_153 = arith.constant 0 : index
    %c0_154 = arith.constant 0 : index
    %c0_155 = arith.constant 0 : index
    %134 = vector.load %arg5[%c0_153, %c0_154, %c0_155] : memref<9x128x128xbf16, #tpu.memory_space<vmem>>, vector<1x128x128xbf16>
    %135 = vector.shape_cast %134 : vector<1x128x128xbf16> to vector<128x128xbf16>
    %cst_156 = arith.constant dense<0.000000e+00> : vector<16x128xf32>
    %136 = tpu.matmul %133, %135, %cst_156 {dimension_numbers = #tpu.dot_dimension_numbers<[1], [0], [0], [1], [0, 0, 1, 1], [], []>} : vector<16x128xbf16>, vector<128x128xbf16>, vector<16x128xf32> -> vector<16x128xf32>
    %137 = arith.addf %131, %136 : vector<16x128xf32>
    %c0_157 = arith.constant 0 : index
    %c1_158 = arith.constant 1 : index
    %c0_159 = arith.constant 0 : index
    %138 = vector.load %arg18[%c0_157, %c1_158, %c0_159] : memref<6x6x128xbf16, #tpu.memory_space<vmem>>, vector<4x4x128xbf16>
    %139 = vector.shape_cast %138 : vector<4x4x128xbf16> to vector<16x128xbf16>
    %c1_160 = arith.constant 1 : index
    %c0_161 = arith.constant 0 : index
    %c0_162 = arith.constant 0 : index
    %140 = vector.load %arg5[%c1_160, %c0_161, %c0_162] : memref<9x128x128xbf16, #tpu.memory_space<vmem>>, vector<1x128x128xbf16>
    %141 = vector.shape_cast %140 : vector<1x128x128xbf16> to vector<128x128xbf16>
    %cst_163 = arith.constant dense<0.000000e+00> : vector<16x128xf32>
    %142 = tpu.matmul %139, %141, %cst_163 {dimension_numbers = #tpu.dot_dimension_numbers<[1], [0], [0], [1], [0, 0, 1, 1], [], []>} : vector<16x128xbf16>, vector<128x128xbf16>, vector<16x128xf32> -> vector<16x128xf32>
    %143 = arith.addf %137, %142 : vector<16x128xf32>
    %c0_164 = arith.constant 0 : index
    %c2_165 = arith.constant 2 : index
    %c0_166 = arith.constant 0 : index
    %144 = vector.load %arg18[%c0_164, %c2_165, %c0_166] : memref<6x6x128xbf16, #tpu.memory_space<vmem>>, vector<4x4x128xbf16>
    %145 = vector.shape_cast %144 : vector<4x4x128xbf16> to vector<16x128xbf16>
    %c2_167 = arith.constant 2 : index
    %c0_168 = arith.constant 0 : index
    %c0_169 = arith.constant 0 : index
    %146 = vector.load %arg5[%c2_167, %c0_168, %c0_169] : memref<9x128x128xbf16, #tpu.memory_space<vmem>>, vector<1x128x128xbf16>
    %147 = vector.shape_cast %146 : vector<1x128x128xbf16> to vector<128x128xbf16>
    %cst_170 = arith.constant dense<0.000000e+00> : vector<16x128xf32>
    %148 = tpu.matmul %145, %147, %cst_170 {dimension_numbers = #tpu.dot_dimension_numbers<[1], [0], [0], [1], [0, 0, 1, 1], [], []>} : vector<16x128xbf16>, vector<128x128xbf16>, vector<16x128xf32> -> vector<16x128xf32>
    %149 = arith.addf %143, %148 : vector<16x128xf32>
    %c1_171 = arith.constant 1 : index
    %c0_172 = arith.constant 0 : index
    %c0_173 = arith.constant 0 : index
    %150 = vector.load %arg18[%c1_171, %c0_172, %c0_173] : memref<6x6x128xbf16, #tpu.memory_space<vmem>>, vector<4x4x128xbf16>
    %151 = vector.shape_cast %150 : vector<4x4x128xbf16> to vector<16x128xbf16>
    %c3_174 = arith.constant 3 : index
    %c0_175 = arith.constant 0 : index
    %c0_176 = arith.constant 0 : index
    %152 = vector.load %arg5[%c3_174, %c0_175, %c0_176] : memref<9x128x128xbf16, #tpu.memory_space<vmem>>, vector<1x128x128xbf16>
    %153 = vector.shape_cast %152 : vector<1x128x128xbf16> to vector<128x128xbf16>
    %cst_177 = arith.constant dense<0.000000e+00> : vector<16x128xf32>
    %154 = tpu.matmul %151, %153, %cst_177 {dimension_numbers = #tpu.dot_dimension_numbers<[1], [0], [0], [1], [0, 0, 1, 1], [], []>} : vector<16x128xbf16>, vector<128x128xbf16>, vector<16x128xf32> -> vector<16x128xf32>
    %155 = arith.addf %149, %154 : vector<16x128xf32>
    %c1_178 = arith.constant 1 : index
    %c1_179 = arith.constant 1 : index
    %c0_180 = arith.constant 0 : index
    %156 = vector.load %arg18[%c1_178, %c1_179, %c0_180] : memref<6x6x128xbf16, #tpu.memory_space<vmem>>, vector<4x4x128xbf16>
    %157 = vector.shape_cast %156 : vector<4x4x128xbf16> to vector<16x128xbf16>
    %c4_181 = arith.constant 4 : index
    %c0_182 = arith.constant 0 : index
    %c0_183 = arith.constant 0 : index
    %158 = vector.load %arg5[%c4_181, %c0_182, %c0_183] : memref<9x128x128xbf16, #tpu.memory_space<vmem>>, vector<1x128x128xbf16>
    %159 = vector.shape_cast %158 : vector<1x128x128xbf16> to vector<128x128xbf16>
    %cst_184 = arith.constant dense<0.000000e+00> : vector<16x128xf32>
    %160 = tpu.matmul %157, %159, %cst_184 {dimension_numbers = #tpu.dot_dimension_numbers<[1], [0], [0], [1], [0, 0, 1, 1], [], []>} : vector<16x128xbf16>, vector<128x128xbf16>, vector<16x128xf32> -> vector<16x128xf32>
    %161 = arith.addf %155, %160 : vector<16x128xf32>
    %c1_185 = arith.constant 1 : index
    %c2_186 = arith.constant 2 : index
    %c0_187 = arith.constant 0 : index
    %162 = vector.load %arg18[%c1_185, %c2_186, %c0_187] : memref<6x6x128xbf16, #tpu.memory_space<vmem>>, vector<4x4x128xbf16>
    %163 = vector.shape_cast %162 : vector<4x4x128xbf16> to vector<16x128xbf16>
    %c5_188 = arith.constant 5 : index
    %c0_189 = arith.constant 0 : index
    %c0_190 = arith.constant 0 : index
    %164 = vector.load %arg5[%c5_188, %c0_189, %c0_190] : memref<9x128x128xbf16, #tpu.memory_space<vmem>>, vector<1x128x128xbf16>
    %165 = vector.shape_cast %164 : vector<1x128x128xbf16> to vector<128x128xbf16>
    %cst_191 = arith.constant dense<0.000000e+00> : vector<16x128xf32>
    %166 = tpu.matmul %163, %165, %cst_191 {dimension_numbers = #tpu.dot_dimension_numbers<[1], [0], [0], [1], [0, 0, 1, 1], [], []>} : vector<16x128xbf16>, vector<128x128xbf16>, vector<16x128xf32> -> vector<16x128xf32>
    %167 = arith.addf %161, %166 : vector<16x128xf32>
    %c2_192 = arith.constant 2 : index
    %c0_193 = arith.constant 0 : index
    %c0_194 = arith.constant 0 : index
    %168 = vector.load %arg18[%c2_192, %c0_193, %c0_194] : memref<6x6x128xbf16, #tpu.memory_space<vmem>>, vector<4x4x128xbf16>
    %169 = vector.shape_cast %168 : vector<4x4x128xbf16> to vector<16x128xbf16>
    %c6_195 = arith.constant 6 : index
    %c0_196 = arith.constant 0 : index
    %c0_197 = arith.constant 0 : index
    %170 = vector.load %arg5[%c6_195, %c0_196, %c0_197] : memref<9x128x128xbf16, #tpu.memory_space<vmem>>, vector<1x128x128xbf16>
    %171 = vector.shape_cast %170 : vector<1x128x128xbf16> to vector<128x128xbf16>
    %cst_198 = arith.constant dense<0.000000e+00> : vector<16x128xf32>
    %172 = tpu.matmul %169, %171, %cst_198 {dimension_numbers = #tpu.dot_dimension_numbers<[1], [0], [0], [1], [0, 0, 1, 1], [], []>} : vector<16x128xbf16>, vector<128x128xbf16>, vector<16x128xf32> -> vector<16x128xf32>
    %173 = arith.addf %167, %172 : vector<16x128xf32>
    %c2_199 = arith.constant 2 : index
    %c1_200 = arith.constant 1 : index
    %c0_201 = arith.constant 0 : index
    %174 = vector.load %arg18[%c2_199, %c1_200, %c0_201] : memref<6x6x128xbf16, #tpu.memory_space<vmem>>, vector<4x4x128xbf16>
    %175 = vector.shape_cast %174 : vector<4x4x128xbf16> to vector<16x128xbf16>
    %c7_202 = arith.constant 7 : index
    %c0_203 = arith.constant 0 : index
    %c0_204 = arith.constant 0 : index
    %176 = vector.load %arg5[%c7_202, %c0_203, %c0_204] : memref<9x128x128xbf16, #tpu.memory_space<vmem>>, vector<1x128x128xbf16>
    %177 = vector.shape_cast %176 : vector<1x128x128xbf16> to vector<128x128xbf16>
    %cst_205 = arith.constant dense<0.000000e+00> : vector<16x128xf32>
    %178 = tpu.matmul %175, %177, %cst_205 {dimension_numbers = #tpu.dot_dimension_numbers<[1], [0], [0], [1], [0, 0, 1, 1], [], []>} : vector<16x128xbf16>, vector<128x128xbf16>, vector<16x128xf32> -> vector<16x128xf32>
    %179 = arith.addf %173, %178 : vector<16x128xf32>
    %c2_206 = arith.constant 2 : index
    %c2_207 = arith.constant 2 : index
    %c0_208 = arith.constant 0 : index
    %180 = vector.load %arg18[%c2_206, %c2_207, %c0_208] : memref<6x6x128xbf16, #tpu.memory_space<vmem>>, vector<4x4x128xbf16>
    %181 = vector.shape_cast %180 : vector<4x4x128xbf16> to vector<16x128xbf16>
    %c8_209 = arith.constant 8 : index
    %c0_210 = arith.constant 0 : index
    %c0_211 = arith.constant 0 : index
    %182 = vector.load %arg5[%c8_209, %c0_210, %c0_211] : memref<9x128x128xbf16, #tpu.memory_space<vmem>>, vector<1x128x128xbf16>
    %183 = vector.shape_cast %182 : vector<1x128x128xbf16> to vector<128x128xbf16>
    %cst_212 = arith.constant dense<0.000000e+00> : vector<16x128xf32>
    %184 = tpu.matmul %181, %183, %cst_212 {dimension_numbers = #tpu.dot_dimension_numbers<[1], [0], [0], [1], [0, 0, 1, 1], [], []>} : vector<16x128xbf16>, vector<128x128xbf16>, vector<16x128xf32> -> vector<16x128xf32>
    %185 = arith.addf %179, %184 : vector<16x128xf32>
    %c0_213 = arith.constant 0 : index
    %c0_214 = arith.constant 0 : index
    %186 = vector.load %arg6[%c0_213, %c0_214] : memref<2x128xf32, #tpu.memory_space<vmem>>, vector<2x128xf32>
    %187 = vector.extract_strided_slice %186 {offsets = [0, 0], sizes = [1, 128], strides = [1, 1]} : vector<2x128xf32> to vector<1x128xf32>
    %188 = vector.broadcast %187 : vector<1x128xf32> to vector<16x128xf32>
    %189 = arith.mulf %185, %188 : vector<16x128xf32>
    %190 = vector.extract_strided_slice %186 {offsets = [1, 0], sizes = [1, 128], strides = [1, 1]} : vector<2x128xf32> to vector<1x128xf32>
    %191 = vector.broadcast %190 : vector<1x128xf32> to vector<16x128xf32>
    %192 = arith.addf %189, %191 : vector<16x128xf32>
    %cst_215 = arith.constant 0.000000e+00 : f32
    %193 = vector.broadcast %cst_215 : f32 to vector<16x128xf32>
    %194 = arith.maximumf %192, %193 : vector<16x128xf32>
    %cst_216 = arith.constant 1.000000e+00 : bf16
    %195 = vector.broadcast %cst_216 : bf16 to vector<1x16xbf16>
    %196 = arith.truncf %194 : vector<16x128xf32> to vector<16x128xbf16>
    %cst_217 = arith.constant dense<0.000000e+00> : vector<1x128xf32>
    %197 = tpu.matmul %195, %196, %cst_217 {dimension_numbers = #tpu.dot_dimension_numbers<[1], [0], [0], [1], [0, 0, 1, 1], [], []>} : vector<1x16xbf16>, vector<16x128xbf16>, vector<1x128xf32> -> vector<1x128xf32>
    %cst_218 = arith.constant 6.250000e-02 : f32
    %198 = vector.broadcast %cst_218 : f32 to vector<1x128xf32>
    %199 = arith.mulf %197, %198 : vector<1x128xf32>
    %200 = arith.truncf %199 : vector<1x128xf32> to vector<1x128xbf16>
    %c0_219 = arith.constant 0 : index
    %c0_220 = arith.constant 0 : index
    %201 = vector.load %arg7[%c0_219, %c0_220] : memref<128x128xbf16, #tpu.memory_space<vmem>>, vector<128x128xbf16>
    %cst_221 = arith.constant dense<0.000000e+00> : vector<1x128xf32>
    %202 = tpu.matmul %200, %201, %cst_221 {dimension_numbers = #tpu.dot_dimension_numbers<[1], [0], [0], [1], [0, 0, 1, 1], [], []>} : vector<1x128xbf16>, vector<128x128xbf16>, vector<1x128xf32> -> vector<1x128xf32>
    %c0_222 = arith.constant 0 : index
    %c0_223 = arith.constant 0 : index
    %203 = vector.load %arg8[%c0_222, %c0_223] : memref<2x128xf32, #tpu.memory_space<vmem>>, vector<2x128xf32>
    %204 = vector.extract_strided_slice %203 {offsets = [0, 0], sizes = [1, 128], strides = [1, 1]} : vector<2x128xf32> to vector<1x128xf32>
    %205 = arith.mulf %202, %204 : vector<1x128xf32>
    %206 = vector.extract_strided_slice %203 {offsets = [1, 0], sizes = [1, 128], strides = [1, 1]} : vector<2x128xf32> to vector<1x128xf32>
    %207 = arith.addf %205, %206 : vector<1x128xf32>
    %cst_224 = arith.constant 0.000000e+00 : f32
    %208 = vector.broadcast %cst_224 : f32 to vector<1x128xf32>
    %209 = arith.subf %208, %207 : vector<1x128xf32>
    %210 = math.exp %209 : vector<1x128xf32>
    %cst_225 = arith.constant 1.000000e+00 : f32
    %211 = vector.broadcast %cst_225 : f32 to vector<1x128xf32>
    %212 = arith.addf %211, %210 : vector<1x128xf32>
    %cst_226 = arith.constant 1.000000e+00 : f32
    %213 = vector.broadcast %cst_226 : f32 to vector<1x128xf32>
    %214 = arith.divf %213, %212 : vector<1x128xf32>
    %215 = vector.broadcast %214 : vector<1x128xf32> to vector<16x128xf32>
    %216 = arith.mulf %194, %215 : vector<16x128xf32>
    %217 = vector.broadcast %127 : vector<1x128xf32> to vector<16x128xf32>
    %218 = arith.addf %216, %217 : vector<16x128xf32>
    %219 = arith.truncf %218 : vector<16x128xf32> to vector<16x128xbf16>
    %220 = vector.shape_cast %219 : vector<16x128xbf16> to vector<4x4x128xbf16>
    %221 = vector.shape_cast %220 : vector<4x4x128xbf16> to vector<4x4x1x128xbf16>
    %222 = vector.shape_cast %221 : vector<4x4x1x128xbf16> to vector<4x4x1x128xbf16>
    %223 = vector.broadcast %222 : vector<4x4x1x128xbf16> to vector<4x4x2x128xbf16>
    %224 = vector.shape_cast %223 : vector<4x4x2x128xbf16> to vector<4x8x128xbf16>
    %225 = vector.shape_cast %224 : vector<4x8x128xbf16> to vector<4x1x8x128xbf16>
    %226 = vector.shape_cast %225 : vector<4x1x8x128xbf16> to vector<4x1x8x128xbf16>
    %227 = vector.broadcast %226 : vector<4x1x8x128xbf16> to vector<4x2x8x128xbf16>
    %228 = vector.shape_cast %227 : vector<4x2x8x128xbf16> to vector<8x8x128xbf16>
    %c1_227 = arith.constant 1 : index
    %c1_228 = arith.constant 1 : index
    %c0_229 = arith.constant 0 : index
    %229 = vector.load %arg20[%c1_227, %c1_228, %c0_229] : memref<10x10x128xbf16, #tpu.memory_space<vmem>>, vector<8x8x128xbf16>
    tpu.vector_store %arg20[%c1_227, %c1_228, %c0_229], %228 {strides = array<i32>} : memref<10x10x128xbf16, #tpu.memory_space<vmem>>, vector<8x8x128xbf16>,
    %cst_230 = arith.constant 0.000000e+00 : f32
    %230 = vector.broadcast %cst_230 : f32 to vector<64x128xf32>
    %c0_231 = arith.constant 0 : index
    %c0_232 = arith.constant 0 : index
    %c0_233 = arith.constant 0 : index
    %231 = vector.load %arg20[%c0_231, %c0_232, %c0_233] : memref<10x10x128xbf16, #tpu.memory_space<vmem>>, vector<8x8x128xbf16>
    %232 = vector.shape_cast %231 : vector<8x8x128xbf16> to vector<64x128xbf16>
    %c0_234 = arith.constant 0 : index
    %c0_235 = arith.constant 0 : index
    %c0_236 = arith.constant 0 : index
    %233 = vector.load %arg9[%c0_234, %c0_235, %c0_236] : memref<9x128x128xbf16, #tpu.memory_space<vmem>>, vector<1x128x128xbf16>
    %234 = vector.shape_cast %233 : vector<1x128x128xbf16> to vector<128x128xbf16>
    %cst_237 = arith.constant dense<0.000000e+00> : vector<64x128xf32>
    %235 = tpu.matmul %232, %234, %cst_237 {dimension_numbers = #tpu.dot_dimension_numbers<[1], [0], [0], [1], [0, 0, 1, 1], [], []>} : vector<64x128xbf16>, vector<128x128xbf16>, vector<64x128xf32> -> vector<64x128xf32>
    %236 = arith.addf %230, %235 : vector<64x128xf32>
    %c0_238 = arith.constant 0 : index
    %c1_239 = arith.constant 1 : index
    %c0_240 = arith.constant 0 : index
    %237 = vector.load %arg20[%c0_238, %c1_239, %c0_240] : memref<10x10x128xbf16, #tpu.memory_space<vmem>>, vector<8x8x128xbf16>
    %238 = vector.shape_cast %237 : vector<8x8x128xbf16> to vector<64x128xbf16>
    %c1_241 = arith.constant 1 : index
    %c0_242 = arith.constant 0 : index
    %c0_243 = arith.constant 0 : index
    %239 = vector.load %arg9[%c1_241, %c0_242, %c0_243] : memref<9x128x128xbf16, #tpu.memory_space<vmem>>, vector<1x128x128xbf16>
    %240 = vector.shape_cast %239 : vector<1x128x128xbf16> to vector<128x128xbf16>
    %cst_244 = arith.constant dense<0.000000e+00> : vector<64x128xf32>
    %241 = tpu.matmul %238, %240, %cst_244 {dimension_numbers = #tpu.dot_dimension_numbers<[1], [0], [0], [1], [0, 0, 1, 1], [], []>} : vector<64x128xbf16>, vector<128x128xbf16>, vector<64x128xf32> -> vector<64x128xf32>
    %242 = arith.addf %236, %241 : vector<64x128xf32>
    %c0_245 = arith.constant 0 : index
    %c2_246 = arith.constant 2 : index
    %c0_247 = arith.constant 0 : index
    %243 = vector.load %arg20[%c0_245, %c2_246, %c0_247] : memref<10x10x128xbf16, #tpu.memory_space<vmem>>, vector<8x8x128xbf16>
    %244 = vector.shape_cast %243 : vector<8x8x128xbf16> to vector<64x128xbf16>
    %c2_248 = arith.constant 2 : index
    %c0_249 = arith.constant 0 : index
    %c0_250 = arith.constant 0 : index
    %245 = vector.load %arg9[%c2_248, %c0_249, %c0_250] : memref<9x128x128xbf16, #tpu.memory_space<vmem>>, vector<1x128x128xbf16>
    %246 = vector.shape_cast %245 : vector<1x128x128xbf16> to vector<128x128xbf16>
    %cst_251 = arith.constant dense<0.000000e+00> : vector<64x128xf32>
    %247 = tpu.matmul %244, %246, %cst_251 {dimension_numbers = #tpu.dot_dimension_numbers<[1], [0], [0], [1], [0, 0, 1, 1], [], []>} : vector<64x128xbf16>, vector<128x128xbf16>, vector<64x128xf32> -> vector<64x128xf32>
    %248 = arith.addf %242, %247 : vector<64x128xf32>
    %c1_252 = arith.constant 1 : index
    %c0_253 = arith.constant 0 : index
    %c0_254 = arith.constant 0 : index
    %249 = vector.load %arg20[%c1_252, %c0_253, %c0_254] : memref<10x10x128xbf16, #tpu.memory_space<vmem>>, vector<8x8x128xbf16>
    %250 = vector.shape_cast %249 : vector<8x8x128xbf16> to vector<64x128xbf16>
    %c3_255 = arith.constant 3 : index
    %c0_256 = arith.constant 0 : index
    %c0_257 = arith.constant 0 : index
    %251 = vector.load %arg9[%c3_255, %c0_256, %c0_257] : memref<9x128x128xbf16, #tpu.memory_space<vmem>>, vector<1x128x128xbf16>
    %252 = vector.shape_cast %251 : vector<1x128x128xbf16> to vector<128x128xbf16>
    %cst_258 = arith.constant dense<0.000000e+00> : vector<64x128xf32>
    %253 = tpu.matmul %250, %252, %cst_258 {dimension_numbers = #tpu.dot_dimension_numbers<[1], [0], [0], [1], [0, 0, 1, 1], [], []>} : vector<64x128xbf16>, vector<128x128xbf16>, vector<64x128xf32> -> vector<64x128xf32>
    %254 = arith.addf %248, %253 : vector<64x128xf32>
    %c1_259 = arith.constant 1 : index
    %c1_260 = arith.constant 1 : index
    %c0_261 = arith.constant 0 : index
    %255 = vector.load %arg20[%c1_259, %c1_260, %c0_261] : memref<10x10x128xbf16, #tpu.memory_space<vmem>>, vector<8x8x128xbf16>
    %256 = vector.shape_cast %255 : vector<8x8x128xbf16> to vector<64x128xbf16>
    %c4_262 = arith.constant 4 : index
    %c0_263 = arith.constant 0 : index
    %c0_264 = arith.constant 0 : index
    %257 = vector.load %arg9[%c4_262, %c0_263, %c0_264] : memref<9x128x128xbf16, #tpu.memory_space<vmem>>, vector<1x128x128xbf16>
    %258 = vector.shape_cast %257 : vector<1x128x128xbf16> to vector<128x128xbf16>
    %cst_265 = arith.constant dense<0.000000e+00> : vector<64x128xf32>
    %259 = tpu.matmul %256, %258, %cst_265 {dimension_numbers = #tpu.dot_dimension_numbers<[1], [0], [0], [1], [0, 0, 1, 1], [], []>} : vector<64x128xbf16>, vector<128x128xbf16>, vector<64x128xf32> -> vector<64x128xf32>
    %260 = arith.addf %254, %259 : vector<64x128xf32>
    %c1_266 = arith.constant 1 : index
    %c2_267 = arith.constant 2 : index
    %c0_268 = arith.constant 0 : index
    %261 = vector.load %arg20[%c1_266, %c2_267, %c0_268] : memref<10x10x128xbf16, #tpu.memory_space<vmem>>, vector<8x8x128xbf16>
    %262 = vector.shape_cast %261 : vector<8x8x128xbf16> to vector<64x128xbf16>
    %c5_269 = arith.constant 5 : index
    %c0_270 = arith.constant 0 : index
    %c0_271 = arith.constant 0 : index
    %263 = vector.load %arg9[%c5_269, %c0_270, %c0_271] : memref<9x128x128xbf16, #tpu.memory_space<vmem>>, vector<1x128x128xbf16>
    %264 = vector.shape_cast %263 : vector<1x128x128xbf16> to vector<128x128xbf16>
    %cst_272 = arith.constant dense<0.000000e+00> : vector<64x128xf32>
    %265 = tpu.matmul %262, %264, %cst_272 {dimension_numbers = #tpu.dot_dimension_numbers<[1], [0], [0], [1], [0, 0, 1, 1], [], []>} : vector<64x128xbf16>, vector<128x128xbf16>, vector<64x128xf32> -> vector<64x128xf32>
    %266 = arith.addf %260, %265 : vector<64x128xf32>
    %c2_273 = arith.constant 2 : index
    %c0_274 = arith.constant 0 : index
    %c0_275 = arith.constant 0 : index
    %267 = vector.load %arg20[%c2_273, %c0_274, %c0_275] : memref<10x10x128xbf16, #tpu.memory_space<vmem>>, vector<8x8x128xbf16>
    %268 = vector.shape_cast %267 : vector<8x8x128xbf16> to vector<64x128xbf16>
    %c6_276 = arith.constant 6 : index
    %c0_277 = arith.constant 0 : index
    %c0_278 = arith.constant 0 : index
    %269 = vector.load %arg9[%c6_276, %c0_277, %c0_278] : memref<9x128x128xbf16, #tpu.memory_space<vmem>>, vector<1x128x128xbf16>
    %270 = vector.shape_cast %269 : vector<1x128x128xbf16> to vector<128x128xbf16>
    %cst_279 = arith.constant dense<0.000000e+00> : vector<64x128xf32>
    %271 = tpu.matmul %268, %270, %cst_279 {dimension_numbers = #tpu.dot_dimension_numbers<[1], [0], [0], [1], [0, 0, 1, 1], [], []>} : vector<64x128xbf16>, vector<128x128xbf16>, vector<64x128xf32> -> vector<64x128xf32>
    %272 = arith.addf %266, %271 : vector<64x128xf32>
    %c2_280 = arith.constant 2 : index
    %c1_281 = arith.constant 1 : index
    %c0_282 = arith.constant 0 : index
    %273 = vector.load %arg20[%c2_280, %c1_281, %c0_282] : memref<10x10x128xbf16, #tpu.memory_space<vmem>>, vector<8x8x128xbf16>
    %274 = vector.shape_cast %273 : vector<8x8x128xbf16> to vector<64x128xbf16>
    %c7_283 = arith.constant 7 : index
    %c0_284 = arith.constant 0 : index
    %c0_285 = arith.constant 0 : index
    %275 = vector.load %arg9[%c7_283, %c0_284, %c0_285] : memref<9x128x128xbf16, #tpu.memory_space<vmem>>, vector<1x128x128xbf16>
    %276 = vector.shape_cast %275 : vector<1x128x128xbf16> to vector<128x128xbf16>
    %cst_286 = arith.constant dense<0.000000e+00> : vector<64x128xf32>
    %277 = tpu.matmul %274, %276, %cst_286 {dimension_numbers = #tpu.dot_dimension_numbers<[1], [0], [0], [1], [0, 0, 1, 1], [], []>} : vector<64x128xbf16>, vector<128x128xbf16>, vector<64x128xf32> -> vector<64x128xf32>
    %278 = arith.addf %272, %277 : vector<64x128xf32>
    %c2_287 = arith.constant 2 : index
    %c2_288 = arith.constant 2 : index
    %c0_289 = arith.constant 0 : index
    %279 = vector.load %arg20[%c2_287, %c2_288, %c0_289] : memref<10x10x128xbf16, #tpu.memory_space<vmem>>, vector<8x8x128xbf16>
    %280 = vector.shape_cast %279 : vector<8x8x128xbf16> to vector<64x128xbf16>
    %c8_290 = arith.constant 8 : index
    %c0_291 = arith.constant 0 : index
    %c0_292 = arith.constant 0 : index
    %281 = vector.load %arg9[%c8_290, %c0_291, %c0_292] : memref<9x128x128xbf16, #tpu.memory_space<vmem>>, vector<1x128x128xbf16>
    %282 = vector.shape_cast %281 : vector<1x128x128xbf16> to vector<128x128xbf16>
    %cst_293 = arith.constant dense<0.000000e+00> : vector<64x128xf32>
    %283 = tpu.matmul %280, %282, %cst_293 {dimension_numbers = #tpu.dot_dimension_numbers<[1], [0], [0], [1], [0, 0, 1, 1], [], []>} : vector<64x128xbf16>, vector<128x128xbf16>, vector<64x128xf32> -> vector<64x128xf32>
    %284 = arith.addf %278, %283 : vector<64x128xf32>
    %c0_294 = arith.constant 0 : index
    %c0_295 = arith.constant 0 : index
    %285 = vector.load %arg10[%c0_294, %c0_295] : memref<2x128xf32, #tpu.memory_space<vmem>>, vector<2x128xf32>
    %286 = vector.extract_strided_slice %285 {offsets = [0, 0], sizes = [1, 128], strides = [1, 1]} : vector<2x128xf32> to vector<1x128xf32>
    %287 = vector.broadcast %286 : vector<1x128xf32> to vector<64x128xf32>
    %288 = arith.mulf %284, %287 : vector<64x128xf32>
    %289 = vector.extract_strided_slice %285 {offsets = [1, 0], sizes = [1, 128], strides = [1, 1]} : vector<2x128xf32> to vector<1x128xf32>
    %290 = vector.broadcast %289 : vector<1x128xf32> to vector<64x128xf32>
    %291 = arith.addf %288, %290 : vector<64x128xf32>
    %cst_296 = arith.constant 0.000000e+00 : f32
    %292 = vector.broadcast %cst_296 : f32 to vector<64x128xf32>
    %293 = arith.maximumf %291, %292 : vector<64x128xf32>
    %294 = vector.broadcast %110 : vector<1x128xf32> to vector<64x128xf32>
    %295 = arith.mulf %90, %294 : vector<64x128xf32>
    %296 = arith.addf %295, %293 : vector<64x128xf32>
    %297 = arith.truncf %296 : vector<64x128xf32> to vector<64x128xbf16>
    %298 = vector.shape_cast %297 : vector<64x128xbf16> to vector<8x8x128xbf16>
    %299 = vector.shape_cast %298 : vector<8x8x128xbf16> to vector<8x8x1x128xbf16>
    %300 = vector.shape_cast %299 : vector<8x8x1x128xbf16> to vector<8x8x1x128xbf16>
    %301 = vector.broadcast %300 : vector<8x8x1x128xbf16> to vector<8x8x2x128xbf16>
    %302 = vector.shape_cast %301 : vector<8x8x2x128xbf16> to vector<8x16x128xbf16>
    %303 = vector.shape_cast %302 : vector<8x16x128xbf16> to vector<8x1x16x128xbf16>
    %304 = vector.shape_cast %303 : vector<8x1x16x128xbf16> to vector<8x1x16x128xbf16>
    %305 = vector.broadcast %304 : vector<8x1x16x128xbf16> to vector<8x2x16x128xbf16>
    %306 = vector.shape_cast %305 : vector<8x2x16x128xbf16> to vector<16x16x128xbf16>
    %c1_297 = arith.constant 1 : index
    %c1_298 = arith.constant 1 : index
    %c0_299 = arith.constant 0 : index
    %307 = vector.load %arg21[%c1_297, %c1_298, %c0_299] : memref<18x18x128xbf16, #tpu.memory_space<vmem>>, vector<16x16x128xbf16>
    tpu.vector_store %arg21[%c1_297, %c1_298, %c0_299], %306 {strides = array<i32>} : memref<18x18x128xbf16, #tpu.memory_space<vmem>>, vector<16x16x128xbf16>,
    %cst_300 = arith.constant 0.000000e+00 : f32
    %308 = vector.broadcast %cst_300 : f32 to vector<256x128xf32>
    %c0_301 = arith.constant 0 : index
    %c0_302 = arith.constant 0 : index
    %c0_303 = arith.constant 0 : index
    %309 = vector.load %arg21[%c0_301, %c0_302, %c0_303] : memref<18x18x128xbf16, #tpu.memory_space<vmem>>, vector<16x16x128xbf16>
    %310 = vector.shape_cast %309 : vector<16x16x128xbf16> to vector<256x128xbf16>
    %c0_304 = arith.constant 0 : index
    %c0_305 = arith.constant 0 : index
    %c0_306 = arith.constant 0 : index
    %311 = vector.load %arg15[%c0_304, %c0_305, %c0_306] : memref<9x128x128xbf16, #tpu.memory_space<vmem>>, vector<1x128x128xbf16>
    %312 = vector.shape_cast %311 : vector<1x128x128xbf16> to vector<128x128xbf16>
    %cst_307 = arith.constant dense<0.000000e+00> : vector<256x128xf32>
    %313 = tpu.matmul %310, %312, %cst_307 {dimension_numbers = #tpu.dot_dimension_numbers<[1], [0], [0], [1], [0, 0, 1, 1], [], []>} : vector<256x128xbf16>, vector<128x128xbf16>, vector<256x128xf32> -> vector<256x128xf32>
    %314 = arith.addf %308, %313 : vector<256x128xf32>
    %c0_308 = arith.constant 0 : index
    %c1_309 = arith.constant 1 : index
    %c0_310 = arith.constant 0 : index
    %315 = vector.load %arg21[%c0_308, %c1_309, %c0_310] : memref<18x18x128xbf16, #tpu.memory_space<vmem>>, vector<16x16x128xbf16>
    %316 = vector.shape_cast %315 : vector<16x16x128xbf16> to vector<256x128xbf16>
    %c1_311 = arith.constant 1 : index
    %c0_312 = arith.constant 0 : index
    %c0_313 = arith.constant 0 : index
    %317 = vector.load %arg15[%c1_311, %c0_312, %c0_313] : memref<9x128x128xbf16, #tpu.memory_space<vmem>>, vector<1x128x128xbf16>
    %318 = vector.shape_cast %317 : vector<1x128x128xbf16> to vector<128x128xbf16>
    %cst_314 = arith.constant dense<0.000000e+00> : vector<256x128xf32>
    %319 = tpu.matmul %316, %318, %cst_314 {dimension_numbers = #tpu.dot_dimension_numbers<[1], [0], [0], [1], [0, 0, 1, 1], [], []>} : vector<256x128xbf16>, vector<128x128xbf16>, vector<256x128xf32> -> vector<256x128xf32>
    %320 = arith.addf %314, %319 : vector<256x128xf32>
    %c0_315 = arith.constant 0 : index
    %c2_316 = arith.constant 2 : index
    %c0_317 = arith.constant 0 : index
    %321 = vector.load %arg21[%c0_315, %c2_316, %c0_317] : memref<18x18x128xbf16, #tpu.memory_space<vmem>>, vector<16x16x128xbf16>
    %322 = vector.shape_cast %321 : vector<16x16x128xbf16> to vector<256x128xbf16>
    %c2_318 = arith.constant 2 : index
    %c0_319 = arith.constant 0 : index
    %c0_320 = arith.constant 0 : index
    %323 = vector.load %arg15[%c2_318, %c0_319, %c0_320] : memref<9x128x128xbf16, #tpu.memory_space<vmem>>, vector<1x128x128xbf16>
    %324 = vector.shape_cast %323 : vector<1x128x128xbf16> to vector<128x128xbf16>
    %cst_321 = arith.constant dense<0.000000e+00> : vector<256x128xf32>
    %325 = tpu.matmul %322, %324, %cst_321 {dimension_numbers = #tpu.dot_dimension_numbers<[1], [0], [0], [1], [0, 0, 1, 1], [], []>} : vector<256x128xbf16>, vector<128x128xbf16>, vector<256x128xf32> -> vector<256x128xf32>
    %326 = arith.addf %320, %325 : vector<256x128xf32>
    %c1_322 = arith.constant 1 : index
    %c0_323 = arith.constant 0 : index
    %c0_324 = arith.constant 0 : index
    %327 = vector.load %arg21[%c1_322, %c0_323, %c0_324] : memref<18x18x128xbf16, #tpu.memory_space<vmem>>, vector<16x16x128xbf16>
    %328 = vector.shape_cast %327 : vector<16x16x128xbf16> to vector<256x128xbf16>
    %c3_325 = arith.constant 3 : index
    %c0_326 = arith.constant 0 : index
    %c0_327 = arith.constant 0 : index
    %329 = vector.load %arg15[%c3_325, %c0_326, %c0_327] : memref<9x128x128xbf16, #tpu.memory_space<vmem>>, vector<1x128x128xbf16>
    %330 = vector.shape_cast %329 : vector<1x128x128xbf16> to vector<128x128xbf16>
    %cst_328 = arith.constant dense<0.000000e+00> : vector<256x128xf32>
    %331 = tpu.matmul %328, %330, %cst_328 {dimension_numbers = #tpu.dot_dimension_numbers<[1], [0], [0], [1], [0, 0, 1, 1], [], []>} : vector<256x128xbf16>, vector<128x128xbf16>, vector<256x128xf32> -> vector<256x128xf32>
    %332 = arith.addf %326, %331 : vector<256x128xf32>
    %c1_329 = arith.constant 1 : index
    %c1_330 = arith.constant 1 : index
    %c0_331 = arith.constant 0 : index
    %333 = vector.load %arg21[%c1_329, %c1_330, %c0_331] : memref<18x18x128xbf16, #tpu.memory_space<vmem>>, vector<16x16x128xbf16>
    %334 = vector.shape_cast %333 : vector<16x16x128xbf16> to vector<256x128xbf16>
    %c4_332 = arith.constant 4 : index
    %c0_333 = arith.constant 0 : index
    %c0_334 = arith.constant 0 : index
    %335 = vector.load %arg15[%c4_332, %c0_333, %c0_334] : memref<9x128x128xbf16, #tpu.memory_space<vmem>>, vector<1x128x128xbf16>
    %336 = vector.shape_cast %335 : vector<1x128x128xbf16> to vector<128x128xbf16>
    %cst_335 = arith.constant dense<0.000000e+00> : vector<256x128xf32>
    %337 = tpu.matmul %334, %336, %cst_335 {dimension_numbers = #tpu.dot_dimension_numbers<[1], [0], [0], [1], [0, 0, 1, 1], [], []>} : vector<256x128xbf16>, vector<128x128xbf16>, vector<256x128xf32> -> vector<256x128xf32>
    %338 = arith.addf %332, %337 : vector<256x128xf32>
    %c1_336 = arith.constant 1 : index
    %c2_337 = arith.constant 2 : index
    %c0_338 = arith.constant 0 : index
    %339 = vector.load %arg21[%c1_336, %c2_337, %c0_338] : memref<18x18x128xbf16, #tpu.memory_space<vmem>>, vector<16x16x128xbf16>
    %340 = vector.shape_cast %339 : vector<16x16x128xbf16> to vector<256x128xbf16>
    %c5_339 = arith.constant 5 : index
    %c0_340 = arith.constant 0 : index
    %c0_341 = arith.constant 0 : index
    %341 = vector.load %arg15[%c5_339, %c0_340, %c0_341] : memref<9x128x128xbf16, #tpu.memory_space<vmem>>, vector<1x128x128xbf16>
    %342 = vector.shape_cast %341 : vector<1x128x128xbf16> to vector<128x128xbf16>
    %cst_342 = arith.constant dense<0.000000e+00> : vector<256x128xf32>
    %343 = tpu.matmul %340, %342, %cst_342 {dimension_numbers = #tpu.dot_dimension_numbers<[1], [0], [0], [1], [0, 0, 1, 1], [], []>} : vector<256x128xbf16>, vector<128x128xbf16>, vector<256x128xf32> -> vector<256x128xf32>
    %344 = arith.addf %338, %343 : vector<256x128xf32>
    %c2_343 = arith.constant 2 : index
    %c0_344 = arith.constant 0 : index
    %c0_345 = arith.constant 0 : index
    %345 = vector.load %arg21[%c2_343, %c0_344, %c0_345] : memref<18x18x128xbf16, #tpu.memory_space<vmem>>, vector<16x16x128xbf16>
    %346 = vector.shape_cast %345 : vector<16x16x128xbf16> to vector<256x128xbf16>
    %c6_346 = arith.constant 6 : index
    %c0_347 = arith.constant 0 : index
    %c0_348 = arith.constant 0 : index
    %347 = vector.load %arg15[%c6_346, %c0_347, %c0_348] : memref<9x128x128xbf16, #tpu.memory_space<vmem>>, vector<1x128x128xbf16>
    %348 = vector.shape_cast %347 : vector<1x128x128xbf16> to vector<128x128xbf16>
    %cst_349 = arith.constant dense<0.000000e+00> : vector<256x128xf32>
    %349 = tpu.matmul %346, %348, %cst_349 {dimension_numbers = #tpu.dot_dimension_numbers<[1], [0], [0], [1], [0, 0, 1, 1], [], []>} : vector<256x128xbf16>, vector<128x128xbf16>, vector<256x128xf32> -> vector<256x128xf32>
    %350 = arith.addf %344, %349 : vector<256x128xf32>
    %c2_350 = arith.constant 2 : index
    %c1_351 = arith.constant 1 : index
    %c0_352 = arith.constant 0 : index
    %351 = vector.load %arg21[%c2_350, %c1_351, %c0_352] : memref<18x18x128xbf16, #tpu.memory_space<vmem>>, vector<16x16x128xbf16>
    %352 = vector.shape_cast %351 : vector<16x16x128xbf16> to vector<256x128xbf16>
    %c7_353 = arith.constant 7 : index
    %c0_354 = arith.constant 0 : index
    %c0_355 = arith.constant 0 : index
    %353 = vector.load %arg15[%c7_353, %c0_354, %c0_355] : memref<9x128x128xbf16, #tpu.memory_space<vmem>>, vector<1x128x128xbf16>
    %354 = vector.shape_cast %353 : vector<1x128x128xbf16> to vector<128x128xbf16>
    %cst_356 = arith.constant dense<0.000000e+00> : vector<256x128xf32>
    %355 = tpu.matmul %352, %354, %cst_356 {dimension_numbers = #tpu.dot_dimension_numbers<[1], [0], [0], [1], [0, 0, 1, 1], [], []>} : vector<256x128xbf16>, vector<128x128xbf16>, vector<256x128xf32> -> vector<256x128xf32>
    %356 = arith.addf %350, %355 : vector<256x128xf32>
    %c2_357 = arith.constant 2 : index
    %c2_358 = arith.constant 2 : index
    %c0_359 = arith.constant 0 : index
    %357 = vector.load %arg21[%c2_357, %c2_358, %c0_359] : memref<18x18x128xbf16, #tpu.memory_space<vmem>>, vector<16x16x128xbf16>
    %358 = vector.shape_cast %357 : vector<16x16x128xbf16> to vector<256x128xbf16>
    %c8_360 = arith.constant 8 : index
    %c0_361 = arith.constant 0 : index
    %c0_362 = arith.constant 0 : index
    %359 = vector.load %arg15[%c8_360, %c0_361, %c0_362] : memref<9x128x128xbf16, #tpu.memory_space<vmem>>, vector<1x128x128xbf16>
    %360 = vector.shape_cast %359 : vector<1x128x128xbf16> to vector<128x128xbf16>
    %cst_363 = arith.constant dense<0.000000e+00> : vector<256x128xf32>
    %361 = tpu.matmul %358, %360, %cst_363 {dimension_numbers = #tpu.dot_dimension_numbers<[1], [0], [0], [1], [0, 0, 1, 1], [], []>} : vector<256x128xbf16>, vector<128x128xbf16>, vector<256x128xf32> -> vector<256x128xf32>
    %362 = arith.addf %356, %361 : vector<256x128xf32>
    %c0_364 = arith.constant 0 : index
    %c0_365 = arith.constant 0 : index
    %363 = vector.load %arg16[%c0_364, %c0_365] : memref<2x128xf32, #tpu.memory_space<vmem>>, vector<2x128xf32>
    %364 = vector.extract_strided_slice %363 {offsets = [0, 0], sizes = [1, 128], strides = [1, 1]} : vector<2x128xf32> to vector<1x128xf32>
    %365 = vector.broadcast %364 : vector<1x128xf32> to vector<256x128xf32>
    %366 = arith.mulf %362, %365 : vector<256x128xf32>
    %367 = vector.extract_strided_slice %363 {offsets = [1, 0], sizes = [1, 128], strides = [1, 1]} : vector<2x128xf32> to vector<1x128xf32>
    %368 = vector.broadcast %367 : vector<1x128xf32> to vector<256x128xf32>
    %369 = arith.addf %366, %368 : vector<256x128xf32>
    %cst_366 = arith.constant 0.000000e+00 : f32
    %370 = vector.broadcast %cst_366 : f32 to vector<256x128xf32>
    %371 = arith.maximumf %369, %370 : vector<256x128xf32>
    %372 = vector.shape_cast %371 : vector<256x128xf32> to vector<16x16x128xf32>
    %c0_367 = arith.constant 0 : index
    %c0_368 = arith.constant 0 : index
    %c0_369 = arith.constant 0 : index
    %c0_370 = arith.constant 0 : index
    %373 = vector.load %arg17[%c0_367, %c0_368, %c0_369, %c0_370] : memref<1x16x16x128xf32, #tpu.memory_space<vmem>>, vector<1x16x16x128xf32>
    %374 = vector.shape_cast %373 : vector<1x16x16x128xf32> to vector<16x16x128xf32>
    %375 = vector.shape_cast %372 : vector<16x16x128xf32> to vector<1x16x16x128xf32>
    tpu.vector_store %arg17[%c0_367, %c0_368, %c0_369, %c0_370], %375 {strides = array<i32>} : memref<1x16x16x128xf32, #tpu.memory_space<vmem>>, vector<1x16x16x128xf32>,
    return
  }
  func.func @transform_0(%arg0: i32) -> (i32, i32, i32, i32) {
    %c0_i32 = arith.constant 0 : i32
    %c0_i32_0 = arith.constant 0 : i32
    %c0_i32_1 = arith.constant 0 : i32
    %c0_i32_2 = arith.constant 0 : i32
    return %arg0, %c0_i32, %c0_i32_0, %c0_i32_1 : i32, i32, i32, i32
  }
  func.func @transform_1(%arg0: i32) -> (i32, i32, i32, i32) {
    %c0_i32 = arith.constant 0 : i32
    %c0_i32_0 = arith.constant 0 : i32
    %c0_i32_1 = arith.constant 0 : i32
    %c0_i32_2 = arith.constant 0 : i32
    return %arg0, %c0_i32, %c0_i32_0, %c0_i32_1 : i32, i32, i32, i32
  }
  func.func @transform_2(%arg0: i32) -> (i32, i32) {
    %c0_i32 = arith.constant 0 : i32
    %c0_i32_0 = arith.constant 0 : i32
    %c0_i32_1 = arith.constant 0 : i32
    return %c0_i32, %c0_i32_0 : i32, i32
  }
  func.func @transform_3(%arg0: i32) -> (i32, i32) {
    %c0_i32 = arith.constant 0 : i32
    %c0_i32_0 = arith.constant 0 : i32
    %c0_i32_1 = arith.constant 0 : i32
    return %c0_i32, %c0_i32_0 : i32, i32
  }
  func.func @transform_4(%arg0: i32) -> (i32, i32, i32) {
    %c0_i32 = arith.constant 0 : i32
    %c0_i32_0 = arith.constant 0 : i32
    %c0_i32_1 = arith.constant 0 : i32
    %c0_i32_2 = arith.constant 0 : i32
    return %c0_i32, %c0_i32_0, %c0_i32_1 : i32, i32, i32
  }
  func.func @transform_5(%arg0: i32) -> (i32, i32) {
    %c0_i32 = arith.constant 0 : i32
    %c0_i32_0 = arith.constant 0 : i32
    %c0_i32_1 = arith.constant 0 : i32
    return %c0_i32, %c0_i32_0 : i32, i32
  }
  func.func @transform_6(%arg0: i32) -> (i32, i32) {
    %c0_i32 = arith.constant 0 : i32
    %c0_i32_0 = arith.constant 0 : i32
    %c0_i32_1 = arith.constant 0 : i32
    return %c0_i32, %c0_i32_0 : i32, i32
  }
  func.func @transform_7(%arg0: i32) -> (i32, i32) {
    %c0_i32 = arith.constant 0 : i32
    %c0_i32_0 = arith.constant 0 : i32
    %c0_i32_1 = arith.constant 0 : i32
    return %c0_i32, %c0_i32_0 : i32, i32
  }
  func.func @transform_8(%arg0: i32) -> (i32, i32, i32) {
    %c0_i32 = arith.constant 0 : i32
    %c0_i32_0 = arith.constant 0 : i32
    %c0_i32_1 = arith.constant 0 : i32
    %c0_i32_2 = arith.constant 0 : i32
    return %c0_i32, %c0_i32_0, %c0_i32_1 : i32, i32, i32
  }
  func.func @transform_9(%arg0: i32) -> (i32, i32) {
    %c0_i32 = arith.constant 0 : i32
    %c0_i32_0 = arith.constant 0 : i32
    %c0_i32_1 = arith.constant 0 : i32
    return %c0_i32, %c0_i32_0 : i32, i32
  }
  func.func @transform_10(%arg0: i32) -> (i32, i32, i32) {
    %c0_i32 = arith.constant 0 : i32
    %c0_i32_0 = arith.constant 0 : i32
    %c0_i32_1 = arith.constant 0 : i32
    %c0_i32_2 = arith.constant 0 : i32
    return %c0_i32, %c0_i32_0, %c0_i32_1 : i32, i32, i32
  }
  func.func @transform_11(%arg0: i32) -> (i32, i32) {
    %c0_i32 = arith.constant 0 : i32
    %c0_i32_0 = arith.constant 0 : i32
    %c0_i32_1 = arith.constant 0 : i32
    return %c0_i32, %c0_i32_0 : i32, i32
  }
  func.func @transform_12(%arg0: i32) -> (i32, i32) {
    %c0_i32 = arith.constant 0 : i32
    %c0_i32_0 = arith.constant 0 : i32
    %c0_i32_1 = arith.constant 0 : i32
    return %c0_i32, %c0_i32_0 : i32, i32
  }
  func.func @transform_13(%arg0: i32) -> (i32, i32) {
    %c0_i32 = arith.constant 0 : i32
    %c0_i32_0 = arith.constant 0 : i32
    %c0_i32_1 = arith.constant 0 : i32
    return %c0_i32, %c0_i32_0 : i32, i32
  }
  func.func @transform_14(%arg0: i32) -> (i32, i32, i32) {
    %c0_i32 = arith.constant 0 : i32
    %c0_i32_0 = arith.constant 0 : i32
    %c0_i32_1 = arith.constant 0 : i32
    %c0_i32_2 = arith.constant 0 : i32
    return %c0_i32, %c0_i32_0, %c0_i32_1 : i32, i32, i32
  }
  func.func @transform_15(%arg0: i32) -> (i32, i32) {
    %c0_i32 = arith.constant 0 : i32
    %c0_i32_0 = arith.constant 0 : i32
    %c0_i32_1 = arith.constant 0 : i32
    return %c0_i32, %c0_i32_0 : i32, i32
  }
  func.func @transform_16(%arg0: i32) -> (i32, i32, i32, i32) {
    %c0_i32 = arith.constant 0 : i32
    %c0_i32_0 = arith.constant 0 : i32
    %c0_i32_1 = arith.constant 0 : i32
    %c0_i32_2 = arith.constant 0 : i32
    return %arg0, %c0_i32, %c0_i32_0, %c0_i32_1 : i32, i32, i32, i32
  }
}

</mosaic_0001>

<llo_original>
// kernel: tpu_custom_call.1
$region0: #{tpu_custom_call.1}
  #allocation0 [shape = 'u32[]', space=smem, size = 0x4, offset = 0x4, fixed_abs, tag = 'smem constant byte address 0x4 - core index']
  #allocation1 [shape = 'u32[72,128]{1,0:T(1,128)}', space=vmem, size = 0x9000, scoped, tag = 'internal scratch']
  #allocation2 [shape = 'bf16[6,6,128]{2,1,0:T(8,128)(2,1)}', space=vmem, size = 0x3000, scoped, tag = 'scratch operand']
  #allocation3 [shape = 'bf16[10,10,128]{2,1,0:T(8,128)(2,1)}', space=vmem, size = 0xa000, scoped, tag = 'scratch operand']
  #allocation4 [shape = 'bf16[10,10,128]{2,1,0:T(8,128)(2,1)}', space=vmem, size = 0xa000, scoped, tag = 'scratch operand']
  #allocation5 [shape = 'bf16[18,18,128]{2,1,0:T(8,128)(2,1)}', space=vmem, size = 0x1b000, scoped, tag = 'scratch operand']
  %s0 = inlined_call_operand.hbm [shape: bf16[2,4,4,128], index: 0, kind: input, shape index: {}]
  %s1 = inlined_call_operand.hbm [shape: bf16[2,8,8,128], index: 1, kind: input, shape index: {}]
  %s2 = inlined_call_operand.hbm [shape: bf16[128,128], index: 2, kind: input, shape index: {}]
  %s3 = inlined_call_operand.vmem [shape: f32[2,128], index: 3, kind: input, shape index: {}]
  %s4 = inlined_call_operand.hbm [shape: bf16[9,128,128], index: 4, kind: input, shape index: {}]
  %s5 = inlined_call_operand.vmem [shape: f32[2,128], index: 5, kind: input, shape index: {}]
  %s6 = inlined_call_operand.hbm [shape: bf16[128,128], index: 6, kind: input, shape index: {}]
  %s7 = inlined_call_operand.vmem [shape: f32[2,128], index: 7, kind: input, shape index: {}]
  %s8 = inlined_call_operand.hbm [shape: bf16[9,128,128], index: 8, kind: input, shape index: {}]
  %s9 = inlined_call_operand.vmem [shape: f32[2,128], index: 9, kind: input, shape index: {}]
  %s10 = inlined_call_operand.hbm [shape: bf16[9,128,128], index: 10, kind: input, shape index: {}]
  %s11 = inlined_call_operand.vmem [shape: f32[2,128], index: 11, kind: input, shape index: {}]
  %s12 = inlined_call_operand.hbm [shape: bf16[128,128], index: 12, kind: input, shape index: {}]
  %s13 = inlined_call_operand.vmem [shape: f32[2,128], index: 13, kind: input, shape index: {}]
  %s14 = inlined_call_operand.hbm [shape: bf16[9,128,128], index: 14, kind: input, shape index: {}]
  %s15 = inlined_call_operand.vmem [shape: f32[2,128], index: 15, kind: input, shape index: {}]
  %s16 = inlined_call_operand.hbm [shape: f32[2,16,16,128], index: 16, kind: output, shape index: {}]
  %s17 = sld [smem:[#allocation0]]
  $region133: #{tpu_custom_call.1} parent=0
    _
  %s19 = ssub.s32 1, %s17
  %s20 = scalar_select 0, %s19, %s17
  $region1: #{tpu_custom_call.1} parent=0
    #allocation6 [shape = 'u8[8192]{0}', space=vmem, size = 0x2000, scoped, tag = 'input window, operand 0']
    #allocation7 [shape = 's32[2]{0}', space=sflag, size = 0x8, scoped, tag = 'scoped memory for tpu_custom_call.1']
    #allocation8 [shape = 's32[2]{0}', space=sflag, size = 0x8, scoped, tag = 'scoped memory for tpu_custom_call.1']
    #allocation9 [shape = 'u8[32768]{0}', space=vmem, size = 0x8000, scoped, tag = 'input window, operand 1']
    #allocation10 [shape = 's32[2]{0}', space=sflag, size = 0x8, scoped, tag = 'scoped memory for tpu_custom_call.1']
    #allocation11 [shape = 'u8[32768]{0}', space=vmem, size = 0x8000, scoped, tag = 'input window, operand 2, single buffered']
    #allocation12 [shape = 'u8[294912]{0}', space=vmem, size = 0x48000, scoped, tag = 'input window, operand 4, single buffered']
    #allocation13 [shape = 's32[1]{0}', space=sflag, size = 0x4, scoped, tag = 'scoped memory for tpu_custom_call.1']
    #allocation14 [shape = 'u8[32768]{0}', space=vmem, size = 0x8000, scoped, tag = 'input window, operand 6, single buffered']
    #allocation15 [shape = 'u8[294912]{0}', space=vmem, size = 0x48000, scoped, tag = 'input window, operand 8, single buffered']
    #allocation16 [shape = 's32[1]{0}', space=sflag, size = 0x4, scoped, tag = 'scoped memory for tpu_custom_call.1']
    #allocation17 [shape = 'u8[294912]{0}', space=vmem, size = 0x48000, scoped, tag = 'input window, operand 10, single buffered']
    #allocation18 [shape = 'u8[32768]{0}', space=vmem, size = 0x8000, scoped, tag = 'input window, operand 12, single buffered']
    #allocation19 [shape = 's32[1]{0}', space=sflag, size = 0x4, scoped, tag = 'scoped memory for tpu_custom_call.1']
    #allocation20 [shape = 'u8[294912]{0}', space=vmem, size = 0x48000, scoped, tag = 'input window, operand 14, single buffered']
    #allocation21 [shape = 'u8[262144]{0}', space=vmem, size = 0x40000, scoped, tag = 'output window, operand 0']
    %21 = vsyncpa [#allocation7], 0
    %s22 = scalar_lea.sflag [#allocation7], 1
    %23 = vsyncpa %s22, 0
    %24 = vsyncpa [#allocation10], 0
    %s25 = scalar_lea.sflag [#allocation10], 1
    %26 = vsyncpa %s25, 0
    %27 = vsyncpa [#allocation13], 0
    %28 = vsyncpa [#allocation16], 0
    %29 = vsyncpa [#allocation19], 0
    %30 = vsyncpa [#allocation8], 0
    %s31 = scalar_lea.sflag [#allocation8], 1
    %32 = vsyncpa %s31, 0
    loop: start=0, step=1, limit=4
    $region2: #{tpu_custom_call.1} parent=1 // loop_pre_header
      _
    $region3: #{tpu_custom_call.1} parent=1 // loop_header
      %s34 = sphi 0, %s38
      %p35 = scmp.ge.s32.totalorder %s34, 4
      %s44 = sphi 0, %s46
      %s47 = sphi 0, %s44
      %s48 = sphi 0, %s47
      %s64 = sphi 0, %s48
      %s70 = sphi 0, %s72
      %s73 = sphi 0, %s70
      %s74 = sphi 0, %s73
      %s90 = sphi 0, %s74
      %s94 = sphi 0, %s94
      %s96 = sphi 0, %s94
      %s97 = sphi 0, %s96
      %s111 = sphi 0, %s97
      %s115 = sphi 0, %s115
      %s117 = sphi 0, %s115
      %s118 = sphi 0, %s117
      %s132 = sphi 0, %s118
      %s136 = sphi 0, %s136
      %s138 = sphi 0, %s136
      %s139 = sphi 0, %s138
      %s153 = sphi 0, %s139
      %s157 = sphi 0, %s157
      %s159 = sphi 0, %s157
      %s160 = sphi 0, %s159
      %s174 = sphi 0, %s160
      %s178 = sphi 0, %s178
      %s180 = sphi 0, %s178
      %s181 = sphi 0, %s180
      %s195 = sphi 0, %s181
      %s199 = sphi 0, %s199
      %s201 = sphi 0, %s199
      %s202 = sphi 0, %s201
      %s216 = sphi 0, %s202
      %s220 = sphi 0, %s220
      %s222 = sphi 0, %s220
      %s223 = sphi 0, %s222
      %s237 = sphi 0, %s223
      %s241 = sphi 0, %s241
      %s243 = sphi 0, %s241
      %s244 = sphi 0, %s243
      %s258 = sphi 0, %s244
      %s262 = sphi 0, %s262
      %s264 = sphi 0, %s262
      %s265 = sphi 0, %s264
      %s279 = sphi 0, %s265
      %s283 = sphi 0, %s283
      %s285 = sphi 0, %s283
      %s286 = sphi 0, %s285
      %s300 = sphi 0, %s286
      %s304 = sphi 0, %s304
      %s306 = sphi 0, %s304
      %s307 = sphi 0, %s306
      %s321 = sphi 0, %s307
      %s325 = sphi 0, %s325
      %s327 = sphi 0, %s325
      %s328 = sphi 0, %s327
      %s342 = sphi 0, %s328
      %s346 = sphi 0, %s346
      %s348 = sphi 0, %s346
      %s349 = sphi 0, %s348
      %s363 = sphi 0, %s349
      %s367 = sphi 0, %s367
      %s369 = sphi 0, %s367
      %s370 = sphi 0, %s369
      %s384 = sphi 0, %s370
      %s390 = sphi 0, %s392
      %s393 = sphi 0, %s390
      %s394 = sphi 0, %s393
      %s410 = sphi 0, %s394
    $region4: #{tpu_custom_call.1} parent=1 // loop_header_branch
      %37 = sbr.rel (%p35) target = $region8
    $region5: #{tpu_custom_call.1} parent=1 // loop_body
      %s39 = ssub.s32 %s34, 1
      %s40 = ssub.s32 %s34, 2
      %s41 = sadd.s32 %s34, 1
      %s42 = ssub.s32 %s34, %s41
      %p43 = scmp.eq.s32.totalorder %s42, 0
      %s45 = sadd.s32 %s44, 1
      %s46 = scalar_select %p43, %s44, %s45
      %p49 = pneg %p43
      %p50 = scmp.eq.s32.totalorder %s34, 1
      %p51 = por %p49, %p50
      %p52 = scmp.ne.s32.totalorder %s44, %s47
      %p53 = scmp.eq.s32.totalorder %s34, 0
      %p54 = por %p52, %p53
      %p55 = scmp.ne.s32.totalorder %s44, %s47
      %p56 = scmp.eq.s32.totalorder %s39, 1
      %p57 = por %p55, %p56
      %p58 = scmp.ne.s32.totalorder %s47, %s48
      %p59 = scmp.eq.s32.totalorder %s39, 0
      %p60 = por %p58, %p59
      %p61 = scmp.ne.s32.totalorder %s47, %s48
      %p62 = scmp.eq.s32.totalorder %s40, 1
      %p63 = por %p61, %p62
      %p65 = scmp.ne.s32.totalorder %s48, %s64
      %p66 = scmp.eq.s32.totalorder %s40, 0
      %p67 = por %p65, %p66
      %s68 = ssub.s32 %s34, %s41
      %p69 = scmp.eq.s32.totalorder %s68, 0
      %s71 = sadd.s32 %s70, 1
      %s72 = scalar_select %p69, %s70, %s71
      %p75 = pneg %p69
      %p76 = scmp.eq.s32.totalorder %s34, 1
      %p77 = por %p75, %p76
      %p78 = scmp.ne.s32.totalorder %s70, %s73
      %p79 = scmp.eq.s32.totalorder %s34, 0
      %p80 = por %p78, %p79
      %p81 = scmp.ne.s32.totalorder %s70, %s73
      %p82 = scmp.eq.s32.totalorder %s39, 1
      %p83 = por %p81, %p82
      %p84 = scmp.ne.s32.totalorder %s73, %s74
      %p85 = scmp.eq.s32.totalorder %s39, 0
      %p86 = por %p84, %p85
      %p87 = scmp.ne.s32.totalorder %s73, %s74
      %p88 = scmp.eq.s32.totalorder %s40, 1
      %p89 = por %p87, %p88
      %p91 = scmp.ne.s32.totalorder %s74, %s90
      %p92 = scmp.eq.s32.totalorder %s40, 0
      %p93 = por %p91, %p92
      %s95 = sadd.s32 %s94, 1
      %p98 = scmp.eq.s32.totalorder %s34, 1
      %p99 = scmp.ne.s32.totalorder %s94, %s96
      %p100 = scmp.eq.s32.totalorder %s34, 0
      %p101 = por %p99, %p100
      %p102 = scmp.ne.s32.totalorder %s94, %s96
      %p103 = scmp.eq.s32.totalorder %s39, 1
      %p104 = por %p102, %p103
      %p105 = scmp.ne.s32.totalorder %s96, %s97
      %p106 = scmp.eq.s32.totalorder %s39, 0
      %p107 = por %p105, %p106
      %p108 = scmp.ne.s32.totalorder %s96, %s97
      %p109 = scmp.eq.s32.totalorder %s40, 1
      %p110 = por %p108, %p109
      %p112 = scmp.ne.s32.totalorder %s97, %s111
      %p113 = scmp.eq.s32.totalorder %s40, 0
      %p114 = por %p112, %p113
      %s116 = sadd.s32 %s115, 1
      %p119 = scmp.eq.s32.totalorder %s34, 1
      %p120 = scmp.ne.s32.totalorder %s115, %s117
      %p121 = scmp.eq.s32.totalorder %s34, 0
      %p122 = por %p120, %p121
      %p123 = scmp.ne.s32.totalorder %s115, %s117
      %p124 = scmp.eq.s32.totalorder %s39, 1
      %p125 = por %p123, %p124
      %p126 = scmp.ne.s32.totalorder %s117, %s118
      %p127 = scmp.eq.s32.totalorder %s39, 0
      %p128 = por %p126, %p127
      %p129 = scmp.ne.s32.totalorder %s117, %s118
      %p130 = scmp.eq.s32.totalorder %s40, 1
      %p131 = por %p129, %p130
      %p133 = scmp.ne.s32.totalorder %s118, %s132
      %p134 = scmp.eq.s32.totalorder %s40, 0
      %p135 = por %p133, %p134
      %s137 = sadd.s32 %s136, 1
      %p140 = scmp.eq.s32.totalorder %s34, 1
      %p141 = scmp.ne.s32.totalorder %s136, %s138
      %p142 = scmp.eq.s32.totalorder %s34, 0
      %p143 = por %p141, %p142
      %p144 = scmp.ne.s32.totalorder %s136, %s138
      %p145 = scmp.eq.s32.totalorder %s39, 1
      %p146 = por %p144, %p145
      %p147 = scmp.ne.s32.totalorder %s138, %s139
      %p148 = scmp.eq.s32.totalorder %s39, 0
      %p149 = por %p147, %p148
      %p150 = scmp.ne.s32.totalorder %s138, %s139
      %p151 = scmp.eq.s32.totalorder %s40, 1
      %p152 = por %p150, %p151
      %p154 = scmp.ne.s32.totalorder %s139, %s153
      %p155 = scmp.eq.s32.totalorder %s40, 0
      %p156 = por %p154, %p155
      %s158 = sadd.s32 %s157, 1
      %p161 = scmp.eq.s32.totalorder %s34, 1
      %p162 = scmp.ne.s32.totalorder %s157, %s159
      %p163 = scmp.eq.s32.totalorder %s34, 0
      %p164 = por %p162, %p163
      %p165 = scmp.ne.s32.totalorder %s157, %s159
      %p166 = scmp.eq.s32.totalorder %s39, 1
      %p167 = por %p165, %p166
      %p168 = scmp.ne.s32.totalorder %s159, %s160
      %p169 = scmp.eq.s32.totalorder %s39, 0
      %p170 = por %p168, %p169
      %p171 = scmp.ne.s32.totalorder %s159, %s160
      %p172 = scmp.eq.s32.totalorder %s40, 1
      %p173 = por %p171, %p172
      %p175 = scmp.ne.s32.totalorder %s160, %s174
      %p176 = scmp.eq.s32.totalorder %s40, 0
      %p177 = por %p175, %p176
      %s179 = sadd.s32 %s178, 1
      %p182 = scmp.eq.s32.totalorder %s34, 1
      %p183 = scmp.ne.s32.totalorder %s178, %s180
      %p184 = scmp.eq.s32.totalorder %s34, 0
      %p185 = por %p183, %p184
      %p186 = scmp.ne.s32.totalorder %s178, %s180
      %p187 = scmp.eq.s32.totalorder %s39, 1
      %p188 = por %p186, %p187
      %p189 = scmp.ne.s32.totalorder %s180, %s181
      %p190 = scmp.eq.s32.totalorder %s39, 0
      %p191 = por %p189, %p190
      %p192 = scmp.ne.s32.totalorder %s180, %s181
      %p193 = scmp.eq.s32.totalorder %s40, 1
      %p194 = por %p192, %p193
      %p196 = scmp.ne.s32.totalorder %s181, %s195
      %p197 = scmp.eq.s32.totalorder %s40, 0
      %p198 = por %p196, %p197
      %s200 = sadd.s32 %s199, 1
      %p203 = scmp.eq.s32.totalorder %s34, 1
      %p204 = scmp.ne.s32.totalorder %s199, %s201
      %p205 = scmp.eq.s32.totalorder %s34, 0
      %p206 = por %p204, %p205
      %p207 = scmp.ne.s32.totalorder %s199, %s201
      %p208 = scmp.eq.s32.totalorder %s39, 1
      %p209 = por %p207, %p208
      %p210 = scmp.ne.s32.totalorder %s201, %s202
      %p211 = scmp.eq.s32.totalorder %s39, 0
      %p212 = por %p210, %p211
      %p213 = scmp.ne.s32.totalorder %s201, %s202
      %p214 = scmp.eq.s32.totalorder %s40, 1
      %p215 = por %p213, %p214
      %p217 = scmp.ne.s32.totalorder %s202, %s216
      %p218 = scmp.eq.s32.totalorder %s40, 0
      %p219 = por %p217, %p218
      %s221 = sadd.s32 %s220, 1
      %p224 = scmp.eq.s32.totalorder %s34, 1
      %p225 = scmp.ne.s32.totalorder %s220, %s222
      %p226 = scmp.eq.s32.totalorder %s34, 0
      %p227 = por %p225, %p226
      %p228 = scmp.ne.s32.totalorder %s220, %s222
      %p229 = scmp.eq.s32.totalorder %s39, 1
      %p230 = por %p228, %p229
      %p231 = scmp.ne.s32.totalorder %s222, %s223
      %p232 = scmp.eq.s32.totalorder %s39, 0
      %p233 = por %p231, %p232
      %p234 = scmp.ne.s32.totalorder %s222, %s223
      %p235 = scmp.eq.s32.totalorder %s40, 1
      %p236 = por %p234, %p235
      %p238 = scmp.ne.s32.totalorder %s223, %s237
      %p239 = scmp.eq.s32.totalorder %s40, 0
      %p240 = por %p238, %p239
      %s242 = sadd.s32 %s241, 1
      %p245 = scmp.eq.s32.totalorder %s34, 1
      %p246 = scmp.ne.s32.totalorder %s241, %s243
      %p247 = scmp.eq.s32.totalorder %s34, 0
      %p248 = por %p246, %p247
      %p249 = scmp.ne.s32.totalorder %s241, %s243
      %p250 = scmp.eq.s32.totalorder %s39, 1
      %p251 = por %p249, %p250
      %p252 = scmp.ne.s32.totalorder %s243, %s244
      %p253 = scmp.eq.s32.totalorder %s39, 0
      %p254 = por %p252, %p253
      %p255 = scmp.ne.s32.totalorder %s243, %s244
      %p256 = scmp.eq.s32.totalorder %s40, 1
      %p257 = por %p255, %p256
      %p259 = scmp.ne.s32.totalorder %s244, %s258
      %p260 = scmp.eq.s32.totalorder %s40, 0
      %p261 = por %p259, %p260
      %s263 = sadd.s32 %s262, 1
      %p266 = scmp.eq.s32.totalorder %s34, 1
      %p267 = scmp.ne.s32.totalorder %s262, %s264
      %p268 = scmp.eq.s32.totalorder %s34, 0
      %p269 = por %p267, %p268
      %p270 = scmp.ne.s32.totalorder %s262, %s264
      %p271 = scmp.eq.s32.totalorder %s39, 1
      %p272 = por %p270, %p271
      %p273 = scmp.ne.s32.totalorder %s264, %s265
      %p274 = scmp.eq.s32.totalorder %s39, 0
      %p275 = por %p273, %p274
      %p276 = scmp.ne.s32.totalorder %s264, %s265
      %p277 = scmp.eq.s32.totalorder %s40, 1
      %p278 = por %p276, %p277
      %p280 = scmp.ne.s32.totalorder %s265, %s279
      %p281 = scmp.eq.s32.totalorder %s40, 0
      %p282 = por %p280, %p281
      %s284 = sadd.s32 %s283, 1
      %p287 = scmp.eq.s32.totalorder %s34, 1
      %p288 = scmp.ne.s32.totalorder %s283, %s285
      %p289 = scmp.eq.s32.totalorder %s34, 0
      %p290 = por %p288, %p289
      %p291 = scmp.ne.s32.totalorder %s283, %s285
      %p292 = scmp.eq.s32.totalorder %s39, 1
      %p293 = por %p291, %p292
      %p294 = scmp.ne.s32.totalorder %s285, %s286
      %p295 = scmp.eq.s32.totalorder %s39, 0
      %p296 = por %p294, %p295
      %p297 = scmp.ne.s32.totalorder %s285, %s286
      %p298 = scmp.eq.s32.totalorder %s40, 1
      %p299 = por %p297, %p298
      %p301 = scmp.ne.s32.totalorder %s286, %s300
      %p302 = scmp.eq.s32.totalorder %s40, 0
      %p303 = por %p301, %p302
      %s305 = sadd.s32 %s304, 1
      %p308 = scmp.eq.s32.totalorder %s34, 1
      %p309 = scmp.ne.s32.totalorder %s304, %s306
      %p310 = scmp.eq.s32.totalorder %s34, 0
      %p311 = por %p309, %p310
      %p312 = scmp.ne.s32.totalorder %s304, %s306
      %p313 = scmp.eq.s32.totalorder %s39, 1
      %p314 = por %p312, %p313
      %p315 = scmp.ne.s32.totalorder %s306, %s307
      %p316 = scmp.eq.s32.totalorder %s39, 0
      %p317 = por %p315, %p316
      %p318 = scmp.ne.s32.totalorder %s306, %s307
      %p319 = scmp.eq.s32.totalorder %s40, 1
      %p320 = por %p318, %p319
      %p322 = scmp.ne.s32.totalorder %s307, %s321
      %p323 = scmp.eq.s32.totalorder %s40, 0
      %p324 = por %p322, %p323
      %s326 = sadd.s32 %s325, 1
      %p329 = scmp.eq.s32.totalorder %s34, 1
      %p330 = scmp.ne.s32.totalorder %s325, %s327
      %p331 = scmp.eq.s32.totalorder %s34, 0
      %p332 = por %p330, %p331
      %p333 = scmp.ne.s32.totalorder %s325, %s327
      %p334 = scmp.eq.s32.totalorder %s39, 1
      %p335 = por %p333, %p334
      %p336 = scmp.ne.s32.totalorder %s327, %s328
      %p337 = scmp.eq.s32.totalorder %s39, 0
      %p338 = por %p336, %p337
      %p339 = scmp.ne.s32.totalorder %s327, %s328
      %p340 = scmp.eq.s32.totalorder %s40, 1
      %p341 = por %p339, %p340
      %p343 = scmp.ne.s32.totalorder %s328, %s342
      %p344 = scmp.eq.s32.totalorder %s40, 0
      %p345 = por %p343, %p344
      %s347 = sadd.s32 %s346, 1
      %p350 = scmp.eq.s32.totalorder %s34, 1
      %p351 = scmp.ne.s32.totalorder %s346, %s348
      %p352 = scmp.eq.s32.totalorder %s34, 0
      %p353 = por %p351, %p352
      %p354 = scmp.ne.s32.totalorder %s346, %s348
      %p355 = scmp.eq.s32.totalorder %s39, 1
      %p356 = por %p354, %p355
      %p357 = scmp.ne.s32.totalorder %s348, %s349
      %p358 = scmp.eq.s32.totalorder %s39, 0
      %p359 = por %p357, %p358
      %p360 = scmp.ne.s32.totalorder %s348, %s349
      %p361 = scmp.eq.s32.totalorder %s40, 1
      %p362 = por %p360, %p361
      %p364 = scmp.ne.s32.totalorder %s349, %s363
      %p365 = scmp.eq.s32.totalorder %s40, 0
      %p366 = por %p364, %p365
      %s368 = sadd.s32 %s367, 1
      %p371 = scmp.eq.s32.totalorder %s34, 1
      %p372 = scmp.ne.s32.totalorder %s367, %s369
      %p373 = scmp.eq.s32.totalorder %s34, 0
      %p374 = por %p372, %p373
      %p375 = scmp.ne.s32.totalorder %s367, %s369
      %p376 = scmp.eq.s32.totalorder %s39, 1
      %p377 = por %p375, %p376
      %p378 = scmp.ne.s32.totalorder %s369, %s370
      %p379 = scmp.eq.s32.totalorder %s39, 0
      %p380 = por %p378, %p379
      %p381 = scmp.ne.s32.totalorder %s369, %s370
      %p382 = scmp.eq.s32.totalorder %s40, 1
      %p383 = por %p381, %p382
      %p385 = scmp.ne.s32.totalorder %s370, %s384
      %p386 = scmp.eq.s32.totalorder %s40, 0
      %p387 = por %p385, %p386
      %s388 = ssub.s32 %s34, %s41
      %p389 = scmp.eq.s32.totalorder %s388, 0
      %s391 = sadd.s32 %s390, 1
      %s392 = scalar_select %p389, %s390, %s391
      %p395 = pneg %p389
      %p396 = scmp.eq.s32.totalorder %s34, 1
      %p397 = por %p395, %p396
      %p398 = scmp.ne.s32.totalorder %s390, %s393
      %p399 = scmp.eq.s32.totalorder %s34, 0
      %p400 = por %p398, %p399
      %p401 = scmp.ne.s32.totalorder %s390, %s393
      %p402 = scmp.eq.s32.totalorder %s39, 1
      %p403 = por %p401, %p402
      %p404 = scmp.ne.s32.totalorder %s393, %s394
      %p405 = scmp.eq.s32.totalorder %s39, 0
      %p406 = por %p404, %p405
      %p407 = scmp.ne.s32.totalorder %s393, %s394
      %p408 = scmp.eq.s32.totalorder %s40, 1
      %p409 = por %p407, %p408
      %p411 = scmp.ne.s32.totalorder %s394, %s410
      %p412 = scmp.eq.s32.totalorder %s40, 0
      %p413 = por %p411, %p412
      %p414 = scmp.le.s32.totalorder 1, %s34
      %p415 = scmp.lt.s32.totalorder %s34, 3
      %p416 = pnand %p414, %p415
      %p417 = pneg %p416
      // Predicated region
      $region9: #{tpu_custom_call.1} parent=5 // pred_check
        _
      $region10: #{tpu_custom_call.1} parent=5 // pred_check_branch
        %419 = sbr.rel (%p416) target = $region12
      $region11: #{tpu_custom_call.1} parent=5 // pred_region
        %s420 = ssub.s32 %s34, 1
        // Predicated region
        $region13: #{tpu_custom_call.1} parent=11 // pred_check
          %p421 = pneg %p107
        $region14: #{tpu_custom_call.1} parent=11 // pred_check_branch
          %423 = sbr.rel (%p421) target = $region16
        $region15: #{tpu_custom_call.1} parent=11 // pred_region
          %425 = vsyncadd [#allocation10], 0
          %s426 = sshll.u32 %s2, 4
          %s427 = int_to_ptr.hbm [resolvable:$true] %s426
          %s428 = sshll.u32 [#allocation11], 4
          %s429 = int_to_ptr.vmem [resolvable:$true] %s428
          %434 = dma.hbm_to_vmem [thread:$0]  %s427, 1024, %s429, [#allocation10], 64, 64, 4
        $region16: #{tpu_custom_call.1} parent=11 // pred_fallthru
          _
        // Predicated region
        $region17: #{tpu_custom_call.1} parent=11 // pred_check
          %p435 = pneg %p128
        $region18: #{tpu_custom_call.1} parent=11 // pred_check_branch
          %437 = sbr.rel (%p435) target = $region20
        $region19: #{tpu_custom_call.1} parent=11 // pred_region
          _
        $region20: #{tpu_custom_call.1} parent=11 // pred_fallthru
          _
        // Predicated region
        $region21: #{tpu_custom_call.1} parent=11 // pred_check
          %p438 = pneg %p149
        $region22: #{tpu_custom_call.1} parent=11 // pred_check_branch
          %440 = sbr.rel (%p438) target = $region24
        $region23: #{tpu_custom_call.1} parent=11 // pred_region
          %442 = vsyncadd [#allocation13], 0
          %s443 = sshll.u32 %s4, 4
          %s444 = int_to_ptr.hbm [resolvable:$true] %s443
          %s445 = sshll.u32 [#allocation12], 4
          %s446 = int_to_ptr.vmem [resolvable:$true] %s445
          %451 = dma.hbm_to_vmem [thread:$0]  %s444, 9216, %s446, [#allocation13], 64, 64, 4
        $region24: #{tpu_custom_call.1} parent=11 // pred_fallthru
          _
        // Predicated region
        $region25: #{tpu_custom_call.1} parent=11 // pred_check
          %p452 = pneg %p170
        $region26: #{tpu_custom_call.1} parent=11 // pred_check_branch
          %454 = sbr.rel (%p452) target = $region28
        $region27: #{tpu_custom_call.1} parent=11 // pred_region
          _
        $region28: #{tpu_custom_call.1} parent=11 // pred_fallthru
          _
        // Predicated region
        $region29: #{tpu_custom_call.1} parent=11 // pred_check
          %p455 = pneg %p191
        $region30: #{tpu_custom_call.1} parent=11 // pred_check_branch
          %457 = sbr.rel (%p455) target = $region32
        $region31: #{tpu_custom_call.1} parent=11 // pred_region
          %459 = vsyncadd [#allocation13], 0
          %s460 = sshll.u32 %s6, 4
          %s461 = int_to_ptr.hbm [resolvable:$true] %s460
          %s462 = sshll.u32 [#allocation14], 4
          %s463 = int_to_ptr.vmem [resolvable:$true] %s462
          %468 = dma.hbm_to_vmem [thread:$0]  %s461, 1024, %s463, [#allocation13], 64, 64, 4
        $region32: #{tpu_custom_call.1} parent=11 // pred_fallthru
          _
        // Predicated region
        $region33: #{tpu_custom_call.1} parent=11 // pred_check
          %p469 = pneg %p212
        $region34: #{tpu_custom_call.1} parent=11 // pred_check_branch
          %471 = sbr.rel (%p469) target = $region36
        $region35: #{tpu_custom_call.1} parent=11 // pred_region
          _
        $region36: #{tpu_custom_call.1} parent=11 // pred_fallthru
          _
        // Predicated region
        $region37: #{tpu_custom_call.1} parent=11 // pred_check
          %p472 = pneg %p233
        $region38: #{tpu_custom_call.1} parent=11 // pred_check_branch
          %474 = sbr.rel (%p472) target = $region40
        $region39: #{tpu_custom_call.1} parent=11 // pred_region
          %476 = vsyncadd [#allocation16], 0
          %s477 = sshll.u32 %s8, 4
          %s478 = int_to_ptr.hbm [resolvable:$true] %s477
          %s479 = sshll.u32 [#allocation15], 4
          %s480 = int_to_ptr.vmem [resolvable:$true] %s479
          %485 = dma.hbm_to_vmem [thread:$0]  %s478, 9216, %s480, [#allocation16], 64, 64, 4
        $region40: #{tpu_custom_call.1} parent=11 // pred_fallthru
          _
        // Predicated region
        $region41: #{tpu_custom_call.1} parent=11 // pred_check
          %p486 = pneg %p254
        $region42: #{tpu_custom_call.1} parent=11 // pred_check_branch
          %488 = sbr.rel (%p486) target = $region44
        $region43: #{tpu_custom_call.1} parent=11 // pred_region
          _
        $region44: #{tpu_custom_call.1} parent=11 // pred_fallthru
          _
        // Predicated region
        $region45: #{tpu_custom_call.1} parent=11 // pred_check
          %p489 = pneg %p275
        $region46: #{tpu_custom_call.1} parent=11 // pred_check_branch
          %491 = sbr.rel (%p489) target = $region48
        $region47: #{tpu_custom_call.1} parent=11 // pred_region
          %493 = vsyncadd [#allocation16], 0
          %s494 = sshll.u32 %s10, 4
          %s495 = int_to_ptr.hbm [resolvable:$true] %s494
          %s496 = sshll.u32 [#allocation17], 4
          %s497 = int_to_ptr.vmem [resolvable:$true] %s496
          %502 = dma.hbm_to_vmem [thread:$0]  %s495, 9216, %s497, [#allocation16], 64, 64, 4
        $region48: #{tpu_custom_call.1} parent=11 // pred_fallthru
          _
        // Predicated region
        $region49: #{tpu_custom_call.1} parent=11 // pred_check
          %p503 = pneg %p296
        $region50: #{tpu_custom_call.1} parent=11 // pred_check_branch
          %505 = sbr.rel (%p503) target = $region52
        $region51: #{tpu_custom_call.1} parent=11 // pred_region
          _
        $region52: #{tpu_custom_call.1} parent=11 // pred_fallthru
          _
        // Predicated region
        $region53: #{tpu_custom_call.1} parent=11 // pred_check
          %p506 = pneg %p317
        $region54: #{tpu_custom_call.1} parent=11 // pred_check_branch
          %508 = sbr.rel (%p506) target = $region56
        $region55: #{tpu_custom_call.1} parent=11 // pred_region
          %510 = vsyncadd [#allocation19], 0
          %s511 = sshll.u32 %s12, 4
          %s512 = int_to_ptr.hbm [resolvable:$true] %s511
          %s513 = sshll.u32 [#allocation18], 4
          %s514 = int_to_ptr.vmem [resolvable:$true] %s513
          %519 = dma.hbm_to_vmem [thread:$0]  %s512, 1024, %s514, [#allocation19], 64, 64, 4
        $region56: #{tpu_custom_call.1} parent=11 // pred_fallthru
          _
        // Predicated region
        $region57: #{tpu_custom_call.1} parent=11 // pred_check
          %p520 = pneg %p338
        $region58: #{tpu_custom_call.1} parent=11 // pred_check_branch
          %522 = sbr.rel (%p520) target = $region60
        $region59: #{tpu_custom_call.1} parent=11 // pred_region
          _
        $region60: #{tpu_custom_call.1} parent=11 // pred_fallthru
          _
        // Predicated region
        $region61: #{tpu_custom_call.1} parent=11 // pred_check
          %p523 = pneg %p359
        $region62: #{tpu_custom_call.1} parent=11 // pred_check_branch
          %525 = sbr.rel (%p523) target = $region64
        $region63: #{tpu_custom_call.1} parent=11 // pred_region
          %527 = vsyncadd [#allocation19], 0
          %s528 = sshll.u32 %s14, 4
          %s529 = int_to_ptr.hbm [resolvable:$true] %s528
          %s530 = sshll.u32 [#allocation20], 4
          %s531 = int_to_ptr.vmem [resolvable:$true] %s530
          %536 = dma.hbm_to_vmem [thread:$0]  %s529, 9216, %s531, [#allocation19], 64, 64, 4
        $region64: #{tpu_custom_call.1} parent=11 // pred_fallthru
          _
        // Predicated region
        $region65: #{tpu_custom_call.1} parent=11 // pred_check
          %p537 = pneg %p380
        $region66: #{tpu_custom_call.1} parent=11 // pred_check_branch
          %539 = sbr.rel (%p537) target = $region68
        $region67: #{tpu_custom_call.1} parent=11 // pred_region
          _
        $region68: #{tpu_custom_call.1} parent=11 // pred_fallthru
          _
      $region12: #{tpu_custom_call.1} parent=5 // pred_fallthru
        _
      %p540 = scmp.lt.s32.totalorder %s34, 2
      // Predicated region
      $region69: #{tpu_custom_call.1} parent=5 // pred_check
        %p541 = pneg %p540
      $region70: #{tpu_custom_call.1} parent=5 // pred_check_branch
        %543 = sbr.rel (%p541) target = $region72
      $region71: #{tpu_custom_call.1} parent=5 // pred_region
        // Predicated region
        $region73: #{tpu_custom_call.1} parent=71 // pred_check
          %p544 = pneg %p54
        $region74: #{tpu_custom_call.1} parent=71 // pred_check_branch
          %546 = sbr.rel (%p544) target = $region76
        $region75: #{tpu_custom_call.1} parent=71 // pred_region
          %s547 = sand.u32 %s44, 1
          %s548 = scalar_lea.sflag [#allocation7], %s547
          %s549 = sand.u32 %s44, 1
          %s550 = smul.addr %s549, 8
          %s551 = scalar_lea.vmem [#allocation6], %s550
          %553 = vsyncadd %s548, 0
          %s554 = smul.addr %s34, 4
          %s555 = smul.addr %s554, 2
          %s556 = scalar_lea.hbm %s0, %s555
          %s557 = sshll.u32 %s556, 4
          %s558 = int_to_ptr.hbm [resolvable:$true] %s557
          %s559 = sshll.u32 %s551, 4
          %s560 = int_to_ptr.vmem [resolvable:$true] %s559
          %565 = dma.hbm_to_vmem [thread:$0]  %s558, 128, %s560, %s548, 32, 32, 2
        $region76: #{tpu_custom_call.1} parent=71 // pred_fallthru
          _
        // Predicated region
        $region77: #{tpu_custom_call.1} parent=71 // pred_check
          %p566 = pneg %p80
        $region78: #{tpu_custom_call.1} parent=71 // pred_check_branch
          %568 = sbr.rel (%p566) target = $region80
        $region79: #{tpu_custom_call.1} parent=71 // pred_region
          %s569 = sand.u32 %s34, 1
          %s570 = scalar_lea.sflag [#allocation10], %s569
          %s571 = sand.u32 %s70, 1
          %s572 = smul.addr %s571, 32
          %s573 = scalar_lea.vmem [#allocation9], %s572
          %575 = vsyncadd %s570, 0
          %s576 = smul.addr %s34, 8
          %s577 = smul.addr %s576, 4
          %s578 = scalar_lea.hbm %s1, %s577
          %s579 = sshll.u32 %s578, 4
          %s580 = int_to_ptr.hbm [resolvable:$true] %s579
          %s581 = sshll.u32 %s573, 4
          %s582 = int_to_ptr.vmem [resolvable:$true] %s581
          %587 = dma.hbm_to_vmem [thread:$0]  %s580, 512, %s582, %s570, 64, 64, 4
        $region80: #{tpu_custom_call.1} parent=71 // pred_fallthru
          _
      $region72: #{tpu_custom_call.1} parent=5 // pred_fallthru
        _
      %p588 = scmp.le.s32.totalorder 1, %s34
      %p589 = scmp.lt.s32.totalorder %s34, 3
      %p590 = pnand %p588, %p589
      %p591 = pneg %p590
      // Predicated region
      $region81: #{tpu_custom_call.1} parent=5 // pred_check
        _
      $region82: #{tpu_custom_call.1} parent=5 // pred_check_branch
        %593 = sbr.rel (%p590) target = $region84
      $region83: #{tpu_custom_call.1} parent=5 // pred_region
        %s594 = ssub.s32 %s34, 1
        %s595 = sand.u32 %s47, 1
        %s596 = scalar_lea.sflag [#allocation7], %s595
        %s597 = sand.u32 %s47, 1
        %s598 = smul.addr %s597, 8
        %s599 = scalar_lea.vmem [#allocation6], %s598
        // Predicated region
        $region85: #{tpu_custom_call.1} parent=83 // pred_check
          %p600 = pneg %p60
        $region86: #{tpu_custom_call.1} parent=83 // pred_check_branch
          %602 = sbr.rel (%p600) target = $region88
        $region87: #{tpu_custom_call.1} parent=83 // pred_region
          %604 = dma.done %s596, 128
        $region88: #{tpu_custom_call.1} parent=83 // pred_fallthru
          _
        %s605 = sand.u32 %s39, 1
        %s606 = scalar_lea.sflag [#allocation10], %s605
        %s607 = sand.u32 %s73, 1
        %s608 = smul.addr %s607, 32
        %s609 = scalar_lea.vmem [#allocation9], %s608
        // Predicated region
        $region89: #{tpu_custom_call.1} parent=83 // pred_check
          %p610 = pneg %p86
        $region90: #{tpu_custom_call.1} parent=83 // pred_check_branch
          %612 = sbr.rel (%p610) target = $region92
        $region91: #{tpu_custom_call.1} parent=83 // pred_region
          %614 = dma.done %s606, 512
        $region92: #{tpu_custom_call.1} parent=83 // pred_fallthru
          _
        // Predicated region
        $region93: #{tpu_custom_call.1} parent=83 // pred_check
          %p615 = pneg %p107
        $region94: #{tpu_custom_call.1} parent=83 // pred_check_branch
          %617 = sbr.rel (%p615) target = $region96
        $region95: #{tpu_custom_call.1} parent=83 // pred_region
          %619 = dma.done [#allocation10], 1024
        $region96: #{tpu_custom_call.1} parent=83 // pred_fallthru
          _
        // Predicated region
        $region97: #{tpu_custom_call.1} parent=83 // pred_check
          %p620 = pneg %p149
        $region98: #{tpu_custom_call.1} parent=83 // pred_check_branch
          %622 = sbr.rel (%p620) target = $region100
        $region99: #{tpu_custom_call.1} parent=83 // pred_region
          %624 = dma.done [#allocation13], 9216
        $region100: #{tpu_custom_call.1} parent=83 // pred_fallthru
          _
        // Predicated region
        $region101: #{tpu_custom_call.1} parent=83 // pred_check
          %p625 = pneg %p191
        $region102: #{tpu_custom_call.1} parent=83 // pred_check_branch
          %627 = sbr.rel (%p625) target = $region104
        $region103: #{tpu_custom_call.1} parent=83 // pred_region
          %629 = dma.done [#allocation13], 1024
        $region104: #{tpu_custom_call.1} parent=83 // pred_fallthru
          _
        // Predicated region
        $region105: #{tpu_custom_call.1} parent=83 // pred_check
          %p630 = pneg %p233
        $region106: #{tpu_custom_call.1} parent=83 // pred_check_branch
          %632 = sbr.rel (%p630) target = $region108
        $region107: #{tpu_custom_call.1} parent=83 // pred_region
          %634 = dma.done [#allocation16], 9216
        $region108: #{tpu_custom_call.1} parent=83 // pred_fallthru
          _
        // Predicated region
        $region109: #{tpu_custom_call.1} parent=83 // pred_check
          %p635 = pneg %p275
        $region110: #{tpu_custom_call.1} parent=83 // pred_check_branch
          %637 = sbr.rel (%p635) target = $region112
        $region111: #{tpu_custom_call.1} parent=83 // pred_region
          %639 = dma.done [#allocation16], 9216
        $region112: #{tpu_custom_call.1} parent=83 // pred_fallthru
          _
        // Predicated region
        $region113: #{tpu_custom_call.1} parent=83 // pred_check
          %p640 = pneg %p317
        $region114: #{tpu_custom_call.1} parent=83 // pred_check_branch
          %642 = sbr.rel (%p640) target = $region116
        $region115: #{tpu_custom_call.1} parent=83 // pred_region
          %644 = dma.done [#allocation19], 1024
        $region116: #{tpu_custom_call.1} parent=83 // pred_fallthru
          _
        // Predicated region
        $region117: #{tpu_custom_call.1} parent=83 // pred_check
          %p645 = pneg %p359
        $region118: #{tpu_custom_call.1} parent=83 // pred_check_branch
          %647 = sbr.rel (%p645) target = $region120
        $region119: #{tpu_custom_call.1} parent=83 // pred_region
          %649 = dma.done [#allocation19], 9216
        $region120: #{tpu_custom_call.1} parent=83 // pred_fallthru
          _
        %s650 = sand.u32 %s47, 1
        %s651 = scalar_lea.sflag [#allocation7], %s650
        %s652 = sand.u32 %s47, 1
        %s653 = smul.addr %s652, 8
        %s654 = scalar_lea.vmem [#allocation6], %s653
        %p655 = pneg %p60
        %p656 = pneg %p57
        %s657 = sand.u32 %s39, 1
        %s658 = scalar_lea.sflag [#allocation10], %s657
        %s659 = sand.u32 %s73, 1
        %s660 = smul.addr %s659, 32
        %s661 = scalar_lea.vmem [#allocation9], %s660
        %p662 = pneg %p86
        %p663 = pneg %p83
        %p664 = pneg %p107
        %p665 = pneg %p104
        %p666 = pneg %p128
        %p667 = pneg %p125
        %p668 = pneg %p149
        %p669 = pneg %p146
        %p670 = pneg %p170
        %p671 = pneg %p167
        %p672 = pneg %p191
        %p673 = pneg %p188
        %p674 = pneg %p212
        %p675 = pneg %p209
        %p676 = pneg %p233
        %p677 = pneg %p230
        %p678 = pneg %p254
        %p679 = pneg %p251
        %p680 = pneg %p275
        %p681 = pneg %p272
        %p682 = pneg %p296
        %p683 = pneg %p293
        %p684 = pneg %p317
        %p685 = pneg %p314
        %p686 = pneg %p338
        %p687 = pneg %p335
        %p688 = pneg %p359
        %p689 = pneg %p356
        %p690 = pneg %p380
        %p691 = pneg %p377
        %p692 = pneg %p406
        %p693 = pneg %p403
        %s694 = sand.u32 %s393, 1
        %s695 = scalar_lea.sflag [#allocation8], %s694
        %s696 = sand.u32 %s393, 1
        %s697 = smul.addr %s696, 256
        %s698 = scalar_lea.vmem [#allocation21], %s697
        %701 = vst [vmem:[#allocation2] sm:$0x7] 0
        %s702 = scalar_lea.vmem [#allocation2], 20
        %703 = vst [vmem:[%s702] sm:$0x7] 0
        %vm704 = vcmask 1040384
        %vm705 = vsmask.f32 256
        %vm706 = vmand %vm704, %vm705
        %v707 = vld [vmem:[#allocation2] sm:$0x1]
        %v708 = vsel %vm706, 0, %v707
        %709 = vst [vmem:[#allocation2] sm:$0x1] %v708
        %v710 = vld [vmem:[#allocation2 + $0x4] sm:$0x1]
        %v711 = vsel %vm706, 0, %v710
        %712 = vst [vmem:[#allocation2 + $0x4] sm:$0x1] %v711
        %v713 = vld [vmem:[#allocation2 + $0x8] sm:$0x1]
        %v714 = vsel %vm706, 0, %v713
        %715 = vst [vmem:[#allocation2 + $0x8] sm:$0x1] %v714
        %v716 = vld [vmem:[#allocation2 + $0xc] sm:$0x1]
        %v717 = vsel %vm706, 0, %v716
        %718 = vst [vmem:[#allocation2 + $0xc] sm:$0x1] %v717
        %v719 = vld [vmem:[#allocation2 + $0x10] sm:$0x1]
        %v720 = vsel %vm706, 0, %v719
        %721 = vst [vmem:[#allocation2 + $0x10] sm:$0x1] %v720
        %v722 = vld [vmem:[#allocation2 + $0x14] sm:$0x1]
        %v723 = vsel %vm706, 0, %v722
        %724 = vst [vmem:[#allocation2 + $0x14] sm:$0x1] %v723
        %vm725 = vcmask 1042434
        %vm726 = vsmask.f32 7946
        %vm727 = vmand %vm725, %vm726
        %v728 = vld [vmem:[#allocation2] sm:$0x4]
        %v729 = vsel %vm727, 0, %v728
        %730 = vst [vmem:[#allocation2] sm:$0x4] %v729
        %v731 = vld [vmem:[#allocation2 + $0x4] sm:$0x4]
        %v732 = vsel %vm727, 0, %v731
        %733 = vst [vmem:[#allocation2 + $0x4] sm:$0x4] %v732
        %v734 = vld [vmem:[#allocation2 + $0x8] sm:$0x4]
        %v735 = vsel %vm727, 0, %v734
        %736 = vst [vmem:[#allocation2 + $0x8] sm:$0x4] %v735
        %v737 = vld [vmem:[#allocation2 + $0xc] sm:$0x4]
        %v738 = vsel %vm727, 0, %v737
        %739 = vst [vmem:[#allocation2 + $0xc] sm:$0x4] %v738
        %v740 = vld [vmem:[#allocation2 + $0x10] sm:$0x4]
        %v741 = vsel %vm727, 0, %v740
        %742 = vst [vmem:[#allocation2 + $0x10] sm:$0x4] %v741
        %v743 = vld [vmem:[#allocation2 + $0x14] sm:$0x4]
        %v744 = vsel %vm727, 0, %v743
        %745 = vst [vmem:[#allocation2 + $0x14] sm:$0x4] %v744
        %746 = vst [vmem:[#allocation3] sm:$0xf] 0
        %747 = vst [vmem:[#allocation3 + $0x4] sm:$0x1] 0
        %s748 = scalar_lea.vmem [#allocation3], 72
        %749 = vst [vmem:[%s748] sm:$0xf] 0
        %750 = vst [vmem:[%s748 + $0x4] sm:$0x1] 0
        %v751 = vld [vmem:[#allocation3] sm:$0x1]
        %v752 = vsel %vm706, 0, %v751
        %753 = vst [vmem:[#allocation3] sm:$0x1] %v752
        %v754 = vld [vmem:[#allocation3 + $0x8] sm:$0x1]
        %v755 = vsel %vm706, 0, %v754
        %756 = vst [vmem:[#allocation3 + $0x8] sm:$0x1] %v755
        %v757 = vld [vmem:[#allocation3 + $0x10] sm:$0x1]
        %v758 = vsel %vm706, 0, %v757
        %759 = vst [vmem:[#allocation3 + $0x10] sm:$0x1] %v758
        %v760 = vld [vmem:[#allocation3 + $0x18] sm:$0x1]
        %v761 = vsel %vm706, 0, %v760
        %762 = vst [vmem:[#allocation3 + $0x18] sm:$0x1] %v761
        %v763 = vld [vmem:[#allocation3 + $0x20] sm:$0x1]
        %v764 = vsel %vm706, 0, %v763
        %765 = vst [vmem:[#allocation3 + $0x20] sm:$0x1] %v764
        %v766 = vld [vmem:[#allocation3 + $0x28] sm:$0x1]
        %v767 = vsel %vm706, 0, %v766
        %768 = vst [vmem:[#allocation3 + $0x28] sm:$0x1] %v767
        %v769 = vld [vmem:[#allocation3 + $0x30] sm:$0x1]
        %v770 = vsel %vm706, 0, %v769
        %771 = vst [vmem:[#allocation3 + $0x30] sm:$0x1] %v770
        %v772 = vld [vmem:[#allocation3 + $0x38] sm:$0x1]
        %v773 = vsel %vm706, 0, %v772
        %774 = vst [vmem:[#allocation3 + $0x38] sm:$0x1] %v773
        %v775 = vld [vmem:[#allocation3 + $0x40] sm:$0x1]
        %v776 = vsel %vm706, 0, %v775
        %777 = vst [vmem:[#allocation3 + $0x40] sm:$0x1] %v776
        %v778 = vld [vmem:[#allocation3 + $0x48] sm:$0x1]
        %v779 = vsel %vm706, 0, %v778
        %780 = vst [vmem:[#allocation3 + $0x48] sm:$0x1] %v779
        %vm781 = vsmask.f32 7938
        %vm782 = vmand %vm704, %vm781
        %v783 = vld [vmem:[#allocation3 + $0x4] sm:$0x1]
        %v784 = vsel %vm782, 0, %v783
        %785 = vst [vmem:[#allocation3 + $0x4] sm:$0x1] %v784
        %v786 = vld [vmem:[#allocation3 + $0xc] sm:$0x1]
        %v787 = vsel %vm782, 0, %v786
        %788 = vst [vmem:[#allocation3 + $0xc] sm:$0x1] %v787
        %v789 = vld [vmem:[#allocation3 + $0x14] sm:$0x1]
        %v790 = vsel %vm782, 0, %v789
        %791 = vst [vmem:[#allocation3 + $0x14] sm:$0x1] %v790
        %v792 = vld [vmem:[#allocation3 + $0x1c] sm:$0x1]
        %v793 = vsel %vm782, 0, %v792
        %794 = vst [vmem:[#allocation3 + $0x1c] sm:$0x1] %v793
        %v795 = vld [vmem:[#allocation3 + $0x24] sm:$0x1]
        %v796 = vsel %vm782, 0, %v795
        %797 = vst [vmem:[#allocation3 + $0x24] sm:$0x1] %v796
        %v798 = vld [vmem:[#allocation3 + $0x2c] sm:$0x1]
        %v799 = vsel %vm782, 0, %v798
        %800 = vst [vmem:[#allocation3 + $0x2c] sm:$0x1] %v799
        %v801 = vld [vmem:[#allocation3 + $0x34] sm:$0x1]
        %v802 = vsel %vm782, 0, %v801
        %803 = vst [vmem:[#allocation3 + $0x34] sm:$0x1] %v802
        %v804 = vld [vmem:[#allocation3 + $0x3c] sm:$0x1]
        %v805 = vsel %vm782, 0, %v804
        %806 = vst [vmem:[#allocation3 + $0x3c] sm:$0x1] %v805
        %v807 = vld [vmem:[#allocation3 + $0x44] sm:$0x1]
        %v808 = vsel %vm782, 0, %v807
        %809 = vst [vmem:[#allocation3 + $0x44] sm:$0x1] %v808
        %v810 = vld [vmem:[#allocation3 + $0x4c] sm:$0x1]
        %v811 = vsel %vm782, 0, %v810
        %812 = vst [vmem:[#allocation3 + $0x4c] sm:$0x1] %v811
        %813 = vst [vmem:[#allocation4] sm:$0xf] 0
        %814 = vst [vmem:[#allocation4 + $0x4] sm:$0x1] 0
        %s815 = scalar_lea.vmem [#allocation4], 72
        %816 = vst [vmem:[%s815] sm:$0xf] 0
        %817 = vst [vmem:[%s815 + $0x4] sm:$0x1] 0
        %v818 = vld [vmem:[#allocation4] sm:$0x1]
        %v819 = vsel %vm706, 0, %v818
        %820 = vst [vmem:[#allocation4] sm:$0x1] %v819
        %v821 = vld [vmem:[#allocation4 + $0x8] sm:$0x1]
        %v822 = vsel %vm706, 0, %v821
        %823 = vst [vmem:[#allocation4 + $0x8] sm:$0x1] %v822
        %v824 = vld [vmem:[#allocation4 + $0x10] sm:$0x1]
        %v825 = vsel %vm706, 0, %v824
        %826 = vst [vmem:[#allocation4 + $0x10] sm:$0x1] %v825
        %v827 = vld [vmem:[#allocation4 + $0x18] sm:$0x1]
        %v828 = vsel %vm706, 0, %v827
        %829 = vst [vmem:[#allocation4 + $0x18] sm:$0x1] %v828
        %v830 = vld [vmem:[#allocation4 + $0x20] sm:$0x1]
        %v831 = vsel %vm706, 0, %v830
        %832 = vst [vmem:[#allocation4 + $0x20] sm:$0x1] %v831
        %v833 = vld [vmem:[#allocation4 + $0x28] sm:$0x1]
        %v834 = vsel %vm706, 0, %v833
        %835 = vst [vmem:[#allocation4 + $0x28] sm:$0x1] %v834
        %v836 = vld [vmem:[#allocation4 + $0x30] sm:$0x1]
        %v837 = vsel %vm706, 0, %v836
        %838 = vst [vmem:[#allocation4 + $0x30] sm:$0x1] %v837
        %v839 = vld [vmem:[#allocation4 + $0x38] sm:$0x1]
        %v840 = vsel %vm706, 0, %v839
        %841 = vst [vmem:[#allocation4 + $0x38] sm:$0x1] %v840
        %v842 = vld [vmem:[#allocation4 + $0x40] sm:$0x1]
        %v843 = vsel %vm706, 0, %v842
        %844 = vst [vmem:[#allocation4 + $0x40] sm:$0x1] %v843
        %v845 = vld [vmem:[#allocation4 + $0x48] sm:$0x1]
        %v846 = vsel %vm706, 0, %v845
        %847 = vst [vmem:[#allocation4 + $0x48] sm:$0x1] %v846
        %v848 = vld [vmem:[#allocation4 + $0x4] sm:$0x1]
        %v849 = vsel %vm782, 0, %v848
        %850 = vst [vmem:[#allocation4 + $0x4] sm:$0x1] %v849
        %v851 = vld [vmem:[#allocation4 + $0xc] sm:$0x1]
        %v852 = vsel %vm782, 0, %v851
        %853 = vst [vmem:[#allocation4 + $0xc] sm:$0x1] %v852
        %v854 = vld [vmem:[#allocation4 + $0x14] sm:$0x1]
        %v855 = vsel %vm782, 0, %v854
        %856 = vst [vmem:[#allocation4 + $0x14] sm:$0x1] %v855
        %v857 = vld [vmem:[#allocation4 + $0x1c] sm:$0x1]
        %v858 = vsel %vm782, 0, %v857
        %859 = vst [vmem:[#allocation4 + $0x1c] sm:$0x1] %v858
        %v860 = vld [vmem:[#allocation4 + $0x24] sm:$0x1]
        %v861 = vsel %vm782, 0, %v860
        %862 = vst [vmem:[#allocation4 + $0x24] sm:$0x1] %v861
        %v863 = vld [vmem:[#allocation4 + $0x2c] sm:$0x1]
        %v864 = vsel %vm782, 0, %v863
        %865 = vst [vmem:[#allocation4 + $0x2c] sm:$0x1] %v864
        %v866 = vld [vmem:[#allocation4 + $0x34] sm:$0x1]
        %v867 = vsel %vm782, 0, %v866
        %868 = vst [vmem:[#allocation4 + $0x34] sm:$0x1] %v867
        %v869 = vld [vmem:[#allocation4 + $0x3c] sm:$0x1]
        %v870 = vsel %vm782, 0, %v869
        %871 = vst [vmem:[#allocation4 + $0x3c] sm:$0x1] %v870
        %v872 = vld [vmem:[#allocation4 + $0x44] sm:$0x1]
        %v873 = vsel %vm782, 0, %v872
        %874 = vst [vmem:[#allocation4 + $0x44] sm:$0x1] %v873
        %v875 = vld [vmem:[#allocation4 + $0x4c] sm:$0x1]
        %v876 = vsel %vm782, 0, %v875
        %877 = vst [vmem:[#allocation4 + $0x4c] sm:$0x1] %v876
        %878 = vst [vmem:[#allocation5] sm:$0xf] 0
        %879 = vst [vmem:[#allocation5 + $0x4] sm:$0xf] 0
        %880 = vst [vmem:[#allocation5 + $0x8] sm:$0x1] 0
        %s881 = scalar_lea.vmem [#allocation5], 204
        %882 = vst [vmem:[%s881] sm:$0xf] 0
        %883 = vst [vmem:[%s881 + $0x4] sm:$0xf] 0
        %884 = vst [vmem:[%s881 + $0x8] sm:$0x1] 0
        %v885 = vld [vmem:[#allocation5] sm:$0x1]
        %v886 = vsel %vm706, 0, %v885
        %887 = vst [vmem:[#allocation5] sm:$0x1] %v886
        %v888 = vld [vmem:[#allocation5 + $0xc] sm:$0x1]
        %v889 = vsel %vm706, 0, %v888
        %890 = vst [vmem:[#allocation5 + $0xc] sm:$0x1] %v889
        %v891 = vld [vmem:[#allocation5 + $0x18] sm:$0x1]
        %v892 = vsel %vm706, 0, %v891
        %893 = vst [vmem:[#allocation5 + $0x18] sm:$0x1] %v892
        %v894 = vld [vmem:[#allocation5 + $0x24] sm:$0x1]
        %v895 = vsel %vm706, 0, %v894
        %896 = vst [vmem:[#allocation5 + $0x24] sm:$0x1] %v895
        %v897 = vld [vmem:[#allocation5 + $0x30] sm:$0x1]
        %v898 = vsel %vm706, 0, %v897
        %899 = vst [vmem:[#allocation5 + $0x30] sm:$0x1] %v898
        %v900 = vld [vmem:[#allocation5 + $0x3c] sm:$0x1]
        %v901 = vsel %vm706, 0, %v900
        %902 = vst [vmem:[#allocation5 + $0x3c] sm:$0x1] %v901
        %v903 = vld [vmem:[#allocation5 + $0x48] sm:$0x1]
        %v904 = vsel %vm706, 0, %v903
        %905 = vst [vmem:[#allocation5 + $0x48] sm:$0x1] %v904
        %v906 = vld [vmem:[#allocation5 + $0x54] sm:$0x1]
        %v907 = vsel %vm706, 0, %v906
        %908 = vst [vmem:[#allocation5 + $0x54] sm:$0x1] %v907
        %v909 = vld [vmem:[#allocation5 + $0x60] sm:$0x1]
        %v910 = vsel %vm706, 0, %v909
        %911 = vst [vmem:[#allocation5 + $0x60] sm:$0x1] %v910
        %v912 = vld [vmem:[#allocation5 + $0x6c] sm:$0x1]
        %v913 = vsel %vm706, 0, %v912
        %914 = vst [vmem:[#allocation5 + $0x6c] sm:$0x1] %v913
        %v915 = vld [vmem:[#allocation5 + $0x78] sm:$0x1]
        %v916 = vsel %vm706, 0, %v915
        %917 = vst [vmem:[#allocation5 + $0x78] sm:$0x1] %v916
        %v918 = vld [vmem:[#allocation5 + $0x84] sm:$0x1]
        %v919 = vsel %vm706, 0, %v918
        %920 = vst [vmem:[#allocation5 + $0x84] sm:$0x1] %v919
        %v921 = vld [vmem:[#allocation5 + $0x90] sm:$0x1]
        %v922 = vsel %vm706, 0, %v921
        %923 = vst [vmem:[#allocation5 + $0x90] sm:$0x1] %v922
        %v924 = vld [vmem:[#allocation5 + $0x9c] sm:$0x1]
        %v925 = vsel %vm706, 0, %v924
        %926 = vst [vmem:[#allocation5 + $0x9c] sm:$0x1] %v925
        %v927 = vld [vmem:[#allocation5 + $0xa8] sm:$0x1]
        %v928 = vsel %vm706, 0, %v927
        %929 = vst [vmem:[#allocation5 + $0xa8] sm:$0x1] %v928
        %v930 = vld [vmem:[#allocation5 + $0xb4] sm:$0x1]
        %v931 = vsel %vm706, 0, %v930
        %932 = vst [vmem:[#allocation5 + $0xb4] sm:$0x1] %v931
        %v933 = vld [vmem:[#allocation5 + $0xc0] sm:$0x1]
        %v934 = vsel %vm706, 0, %v933
        %935 = vst [vmem:[#allocation5 + $0xc0] sm:$0x1] %v934
        %v936 = vld [vmem:[#allocation5 + $0xcc] sm:$0x1]
        %v937 = vsel %vm706, 0, %v936
        %938 = vst [vmem:[#allocation5 + $0xcc] sm:$0x1] %v937
        %v939 = vld [vmem:[#allocation5 + $0x8] sm:$0x1]
        %v940 = vsel %vm782, 0, %v939
        %941 = vst [vmem:[#allocation5 + $0x8] sm:$0x1] %v940
        %v942 = vld [vmem:[#allocation5 + $0x14] sm:$0x1]
        %v943 = vsel %vm782, 0, %v942
        %944 = vst [vmem:[#allocation5 + $0x14] sm:$0x1] %v943
        %v945 = vld [vmem:[#allocation5 + $0x20] sm:$0x1]
        %v946 = vsel %vm782, 0, %v945
        %947 = vst [vmem:[#allocation5 + $0x20] sm:$0x1] %v946
        %v948 = vld [vmem:[#allocation5 + $0x2c] sm:$0x1]
        %v949 = vsel %vm782, 0, %v948
        %950 = vst [vmem:[#allocation5 + $0x2c] sm:$0x1] %v949
        %v951 = vld [vmem:[#allocation5 + $0x38] sm:$0x1]
        %v952 = vsel %vm782, 0, %v951
        %953 = vst [vmem:[#allocation5 + $0x38] sm:$0x1] %v952
        %v954 = vld [vmem:[#allocation5 + $0x44] sm:$0x1]
        %v955 = vsel %vm782, 0, %v954
        %956 = vst [vmem:[#allocation5 + $0x44] sm:$0x1] %v955
        %v957 = vld [vmem:[#allocation5 + $0x50] sm:$0x1]
        %v958 = vsel %vm782, 0, %v957
        %959 = vst [vmem:[#allocation5 + $0x50] sm:$0x1] %v958
        %v960 = vld [vmem:[#allocation5 + $0x5c] sm:$0x1]
        %v961 = vsel %vm782, 0, %v960
        %962 = vst [vmem:[#allocation5 + $0x5c] sm:$0x1] %v961
        %v963 = vld [vmem:[#allocation5 + $0x68] sm:$0x1]
        %v964 = vsel %vm782, 0, %v963
        %965 = vst [vmem:[#allocation5 + $0x68] sm:$0x1] %v964
        %v966 = vld [vmem:[#allocation5 + $0x74] sm:$0x1]
        %v967 = vsel %vm782, 0, %v966
        %968 = vst [vmem:[#allocation5 + $0x74] sm:$0x1] %v967
        %v969 = vld [vmem:[#allocation5 + $0x80] sm:$0x1]
        %v970 = vsel %vm782, 0, %v969
        %971 = vst [vmem:[#allocation5 + $0x80] sm:$0x1] %v970
        %v972 = vld [vmem:[#allocation5 + $0x8c] sm:$0x1]
        %v973 = vsel %vm782, 0, %v972
        %974 = vst [vmem:[#allocation5 + $0x8c] sm:$0x1] %v973
        %v975 = vld [vmem:[#allocation5 + $0x98] sm:$0x1]
        %v976 = vsel %vm782, 0, %v975
        %977 = vst [vmem:[#allocation5 + $0x98] sm:$0x1] %v976
        %v978 = vld [vmem:[#allocation5 + $0xa4] sm:$0x1]
        %v979 = vsel %vm782, 0, %v978
        %980 = vst [vmem:[#allocation5 + $0xa4] sm:$0x1] %v979
        %v981 = vld [vmem:[#allocation5 + $0xb0] sm:$0x1]
        %v982 = vsel %vm782, 0, %v981
        %983 = vst [vmem:[#allocation5 + $0xb0] sm:$0x1] %v982
        %v984 = vld [vmem:[#allocation5 + $0xbc] sm:$0x1]
        %v985 = vsel %vm782, 0, %v984
        %986 = vst [vmem:[#allocation5 + $0xbc] sm:$0x1] %v985
        %v987 = vld [vmem:[#allocation5 + $0xc8] sm:$0x1]
        %v988 = vsel %vm782, 0, %v987
        %989 = vst [vmem:[#allocation5 + $0xc8] sm:$0x1] %v988
        %v990 = vld [vmem:[#allocation5 + $0xd4] sm:$0x1]
        %v991 = vsel %vm782, 0, %v990
        %992 = vst [vmem:[#allocation5 + $0xd4] sm:$0x1] %v991
        %v993 = vld [vmem:[%s609] sm:$0xf]
        %v994 = vld [vmem:[%s609 + $0x4] sm:$0xf]
        %v995 = vld [vmem:[%s609 + $0x8] sm:$0xf]
        %v996 = vld [vmem:[%s609 + $0xc] sm:$0xf]
        %v997 = vld [vmem:[%s609 + $0x10] sm:$0xf]
        %v998 = vld [vmem:[%s609 + $0x14] sm:$0xf]
        %v999 = vld [vmem:[%s609 + $0x18] sm:$0xf]
        %v1000 = vld [vmem:[%s609 + $0x1c] sm:$0xf]
        %v1002 = vshrl.u32 %v993, 16
        %v1004 = vrot.slane %v1002, 7
        %v1005 = vshll.u32 %v993, 16
        %v1007 = vor.u32 %v1004, %v1005
        %v1008 = vrot.slane %v1004, 4
        %v1010 = vshrl.u32 %v994, 16
        %v1012 = vrot.slane %v1010, 7
        %v1013 = vshll.u32 %v994, 16
        %v1015 = vor.u32 %v1012, %v1013
        %v1016 = vrot.slane %v1012, 4
        %v1018 = vshrl.u32 %v995, 16
        %v1020 = vrot.slane %v1018, 7
        %v1021 = vshll.u32 %v995, 16
        %v1023 = vor.u32 %v1020, %v1021
        %v1024 = vrot.slane %v1020, 4
        %v1026 = vshrl.u32 %v996, 16
        %v1028 = vrot.slane %v1026, 7
        %v1029 = vshll.u32 %v996, 16
        %v1031 = vor.u32 %v1028, %v1029
        %v1032 = vrot.slane %v1028, 4
        %v1034 = vshrl.u32 %v997, 16
        %v1036 = vrot.slane %v1034, 7
        %v1037 = vshll.u32 %v997, 16
        %v1039 = vor.u32 %v1036, %v1037
        %v1040 = vrot.slane %v1036, 4
        %v1042 = vshrl.u32 %v998, 16
        %v1044 = vrot.slane %v1042, 7
        %v1045 = vshll.u32 %v998, 16
        %v1047 = vor.u32 %v1044, %v1045
        %v1048 = vrot.slane %v1044, 4
        %v1050 = vshrl.u32 %v999, 16
        %v1052 = vrot.slane %v1050, 7
        %v1053 = vshll.u32 %v999, 16
        %v1055 = vor.u32 %v1052, %v1053
        %v1056 = vrot.slane %v1052, 4
        %v1058 = vshrl.u32 %v1000, 16
        %v1060 = vrot.slane %v1058, 7
        %v1061 = vshll.u32 %v1000, 16
        %v1063 = vor.u32 %v1060, %v1061
        %v1064 = vrot.slane %v1060, 4
        %s1081 = scalar_lea.vmem [#allocation3], 8
        %vm1082 = vcmask 1043456
        %vm1083 = vmand %vm1082, %vm781
        %v1084 = vld [vmem:[%s1081] sm:$0xf]
        %v1085 = vsel %vm1083, %v1007, %v1084
        %1086 = vst [vmem:[%s1081] sm:$0xf] %v1085
        %v1087 = vld [vmem:[%s1081 + $0x4] sm:$0x1]
        %v1088 = vsel %vm706, %v1008, %v1087
        %1089 = vst [vmem:[%s1081 + $0x4] sm:$0x1] %v1088
        %v1090 = vld [vmem:[%s1081 + $0x8] sm:$0xf]
        %v1091 = vsel %vm1083, %v1015, %v1090
        %1092 = vst [vmem:[%s1081 + $0x8] sm:$0xf] %v1091
        %v1093 = vld [vmem:[%s1081 + $0xc] sm:$0x1]
        %v1094 = vsel %vm706, %v1016, %v1093
        %1095 = vst [vmem:[%s1081 + $0xc] sm:$0x1] %v1094
        %v1096 = vld [vmem:[%s1081 + $0x10] sm:$0xf]
        %v1097 = vsel %vm1083, %v1023, %v1096
        %1098 = vst [vmem:[%s1081 + $0x10] sm:$0xf] %v1097
        %v1099 = vld [vmem:[%s1081 + $0x14] sm:$0x1]
        %v1100 = vsel %vm706, %v1024, %v1099
        %1101 = vst [vmem:[%s1081 + $0x14] sm:$0x1] %v1100
        %v1102 = vld [vmem:[%s1081 + $0x18] sm:$0xf]
        %v1103 = vsel %vm1083, %v1031, %v1102
        %1104 = vst [vmem:[%s1081 + $0x18] sm:$0xf] %v1103
        %v1105 = vld [vmem:[%s1081 + $0x1c] sm:$0x1]
        %v1106 = vsel %vm706, %v1032, %v1105
        %1107 = vst [vmem:[%s1081 + $0x1c] sm:$0x1] %v1106
        %v1108 = vld [vmem:[%s1081 + $0x20] sm:$0xf]
        %v1109 = vsel %vm1083, %v1039, %v1108
        %1110 = vst [vmem:[%s1081 + $0x20] sm:$0xf] %v1109
        %v1111 = vld [vmem:[%s1081 + $0x24] sm:$0x1]
        %v1112 = vsel %vm706, %v1040, %v1111
        %1113 = vst [vmem:[%s1081 + $0x24] sm:$0x1] %v1112
        %v1114 = vld [vmem:[%s1081 + $0x28] sm:$0xf]
        %v1115 = vsel %vm1083, %v1047, %v1114
        %1116 = vst [vmem:[%s1081 + $0x28] sm:$0xf] %v1115
        %v1117 = vld [vmem:[%s1081 + $0x2c] sm:$0x1]
        %v1118 = vsel %vm706, %v1048, %v1117
        %1119 = vst [vmem:[%s1081 + $0x2c] sm:$0x1] %v1118
        %v1120 = vld [vmem:[%s1081 + $0x30] sm:$0xf]
        %v1121 = vsel %vm1083, %v1055, %v1120
        %1122 = vst [vmem:[%s1081 + $0x30] sm:$0xf] %v1121
        %v1123 = vld [vmem:[%s1081 + $0x34] sm:$0x1]
        %v1124 = vsel %vm706, %v1056, %v1123
        %1125 = vst [vmem:[%s1081 + $0x34] sm:$0x1] %v1124
        %v1126 = vld [vmem:[%s1081 + $0x38] sm:$0xf]
        %v1127 = vsel %vm1083, %v1063, %v1126
        %1128 = vst [vmem:[%s1081 + $0x38] sm:$0xf] %v1127
        %v1129 = vld [vmem:[%s1081 + $0x3c] sm:$0x1]
        %v1130 = vsel %vm706, %v1064, %v1129
        %1131 = vst [vmem:[%s1081 + $0x3c] sm:$0x1] %v1130
        %v1132 = vld [vmem:[#allocation3] sm:$0xf]
        %v1133 = vld [vmem:[#allocation3 + $0x8] sm:$0xf]
        %v1134 = vld [vmem:[#allocation3 + $0x10] sm:$0xf]
        %v1135 = vld [vmem:[#allocation3 + $0x18] sm:$0xf]
        %v1136 = vld [vmem:[#allocation3 + $0x20] sm:$0xf]
        %v1137 = vld [vmem:[#allocation3 + $0x28] sm:$0xf]
        %v1138 = vld [vmem:[#allocation3 + $0x30] sm:$0xf]
        %v1139 = vld [vmem:[#allocation3 + $0x38] sm:$0xf]
        %v1140 = vld [vmem:[#allocation17] sm:$0xf]
        %v1141 = vld [vmem:[#allocation17 + $0x4] sm:$0xf]
        %v1142 = vld [vmem:[#allocation17 + $0x8] sm:$0xf]
        %v1143 = vld [vmem:[#allocation17 + $0xc] sm:$0xf]
        %v1144 = vld [vmem:[#allocation17 + $0x10] sm:$0xf]
        %v1145 = vld [vmem:[#allocation17 + $0x14] sm:$0xf]
        %v1146 = vld [vmem:[#allocation17 + $0x18] sm:$0xf]
        %v1147 = vld [vmem:[#allocation17 + $0x1c] sm:$0xf]
        %v1148 = vld [vmem:[#allocation17 + $0x20] sm:$0xf]
        %v1149 = vld [vmem:[#allocation17 + $0x24] sm:$0xf]
        %v1150 = vld [vmem:[#allocation17 + $0x28] sm:$0xf]
        %v1151 = vld [vmem:[#allocation17 + $0x2c] sm:$0xf]
        %v1152 = vld [vmem:[#allocation17 + $0x30] sm:$0xf]
        %v1153 = vld [vmem:[#allocation17 + $0x34] sm:$0xf]
        %v1154 = vld [vmem:[#allocation17 + $0x38] sm:$0xf]
        %v1155 = vld [vmem:[#allocation17 + $0x3c] sm:$0xf]
        %v1156 = vld [vmem:[#allocation3 + $0x4] sm:$0x1]
        %v1157 = vld [vmem:[#allocation3 + $0xc] sm:$0x1]
        %v1158 = vld [vmem:[#allocation3 + $0x14] sm:$0x1]
        %v1159 = vld [vmem:[#allocation3 + $0x1c] sm:$0x1]
        %v1160 = vld [vmem:[#allocation3 + $0x24] sm:$0x1]
        %v1161 = vld [vmem:[#allocation3 + $0x2c] sm:$0x1]
        %v1162 = vld [vmem:[#allocation3 + $0x34] sm:$0x1]
        %v1163 = vld [vmem:[#allocation3 + $0x3c] sm:$0x1]
        %vm1164 = vsmask.f32 3328
        %vm1165 = vsmask.f32 7440
        %vm1166 = vmor %vm1164, %vm1165
        %v1168 = vshrl.u32 %v1132, 16
        %v1170 = vrot.slane %v1168, 4
        %v1171 = vshll.u32 %v1132, 16
        %v1173 = vrot.slane %v1171, 5
        %v1174 = vor.u32 %v1170, %v1173
        %v1175 = vrot.slane %v1174, 4
        %v1177 = vshll.u32 %v1156, 16
        %v1179 = vrot.slane %v1177, 5
        %v1180 = vsel %vm1166, %v1175, %v1179
        %v1182 = vshrl.u32 %v1133, 16
        %v1184 = vrot.slane %v1182, 4
        %v1185 = vshll.u32 %v1133, 16
        %v1187 = vrot.slane %v1185, 5
        %v1188 = vor.u32 %v1184, %v1187
        %v1189 = vrot.slane %v1188, 4
        %v1191 = vshll.u32 %v1157, 16
        %v1193 = vrot.slane %v1191, 5
        %v1194 = vsel %vm1166, %v1189, %v1193
        %v1196 = vshrl.u32 %v1134, 16
        %v1198 = vrot.slane %v1196, 4
        %v1199 = vshll.u32 %v1134, 16
        %v1201 = vrot.slane %v1199, 5
        %v1202 = vor.u32 %v1198, %v1201
        %v1203 = vrot.slane %v1202, 4
        %v1205 = vshll.u32 %v1158, 16
        %v1207 = vrot.slane %v1205, 5
        %v1208 = vsel %vm1166, %v1203, %v1207
        %v1210 = vshrl.u32 %v1135, 16
        %v1212 = vrot.slane %v1210, 4
        %v1213 = vshll.u32 %v1135, 16
        %v1215 = vrot.slane %v1213, 5
        %v1216 = vor.u32 %v1212, %v1215
        %v1217 = vrot.slane %v1216, 4
        %v1219 = vshll.u32 %v1159, 16
        %v1221 = vrot.slane %v1219, 5
        %v1222 = vsel %vm1166, %v1217, %v1221
        %v1224 = vshrl.u32 %v1136, 16
        %v1226 = vrot.slane %v1224, 4
        %v1227 = vshll.u32 %v1136, 16
        %v1229 = vrot.slane %v1227, 5
        %v1230 = vor.u32 %v1226, %v1229
        %v1231 = vrot.slane %v1230, 4
        %v1233 = vshll.u32 %v1160, 16
        %v1235 = vrot.slane %v1233, 5
        %v1236 = vsel %vm1166, %v1231, %v1235
        %v1238 = vshrl.u32 %v1137, 16
        %v1240 = vrot.slane %v1238, 4
        %v1241 = vshll.u32 %v1137, 16
        %v1243 = vrot.slane %v1241, 5
        %v1244 = vor.u32 %v1240, %v1243
        %v1245 = vrot.slane %v1244, 4
        %v1247 = vshll.u32 %v1161, 16
        %v1249 = vrot.slane %v1247, 5
        %v1250 = vsel %vm1166, %v1245, %v1249
        %v1252 = vshrl.u32 %v1138, 16
        %v1254 = vrot.slane %v1252, 4
        %v1255 = vshll.u32 %v1138, 16
        %v1257 = vrot.slane %v1255, 5
        %v1258 = vor.u32 %v1254, %v1257
        %v1259 = vrot.slane %v1258, 4
        %v1261 = vshll.u32 %v1162, 16
        %v1263 = vrot.slane %v1261, 5
        %v1264 = vsel %vm1166, %v1259, %v1263
        %v1266 = vshrl.u32 %v1139, 16
        %v1268 = vrot.slane %v1266, 4
        %v1269 = vshll.u32 %v1139, 16
        %v1271 = vrot.slane %v1269, 5
        %v1272 = vor.u32 %v1268, %v1271
        %v1273 = vrot.slane %v1272, 4
        %v1275 = vshll.u32 %v1163, 16
        %v1277 = vrot.slane %v1275, 5
        %v1278 = vsel %vm1166, %v1273, %v1277
        %s1279 = scalar_lea.vmem [#allocation17], 64
        %v1280 = vld [vmem:[%s1279] sm:$0xf]
        %v1281 = vld [vmem:[%s1279 + $0x4] sm:$0xf]
        %v1282 = vld [vmem:[%s1279 + $0x8] sm:$0xf]
        %v1283 = vld [vmem:[%s1279 + $0xc] sm:$0xf]
        %v1284 = vld [vmem:[%s1279 + $0x10] sm:$0xf]
        %v1285 = vld [vmem:[%s1279 + $0x14] sm:$0xf]
        %v1286 = vld [vmem:[%s1279 + $0x18] sm:$0xf]
        %v1287 = vld [vmem:[%s1279 + $0x1c] sm:$0xf]
        %v1288 = vld [vmem:[%s1279 + $0x20] sm:$0xf]
        %v1289 = vld [vmem:[%s1279 + $0x24] sm:$0xf]
        %v1290 = vld [vmem:[%s1279 + $0x28] sm:$0xf]
        %v1291 = vld [vmem:[%s1279 + $0x2c] sm:$0xf]
        %v1292 = vld [vmem:[%s1279 + $0x30] sm:$0xf]
        %v1293 = vld [vmem:[%s1279 + $0x34] sm:$0xf]
        %v1294 = vld [vmem:[%s1279 + $0x38] sm:$0xf]
        %v1295 = vld [vmem:[%s1279 + $0x3c] sm:$0xf]
        %v1296 = vunpack.c.l.b16 %v1180
        %v1297 = vunpack.c.l.b16 %v1194
        %v1298 = vunpack.c.l.b16 %v1208
        %v1299 = vunpack.c.l.b16 %v1222
        %v1300 = vunpack.c.l.b16 %v1236
        %v1301 = vunpack.c.l.b16 %v1250
        %v1302 = vunpack.c.l.b16 %v1264
        %v1303 = vunpack.c.l.b16 %v1278
        %v1304 = vpack.c.b16 %v1297, %v1296
        %v1305 = vpack.c.b16 %v1299, %v1298
        %v1306 = vpack.c.b16 %v1301, %v1300
        %v1307 = vpack.c.b16 %v1303, %v1302
        %v1328 = vunpack.c.l.b16 %v1280
        %v1329 = vunpack.c.l.b16 %v1281
        %v1330 = vunpack.c.l.b16 %v1282
        %v1331 = vunpack.c.l.b16 %v1283
        %v1332 = vunpack.c.l.b16 %v1284
        %v1333 = vunpack.c.l.b16 %v1285
        %v1334 = vunpack.c.l.b16 %v1286
        %v1335 = vunpack.c.l.b16 %v1287
        %v1336 = vunpack.c.l.b16 %v1288
        %v1337 = vunpack.c.l.b16 %v1289
        %v1338 = vunpack.c.l.b16 %v1290
        %v1339 = vunpack.c.l.b16 %v1291
        %v1340 = vunpack.c.l.b16 %v1292
        %v1341 = vunpack.c.l.b16 %v1293
        %v1342 = vunpack.c.l.b16 %v1294
        %v1343 = vunpack.c.l.b16 %v1295
        %v1344 = vpack.c.b16 %v1329, %v1328
        %v1345 = vpack.c.b16 %v1331, %v1330
        %v1346 = vpack.c.b16 %v1333, %v1332
        %v1347 = vpack.c.b16 %v1335, %v1334
        %v1348 = vpack.c.b16 %v1337, %v1336
        %v1349 = vpack.c.b16 %v1339, %v1338
        %v1350 = vpack.c.b16 %v1341, %v1340
        %v1351 = vpack.c.b16 %v1343, %v1342
        %1360 = vmatpush.bf16.msra.mxu0 %v1351
        %1361 = vmatpush.bf16.msra.mxu0 %v1350
        %1362 = vmatpush.bf16.msra.mxu0 %v1349
        %1363 = vmatpush.bf16.msra.mxu0 %v1348
        %1364 = vmatpush.bf16.msra.mxu0 %v1347
        %1365 = vmatpush.bf16.msra.mxu0 %v1346
        %1366 = vmatpush.bf16.msra.mxu0 %v1345
        %1367 = vmatpush.bf16.msra.mxu0 %v1344
        %1368 = vmatmul.bf16.gmra.mxu0 %v1304
        %v1369 = vpop.f32.mrf.mxu0
        %v1370 = vadd.f32 0.0, %v1369
        %v1371 = vpop.f32.mrf.mxu0
        %v1372 = vadd.f32 0.0, %v1371
        %1373 = vmatmul.bf16.gmra.mxu0 %v1305
        %v1374 = vpop.f32.mrf.mxu0
        %v1375 = vadd.f32 0.0, %v1374
        %v1376 = vpop.f32.mrf.mxu0
        %v1377 = vadd.f32 0.0, %v1376
        %1378 = vmatmul.bf16.gmra.mxu0 %v1306
        %v1379 = vpop.f32.mrf.mxu0
        %v1380 = vadd.f32 0.0, %v1379
        %v1381 = vpop.f32.mrf.mxu0
        %v1382 = vadd.f32 0.0, %v1381
        %1383 = vmatmul.bf16.gmra.mxu0 %v1307
        %v1384 = vpop.f32.mrf.mxu0
        %v1385 = vadd.f32 0.0, %v1384
        %v1386 = vpop.f32.mrf.mxu0
        %v1387 = vadd.f32 0.0, %v1386
        %1388 = vdwg.mxu0
        %v1397 = vunpack.c.l.b16 %v1132
        %v1398 = vunpack.c.l.b16 %v1133
        %v1399 = vunpack.c.l.b16 %v1134
        %v1400 = vunpack.c.l.b16 %v1135
        %v1401 = vunpack.c.l.b16 %v1136
        %v1402 = vunpack.c.l.b16 %v1137
        %v1403 = vunpack.c.l.b16 %v1138
        %v1404 = vunpack.c.l.b16 %v1139
        %v1405 = vpack.c.b16 %v1398, %v1397
        %v1406 = vpack.c.b16 %v1400, %v1399
        %v1407 = vpack.c.b16 %v1402, %v1401
        %v1408 = vpack.c.b16 %v1404, %v1403
        %v1429 = vunpack.c.l.b16 %v1140
        %v1430 = vunpack.c.l.b16 %v1141
        %v1431 = vunpack.c.l.b16 %v1142
        %v1432 = vunpack.c.l.b16 %v1143
        %v1433 = vunpack.c.l.b16 %v1144
        %v1434 = vunpack.c.l.b16 %v1145
        %v1435 = vunpack.c.l.b16 %v1146
        %v1436 = vunpack.c.l.b16 %v1147
        %v1437 = vunpack.c.l.b16 %v1148
        %v1438 = vunpack.c.l.b16 %v1149
        %v1439 = vunpack.c.l.b16 %v1150
        %v1440 = vunpack.c.l.b16 %v1151
        %v1441 = vunpack.c.l.b16 %v1152
        %v1442 = vunpack.c.l.b16 %v1153
        %v1443 = vunpack.c.l.b16 %v1154
        %v1444 = vunpack.c.l.b16 %v1155
        %v1445 = vpack.c.b16 %v1430, %v1429
        %v1446 = vpack.c.b16 %v1432, %v1431
        %v1447 = vpack.c.b16 %v1434, %v1433
        %v1448 = vpack.c.b16 %v1436, %v1435
        %v1449 = vpack.c.b16 %v1438, %v1437
        %v1450 = vpack.c.b16 %v1440, %v1439
        %v1451 = vpack.c.b16 %v1442, %v1441
        %v1452 = vpack.c.b16 %v1444, %v1443
        %1461 = vmatpush.bf16.msra.mxu0 %v1452
        %1462 = vmatpush.bf16.msra.mxu0 %v1451
        %1463 = vmatpush.bf16.msra.mxu0 %v1450
        %1464 = vmatpush.bf16.msra.mxu0 %v1449
        %1465 = vmatpush.bf16.msra.mxu0 %v1448
        %1466 = vmatpush.bf16.msra.mxu0 %v1447
        %1467 = vmatpush.bf16.msra.mxu0 %v1446
        %1468 = vmatpush.bf16.msra.mxu0 %v1445
        %1469 = vmatmul.bf16.gmra.mxu0 %v1405
        %v1470 = vpop.f32.mrf.mxu0
        %v1471 = vadd.f32 %v1370, %v1470
        %v1472 = vpop.f32.mrf.mxu0
        %v1473 = vadd.f32 %v1372, %v1472
        %1474 = vmatmul.bf16.gmra.mxu0 %v1406
        %v1475 = vpop.f32.mrf.mxu0
        %v1476 = vadd.f32 %v1375, %v1475
        %v1477 = vpop.f32.mrf.mxu0
        %v1478 = vadd.f32 %v1377, %v1477
        %1479 = vmatmul.bf16.gmra.mxu0 %v1407
        %v1480 = vpop.f32.mrf.mxu0
        %v1481 = vadd.f32 %v1380, %v1480
        %v1482 = vpop.f32.mrf.mxu0
        %v1483 = vadd.f32 %v1382, %v1482
        %1484 = vmatmul.bf16.gmra.mxu0 %v1408
        %v1485 = vpop.f32.mrf.mxu0
        %v1486 = vadd.f32 %v1385, %v1485
        %v1487 = vpop.f32.mrf.mxu0
        %v1488 = vadd.f32 %v1387, %v1487
        %1489 = vdwg.mxu0
        %v1490 = vld [vmem:[#allocation3] sm:$0xe]
        %v1491 = vld [vmem:[#allocation3 + $0x8] sm:$0xe]
        %v1492 = vld [vmem:[#allocation3 + $0x10] sm:$0xe]
        %v1493 = vld [vmem:[#allocation3 + $0x18] sm:$0xe]
        %v1494 = vld [vmem:[#allocation3 + $0x20] sm:$0xe]
        %v1495 = vld [vmem:[#allocation3 + $0x28] sm:$0xe]
        %v1496 = vld [vmem:[#allocation3 + $0x30] sm:$0xe]
        %v1497 = vld [vmem:[#allocation3 + $0x38] sm:$0xe]
        %vm1514 = vcmask 1042432
        %vm1515 = vcmask 1046532
        %vm1516 = vmor %vm1514, %vm1515
        %v1517 = vrot.slane %v1490, 5
        %v1518 = vrot.slane %v1517, 4
        %v1519 = vrot.slane %v1156, 5
        %v1520 = vsel %vm1516, %v1518, %v1519
        %v1521 = vrot.slane %v1491, 5
        %v1522 = vrot.slane %v1521, 4
        %v1523 = vrot.slane %v1157, 5
        %v1524 = vsel %vm1516, %v1522, %v1523
        %v1525 = vrot.slane %v1492, 5
        %v1526 = vrot.slane %v1525, 4
        %v1527 = vrot.slane %v1158, 5
        %v1528 = vsel %vm1516, %v1526, %v1527
        %v1529 = vrot.slane %v1493, 5
        %v1530 = vrot.slane %v1529, 4
        %v1531 = vrot.slane %v1159, 5
        %v1532 = vsel %vm1516, %v1530, %v1531
        %v1533 = vrot.slane %v1494, 5
        %v1534 = vrot.slane %v1533, 4
        %v1535 = vrot.slane %v1160, 5
        %v1536 = vsel %vm1516, %v1534, %v1535
        %v1537 = vrot.slane %v1495, 5
        %v1538 = vrot.slane %v1537, 4
        %v1539 = vrot.slane %v1161, 5
        %v1540 = vsel %vm1516, %v1538, %v1539
        %v1541 = vrot.slane %v1496, 5
        %v1542 = vrot.slane %v1541, 4
        %v1543 = vrot.slane %v1162, 5
        %v1544 = vsel %vm1516, %v1542, %v1543
        %v1545 = vrot.slane %v1497, 5
        %v1546 = vrot.slane %v1545, 4
        %v1547 = vrot.slane %v1163, 5
        %v1548 = vsel %vm1516, %v1546, %v1547
        %s1549 = scalar_lea.vmem [#allocation17], 128
        %v1550 = vld [vmem:[%s1549] sm:$0xf]
        %v1551 = vld [vmem:[%s1549 + $0x4] sm:$0xf]
        %v1552 = vld [vmem:[%s1549 + $0x8] sm:$0xf]
        %v1553 = vld [vmem:[%s1549 + $0xc] sm:$0xf]
        %v1554 = vld [vmem:[%s1549 + $0x10] sm:$0xf]
        %v1555 = vld [vmem:[%s1549 + $0x14] sm:$0xf]
        %v1556 = vld [vmem:[%s1549 + $0x18] sm:$0xf]
        %v1557 = vld [vmem:[%s1549 + $0x1c] sm:$0xf]
        %v1558 = vld [vmem:[%s1549 + $0x20] sm:$0xf]
        %v1559 = vld [vmem:[%s1549 + $0x24] sm:$0xf]
        %v1560 = vld [vmem:[%s1549 + $0x28] sm:$0xf]
        %v1561 = vld [vmem:[%s1549 + $0x2c] sm:$0xf]
        %v1562 = vld [vmem:[%s1549 + $0x30] sm:$0xf]
        %v1563 = vld [vmem:[%s1549 + $0x34] sm:$0xf]
        %v1564 = vld [vmem:[%s1549 + $0x38] sm:$0xf]
        %v1565 = vld [vmem:[%s1549 + $0x3c] sm:$0xf]
        %v1566 = vunpack.c.l.b16 %v1520
        %v1567 = vunpack.c.l.b16 %v1524
        %v1568 = vunpack.c.l.b16 %v1528
        %v1569 = vunpack.c.l.b16 %v1532
        %v1570 = vunpack.c.l.b16 %v1536
        %v1571 = vunpack.c.l.b16 %v1540
        %v1572 = vunpack.c.l.b16 %v1544
        %v1573 = vunpack.c.l.b16 %v1548
        %v1574 = vpack.c.b16 %v1567, %v1566
        %v1575 = vpack.c.b16 %v1569, %v1568
        %v1576 = vpack.c.b16 %v1571, %v1570
        %v1577 = vpack.c.b16 %v1573, %v1572
        %v1598 = vunpack.c.l.b16 %v1550
        %v1599 = vunpack.c.l.b16 %v1551
        %v1600 = vunpack.c.l.b16 %v1552
        %v1601 = vunpack.c.l.b16 %v1553
        %v1602 = vunpack.c.l.b16 %v1554
        %v1603 = vunpack.c.l.b16 %v1555
        %v1604 = vunpack.c.l.b16 %v1556
        %v1605 = vunpack.c.l.b16 %v1557
        %v1606 = vunpack.c.l.b16 %v1558
        %v1607 = vunpack.c.l.b16 %v1559
        %v1608 = vunpack.c.l.b16 %v1560
        %v1609 = vunpack.c.l.b16 %v1561
        %v1610 = vunpack.c.l.b16 %v1562
        %v1611 = vunpack.c.l.b16 %v1563
        %v1612 = vunpack.c.l.b16 %v1564
        %v1613 = vunpack.c.l.b16 %v1565
        %v1614 = vpack.c.b16 %v1599, %v1598
        %v1615 = vpack.c.b16 %v1601, %v1600
        %v1616 = vpack.c.b16 %v1603, %v1602
        %v1617 = vpack.c.b16 %v1605, %v1604
        %v1618 = vpack.c.b16 %v1607, %v1606
        %v1619 = vpack.c.b16 %v1609, %v1608
        %v1620 = vpack.c.b16 %v1611, %v1610
        %v1621 = vpack.c.b16 %v1613, %v1612
        %1630 = vmatpush.bf16.msra.mxu0 %v1621
        %1631 = vmatpush.bf16.msra.mxu0 %v1620
        %1632 = vmatpush.bf16.msra.mxu0 %v1619
        %1633 = vmatpush.bf16.msra.mxu0 %v1618
        %1634 = vmatpush.bf16.msra.mxu0 %v1617
        %1635 = vmatpush.bf16.msra.mxu0 %v1616
        %1636 = vmatpush.bf16.msra.mxu0 %v1615
        %1637 = vmatpush.bf16.msra.mxu0 %v1614
        %1638 = vmatmul.bf16.gmra.mxu0 %v1574
        %v1639 = vpop.f32.mrf.mxu0
        %v1640 = vadd.f32 0.0, %v1639
        %v1641 = vpop.f32.mrf.mxu0
        %v1642 = vadd.f32 0.0, %v1641
        %1643 = vmatmul.bf16.gmra.mxu0 %v1575
        %v1644 = vpop.f32.mrf.mxu0
        %v1645 = vadd.f32 0.0, %v1644
        %v1646 = vpop.f32.mrf.mxu0
        %v1647 = vadd.f32 0.0, %v1646
        %1648 = vmatmul.bf16.gmra.mxu0 %v1576
        %v1649 = vpop.f32.mrf.mxu0
        %v1650 = vadd.f32 0.0, %v1649
        %v1651 = vpop.f32.mrf.mxu0
        %v1652 = vadd.f32 0.0, %v1651
        %1653 = vmatmul.bf16.gmra.mxu0 %v1577
        %v1654 = vpop.f32.mrf.mxu0
        %v1655 = vadd.f32 0.0, %v1654
        %v1656 = vpop.f32.mrf.mxu0
        %v1657 = vadd.f32 0.0, %v1656
        %1658 = vdwg.mxu0
        %v1659 = vadd.f32 %v1471, %v1640
        %v1660 = vadd.f32 %v1473, %v1642
        %v1661 = vadd.f32 %v1476, %v1645
        %v1662 = vadd.f32 %v1478, %v1647
        %v1663 = vadd.f32 %v1481, %v1650
        %v1664 = vadd.f32 %v1483, %v1652
        %v1665 = vadd.f32 %v1486, %v1655
        %v1666 = vadd.f32 %v1488, %v1657
        %v1667 = vld [vmem:[%s1081] sm:$0xf]
        %v1668 = vld [vmem:[%s1081 + $0x8] sm:$0xf]
        %v1669 = vld [vmem:[%s1081 + $0x10] sm:$0xf]
        %v1670 = vld [vmem:[%s1081 + $0x18] sm:$0xf]
        %v1671 = vld [vmem:[%s1081 + $0x20] sm:$0xf]
        %v1672 = vld [vmem:[%s1081 + $0x28] sm:$0xf]
        %v1673 = vld [vmem:[%s1081 + $0x30] sm:$0xf]
        %v1674 = vld [vmem:[%s1081 + $0x38] sm:$0xf]
        %s1675 = scalar_lea.vmem [#allocation17], 192
        %v1676 = vld [vmem:[%s1675] sm:$0xf]
        %v1677 = vld [vmem:[%s1675 + $0x4] sm:$0xf]
        %v1678 = vld [vmem:[%s1675 + $0x8] sm:$0xf]
        %v1679 = vld [vmem:[%s1675 + $0xc] sm:$0xf]
        %v1680 = vld [vmem:[%s1675 + $0x10] sm:$0xf]
        %v1681 = vld [vmem:[%s1675 + $0x14] sm:$0xf]
        %v1682 = vld [vmem:[%s1675 + $0x18] sm:$0xf]
        %v1683 = vld [vmem:[%s1675 + $0x1c] sm:$0xf]
        %v1684 = vld [vmem:[%s1675 + $0x20] sm:$0xf]
        %v1685 = vld [vmem:[%s1675 + $0x24] sm:$0xf]
        %v1686 = vld [vmem:[%s1675 + $0x28] sm:$0xf]
        %v1687 = vld [vmem:[%s1675 + $0x2c] sm:$0xf]
        %v1688 = vld [vmem:[%s1675 + $0x30] sm:$0xf]
        %v1689 = vld [vmem:[%s1675 + $0x34] sm:$0xf]
        %v1690 = vld [vmem:[%s1675 + $0x38] sm:$0xf]
        %v1691 = vld [vmem:[%s1675 + $0x3c] sm:$0xf]
        %v1700 = vunpack.c.l.b16 %v1667
        %v1701 = vunpack.c.l.b16 %v1668
        %v1702 = vunpack.c.l.b16 %v1669
        %v1703 = vunpack.c.l.b16 %v1670
        %v1704 = vunpack.c.l.b16 %v1671
        %v1705 = vunpack.c.l.b16 %v1672
        %v1706 = vunpack.c.l.b16 %v1673
        %v1707 = vunpack.c.l.b16 %v1674
        %v1708 = vpack.c.b16 %v1701, %v1700
        %v1709 = vpack.c.b16 %v1703, %v1702
        %v1710 = vpack.c.b16 %v1705, %v1704
        %v1711 = vpack.c.b16 %v1707, %v1706
        %v1732 = vunpack.c.l.b16 %v1676
        %v1733 = vunpack.c.l.b16 %v1677
        %v1734 = vunpack.c.l.b16 %v1678
        %v1735 = vunpack.c.l.b16 %v1679
        %v1736 = vunpack.c.l.b16 %v1680
        %v1737 = vunpack.c.l.b16 %v1681
        %v1738 = vunpack.c.l.b16 %v1682
        %v1739 = vunpack.c.l.b16 %v1683
        %v1740 = vunpack.c.l.b16 %v1684
        %v1741 = vunpack.c.l.b16 %v1685
        %v1742 = vunpack.c.l.b16 %v1686
        %v1743 = vunpack.c.l.b16 %v1687
        %v1744 = vunpack.c.l.b16 %v1688
        %v1745 = vunpack.c.l.b16 %v1689
        %v1746 = vunpack.c.l.b16 %v1690
        %v1747 = vunpack.c.l.b16 %v1691
        %v1748 = vpack.c.b16 %v1733, %v1732
        %v1749 = vpack.c.b16 %v1735, %v1734
        %v1750 = vpack.c.b16 %v1737, %v1736
        %v1751 = vpack.c.b16 %v1739, %v1738
        %v1752 = vpack.c.b16 %v1741, %v1740
        %v1753 = vpack.c.b16 %v1743, %v1742
        %v1754 = vpack.c.b16 %v1745, %v1744
        %v1755 = vpack.c.b16 %v1747, %v1746
        %1764 = vmatpush.bf16.msra.mxu0 %v1755
        %1765 = vmatpush.bf16.msra.mxu0 %v1754
        %1766 = vmatpush.bf16.msra.mxu0 %v1753
        %1767 = vmatpush.bf16.msra.mxu0 %v1752
        %1768 = vmatpush.bf16.msra.mxu0 %v1751
        %1769 = vmatpush.bf16.msra.mxu0 %v1750
        %1770 = vmatpush.bf16.msra.mxu0 %v1749
        %1771 = vmatpush.bf16.msra.mxu0 %v1748
        %1772 = vmatmul.bf16.gmra.mxu0 %v1708
        %v1773 = vpop.f32.mrf.mxu0
        %v1774 = vadd.f32 0.0, %v1773
        %v1775 = vpop.f32.mrf.mxu0
        %v1776 = vadd.f32 0.0, %v1775
        %1777 = vmatmul.bf16.gmra.mxu0 %v1709
        %v1778 = vpop.f32.mrf.mxu0
        %v1779 = vadd.f32 0.0, %v1778
        %v1780 = vpop.f32.mrf.mxu0
        %v1781 = vadd.f32 0.0, %v1780
        %1782 = vmatmul.bf16.gmra.mxu0 %v1710
        %v1783 = vpop.f32.mrf.mxu0
        %v1784 = vadd.f32 0.0, %v1783
        %v1785 = vpop.f32.mrf.mxu0
        %v1786 = vadd.f32 0.0, %v1785
        %1787 = vmatmul.bf16.gmra.mxu0 %v1711
        %v1788 = vpop.f32.mrf.mxu0
        %v1789 = vadd.f32 0.0, %v1788
        %v1790 = vpop.f32.mrf.mxu0
        %v1791 = vadd.f32 0.0, %v1790
        %1792 = vdwg.mxu0
        %v1793 = vadd.f32 %v1659, %v1774
        %v1794 = vadd.f32 %v1660, %v1776
        %v1795 = vadd.f32 %v1661, %v1779
        %v1796 = vadd.f32 %v1662, %v1781
        %v1797 = vadd.f32 %v1663, %v1784
        %v1798 = vadd.f32 %v1664, %v1786
        %v1799 = vadd.f32 %v1665, %v1789
        %v1800 = vadd.f32 %v1666, %v1791
        %v1801 = vld [vmem:[%s1081] sm:$0xf]
        %v1802 = vld [vmem:[%s1081 + $0x4] sm:$0x1]
        %v1803 = vld [vmem:[%s1081 + $0x8] sm:$0xf]
        %v1804 = vld [vmem:[%s1081 + $0xc] sm:$0x1]
        %v1805 = vld [vmem:[%s1081 + $0x10] sm:$0xf]
        %v1806 = vld [vmem:[%s1081 + $0x14] sm:$0x1]
        %v1807 = vld [vmem:[%s1081 + $0x18] sm:$0xf]
        %v1808 = vld [vmem:[%s1081 + $0x1c] sm:$0x1]
        %v1809 = vld [vmem:[%s1081 + $0x20] sm:$0xf]
        %v1810 = vld [vmem:[%s1081 + $0x24] sm:$0x1]
        %v1811 = vld [vmem:[%s1081 + $0x28] sm:$0xf]
        %v1812 = vld [vmem:[%s1081 + $0x2c] sm:$0x1]
        %v1813 = vld [vmem:[%s1081 + $0x30] sm:$0xf]
        %v1814 = vld [vmem:[%s1081 + $0x34] sm:$0x1]
        %v1815 = vld [vmem:[%s1081 + $0x38] sm:$0xf]
        %v1816 = vld [vmem:[%s1081 + $0x3c] sm:$0x1]
        %v1818 = vshrl.u32 %v1801, 16
        %v1820 = vrot.slane %v1818, 4
        %v1821 = vshll.u32 %v1801, 16
        %v1823 = vrot.slane %v1821, 5
        %v1824 = vor.u32 %v1820, %v1823
        %v1825 = vrot.slane %v1824, 4
        %v1827 = vshll.u32 %v1802, 16
        %v1829 = vrot.slane %v1827, 5
        %v1830 = vsel %vm1166, %v1825, %v1829
        %v1832 = vshrl.u32 %v1803, 16
        %v1834 = vrot.slane %v1832, 4
        %v1835 = vshll.u32 %v1803, 16
        %v1837 = vrot.slane %v1835, 5
        %v1838 = vor.u32 %v1834, %v1837
        %v1839 = vrot.slane %v1838, 4
        %v1841 = vshll.u32 %v1804, 16
        %v1843 = vrot.slane %v1841, 5
        %v1844 = vsel %vm1166, %v1839, %v1843
        %v1846 = vshrl.u32 %v1805, 16
        %v1848 = vrot.slane %v1846, 4
        %v1849 = vshll.u32 %v1805, 16
        %v1851 = vrot.slane %v1849, 5
        %v1852 = vor.u32 %v1848, %v1851
        %v1853 = vrot.slane %v1852, 4
        %v1855 = vshll.u32 %v1806, 16
        %v1857 = vrot.slane %v1855, 5
        %v1858 = vsel %vm1166, %v1853, %v1857
        %v1860 = vshrl.u32 %v1807, 16
        %v1862 = vrot.slane %v1860, 4
        %v1863 = vshll.u32 %v1807, 16
        %v1865 = vrot.slane %v1863, 5
        %v1866 = vor.u32 %v1862, %v1865
        %v1867 = vrot.slane %v1866, 4
        %v1869 = vshll.u32 %v1808, 16
        %v1871 = vrot.slane %v1869, 5
        %v1872 = vsel %vm1166, %v1867, %v1871
        %v1874 = vshrl.u32 %v1809, 16
        %v1876 = vrot.slane %v1874, 4
        %v1877 = vshll.u32 %v1809, 16
        %v1879 = vrot.slane %v1877, 5
        %v1880 = vor.u32 %v1876, %v1879
        %v1881 = vrot.slane %v1880, 4
        %v1883 = vshll.u32 %v1810, 16
        %v1885 = vrot.slane %v1883, 5
        %v1886 = vsel %vm1166, %v1881, %v1885
        %v1888 = vshrl.u32 %v1811, 16
        %v1890 = vrot.slane %v1888, 4
        %v1891 = vshll.u32 %v1811, 16
        %v1893 = vrot.slane %v1891, 5
        %v1894 = vor.u32 %v1890, %v1893
        %v1895 = vrot.slane %v1894, 4
        %v1897 = vshll.u32 %v1812, 16
        %v1899 = vrot.slane %v1897, 5
        %v1900 = vsel %vm1166, %v1895, %v1899
        %v1902 = vshrl.u32 %v1813, 16
        %v1904 = vrot.slane %v1902, 4
        %v1905 = vshll.u32 %v1813, 16
        %v1907 = vrot.slane %v1905, 5
        %v1908 = vor.u32 %v1904, %v1907
        %v1909 = vrot.slane %v1908, 4
        %v1911 = vshll.u32 %v1814, 16
        %v1913 = vrot.slane %v1911, 5
        %v1914 = vsel %vm1166, %v1909, %v1913
        %v1916 = vshrl.u32 %v1815, 16
        %v1918 = vrot.slane %v1916, 4
        %v1919 = vshll.u32 %v1815, 16
        %v1921 = vrot.slane %v1919, 5
        %v1922 = vor.u32 %v1918, %v1921
        %v1923 = vrot.slane %v1922, 4
        %v1925 = vshll.u32 %v1816, 16
        %v1927 = vrot.slane %v1925, 5
        %v1928 = vsel %vm1166, %v1923, %v1927
        %s1929 = scalar_lea.vmem [#allocation17], 256
        %v1930 = vld [vmem:[%s1929] sm:$0xf]
        %v1931 = vld [vmem:[%s1929 + $0x4] sm:$0xf]
        %v1932 = vld [vmem:[%s1929 + $0x8] sm:$0xf]
        %v1933 = vld [vmem:[%s1929 + $0xc] sm:$0xf]
        %v1934 = vld [vmem:[%s1929 + $0x10] sm:$0xf]
        %v1935 = vld [vmem:[%s1929 + $0x14] sm:$0xf]
        %v1936 = vld [vmem:[%s1929 + $0x18] sm:$0xf]
        %v1937 = vld [vmem:[%s1929 + $0x1c] sm:$0xf]
        %v1938 = vld [vmem:[%s1929 + $0x20] sm:$0xf]
        %v1939 = vld [vmem:[%s1929 + $0x24] sm:$0xf]
        %v1940 = vld [vmem:[%s1929 + $0x28] sm:$0xf]
        %v1941 = vld [vmem:[%s1929 + $0x2c] sm:$0xf]
        %v1942 = vld [vmem:[%s1929 + $0x30] sm:$0xf]
        %v1943 = vld [vmem:[%s1929 + $0x34] sm:$0xf]
        %v1944 = vld [vmem:[%s1929 + $0x38] sm:$0xf]
        %v1945 = vld [vmem:[%s1929 + $0x3c] sm:$0xf]
        %v1946 = vunpack.c.l.b16 %v1830
        %v1947 = vunpack.c.l.b16 %v1844
        %v1948 = vunpack.c.l.b16 %v1858
        %v1949 = vunpack.c.l.b16 %v1872
        %v1950 = vunpack.c.l.b16 %v1886
        %v1951 = vunpack.c.l.b16 %v1900
        %v1952 = vunpack.c.l.b16 %v1914
        %v1953 = vunpack.c.l.b16 %v1928
        %v1954 = vpack.c.b16 %v1947, %v1946
        %v1955 = vpack.c.b16 %v1949, %v1948
        %v1956 = vpack.c.b16 %v1951, %v1950
        %v1957 = vpack.c.b16 %v1953, %v1952
        %v1978 = vunpack.c.l.b16 %v1930
        %v1979 = vunpack.c.l.b16 %v1931
        %v1980 = vunpack.c.l.b16 %v1932
        %v1981 = vunpack.c.l.b16 %v1933
        %v1982 = vunpack.c.l.b16 %v1934
        %v1983 = vunpack.c.l.b16 %v1935
        %v1984 = vunpack.c.l.b16 %v1936
        %v1985 = vunpack.c.l.b16 %v1937
        %v1986 = vunpack.c.l.b16 %v1938
        %v1987 = vunpack.c.l.b16 %v1939
        %v1988 = vunpack.c.l.b16 %v1940
        %v1989 = vunpack.c.l.b16 %v1941
        %v1990 = vunpack.c.l.b16 %v1942
        %v1991 = vunpack.c.l.b16 %v1943
        %v1992 = vunpack.c.l.b16 %v1944
        %v1993 = vunpack.c.l.b16 %v1945
        %v1994 = vpack.c.b16 %v1979, %v1978
        %v1995 = vpack.c.b16 %v1981, %v1980
        %v1996 = vpack.c.b16 %v1983, %v1982
        %v1997 = vpack.c.b16 %v1985, %v1984
        %v1998 = vpack.c.b16 %v1987, %v1986
        %v1999 = vpack.c.b16 %v1989, %v1988
        %v2000 = vpack.c.b16 %v1991, %v1990
        %v2001 = vpack.c.b16 %v1993, %v1992
        %2010 = vmatpush.bf16.msra.mxu0 %v2001
        %2011 = vmatpush.bf16.msra.mxu0 %v2000
        %2012 = vmatpush.bf16.msra.mxu0 %v1999
        %2013 = vmatpush.bf16.msra.mxu0 %v1998
        %2014 = vmatpush.bf16.msra.mxu0 %v1997
        %2015 = vmatpush.bf16.msra.mxu0 %v1996
        %2016 = vmatpush.bf16.msra.mxu0 %v1995
        %2017 = vmatpush.bf16.msra.mxu0 %v1994
        %2018 = vmatmul.bf16.gmra.mxu0 %v1954
        %v2019 = vpop.f32.mrf.mxu0
        %v2020 = vadd.f32 0.0, %v2019
        %v2021 = vpop.f32.mrf.mxu0
        %v2022 = vadd.f32 0.0, %v2021
        %2023 = vmatmul.bf16.gmra.mxu0 %v1955
        %v2024 = vpop.f32.mrf.mxu0
        %v2025 = vadd.f32 0.0, %v2024
        %v2026 = vpop.f32.mrf.mxu0
        %v2027 = vadd.f32 0.0, %v2026
        %2028 = vmatmul.bf16.gmra.mxu0 %v1956
        %v2029 = vpop.f32.mrf.mxu0
        %v2030 = vadd.f32 0.0, %v2029
        %v2031 = vpop.f32.mrf.mxu0
        %v2032 = vadd.f32 0.0, %v2031
        %2033 = vmatmul.bf16.gmra.mxu0 %v1957
        %v2034 = vpop.f32.mrf.mxu0
        %v2035 = vadd.f32 0.0, %v2034
        %v2036 = vpop.f32.mrf.mxu0
        %v2037 = vadd.f32 0.0, %v2036
        %2038 = vdwg.mxu0
        %v2039 = vadd.f32 %v1793, %v2020
        %v2040 = vadd.f32 %v1794, %v2022
        %v2041 = vadd.f32 %v1795, %v2025
        %v2042 = vadd.f32 %v1796, %v2027
        %v2043 = vadd.f32 %v1797, %v2030
        %v2044 = vadd.f32 %v1798, %v2032
        %v2045 = vadd.f32 %v1799, %v2035
        %v2046 = vadd.f32 %v1800, %v2037
        %v2047 = vld [vmem:[%s1081] sm:$0xe]
        %v2048 = vld [vmem:[%s1081 + $0x8] sm:$0xe]
        %v2049 = vld [vmem:[%s1081 + $0x10] sm:$0xe]
        %v2050 = vld [vmem:[%s1081 + $0x18] sm:$0xe]
        %v2051 = vld [vmem:[%s1081 + $0x20] sm:$0xe]
        %v2052 = vld [vmem:[%s1081 + $0x28] sm:$0xe]
        %v2053 = vld [vmem:[%s1081 + $0x30] sm:$0xe]
        %v2054 = vld [vmem:[%s1081 + $0x38] sm:$0xe]
        %v2071 = vrot.slane %v2047, 5
        %v2072 = vrot.slane %v2071, 4
        %v2073 = vrot.slane %v1802, 5
        %v2074 = vsel %vm1516, %v2072, %v2073
        %v2075 = vrot.slane %v2048, 5
        %v2076 = vrot.slane %v2075, 4
        %v2077 = vrot.slane %v1804, 5
        %v2078 = vsel %vm1516, %v2076, %v2077
        %v2079 = vrot.slane %v2049, 5
        %v2080 = vrot.slane %v2079, 4
        %v2081 = vrot.slane %v1806, 5
        %v2082 = vsel %vm1516, %v2080, %v2081
        %v2083 = vrot.slane %v2050, 5
        %v2084 = vrot.slane %v2083, 4
        %v2085 = vrot.slane %v1808, 5
        %v2086 = vsel %vm1516, %v2084, %v2085
        %v2087 = vrot.slane %v2051, 5
        %v2088 = vrot.slane %v2087, 4
        %v2089 = vrot.slane %v1810, 5
        %v2090 = vsel %vm1516, %v2088, %v2089
        %v2091 = vrot.slane %v2052, 5
        %v2092 = vrot.slane %v2091, 4
        %v2093 = vrot.slane %v1812, 5
        %v2094 = vsel %vm1516, %v2092, %v2093
        %v2095 = vrot.slane %v2053, 5
        %v2096 = vrot.slane %v2095, 4
        %v2097 = vrot.slane %v1814, 5
        %v2098 = vsel %vm1516, %v2096, %v2097
        %v2099 = vrot.slane %v2054, 5
        %v2100 = vrot.slane %v2099, 4
        %v2101 = vrot.slane %v1816, 5
        %v2102 = vsel %vm1516, %v2100, %v2101
        %s2103 = scalar_lea.vmem [#allocation17], 320
        %v2104 = vld [vmem:[%s2103] sm:$0xf]
        %v2105 = vld [vmem:[%s2103 + $0x4] sm:$0xf]
        %v2106 = vld [vmem:[%s2103 + $0x8] sm:$0xf]
        %v2107 = vld [vmem:[%s2103 + $0xc] sm:$0xf]
        %v2108 = vld [vmem:[%s2103 + $0x10] sm:$0xf]
        %v2109 = vld [vmem:[%s2103 + $0x14] sm:$0xf]
        %v2110 = vld [vmem:[%s2103 + $0x18] sm:$0xf]
        %v2111 = vld [vmem:[%s2103 + $0x1c] sm:$0xf]
        %v2112 = vld [vmem:[%s2103 + $0x20] sm:$0xf]
        %v2113 = vld [vmem:[%s2103 + $0x24] sm:$0xf]
        %v2114 = vld [vmem:[%s2103 + $0x28] sm:$0xf]
        %v2115 = vld [vmem:[%s2103 + $0x2c] sm:$0xf]
        %v2116 = vld [vmem:[%s2103 + $0x30] sm:$0xf]
        %v2117 = vld [vmem:[%s2103 + $0x34] sm:$0xf]
        %v2118 = vld [vmem:[%s2103 + $0x38] sm:$0xf]
        %v2119 = vld [vmem:[%s2103 + $0x3c] sm:$0xf]
        %v2120 = vunpack.c.l.b16 %v2074
        %v2121 = vunpack.c.l.b16 %v2078
        %v2122 = vunpack.c.l.b16 %v2082
        %v2123 = vunpack.c.l.b16 %v2086
        %v2124 = vunpack.c.l.b16 %v2090
        %v2125 = vunpack.c.l.b16 %v2094
        %v2126 = vunpack.c.l.b16 %v2098
        %v2127 = vunpack.c.l.b16 %v2102
        %v2128 = vpack.c.b16 %v2121, %v2120
        %v2129 = vpack.c.b16 %v2123, %v2122
        %v2130 = vpack.c.b16 %v2125, %v2124
        %v2131 = vpack.c.b16 %v2127, %v2126
        %v2152 = vunpack.c.l.b16 %v2104
        %v2153 = vunpack.c.l.b16 %v2105
        %v2154 = vunpack.c.l.b16 %v2106
        %v2155 = vunpack.c.l.b16 %v2107
        %v2156 = vunpack.c.l.b16 %v2108
        %v2157 = vunpack.c.l.b16 %v2109
        %v2158 = vunpack.c.l.b16 %v2110
        %v2159 = vunpack.c.l.b16 %v2111
        %v2160 = vunpack.c.l.b16 %v2112
        %v2161 = vunpack.c.l.b16 %v2113
        %v2162 = vunpack.c.l.b16 %v2114
        %v2163 = vunpack.c.l.b16 %v2115
        %v2164 = vunpack.c.l.b16 %v2116
        %v2165 = vunpack.c.l.b16 %v2117
        %v2166 = vunpack.c.l.b16 %v2118
        %v2167 = vunpack.c.l.b16 %v2119
        %v2168 = vpack.c.b16 %v2153, %v2152
        %v2169 = vpack.c.b16 %v2155, %v2154
        %v2170 = vpack.c.b16 %v2157, %v2156
        %v2171 = vpack.c.b16 %v2159, %v2158
        %v2172 = vpack.c.b16 %v2161, %v2160
        %v2173 = vpack.c.b16 %v2163, %v2162
        %v2174 = vpack.c.b16 %v2165, %v2164
        %v2175 = vpack.c.b16 %v2167, %v2166
        %2184 = vmatpush.bf16.msra.mxu0 %v2175
        %2185 = vmatpush.bf16.msra.mxu0 %v2174
        %2186 = vmatpush.bf16.msra.mxu0 %v2173
        %2187 = vmatpush.bf16.msra.mxu0 %v2172
        %2188 = vmatpush.bf16.msra.mxu0 %v2171
        %2189 = vmatpush.bf16.msra.mxu0 %v2170
        %2190 = vmatpush.bf16.msra.mxu0 %v2169
        %2191 = vmatpush.bf16.msra.mxu0 %v2168
        %2192 = vmatmul.bf16.gmra.mxu0 %v2128
        %v2193 = vpop.f32.mrf.mxu0
        %v2194 = vadd.f32 0.0, %v2193
        %v2195 = vpop.f32.mrf.mxu0
        %v2196 = vadd.f32 0.0, %v2195
        %2197 = vmatmul.bf16.gmra.mxu0 %v2129
        %v2198 = vpop.f32.mrf.mxu0
        %v2199 = vadd.f32 0.0, %v2198
        %v2200 = vpop.f32.mrf.mxu0
        %v2201 = vadd.f32 0.0, %v2200
        %2202 = vmatmul.bf16.gmra.mxu0 %v2130
        %v2203 = vpop.f32.mrf.mxu0
        %v2204 = vadd.f32 0.0, %v2203
        %v2205 = vpop.f32.mrf.mxu0
        %v2206 = vadd.f32 0.0, %v2205
        %2207 = vmatmul.bf16.gmra.mxu0 %v2131
        %v2208 = vpop.f32.mrf.mxu0
        %v2209 = vadd.f32 0.0, %v2208
        %v2210 = vpop.f32.mrf.mxu0
        %v2211 = vadd.f32 0.0, %v2210
        %2212 = vdwg.mxu0
        %v2213 = vadd.f32 %v2039, %v2194
        %v2214 = vadd.f32 %v2040, %v2196
        %v2215 = vadd.f32 %v2041, %v2199
        %v2216 = vadd.f32 %v2042, %v2201
        %v2217 = vadd.f32 %v2043, %v2204
        %v2218 = vadd.f32 %v2044, %v2206
        %v2219 = vadd.f32 %v2045, %v2209
        %v2220 = vadd.f32 %v2046, %v2211
        %s2221 = scalar_lea.vmem [#allocation3], 16
        %v2222 = vld [vmem:[%s2221] sm:$0xf]
        %v2223 = vld [vmem:[%s2221 + $0x8] sm:$0xf]
        %v2224 = vld [vmem:[%s2221 + $0x10] sm:$0xf]
        %v2225 = vld [vmem:[%s2221 + $0x18] sm:$0xf]
        %v2226 = vld [vmem:[%s2221 + $0x20] sm:$0xf]
        %v2227 = vld [vmem:[%s2221 + $0x28] sm:$0xf]
        %v2228 = vld [vmem:[%s2221 + $0x30] sm:$0xf]
        %v2229 = vld [vmem:[%s2221 + $0x38] sm:$0xf]
        %s2230 = scalar_lea.vmem [#allocation17], 384
        %v2231 = vld [vmem:[%s2230] sm:$0xf]
        %v2232 = vld [vmem:[%s2230 + $0x4] sm:$0xf]
        %v2233 = vld [vmem:[%s2230 + $0x8] sm:$0xf]
        %v2234 = vld [vmem:[%s2230 + $0xc] sm:$0xf]
        %v2235 = vld [vmem:[%s2230 + $0x10] sm:$0xf]
        %v2236 = vld [vmem:[%s2230 + $0x14] sm:$0xf]
        %v2237 = vld [vmem:[%s2230 + $0x18] sm:$0xf]
        %v2238 = vld [vmem:[%s2230 + $0x1c] sm:$0xf]
        %v2239 = vld [vmem:[%s2230 + $0x20] sm:$0xf]
        %v2240 = vld [vmem:[%s2230 + $0x24] sm:$0xf]
        %v2241 = vld [vmem:[%s2230 + $0x28] sm:$0xf]
        %v2242 = vld [vmem:[%s2230 + $0x2c] sm:$0xf]
        %v2243 = vld [vmem:[%s2230 + $0x30] sm:$0xf]
        %v2244 = vld [vmem:[%s2230 + $0x34] sm:$0xf]
        %v2245 = vld [vmem:[%s2230 + $0x38] sm:$0xf]
        %v2246 = vld [vmem:[%s2230 + $0x3c] sm:$0xf]
        %v2255 = vunpack.c.l.b16 %v2222
        %v2256 = vunpack.c.l.b16 %v2223
        %v2257 = vunpack.c.l.b16 %v2224
        %v2258 = vunpack.c.l.b16 %v2225
        %v2259 = vunpack.c.l.b16 %v2226
        %v2260 = vunpack.c.l.b16 %v2227
        %v2261 = vunpack.c.l.b16 %v2228
        %v2262 = vunpack.c.l.b16 %v2229
        %v2263 = vpack.c.b16 %v2256, %v2255
        %v2264 = vpack.c.b16 %v2258, %v2257
        %v2265 = vpack.c.b16 %v2260, %v2259
        %v2266 = vpack.c.b16 %v2262, %v2261
        %v2287 = vunpack.c.l.b16 %v2231
        %v2288 = vunpack.c.l.b16 %v2232
        %v2289 = vunpack.c.l.b16 %v2233
        %v2290 = vunpack.c.l.b16 %v2234
        %v2291 = vunpack.c.l.b16 %v2235
        %v2292 = vunpack.c.l.b16 %v2236
        %v2293 = vunpack.c.l.b16 %v2237
        %v2294 = vunpack.c.l.b16 %v2238
        %v2295 = vunpack.c.l.b16 %v2239
        %v2296 = vunpack.c.l.b16 %v2240
        %v2297 = vunpack.c.l.b16 %v2241
        %v2298 = vunpack.c.l.b16 %v2242
        %v2299 = vunpack.c.l.b16 %v2243
        %v2300 = vunpack.c.l.b16 %v2244
        %v2301 = vunpack.c.l.b16 %v2245
        %v2302 = vunpack.c.l.b16 %v2246
        %v2303 = vpack.c.b16 %v2288, %v2287
        %v2304 = vpack.c.b16 %v2290, %v2289
        %v2305 = vpack.c.b16 %v2292, %v2291
        %v2306 = vpack.c.b16 %v2294, %v2293
        %v2307 = vpack.c.b16 %v2296, %v2295
        %v2308 = vpack.c.b16 %v2298, %v2297
        %v2309 = vpack.c.b16 %v2300, %v2299
        %v2310 = vpack.c.b16 %v2302, %v2301
        %2319 = vmatpush.bf16.msra.mxu0 %v2310
        %2320 = vmatpush.bf16.msra.mxu0 %v2309
        %2321 = vmatpush.bf16.msra.mxu0 %v2308
        %2322 = vmatpush.bf16.msra.mxu0 %v2307
        %2323 = vmatpush.bf16.msra.mxu0 %v2306
        %2324 = vmatpush.bf16.msra.mxu0 %v2305
        %2325 = vmatpush.bf16.msra.mxu0 %v2304
        %2326 = vmatpush.bf16.msra.mxu0 %v2303
        %2327 = vmatmul.bf16.gmra.mxu0 %v2263
        %v2328 = vpop.f32.mrf.mxu0
        %v2329 = vadd.f32 0.0, %v2328
        %v2330 = vpop.f32.mrf.mxu0
        %v2331 = vadd.f32 0.0, %v2330
        %2332 = vmatmul.bf16.gmra.mxu0 %v2264
        %v2333 = vpop.f32.mrf.mxu0
        %v2334 = vadd.f32 0.0, %v2333
        %v2335 = vpop.f32.mrf.mxu0
        %v2336 = vadd.f32 0.0, %v2335
        %2337 = vmatmul.bf16.gmra.mxu0 %v2265
        %v2338 = vpop.f32.mrf.mxu0
        %v2339 = vadd.f32 0.0, %v2338
        %v2340 = vpop.f32.mrf.mxu0
        %v2341 = vadd.f32 0.0, %v2340
        %2342 = vmatmul.bf16.gmra.mxu0 %v2266
        %v2343 = vpop.f32.mrf.mxu0
        %v2344 = vadd.f32 0.0, %v2343
        %v2345 = vpop.f32.mrf.mxu0
        %v2346 = vadd.f32 0.0, %v2345
        %2347 = vdwg.mxu0
        %v2348 = vadd.f32 %v2213, %v2329
        %v2349 = vadd.f32 %v2214, %v2331
        %v2350 = vadd.f32 %v2215, %v2334
        %v2351 = vadd.f32 %v2216, %v2336
        %v2352 = vadd.f32 %v2217, %v2339
        %v2353 = vadd.f32 %v2218, %v2341
        %v2354 = vadd.f32 %v2219, %v2344
        %v2355 = vadd.f32 %v2220, %v2346
        %v2356 = vld [vmem:[%s2221] sm:$0xf]
        %v2357 = vld [vmem:[%s2221 + $0x4] sm:$0x1]
        %v2358 = vld [vmem:[%s2221 + $0x8] sm:$0xf]
        %v2359 = vld [vmem:[%s2221 + $0xc] sm:$0x1]
        %v2360 = vld [vmem:[%s2221 + $0x10] sm:$0xf]
        %v2361 = vld [vmem:[%s2221 + $0x14] sm:$0x1]
        %v2362 = vld [vmem:[%s2221 + $0x18] sm:$0xf]
        %v2363 = vld [vmem:[%s2221 + $0x1c] sm:$0x1]
        %v2364 = vld [vmem:[%s2221 + $0x20] sm:$0xf]
        %v2365 = vld [vmem:[%s2221 + $0x24] sm:$0x1]
        %v2366 = vld [vmem:[%s2221 + $0x28] sm:$0xf]
        %v2367 = vld [vmem:[%s2221 + $0x2c] sm:$0x1]
        %v2368 = vld [vmem:[%s2221 + $0x30] sm:$0xf]
        %v2369 = vld [vmem:[%s2221 + $0x34] sm:$0x1]
        %v2370 = vld [vmem:[%s2221 + $0x38] sm:$0xf]
        %v2371 = vld [vmem:[%s2221 + $0x3c] sm:$0x1]
        %v2373 = vshrl.u32 %v2356, 16
        %v2375 = vrot.slane %v2373, 4
        %v2376 = vshll.u32 %v2356, 16
        %v2378 = vrot.slane %v2376, 5
        %v2379 = vor.u32 %v2375, %v2378
        %v2380 = vrot.slane %v2379, 4
        %v2382 = vshll.u32 %v2357, 16
        %v2384 = vrot.slane %v2382, 5
        %v2385 = vsel %vm1166, %v2380, %v2384
        %v2387 = vshrl.u32 %v2358, 16
        %v2389 = vrot.slane %v2387, 4
        %v2390 = vshll.u32 %v2358, 16
        %v2392 = vrot.slane %v2390, 5
        %v2393 = vor.u32 %v2389, %v2392
        %v2394 = vrot.slane %v2393, 4
        %v2396 = vshll.u32 %v2359, 16
        %v2398 = vrot.slane %v2396, 5
        %v2399 = vsel %vm1166, %v2394, %v2398
        %v2401 = vshrl.u32 %v2360, 16
        %v2403 = vrot.slane %v2401, 4
        %v2404 = vshll.u32 %v2360, 16
        %v2406 = vrot.slane %v2404, 5
        %v2407 = vor.u32 %v2403, %v2406
        %v2408 = vrot.slane %v2407, 4
        %v2410 = vshll.u32 %v2361, 16
        %v2412 = vrot.slane %v2410, 5
        %v2413 = vsel %vm1166, %v2408, %v2412
        %v2415 = vshrl.u32 %v2362, 16
        %v2417 = vrot.slane %v2415, 4
        %v2418 = vshll.u32 %v2362, 16
        %v2420 = vrot.slane %v2418, 5
        %v2421 = vor.u32 %v2417, %v2420
        %v2422 = vrot.slane %v2421, 4
        %v2424 = vshll.u32 %v2363, 16
        %v2426 = vrot.slane %v2424, 5
        %v2427 = vsel %vm1166, %v2422, %v2426
        %v2429 = vshrl.u32 %v2364, 16
        %v2431 = vrot.slane %v2429, 4
        %v2432 = vshll.u32 %v2364, 16
        %v2434 = vrot.slane %v2432, 5
        %v2435 = vor.u32 %v2431, %v2434
        %v2436 = vrot.slane %v2435, 4
        %v2438 = vshll.u32 %v2365, 16
        %v2440 = vrot.slane %v2438, 5
        %v2441 = vsel %vm1166, %v2436, %v2440
        %v2443 = vshrl.u32 %v2366, 16
        %v2445 = vrot.slane %v2443, 4
        %v2446 = vshll.u32 %v2366, 16
        %v2448 = vrot.slane %v2446, 5
        %v2449 = vor.u32 %v2445, %v2448
        %v2450 = vrot.slane %v2449, 4
        %v2452 = vshll.u32 %v2367, 16
        %v2454 = vrot.slane %v2452, 5
        %v2455 = vsel %vm1166, %v2450, %v2454
        %v2457 = vshrl.u32 %v2368, 16
        %v2459 = vrot.slane %v2457, 4
        %v2460 = vshll.u32 %v2368, 16
        %v2462 = vrot.slane %v2460, 5
        %v2463 = vor.u32 %v2459, %v2462
        %v2464 = vrot.slane %v2463, 4
        %v2466 = vshll.u32 %v2369, 16
        %v2468 = vrot.slane %v2466, 5
        %v2469 = vsel %vm1166, %v2464, %v2468
        %v2471 = vshrl.u32 %v2370, 16
        %v2473 = vrot.slane %v2471, 4
        %v2474 = vshll.u32 %v2370, 16
        %v2476 = vrot.slane %v2474, 5
        %v2477 = vor.u32 %v2473, %v2476
        %v2478 = vrot.slane %v2477, 4
        %v2480 = vshll.u32 %v2371, 16
        %v2482 = vrot.slane %v2480, 5
        %v2483 = vsel %vm1166, %v2478, %v2482
        %s2484 = scalar_lea.vmem [#allocation17], 448
        %v2485 = vld [vmem:[%s2484] sm:$0xf]
        %v2486 = vld [vmem:[%s2484 + $0x4] sm:$0xf]
        %v2487 = vld [vmem:[%s2484 + $0x8] sm:$0xf]
        %v2488 = vld [vmem:[%s2484 + $0xc] sm:$0xf]
        %v2489 = vld [vmem:[%s2484 + $0x10] sm:$0xf]
        %v2490 = vld [vmem:[%s2484 + $0x14] sm:$0xf]
        %v2491 = vld [vmem:[%s2484 + $0x18] sm:$0xf]
        %v2492 = vld [vmem:[%s2484 + $0x1c] sm:$0xf]
        %v2493 = vld [vmem:[%s2484 + $0x20] sm:$0xf]
        %v2494 = vld [vmem:[%s2484 + $0x24] sm:$0xf]
        %v2495 = vld [vmem:[%s2484 + $0x28] sm:$0xf]
        %v2496 = vld [vmem:[%s2484 + $0x2c] sm:$0xf]
        %v2497 = vld [vmem:[%s2484 + $0x30] sm:$0xf]
        %v2498 = vld [vmem:[%s2484 + $0x34] sm:$0xf]
        %v2499 = vld [vmem:[%s2484 + $0x38] sm:$0xf]
        %v2500 = vld [vmem:[%s2484 + $0x3c] sm:$0xf]
        %v2501 = vunpack.c.l.b16 %v2385
        %v2502 = vunpack.c.l.b16 %v2399
        %v2503 = vunpack.c.l.b16 %v2413
        %v2504 = vunpack.c.l.b16 %v2427
        %v2505 = vunpack.c.l.b16 %v2441
        %v2506 = vunpack.c.l.b16 %v2455
        %v2507 = vunpack.c.l.b16 %v2469
        %v2508 = vunpack.c.l.b16 %v2483
        %v2509 = vpack.c.b16 %v2502, %v2501
        %v2510 = vpack.c.b16 %v2504, %v2503
        %v2511 = vpack.c.b16 %v2506, %v2505
        %v2512 = vpack.c.b16 %v2508, %v2507
        %v2533 = vunpack.c.l.b16 %v2485
        %v2534 = vunpack.c.l.b16 %v2486
        %v2535 = vunpack.c.l.b16 %v2487
        %v2536 = vunpack.c.l.b16 %v2488
        %v2537 = vunpack.c.l.b16 %v2489
        %v2538 = vunpack.c.l.b16 %v2490
        %v2539 = vunpack.c.l.b16 %v2491
        %v2540 = vunpack.c.l.b16 %v2492
        %v2541 = vunpack.c.l.b16 %v2493
        %v2542 = vunpack.c.l.b16 %v2494
        %v2543 = vunpack.c.l.b16 %v2495
        %v2544 = vunpack.c.l.b16 %v2496
        %v2545 = vunpack.c.l.b16 %v2497
        %v2546 = vunpack.c.l.b16 %v2498
        %v2547 = vunpack.c.l.b16 %v2499
        %v2548 = vunpack.c.l.b16 %v2500
        %v2549 = vpack.c.b16 %v2534, %v2533
        %v2550 = vpack.c.b16 %v2536, %v2535
        %v2551 = vpack.c.b16 %v2538, %v2537
        %v2552 = vpack.c.b16 %v2540, %v2539
        %v2553 = vpack.c.b16 %v2542, %v2541
        %v2554 = vpack.c.b16 %v2544, %v2543
        %v2555 = vpack.c.b16 %v2546, %v2545
        %v2556 = vpack.c.b16 %v2548, %v2547
        %2565 = vmatpush.bf16.msra.mxu0 %v2556
        %2566 = vmatpush.bf16.msra.mxu0 %v2555
        %2567 = vmatpush.bf16.msra.mxu0 %v2554
        %2568 = vmatpush.bf16.msra.mxu0 %v2553
        %2569 = vmatpush.bf16.msra.mxu0 %v2552
        %2570 = vmatpush.bf16.msra.mxu0 %v2551
        %2571 = vmatpush.bf16.msra.mxu0 %v2550
        %2572 = vmatpush.bf16.msra.mxu0 %v2549
        %2573 = vmatmul.bf16.gmra.mxu0 %v2509
        %v2574 = vpop.f32.mrf.mxu0
        %v2575 = vadd.f32 0.0, %v2574
        %v2576 = vpop.f32.mrf.mxu0
        %v2577 = vadd.f32 0.0, %v2576
        %2578 = vmatmul.bf16.gmra.mxu0 %v2510
        %v2579 = vpop.f32.mrf.mxu0
        %v2580 = vadd.f32 0.0, %v2579
        %v2581 = vpop.f32.mrf.mxu0
        %v2582 = vadd.f32 0.0, %v2581
        %2583 = vmatmul.bf16.gmra.mxu0 %v2511
        %v2584 = vpop.f32.mrf.mxu0
        %v2585 = vadd.f32 0.0, %v2584
        %v2586 = vpop.f32.mrf.mxu0
        %v2587 = vadd.f32 0.0, %v2586
        %2588 = vmatmul.bf16.gmra.mxu0 %v2512
        %v2589 = vpop.f32.mrf.mxu0
        %v2590 = vadd.f32 0.0, %v2589
        %v2591 = vpop.f32.mrf.mxu0
        %v2592 = vadd.f32 0.0, %v2591
        %2593 = vdwg.mxu0
        %v2594 = vadd.f32 %v2348, %v2575
        %v2595 = vadd.f32 %v2349, %v2577
        %v2596 = vadd.f32 %v2350, %v2580
        %v2597 = vadd.f32 %v2351, %v2582
        %v2598 = vadd.f32 %v2352, %v2585
        %v2599 = vadd.f32 %v2353, %v2587
        %v2600 = vadd.f32 %v2354, %v2590
        %v2601 = vadd.f32 %v2355, %v2592
        %v2602 = vld [vmem:[%s2221] sm:$0xe]
        %v2603 = vld [vmem:[%s2221 + $0x8] sm:$0xe]
        %v2604 = vld [vmem:[%s2221 + $0x10] sm:$0xe]
        %v2605 = vld [vmem:[%s2221 + $0x18] sm:$0xe]
        %v2606 = vld [vmem:[%s2221 + $0x20] sm:$0xe]
        %v2607 = vld [vmem:[%s2221 + $0x28] sm:$0xe]
        %v2608 = vld [vmem:[%s2221 + $0x30] sm:$0xe]
        %v2609 = vld [vmem:[%s2221 + $0x38] sm:$0xe]
        %v2626 = vrot.slane %v2602, 5
        %v2627 = vrot.slane %v2626, 4
        %v2628 = vrot.slane %v2357, 5
        %v2629 = vsel %vm1516, %v2627, %v2628
        %v2630 = vrot.slane %v2603, 5
        %v2631 = vrot.slane %v2630, 4
        %v2632 = vrot.slane %v2359, 5
        %v2633 = vsel %vm1516, %v2631, %v2632
        %v2634 = vrot.slane %v2604, 5
        %v2635 = vrot.slane %v2634, 4
        %v2636 = vrot.slane %v2361, 5
        %v2637 = vsel %vm1516, %v2635, %v2636
        %v2638 = vrot.slane %v2605, 5
        %v2639 = vrot.slane %v2638, 4
        %v2640 = vrot.slane %v2363, 5
        %v2641 = vsel %vm1516, %v2639, %v2640
        %v2642 = vrot.slane %v2606, 5
        %v2643 = vrot.slane %v2642, 4
        %v2644 = vrot.slane %v2365, 5
        %v2645 = vsel %vm1516, %v2643, %v2644
        %v2646 = vrot.slane %v2607, 5
        %v2647 = vrot.slane %v2646, 4
        %v2648 = vrot.slane %v2367, 5
        %v2649 = vsel %vm1516, %v2647, %v2648
        %v2650 = vrot.slane %v2608, 5
        %v2651 = vrot.slane %v2650, 4
        %v2652 = vrot.slane %v2369, 5
        %v2653 = vsel %vm1516, %v2651, %v2652
        %v2654 = vrot.slane %v2609, 5
        %v2655 = vrot.slane %v2654, 4
        %v2656 = vrot.slane %v2371, 5
        %v2657 = vsel %vm1516, %v2655, %v2656
        %s2658 = scalar_lea.vmem [#allocation17], 512
        %v2659 = vld [vmem:[%s2658] sm:$0xf]
        %v2660 = vld [vmem:[%s2658 + $0x4] sm:$0xf]
        %v2661 = vld [vmem:[%s2658 + $0x8] sm:$0xf]
        %v2662 = vld [vmem:[%s2658 + $0xc] sm:$0xf]
        %v2663 = vld [vmem:[%s2658 + $0x10] sm:$0xf]
        %v2664 = vld [vmem:[%s2658 + $0x14] sm:$0xf]
        %v2665 = vld [vmem:[%s2658 + $0x18] sm:$0xf]
        %v2666 = vld [vmem:[%s2658 + $0x1c] sm:$0xf]
        %v2667 = vld [vmem:[%s2658 + $0x20] sm:$0xf]
        %v2668 = vld [vmem:[%s2658 + $0x24] sm:$0xf]
        %v2669 = vld [vmem:[%s2658 + $0x28] sm:$0xf]
        %v2670 = vld [vmem:[%s2658 + $0x2c] sm:$0xf]
        %v2671 = vld [vmem:[%s2658 + $0x30] sm:$0xf]
        %v2672 = vld [vmem:[%s2658 + $0x34] sm:$0xf]
        %v2673 = vld [vmem:[%s2658 + $0x38] sm:$0xf]
        %v2674 = vld [vmem:[%s2658 + $0x3c] sm:$0xf]
        %v2675 = vunpack.c.l.b16 %v2629
        %v2676 = vunpack.c.l.b16 %v2633
        %v2677 = vunpack.c.l.b16 %v2637
        %v2678 = vunpack.c.l.b16 %v2641
        %v2679 = vunpack.c.l.b16 %v2645
        %v2680 = vunpack.c.l.b16 %v2649
        %v2681 = vunpack.c.l.b16 %v2653
        %v2682 = vunpack.c.l.b16 %v2657
        %v2683 = vpack.c.b16 %v2676, %v2675
        %v2684 = vpack.c.b16 %v2678, %v2677
        %v2685 = vpack.c.b16 %v2680, %v2679
        %v2686 = vpack.c.b16 %v2682, %v2681
        %v2707 = vunpack.c.l.b16 %v2659
        %v2708 = vunpack.c.l.b16 %v2660
        %v2709 = vunpack.c.l.b16 %v2661
        %v2710 = vunpack.c.l.b16 %v2662
        %v2711 = vunpack.c.l.b16 %v2663
        %v2712 = vunpack.c.l.b16 %v2664
        %v2713 = vunpack.c.l.b16 %v2665
        %v2714 = vunpack.c.l.b16 %v2666
        %v2715 = vunpack.c.l.b16 %v2667
        %v2716 = vunpack.c.l.b16 %v2668
        %v2717 = vunpack.c.l.b16 %v2669
        %v2718 = vunpack.c.l.b16 %v2670
        %v2719 = vunpack.c.l.b16 %v2671
        %v2720 = vunpack.c.l.b16 %v2672
        %v2721 = vunpack.c.l.b16 %v2673
        %v2722 = vunpack.c.l.b16 %v2674
        %v2723 = vpack.c.b16 %v2708, %v2707
        %v2724 = vpack.c.b16 %v2710, %v2709
        %v2725 = vpack.c.b16 %v2712, %v2711
        %v2726 = vpack.c.b16 %v2714, %v2713
        %v2727 = vpack.c.b16 %v2716, %v2715
        %v2728 = vpack.c.b16 %v2718, %v2717
        %v2729 = vpack.c.b16 %v2720, %v2719
        %v2730 = vpack.c.b16 %v2722, %v2721
        %2739 = vmatpush.bf16.msra.mxu0 %v2730
        %2740 = vmatpush.bf16.msra.mxu0 %v2729
        %2741 = vmatpush.bf16.msra.mxu0 %v2728
        %2742 = vmatpush.bf16.msra.mxu0 %v2727
        %2743 = vmatpush.bf16.msra.mxu0 %v2726
        %2744 = vmatpush.bf16.msra.mxu0 %v2725
        %2745 = vmatpush.bf16.msra.mxu0 %v2724
        %2746 = vmatpush.bf16.msra.mxu0 %v2723
        %2747 = vmatmul.bf16.gmra.mxu0 %v2683
        %v2748 = vpop.f32.mrf.mxu0
        %v2749 = vadd.f32 0.0, %v2748
        %v2750 = vpop.f32.mrf.mxu0
        %v2751 = vadd.f32 0.0, %v2750
        %2752 = vmatmul.bf16.gmra.mxu0 %v2684
        %v2753 = vpop.f32.mrf.mxu0
        %v2754 = vadd.f32 0.0, %v2753
        %v2755 = vpop.f32.mrf.mxu0
        %v2756 = vadd.f32 0.0, %v2755
        %2757 = vmatmul.bf16.gmra.mxu0 %v2685
        %v2758 = vpop.f32.mrf.mxu0
        %v2759 = vadd.f32 0.0, %v2758
        %v2760 = vpop.f32.mrf.mxu0
        %v2761 = vadd.f32 0.0, %v2760
        %2762 = vmatmul.bf16.gmra.mxu0 %v2686
        %v2763 = vpop.f32.mrf.mxu0
        %v2764 = vadd.f32 0.0, %v2763
        %v2765 = vpop.f32.mrf.mxu0
        %v2766 = vadd.f32 0.0, %v2765
        %2767 = vdwg.mxu0
        %v2768 = vadd.f32 %v2594, %v2749
        %v2769 = vadd.f32 %v2595, %v2751
        %v2770 = vadd.f32 %v2596, %v2754
        %v2771 = vadd.f32 %v2597, %v2756
        %v2772 = vadd.f32 %v2598, %v2759
        %v2773 = vadd.f32 %v2599, %v2761
        %v2774 = vadd.f32 %v2600, %v2764
        %v2775 = vadd.f32 %v2601, %v2766
        %v2776 = vld [vmem:[%s11] sm:$0x3]
        %v2777 = vperm.slane %v2776, 0
        %v2778 = vmul.f32 %v2768, %v2777
        %v2779 = vmul.f32 %v2769, %v2777
        %v2780 = vmul.f32 %v2770, %v2777
        %v2781 = vmul.f32 %v2771, %v2777
        %v2782 = vmul.f32 %v2772, %v2777
        %v2783 = vmul.f32 %v2773, %v2777
        %v2784 = vmul.f32 %v2774, %v2777
        %v2785 = vmul.f32 %v2775, %v2777
        %v2786 = vperm.slane %v2776, 1
        %v2787 = vadd.f32 %v2778, %v2786
        %v2788 = vadd.f32 %v2779, %v2786
        %v2789 = vadd.f32 %v2780, %v2786
        %v2790 = vadd.f32 %v2781, %v2786
        %v2791 = vadd.f32 %v2782, %v2786
        %v2792 = vadd.f32 %v2783, %v2786
        %v2793 = vadd.f32 %v2784, %v2786
        %v2794 = vadd.f32 %v2785, %v2786
        %v2795 = vmax.f32 %v2787, 0.0
        %v2796 = vmax.f32 %v2788, 0.0
        %v2797 = vmax.f32 %v2789, 0.0
        %v2798 = vmax.f32 %v2790, 0.0
        %v2799 = vmax.f32 %v2791, 0.0
        %v2800 = vmax.f32 %v2792, 0.0
        %v2801 = vmax.f32 %v2793, 0.0
        %v2802 = vmax.f32 %v2794, 0.0
        %v2803 = vpack.c.bf16 %v2796, %v2795
        %v2804 = vpack.c.bf16 %v2798, %v2797
        %v2805 = vpack.c.bf16 %v2800, %v2799
        %v2806 = vpack.c.bf16 %v2802, %v2801
        %vm2807 = vcmask 523264
        %v2809 = vsel %vm2807, 1065369472, 0
        %2811 = vmatpush.bf16.msra.mxu0 0
        %2812 = vmatpush.bf16.msra.mxu0 0
        %2813 = vmatpush.bf16.msra.mxu0 0
        %2814 = vmatpush.bf16.msra.mxu0 0
        %2815 = vmatpush.bf16.msra.mxu0 %v2806
        %2816 = vmatpush.bf16.msra.mxu0 %v2805
        %2817 = vmatpush.bf16.msra.mxu0 %v2804
        %2818 = vmatpush.bf16.msra.mxu0 %v2803
        %2819 = vmatmul.bf16.gmra.mxu0 %v2809
        %v2820 = vpop.f32.mrf.mxu0
        %v2821 = vadd.f32 0.0, %v2820
        %v2822 = vpop.f32.mrf.mxu0
        %2823 = vdwg.mxu0
        %v2824 = vmul.f32 %v2821, 0.015625
        %v2825 = vpack.c.bf16 %v2824, %v2824
        %v2826 = vld [vmem:[#allocation18] sm:$0xf]
        %v2827 = vld [vmem:[#allocation18 + $0x4] sm:$0xf]
        %v2828 = vld [vmem:[#allocation18 + $0x8] sm:$0xf]
        %v2829 = vld [vmem:[#allocation18 + $0xc] sm:$0xf]
        %v2830 = vld [vmem:[#allocation18 + $0x10] sm:$0xf]
        %v2831 = vld [vmem:[#allocation18 + $0x14] sm:$0xf]
        %v2832 = vld [vmem:[#allocation18 + $0x18] sm:$0xf]
        %v2833 = vld [vmem:[#allocation18 + $0x1c] sm:$0xf]
        %v2834 = vld [vmem:[#allocation18 + $0x20] sm:$0xf]
        %v2835 = vld [vmem:[#allocation18 + $0x24] sm:$0xf]
        %v2836 = vld [vmem:[#allocation18 + $0x28] sm:$0xf]
        %v2837 = vld [vmem:[#allocation18 + $0x2c] sm:$0xf]
        %v2838 = vld [vmem:[#allocation18 + $0x30] sm:$0xf]
        %v2839 = vld [vmem:[#allocation18 + $0x34] sm:$0xf]
        %v2840 = vld [vmem:[#allocation18 + $0x38] sm:$0xf]
        %v2841 = vld [vmem:[#allocation18 + $0x3c] sm:$0xf]
        %v2858 = vunpack.c.l.b16 %v2826
        %v2859 = vunpack.c.l.b16 %v2827
        %v2860 = vunpack.c.l.b16 %v2828
        %v2861 = vunpack.c.l.b16 %v2829
        %v2862 = vunpack.c.l.b16 %v2830
        %v2863 = vunpack.c.l.b16 %v2831
        %v2864 = vunpack.c.l.b16 %v2832
        %v2865 = vunpack.c.l.b16 %v2833
        %v2866 = vunpack.c.l.b16 %v2834
        %v2867 = vunpack.c.l.b16 %v2835
        %v2868 = vunpack.c.l.b16 %v2836
        %v2869 = vunpack.c.l.b16 %v2837
        %v2870 = vunpack.c.l.b16 %v2838
        %v2871 = vunpack.c.l.b16 %v2839
        %v2872 = vunpack.c.l.b16 %v2840
        %v2873 = vunpack.c.l.b16 %v2841
        %v2874 = vpack.c.b16 %v2859, %v2858
        %v2875 = vpack.c.b16 %v2861, %v2860
        %v2876 = vpack.c.b16 %v2863, %v2862
        %v2877 = vpack.c.b16 %v2865, %v2864
        %v2878 = vpack.c.b16 %v2867, %v2866
        %v2879 = vpack.c.b16 %v2869, %v2868
        %v2880 = vpack.c.b16 %v2871, %v2870
        %v2881 = vpack.c.b16 %v2873, %v2872
        %2890 = vmatpush.bf16.msra.mxu0 %v2881
        %2891 = vmatpush.bf16.msra.mxu0 %v2880
        %2892 = vmatpush.bf16.msra.mxu0 %v2879
        %2893 = vmatpush.bf16.msra.mxu0 %v2878
        %2894 = vmatpush.bf16.msra.mxu0 %v2877
        %2895 = vmatpush.bf16.msra.mxu0 %v2876
        %2896 = vmatpush.bf16.msra.mxu0 %v2875
        %2897 = vmatpush.bf16.msra.mxu0 %v2874
        %2898 = vmatmul.bf16.gmra.mxu0 %v2825
        %v2899 = vpop.f32.mrf.mxu0
        %v2900 = vadd.f32 0.0, %v2899
        %v2901 = vpop.f32.mrf.mxu0
        %2902 = vdwg.mxu0
        %v2903 = vld [vmem:[%s13] sm:$0x3]
        %v2904 = vmul.f32 %v2900, %v2903
        %v2906 = vrot.slane %v2903, 1
        %v2908 = vadd.f32 %v2904, %v2906
        %v2909 = vsub.f32 0.0, %v2908
        %v2910 = vmul.f32 %v2909, 1.442695
        %v2911 = vpow.pop %v2910
        %v2912 = vadd.f32 %v2911, 1.0
        %v2913 = vrcp.pop %v2912
        %v2914 = vmul.f32 %v2912, %v2913
        %v2915 = vsub.f32 1.0, %v2914
        %v2916 = vmul.f32 %v2913, %v2915
        %v2917 = vadd.f32 %v2913, %v2916
        %vm2918 = vweird.f32 %v2912
        %vm2919 = vweird.f32 %v2913
        %vm2920 = vmor %vm2918, %vm2919
        %v2921 = vsel %vm2920, %v2913, %v2917
        %v2922 = vand.u32 2147483647, %v2912
        %vm2923 = vcmp.eq.f32.partialorder %v2922, 8.507059e+37
        %v2924 = vand.u32 %v2912, 2147483648
        %v2925 = vor.u32 1.1754944e-38, %v2924
        %v2926 = vsel %vm2923, %v2925, %v2921
        %v2927 = vmul.f32 1.0, %v2926
        %v2928 = vld [vmem:[%s599] sm:$0x3]
        %v2929 = vld [vmem:[%s599 + $0x2] sm:$0x3]
        %v2930 = vld [vmem:[%s599 + $0x4] sm:$0x3]
        %v2931 = vld [vmem:[%s599 + $0x6] sm:$0x3]
        %2933 = vst [vmem:[#allocation1] ss:$4 sm:$0xff] %v2928
        %s2935 = scalar_lea.vmem [#allocation1], 1
        %2936 = vst [vmem:[%s2935] ss:$4 sm:$0xff] %v2929
        %s2938 = scalar_lea.vmem [#allocation1], 2
        %2939 = vst [vmem:[%s2938] ss:$4 sm:$0xff] %v2930
        %s2941 = scalar_lea.vmem [#allocation1], 3
        %2942 = vst [vmem:[%s2941] ss:$4 sm:$0xff] %v2931
        %v2943 = vld.sshfl [vmem:[#allocation1] sm:$0xff pattern:$0x73625140]
        %vm2945 = vcmask 130048
        %v2946 = vsel %vm2945, 1065369472, 0
        %2948 = vmatpush.bf16.msra.mxu0 0
        %2949 = vmatpush.bf16.msra.mxu0 0
        %2950 = vmatpush.bf16.msra.mxu0 0
        %2951 = vmatpush.bf16.msra.mxu0 0
        %2952 = vmatpush.bf16.msra.mxu0 0
        %2953 = vmatpush.bf16.msra.mxu0 0
        %2954 = vmatpush.bf16.msra.mxu0 0
        %2955 = vmatpush.bf16.msra.mxu0 %v2943
        %2956 = vmatmul.bf16.gmra.mxu0 %v2946
        %v2957 = vpop.f32.mrf.mxu0
        %v2958 = vadd.f32 0.0, %v2957
        %v2959 = vpop.f32.mrf.mxu0
        %2960 = vdwg.mxu0
        %v2961 = vmul.f32 %v2958, 0.0625
        %v2962 = vpack.c.bf16 %v2961, %v2961
        %v2963 = vld [vmem:[#allocation11] sm:$0xf]
        %v2964 = vld [vmem:[#allocation11 + $0x4] sm:$0xf]
        %v2965 = vld [vmem:[#allocation11 + $0x8] sm:$0xf]
        %v2966 = vld [vmem:[#allocation11 + $0xc] sm:$0xf]
        %v2967 = vld [vmem:[#allocation11 + $0x10] sm:$0xf]
        %v2968 = vld [vmem:[#allocation11 + $0x14] sm:$0xf]
        %v2969 = vld [vmem:[#allocation11 + $0x18] sm:$0xf]
        %v2970 = vld [vmem:[#allocation11 + $0x1c] sm:$0xf]
        %v2971 = vld [vmem:[#allocation11 + $0x20] sm:$0xf]
        %v2972 = vld [vmem:[#allocation11 + $0x24] sm:$0xf]
        %v2973 = vld [vmem:[#allocation11 + $0x28] sm:$0xf]
        %v2974 = vld [vmem:[#allocation11 + $0x2c] sm:$0xf]
        %v2975 = vld [vmem:[#allocation11 + $0x30] sm:$0xf]
        %v2976 = vld [vmem:[#allocation11 + $0x34] sm:$0xf]
        %v2977 = vld [vmem:[#allocation11 + $0x38] sm:$0xf]
        %v2978 = vld [vmem:[#allocation11 + $0x3c] sm:$0xf]
        %v2995 = vunpack.c.l.b16 %v2963
        %v2996 = vunpack.c.l.b16 %v2964
        %v2997 = vunpack.c.l.b16 %v2965
        %v2998 = vunpack.c.l.b16 %v2966
        %v2999 = vunpack.c.l.b16 %v2967
        %v3000 = vunpack.c.l.b16 %v2968
        %v3001 = vunpack.c.l.b16 %v2969
        %v3002 = vunpack.c.l.b16 %v2970
        %v3003 = vunpack.c.l.b16 %v2971
        %v3004 = vunpack.c.l.b16 %v2972
        %v3005 = vunpack.c.l.b16 %v2973
        %v3006 = vunpack.c.l.b16 %v2974
        %v3007 = vunpack.c.l.b16 %v2975
        %v3008 = vunpack.c.l.b16 %v2976
        %v3009 = vunpack.c.l.b16 %v2977
        %v3010 = vunpack.c.l.b16 %v2978
        %v3011 = vpack.c.b16 %v2996, %v2995
        %v3012 = vpack.c.b16 %v2998, %v2997
        %v3013 = vpack.c.b16 %v3000, %v2999
        %v3014 = vpack.c.b16 %v3002, %v3001
        %v3015 = vpack.c.b16 %v3004, %v3003
        %v3016 = vpack.c.b16 %v3006, %v3005
        %v3017 = vpack.c.b16 %v3008, %v3007
        %v3018 = vpack.c.b16 %v3010, %v3009
        %3027 = vmatpush.bf16.msra.mxu0 %v3018
        %3028 = vmatpush.bf16.msra.mxu0 %v3017
        %3029 = vmatpush.bf16.msra.mxu0 %v3016
        %3030 = vmatpush.bf16.msra.mxu0 %v3015
        %3031 = vmatpush.bf16.msra.mxu0 %v3014
        %3032 = vmatpush.bf16.msra.mxu0 %v3013
        %3033 = vmatpush.bf16.msra.mxu0 %v3012
        %3034 = vmatpush.bf16.msra.mxu0 %v3011
        %3035 = vmatmul.bf16.gmra.mxu0 %v2962
        %v3036 = vpop.f32.mrf.mxu0
        %v3037 = vadd.f32 0.0, %v3036
        %v3038 = vpop.f32.mrf.mxu0
        %3039 = vdwg.mxu0
        %v3040 = vld [vmem:[%s3] sm:$0x3]
        %v3041 = vmul.f32 %v3037, %v3040
        %v3043 = vrot.slane %v3040, 1
        %v3045 = vadd.f32 %v3041, %v3043
        %v3046 = vmax.f32 %v3045, 0.0
        %3047 = vst [vmem:[#allocation1] ss:$2 sm:$0xff] %v2928
        %v3048 = vld.sshfl [vmem:[#allocation1] sm:$0xff pattern:$0x75643120]
        %s3049 = scalar_lea.vmem [#allocation1], 16
        %3050 = vst [vmem:[%s3049] ss:$2 sm:$0xff] %v2929
        %v3051 = vld.sshfl [vmem:[#allocation1 + $0x10] sm:$0xff pattern:$0x75643120]
        %s3052 = scalar_lea.vmem [#allocation1], 32
        %3053 = vst [vmem:[%s3052] ss:$2 sm:$0xff] %v2930
        %v3054 = vld.sshfl [vmem:[#allocation1 + $0x20] sm:$0xff pattern:$0x75643120]
        %s3055 = scalar_lea.vmem [#allocation1], 48
        %3056 = vst [vmem:[%s3055] ss:$2 sm:$0xff] %v2931
        %v3057 = vld.sshfl [vmem:[#allocation1 + $0x30] sm:$0xff pattern:$0x75643120]
        %v3058 = vshrl.u32 %v3048, 16
        %v3060 = vrot.slane %v3058, 7
        %v3061 = vshll.u32 %v3048, 16
        %v3063 = vor.u32 %v3060, %v3061
        %v3064 = vshrl.u32 %v3051, 16
        %v3066 = vrot.slane %v3064, 7
        %v3067 = vshll.u32 %v3051, 16
        %v3069 = vor.u32 %v3066, %v3067
        %v3070 = vshrl.u32 %v3054, 16
        %v3072 = vrot.slane %v3070, 7
        %v3073 = vshll.u32 %v3054, 16
        %v3075 = vor.u32 %v3072, %v3073
        %v3076 = vshrl.u32 %v3057, 16
        %v3078 = vrot.slane %v3076, 7
        %v3079 = vshll.u32 %v3057, 16
        %v3081 = vor.u32 %v3078, %v3079
        %s3086 = scalar_lea.vmem [#allocation2], 4
        %vm3087 = vsmask.f32 2306
        %vm3088 = vmand %vm1514, %vm3087
        %v3089 = vld [vmem:[%s3086] sm:$0x7]
        %v3090 = vsel %vm3088, %v3063, %v3089
        %3091 = vst [vmem:[%s3086] sm:$0x7] %v3090
        %v3092 = vld [vmem:[%s3086 + $0x4] sm:$0x7]
        %v3093 = vsel %vm3088, %v3069, %v3092
        %3094 = vst [vmem:[%s3086 + $0x4] sm:$0x7] %v3093
        %v3095 = vld [vmem:[%s3086 + $0x8] sm:$0x7]
        %v3096 = vsel %vm3088, %v3075, %v3095
        %3097 = vst [vmem:[%s3086 + $0x8] sm:$0x7] %v3096
        %v3098 = vld [vmem:[%s3086 + $0xc] sm:$0x7]
        %v3099 = vsel %vm3088, %v3081, %v3098
        %3100 = vst [vmem:[%s3086 + $0xc] sm:$0x7] %v3099
        %v3101 = vld [vmem:[#allocation2] sm:$0x3]
        %v3102 = vld [vmem:[#allocation2 + $0x4] sm:$0x3]
        %v3103 = vld [vmem:[#allocation2 + $0x8] sm:$0x3]
        %v3104 = vld [vmem:[#allocation2 + $0xc] sm:$0x3]
        %v3105 = vld [vmem:[#allocation12] sm:$0xf]
        %v3106 = vld [vmem:[#allocation12 + $0x4] sm:$0xf]
        %v3107 = vld [vmem:[#allocation12 + $0x8] sm:$0xf]
        %v3108 = vld [vmem:[#allocation12 + $0xc] sm:$0xf]
        %v3109 = vld [vmem:[#allocation12 + $0x10] sm:$0xf]
        %v3110 = vld [vmem:[#allocation12 + $0x14] sm:$0xf]
        %v3111 = vld [vmem:[#allocation12 + $0x18] sm:$0xf]
        %v3112 = vld [vmem:[#allocation12 + $0x1c] sm:$0xf]
        %v3113 = vld [vmem:[#allocation12 + $0x20] sm:$0xf]
        %v3114 = vld [vmem:[#allocation12 + $0x24] sm:$0xf]
        %v3115 = vld [vmem:[#allocation12 + $0x28] sm:$0xf]
        %v3116 = vld [vmem:[#allocation12 + $0x2c] sm:$0xf]
        %v3117 = vld [vmem:[#allocation12 + $0x30] sm:$0xf]
        %v3118 = vld [vmem:[#allocation12 + $0x34] sm:$0xf]
        %v3119 = vld [vmem:[#allocation12 + $0x38] sm:$0xf]
        %v3120 = vld [vmem:[#allocation12 + $0x3c] sm:$0xf]
        %v3121 = vld [vmem:[#allocation2] sm:$0x7]
        %v3122 = vld [vmem:[#allocation2 + $0x4] sm:$0x7]
        %v3123 = vld [vmem:[#allocation2 + $0x8] sm:$0x7]
        %v3124 = vld [vmem:[#allocation2 + $0xc] sm:$0x7]
        %v3129 = vrot.slane %v3121, 2
        %v3130 = vrot.slane %v3122, 2
        %v3131 = vrot.slane %v3123, 2
        %v3132 = vrot.slane %v3124, 2
        %vm3133 = vcmask 1041408
        %v3136 = vsel %vm3133, %v3121, %v3129
        %vm3137 = vcmask 1043458
        %v3138 = vsel %vm3137, %v3121, %v3129
        %v3140 = vrot.slane %v3138, 2
        %v3143 = vsel %vm3133, %v3122, %v3130
        %v3144 = vsel %vm3137, %v3122, %v3130
        %v3146 = vrot.slane %v3144, 2
        %v3149 = vsel %vm3133, %v3123, %v3131
        %v3150 = vsel %vm3137, %v3123, %v3131
        %v3152 = vrot.slane %v3150, 2
        %v3155 = vsel %vm3133, %v3124, %v3132
        %v3156 = vsel %vm3137, %v3124, %v3132
        %v3158 = vrot.slane %v3156, 2
        %vm3159 = vsmask.f32 1280
        %vm3160 = vsmask.f32 3336
        %vm3161 = vmor %vm3159, %vm3160
        %vm3162 = vsmask.f32 5392
        %vm3163 = vmor %vm3161, %vm3162
        %vm3164 = vsmask.f32 7448
        %vm3165 = vmor %vm3163, %vm3164
        %v3166 = vshrl.u32 %v3136, 16
        %v3168 = vrot.slane %v3166, 6
        %v3169 = vshll.u32 %v3136, 16
        %v3171 = vrot.slane %v3169, 7
        %v3172 = vor.u32 %v3168, %v3171
        %v3173 = vrot.slane %v3172, 2
        %v3175 = vshll.u32 %v3140, 16
        %v3177 = vrot.slane %v3175, 7
        %v3178 = vsel %vm3165, %v3173, %v3177
        %v3179 = vshrl.u32 %v3143, 16
        %v3181 = vrot.slane %v3179, 6
        %v3182 = vshll.u32 %v3143, 16
        %v3184 = vrot.slane %v3182, 7
        %v3185 = vor.u32 %v3181, %v3184
        %v3186 = vrot.slane %v3185, 2
        %v3188 = vshll.u32 %v3146, 16
        %v3190 = vrot.slane %v3188, 7
        %v3191 = vsel %vm3165, %v3186, %v3190
        %v3192 = vshrl.u32 %v3149, 16
        %v3194 = vrot.slane %v3192, 6
        %v3195 = vshll.u32 %v3149, 16
        %v3197 = vrot.slane %v3195, 7
        %v3198 = vor.u32 %v3194, %v3197
        %v3199 = vrot.slane %v3198, 2
        %v3201 = vshll.u32 %v3152, 16
        %v3203 = vrot.slane %v3201, 7
        %v3204 = vsel %vm3165, %v3199, %v3203
        %v3205 = vshrl.u32 %v3155, 16
        %v3207 = vrot.slane %v3205, 6
        %v3208 = vshll.u32 %v3155, 16
        %v3210 = vrot.slane %v3208, 7
        %v3211 = vor.u32 %v3207, %v3210
        %v3212 = vrot.slane %v3211, 2
        %v3214 = vshll.u32 %v3158, 16
        %v3216 = vrot.slane %v3214, 7
        %v3217 = vsel %vm3165, %v3212, %v3216
        %s3218 = scalar_lea.vmem [#allocation12], 64
        %v3219 = vld [vmem:[%s3218] sm:$0xf]
        %v3220 = vld [vmem:[%s3218 + $0x4] sm:$0xf]
        %v3221 = vld [vmem:[%s3218 + $0x8] sm:$0xf]
        %v3222 = vld [vmem:[%s3218 + $0xc] sm:$0xf]
        %v3223 = vld [vmem:[%s3218 + $0x10] sm:$0xf]
        %v3224 = vld [vmem:[%s3218 + $0x14] sm:$0xf]
        %v3225 = vld [vmem:[%s3218 + $0x18] sm:$0xf]
        %v3226 = vld [vmem:[%s3218 + $0x1c] sm:$0xf]
        %v3227 = vld [vmem:[%s3218 + $0x20] sm:$0xf]
        %v3228 = vld [vmem:[%s3218 + $0x24] sm:$0xf]
        %v3229 = vld [vmem:[%s3218 + $0x28] sm:$0xf]
        %v3230 = vld [vmem:[%s3218 + $0x2c] sm:$0xf]
        %v3231 = vld [vmem:[%s3218 + $0x30] sm:$0xf]
        %v3232 = vld [vmem:[%s3218 + $0x34] sm:$0xf]
        %v3233 = vld [vmem:[%s3218 + $0x38] sm:$0xf]
        %v3234 = vld [vmem:[%s3218 + $0x3c] sm:$0xf]
        %3236 = vst [vmem:[#allocation1] ss:$4 sm:$0xff] %v3178
        %s3238 = scalar_lea.vmem [#allocation1], 1
        %3239 = vst [vmem:[%s3238] ss:$4 sm:$0xff] %v3191
        %s3241 = scalar_lea.vmem [#allocation1], 2
        %3242 = vst [vmem:[%s3241] ss:$4 sm:$0xff] %v3204
        %s3244 = scalar_lea.vmem [#allocation1], 3
        %3245 = vst [vmem:[%s3244] ss:$4 sm:$0xff] %v3217
        %v3246 = vld.sshfl [vmem:[#allocation1] sm:$0xff pattern:$0x73625140]
        %v3264 = vunpack.c.l.b16 %v3219
        %v3265 = vunpack.c.l.b16 %v3220
        %v3266 = vunpack.c.l.b16 %v3221
        %v3267 = vunpack.c.l.b16 %v3222
        %v3268 = vunpack.c.l.b16 %v3223
        %v3269 = vunpack.c.l.b16 %v3224
        %v3270 = vunpack.c.l.b16 %v3225
        %v3271 = vunpack.c.l.b16 %v3226
        %v3272 = vunpack.c.l.b16 %v3227
        %v3273 = vunpack.c.l.b16 %v3228
        %v3274 = vunpack.c.l.b16 %v3229
        %v3275 = vunpack.c.l.b16 %v3230
        %v3276 = vunpack.c.l.b16 %v3231
        %v3277 = vunpack.c.l.b16 %v3232
        %v3278 = vunpack.c.l.b16 %v3233
        %v3279 = vunpack.c.l.b16 %v3234
        %v3280 = vpack.c.b16 %v3265, %v3264
        %v3281 = vpack.c.b16 %v3267, %v3266
        %v3282 = vpack.c.b16 %v3269, %v3268
        %v3283 = vpack.c.b16 %v3271, %v3270
        %v3284 = vpack.c.b16 %v3273, %v3272
        %v3285 = vpack.c.b16 %v3275, %v3274
        %v3286 = vpack.c.b16 %v3277, %v3276
        %v3287 = vpack.c.b16 %v3279, %v3278
        %3296 = vmatpush.bf16.msra.mxu0 %v3287
        %3297 = vmatpush.bf16.msra.mxu0 %v3286
        %3298 = vmatpush.bf16.msra.mxu0 %v3285
        %3299 = vmatpush.bf16.msra.mxu0 %v3284
        %3300 = vmatpush.bf16.msra.mxu0 %v3283
        %3301 = vmatpush.bf16.msra.mxu0 %v3282
        %3302 = vmatpush.bf16.msra.mxu0 %v3281
        %3303 = vmatpush.bf16.msra.mxu0 %v3280
        %3304 = vmatmul.bf16.gmra.mxu0 %v3246
        %v3305 = vpop.f32.mrf.mxu0
        %v3306 = vadd.f32 0.0, %v3305
        %v3307 = vpop.f32.mrf.mxu0
        %v3308 = vadd.f32 0.0, %v3307
        %3309 = vdwg.mxu0
        %3311 = vst [vmem:[#allocation1] ss:$4 sm:$0xff] %v3101
        %s3313 = scalar_lea.vmem [#allocation1], 1
        %3314 = vst [vmem:[%s3313] ss:$4 sm:$0xff] %v3102
        %s3316 = scalar_lea.vmem [#allocation1], 2
        %3317 = vst [vmem:[%s3316] ss:$4 sm:$0xff] %v3103
        %s3319 = scalar_lea.vmem [#allocation1], 3
        %3320 = vst [vmem:[%s3319] ss:$4 sm:$0xff] %v3104
        %v3321 = vld.sshfl [vmem:[#allocation1] sm:$0xff pattern:$0x73625140]
        %v3339 = vunpack.c.l.b16 %v3105
        %v3340 = vunpack.c.l.b16 %v3106
        %v3341 = vunpack.c.l.b16 %v3107
        %v3342 = vunpack.c.l.b16 %v3108
        %v3343 = vunpack.c.l.b16 %v3109
        %v3344 = vunpack.c.l.b16 %v3110
        %v3345 = vunpack.c.l.b16 %v3111
        %v3346 = vunpack.c.l.b16 %v3112
        %v3347 = vunpack.c.l.b16 %v3113
        %v3348 = vunpack.c.l.b16 %v3114
        %v3349 = vunpack.c.l.b16 %v3115
        %v3350 = vunpack.c.l.b16 %v3116
        %v3351 = vunpack.c.l.b16 %v3117
        %v3352 = vunpack.c.l.b16 %v3118
        %v3353 = vunpack.c.l.b16 %v3119
        %v3354 = vunpack.c.l.b16 %v3120
        %v3355 = vpack.c.b16 %v3340, %v3339
        %v3356 = vpack.c.b16 %v3342, %v3341
        %v3357 = vpack.c.b16 %v3344, %v3343
        %v3358 = vpack.c.b16 %v3346, %v3345
        %v3359 = vpack.c.b16 %v3348, %v3347
        %v3360 = vpack.c.b16 %v3350, %v3349
        %v3361 = vpack.c.b16 %v3352, %v3351
        %v3362 = vpack.c.b16 %v3354, %v3353
        %3371 = vmatpush.bf16.msra.mxu0 %v3362
        %3372 = vmatpush.bf16.msra.mxu0 %v3361
        %3373 = vmatpush.bf16.msra.mxu0 %v3360
        %3374 = vmatpush.bf16.msra.mxu0 %v3359
        %3375 = vmatpush.bf16.msra.mxu0 %v3358
        %3376 = vmatpush.bf16.msra.mxu0 %v3357
        %3377 = vmatpush.bf16.msra.mxu0 %v3356
        %3378 = vmatpush.bf16.msra.mxu0 %v3355
        %3379 = vmatmul.bf16.gmra.mxu0 %v3321
        %v3380 = vpop.f32.mrf.mxu0
        %v3381 = vadd.f32 %v3306, %v3380
        %v3382 = vpop.f32.mrf.mxu0
        %v3383 = vadd.f32 %v3308, %v3382
        %3384 = vdwg.mxu0
        %v3385 = vld [vmem:[#allocation2] sm:$0x6]
        %v3386 = vld [vmem:[#allocation2 + $0x4] sm:$0x6]
        %v3387 = vld [vmem:[#allocation2 + $0x8] sm:$0x6]
        %v3388 = vld [vmem:[#allocation2 + $0xc] sm:$0x6]
        %v3393 = vrot.slane %v3385, 2
        %v3394 = vrot.slane %v3386, 2
        %v3395 = vrot.slane %v3387, 2
        %v3396 = vrot.slane %v3388, 2
        %v3399 = vsel %vm3133, %v3385, %v3393
        %v3401 = vsel %vm3137, %v3385, %v3393
        %v3403 = vrot.slane %v3401, 2
        %v3406 = vsel %vm3133, %v3386, %v3394
        %v3408 = vsel %vm3137, %v3386, %v3394
        %v3410 = vrot.slane %v3408, 2
        %v3413 = vsel %vm3133, %v3387, %v3395
        %v3415 = vsel %vm3137, %v3387, %v3395
        %v3417 = vrot.slane %v3415, 2
        %v3420 = vsel %vm3133, %v3388, %v3396
        %v3422 = vsel %vm3137, %v3388, %v3396
        %v3424 = vrot.slane %v3422, 2
        %vm3425 = vmor %vm704, %vm725
        %vm3426 = vcmask 1044484
        %vm3427 = vmor %vm3425, %vm3426
        %vm3428 = vcmask 1046534
        %vm3429 = vmor %vm3427, %vm3428
        %v3430 = vrot.slane %v3399, 7
        %v3431 = vrot.slane %v3430, 2
        %v3432 = vrot.slane %v3403, 7
        %v3433 = vsel %vm3429, %v3431, %v3432
        %v3434 = vrot.slane %v3406, 7
        %v3435 = vrot.slane %v3434, 2
        %v3436 = vrot.slane %v3410, 7
        %v3437 = vsel %vm3429, %v3435, %v3436
        %v3438 = vrot.slane %v3413, 7
        %v3439 = vrot.slane %v3438, 2
        %v3440 = vrot.slane %v3417, 7
        %v3441 = vsel %vm3429, %v3439, %v3440
        %v3442 = vrot.slane %v3420, 7
        %v3443 = vrot.slane %v3442, 2
        %v3444 = vrot.slane %v3424, 7
        %v3445 = vsel %vm3429, %v3443, %v3444
        %s3446 = scalar_lea.vmem [#allocation12], 128
        %v3447 = vld [vmem:[%s3446] sm:$0xf]
        %v3448 = vld [vmem:[%s3446 + $0x4] sm:$0xf]
        %v3449 = vld [vmem:[%s3446 + $0x8] sm:$0xf]
        %v3450 = vld [vmem:[%s3446 + $0xc] sm:$0xf]
        %v3451 = vld [vmem:[%s3446 + $0x10] sm:$0xf]
        %v3452 = vld [vmem:[%s3446 + $0x14] sm:$0xf]
        %v3453 = vld [vmem:[%s3446 + $0x18] sm:$0xf]
        %v3454 = vld [vmem:[%s3446 + $0x1c] sm:$0xf]
        %v3455 = vld [vmem:[%s3446 + $0x20] sm:$0xf]
        %v3456 = vld [vmem:[%s3446 + $0x24] sm:$0xf]
        %v3457 = vld [vmem:[%s3446 + $0x28] sm:$0xf]
        %v3458 = vld [vmem:[%s3446 + $0x2c] sm:$0xf]
        %v3459 = vld [vmem:[%s3446 + $0x30] sm:$0xf]
        %v3460 = vld [vmem:[%s3446 + $0x34] sm:$0xf]
        %v3461 = vld [vmem:[%s3446 + $0x38] sm:$0xf]
        %v3462 = vld [vmem:[%s3446 + $0x3c] sm:$0xf]
        %3464 = vst [vmem:[#allocation1] ss:$4 sm:$0xff] %v3433
        %s3466 = scalar_lea.vmem [#allocation1], 1
        %3467 = vst [vmem:[%s3466] ss:$4 sm:$0xff] %v3437
        %s3469 = scalar_lea.vmem [#allocation1], 2
        %3470 = vst [vmem:[%s3469] ss:$4 sm:$0xff] %v3441
        %s3472 = scalar_lea.vmem [#allocation1], 3
        %3473 = vst [vmem:[%s3472] ss:$4 sm:$0xff] %v3445
        %v3474 = vld.sshfl [vmem:[#allocation1] sm:$0xff pattern:$0x73625140]
        %v3492 = vunpack.c.l.b16 %v3447
        %v3493 = vunpack.c.l.b16 %v3448
        %v3494 = vunpack.c.l.b16 %v3449
        %v3495 = vunpack.c.l.b16 %v3450
        %v3496 = vunpack.c.l.b16 %v3451
        %v3497 = vunpack.c.l.b16 %v3452
        %v3498 = vunpack.c.l.b16 %v3453
        %v3499 = vunpack.c.l.b16 %v3454
        %v3500 = vunpack.c.l.b16 %v3455
        %v3501 = vunpack.c.l.b16 %v3456
        %v3502 = vunpack.c.l.b16 %v3457
        %v3503 = vunpack.c.l.b16 %v3458
        %v3504 = vunpack.c.l.b16 %v3459
        %v3505 = vunpack.c.l.b16 %v3460
        %v3506 = vunpack.c.l.b16 %v3461
        %v3507 = vunpack.c.l.b16 %v3462
        %v3508 = vpack.c.b16 %v3493, %v3492
        %v3509 = vpack.c.b16 %v3495, %v3494
        %v3510 = vpack.c.b16 %v3497, %v3496
        %v3511 = vpack.c.b16 %v3499, %v3498
        %v3512 = vpack.c.b16 %v3501, %v3500
        %v3513 = vpack.c.b16 %v3503, %v3502
        %v3514 = vpack.c.b16 %v3505, %v3504
        %v3515 = vpack.c.b16 %v3507, %v3506
        %3524 = vmatpush.bf16.msra.mxu0 %v3515
        %3525 = vmatpush.bf16.msra.mxu0 %v3514
        %3526 = vmatpush.bf16.msra.mxu0 %v3513
        %3527 = vmatpush.bf16.msra.mxu0 %v3512
        %3528 = vmatpush.bf16.msra.mxu0 %v3511
        %3529 = vmatpush.bf16.msra.mxu0 %v3510
        %3530 = vmatpush.bf16.msra.mxu0 %v3509
        %3531 = vmatpush.bf16.msra.mxu0 %v3508
        %3532 = vmatmul.bf16.gmra.mxu0 %v3474
        %v3533 = vpop.f32.mrf.mxu0
        %v3534 = vadd.f32 0.0, %v3533
        %v3535 = vpop.f32.mrf.mxu0
        %v3536 = vadd.f32 0.0, %v3535
        %3537 = vdwg.mxu0
        %v3538 = vadd.f32 %v3381, %v3534
        %v3539 = vadd.f32 %v3383, %v3536
        %v3540 = vld [vmem:[%s3086] sm:$0x3]
        %v3541 = vld [vmem:[%s3086 + $0x4] sm:$0x3]
        %v3542 = vld [vmem:[%s3086 + $0x8] sm:$0x3]
        %v3543 = vld [vmem:[%s3086 + $0xc] sm:$0x3]
        %s3544 = scalar_lea.vmem [#allocation12], 192
        %v3545 = vld [vmem:[%s3544] sm:$0xf]
        %v3546 = vld [vmem:[%s3544 + $0x4] sm:$0xf]
        %v3547 = vld [vmem:[%s3544 + $0x8] sm:$0xf]
        %v3548 = vld [vmem:[%s3544 + $0xc] sm:$0xf]
        %v3549 = vld [vmem:[%s3544 + $0x10] sm:$0xf]
        %v3550 = vld [vmem:[%s3544 + $0x14] sm:$0xf]
        %v3551 = vld [vmem:[%s3544 + $0x18] sm:$0xf]
        %v3552 = vld [vmem:[%s3544 + $0x1c] sm:$0xf]
        %v3553 = vld [vmem:[%s3544 + $0x20] sm:$0xf]
        %v3554 = vld [vmem:[%s3544 + $0x24] sm:$0xf]
        %v3555 = vld [vmem:[%s3544 + $0x28] sm:$0xf]
        %v3556 = vld [vmem:[%s3544 + $0x2c] sm:$0xf]
        %v3557 = vld [vmem:[%s3544 + $0x30] sm:$0xf]
        %v3558 = vld [vmem:[%s3544 + $0x34] sm:$0xf]
        %v3559 = vld [vmem:[%s3544 + $0x38] sm:$0xf]
        %v3560 = vld [vmem:[%s3544 + $0x3c] sm:$0xf]
        %3562 = vst [vmem:[#allocation1] ss:$4 sm:$0xff] %v3540
        %s3564 = scalar_lea.vmem [#allocation1], 1
        %3565 = vst [vmem:[%s3564] ss:$4 sm:$0xff] %v3541
        %s3567 = scalar_lea.vmem [#allocation1], 2
        %3568 = vst [vmem:[%s3567] ss:$4 sm:$0xff] %v3542
        %s3570 = scalar_lea.vmem [#allocation1], 3
        %3571 = vst [vmem:[%s3570] ss:$4 sm:$0xff] %v3543
        %v3572 = vld.sshfl [vmem:[#allocation1] sm:$0xff pattern:$0x73625140]
        %v3590 = vunpack.c.l.b16 %v3545
        %v3591 = vunpack.c.l.b16 %v3546
        %v3592 = vunpack.c.l.b16 %v3547
        %v3593 = vunpack.c.l.b16 %v3548
        %v3594 = vunpack.c.l.b16 %v3549
        %v3595 = vunpack.c.l.b16 %v3550
        %v3596 = vunpack.c.l.b16 %v3551
        %v3597 = vunpack.c.l.b16 %v3552
        %v3598 = vunpack.c.l.b16 %v3553
        %v3599 = vunpack.c.l.b16 %v3554
        %v3600 = vunpack.c.l.b16 %v3555
        %v3601 = vunpack.c.l.b16 %v3556
        %v3602 = vunpack.c.l.b16 %v3557
        %v3603 = vunpack.c.l.b16 %v3558
        %v3604 = vunpack.c.l.b16 %v3559
        %v3605 = vunpack.c.l.b16 %v3560
        %v3606 = vpack.c.b16 %v3591, %v3590
        %v3607 = vpack.c.b16 %v3593, %v3592
        %v3608 = vpack.c.b16 %v3595, %v3594
        %v3609 = vpack.c.b16 %v3597, %v3596
        %v3610 = vpack.c.b16 %v3599, %v3598
        %v3611 = vpack.c.b16 %v3601, %v3600
        %v3612 = vpack.c.b16 %v3603, %v3602
        %v3613 = vpack.c.b16 %v3605, %v3604
        %3622 = vmatpush.bf16.msra.mxu0 %v3613
        %3623 = vmatpush.bf16.msra.mxu0 %v3612
        %3624 = vmatpush.bf16.msra.mxu0 %v3611
        %3625 = vmatpush.bf16.msra.mxu0 %v3610
        %3626 = vmatpush.bf16.msra.mxu0 %v3609
        %3627 = vmatpush.bf16.msra.mxu0 %v3608
        %3628 = vmatpush.bf16.msra.mxu0 %v3607
        %3629 = vmatpush.bf16.msra.mxu0 %v3606
        %3630 = vmatmul.bf16.gmra.mxu0 %v3572
        %v3631 = vpop.f32.mrf.mxu0
        %v3632 = vadd.f32 0.0, %v3631
        %v3633 = vpop.f32.mrf.mxu0
        %v3634 = vadd.f32 0.0, %v3633
        %3635 = vdwg.mxu0
        %v3636 = vadd.f32 %v3538, %v3632
        %v3637 = vadd.f32 %v3539, %v3634
        %v3638 = vld [vmem:[%s3086] sm:$0x7]
        %v3639 = vld [vmem:[%s3086 + $0x4] sm:$0x7]
        %v3640 = vld [vmem:[%s3086 + $0x8] sm:$0x7]
        %v3641 = vld [vmem:[%s3086 + $0xc] sm:$0x7]
        %v3646 = vrot.slane %v3638, 2
        %v3647 = vrot.slane %v3639, 2
        %v3648 = vrot.slane %v3640, 2
        %v3649 = vrot.slane %v3641, 2
        %v3652 = vsel %vm3133, %v3638, %v3646
        %v3653 = vsel %vm3137, %v3638, %v3646
        %v3655 = vrot.slane %v3653, 2
        %v3658 = vsel %vm3133, %v3639, %v3647
        %v3659 = vsel %vm3137, %v3639, %v3647
        %v3661 = vrot.slane %v3659, 2
        %v3664 = vsel %vm3133, %v3640, %v3648
        %v3665 = vsel %vm3137, %v3640, %v3648
        %v3667 = vrot.slane %v3665, 2
        %v3670 = vsel %vm3133, %v3641, %v3649
        %v3671 = vsel %vm3137, %v3641, %v3649
        %v3673 = vrot.slane %v3671, 2
        %v3674 = vshrl.u32 %v3652, 16
        %v3676 = vrot.slane %v3674, 6
        %v3677 = vshll.u32 %v3652, 16
        %v3679 = vrot.slane %v3677, 7
        %v3680 = vor.u32 %v3676, %v3679
        %v3681 = vrot.slane %v3680, 2
        %v3683 = vshll.u32 %v3655, 16
        %v3685 = vrot.slane %v3683, 7
        %v3686 = vsel %vm3165, %v3681, %v3685
        %v3687 = vshrl.u32 %v3658, 16
        %v3689 = vrot.slane %v3687, 6
        %v3690 = vshll.u32 %v3658, 16
        %v3692 = vrot.slane %v3690, 7
        %v3693 = vor.u32 %v3689, %v3692
        %v3694 = vrot.slane %v3693, 2
        %v3696 = vshll.u32 %v3661, 16
        %v3698 = vrot.slane %v3696, 7
        %v3699 = vsel %vm3165, %v3694, %v3698
        %v3700 = vshrl.u32 %v3664, 16
        %v3702 = vrot.slane %v3700, 6
        %v3703 = vshll.u32 %v3664, 16
        %v3705 = vrot.slane %v3703, 7
        %v3706 = vor.u32 %v3702, %v3705
        %v3707 = vrot.slane %v3706, 2
        %v3709 = vshll.u32 %v3667, 16
        %v3711 = vrot.slane %v3709, 7
        %v3712 = vsel %vm3165, %v3707, %v3711
        %v3713 = vshrl.u32 %v3670, 16
        %v3715 = vrot.slane %v3713, 6
        %v3716 = vshll.u32 %v3670, 16
        %v3718 = vrot.slane %v3716, 7
        %v3719 = vor.u32 %v3715, %v3718
        %v3720 = vrot.slane %v3719, 2
        %v3722 = vshll.u32 %v3673, 16
        %v3724 = vrot.slane %v3722, 7
        %v3725 = vsel %vm3165, %v3720, %v3724
        %s3726 = scalar_lea.vmem [#allocation12], 256
        %v3727 = vld [vmem:[%s3726] sm:$0xf]
        %v3728 = vld [vmem:[%s3726 + $0x4] sm:$0xf]
        %v3729 = vld [vmem:[%s3726 + $0x8] sm:$0xf]
        %v3730 = vld [vmem:[%s3726 + $0xc] sm:$0xf]
        %v3731 = vld [vmem:[%s3726 + $0x10] sm:$0xf]
        %v3732 = vld [vmem:[%s3726 + $0x14] sm:$0xf]
        %v3733 = vld [vmem:[%s3726 + $0x18] sm:$0xf]
        %v3734 = vld [vmem:[%s3726 + $0x1c] sm:$0xf]
        %v3735 = vld [vmem:[%s3726 + $0x20] sm:$0xf]
        %v3736 = vld [vmem:[%s3726 + $0x24] sm:$0xf]
        %v3737 = vld [vmem:[%s3726 + $0x28] sm:$0xf]
        %v3738 = vld [vmem:[%s3726 + $0x2c] sm:$0xf]
        %v3739 = vld [vmem:[%s3726 + $0x30] sm:$0xf]
        %v3740 = vld [vmem:[%s3726 + $0x34] sm:$0xf]
        %v3741 = vld [vmem:[%s3726 + $0x38] sm:$0xf]
        %v3742 = vld [vmem:[%s3726 + $0x3c] sm:$0xf]
        %3744 = vst [vmem:[#allocation1] ss:$4 sm:$0xff] %v3686
        %s3746 = scalar_lea.vmem [#allocation1], 1
        %3747 = vst [vmem:[%s3746] ss:$4 sm:$0xff] %v3699
        %s3749 = scalar_lea.vmem [#allocation1], 2
        %3750 = vst [vmem:[%s3749] ss:$4 sm:$0xff] %v3712
        %s3752 = scalar_lea.vmem [#allocation1], 3
        %3753 = vst [vmem:[%s3752] ss:$4 sm:$0xff] %v3725
        %v3754 = vld.sshfl [vmem:[#allocation1] sm:$0xff pattern:$0x73625140]
        %v3772 = vunpack.c.l.b16 %v3727
        %v3773 = vunpack.c.l.b16 %v3728
        %v3774 = vunpack.c.l.b16 %v3729
        %v3775 = vunpack.c.l.b16 %v3730
        %v3776 = vunpack.c.l.b16 %v3731
        %v3777 = vunpack.c.l.b16 %v3732
        %v3778 = vunpack.c.l.b16 %v3733
        %v3779 = vunpack.c.l.b16 %v3734
        %v3780 = vunpack.c.l.b16 %v3735
        %v3781 = vunpack.c.l.b16 %v3736
        %v3782 = vunpack.c.l.b16 %v3737
        %v3783 = vunpack.c.l.b16 %v3738
        %v3784 = vunpack.c.l.b16 %v3739
        %v3785 = vunpack.c.l.b16 %v3740
        %v3786 = vunpack.c.l.b16 %v3741
        %v3787 = vunpack.c.l.b16 %v3742
        %v3788 = vpack.c.b16 %v3773, %v3772
        %v3789 = vpack.c.b16 %v3775, %v3774
        %v3790 = vpack.c.b16 %v3777, %v3776
        %v3791 = vpack.c.b16 %v3779, %v3778
        %v3792 = vpack.c.b16 %v3781, %v3780
        %v3793 = vpack.c.b16 %v3783, %v3782
        %v3794 = vpack.c.b16 %v3785, %v3784
        %v3795 = vpack.c.b16 %v3787, %v3786
        %3804 = vmatpush.bf16.msra.mxu0 %v3795
        %3805 = vmatpush.bf16.msra.mxu0 %v3794
        %3806 = vmatpush.bf16.msra.mxu0 %v3793
        %3807 = vmatpush.bf16.msra.mxu0 %v3792
        %3808 = vmatpush.bf16.msra.mxu0 %v3791
        %3809 = vmatpush.bf16.msra.mxu0 %v3790
        %3810 = vmatpush.bf16.msra.mxu0 %v3789
        %3811 = vmatpush.bf16.msra.mxu0 %v3788
        %3812 = vmatmul.bf16.gmra.mxu0 %v3754
        %v3813 = vpop.f32.mrf.mxu0
        %v3814 = vadd.f32 0.0, %v3813
        %v3815 = vpop.f32.mrf.mxu0
        %v3816 = vadd.f32 0.0, %v3815
        %3817 = vdwg.mxu0
        %v3818 = vadd.f32 %v3636, %v3814
        %v3819 = vadd.f32 %v3637, %v3816
        %v3820 = vld [vmem:[%s3086] sm:$0x6]
        %v3821 = vld [vmem:[%s3086 + $0x4] sm:$0x6]
        %v3822 = vld [vmem:[%s3086 + $0x8] sm:$0x6]
        %v3823 = vld [vmem:[%s3086 + $0xc] sm:$0x6]
        %v3828 = vrot.slane %v3820, 2
        %v3829 = vrot.slane %v3821, 2
        %v3830 = vrot.slane %v3822, 2
        %v3831 = vrot.slane %v3823, 2
        %v3834 = vsel %vm3133, %v3820, %v3828
        %v3836 = vsel %vm3137, %v3820, %v3828
        %v3838 = vrot.slane %v3836, 2
        %v3841 = vsel %vm3133, %v3821, %v3829
        %v3843 = vsel %vm3137, %v3821, %v3829
        %v3845 = vrot.slane %v3843, 2
        %v3848 = vsel %vm3133, %v3822, %v3830
        %v3850 = vsel %vm3137, %v3822, %v3830
        %v3852 = vrot.slane %v3850, 2
        %v3855 = vsel %vm3133, %v3823, %v3831
        %v3857 = vsel %vm3137, %v3823, %v3831
        %v3859 = vrot.slane %v3857, 2
        %v3860 = vrot.slane %v3834, 7
        %v3861 = vrot.slane %v3860, 2
        %v3862 = vrot.slane %v3838, 7
        %v3863 = vsel %vm3429, %v3861, %v3862
        %v3864 = vrot.slane %v3841, 7
        %v3865 = vrot.slane %v3864, 2
        %v3866 = vrot.slane %v3845, 7
        %v3867 = vsel %vm3429, %v3865, %v3866
        %v3868 = vrot.slane %v3848, 7
        %v3869 = vrot.slane %v3868, 2
        %v3870 = vrot.slane %v3852, 7
        %v3871 = vsel %vm3429, %v3869, %v3870
        %v3872 = vrot.slane %v3855, 7
        %v3873 = vrot.slane %v3872, 2
        %v3874 = vrot.slane %v3859, 7
        %v3875 = vsel %vm3429, %v3873, %v3874
        %s3876 = scalar_lea.vmem [#allocation12], 320
        %v3877 = vld [vmem:[%s3876] sm:$0xf]
        %v3878 = vld [vmem:[%s3876 + $0x4] sm:$0xf]
        %v3879 = vld [vmem:[%s3876 + $0x8] sm:$0xf]
        %v3880 = vld [vmem:[%s3876 + $0xc] sm:$0xf]
        %v3881 = vld [vmem:[%s3876 + $0x10] sm:$0xf]
        %v3882 = vld [vmem:[%s3876 + $0x14] sm:$0xf]
        %v3883 = vld [vmem:[%s3876 + $0x18] sm:$0xf]
        %v3884 = vld [vmem:[%s3876 + $0x1c] sm:$0xf]
        %v3885 = vld [vmem:[%s3876 + $0x20] sm:$0xf]
        %v3886 = vld [vmem:[%s3876 + $0x24] sm:$0xf]
        %v3887 = vld [vmem:[%s3876 + $0x28] sm:$0xf]
        %v3888 = vld [vmem:[%s3876 + $0x2c] sm:$0xf]
        %v3889 = vld [vmem:[%s3876 + $0x30] sm:$0xf]
        %v3890 = vld [vmem:[%s3876 + $0x34] sm:$0xf]
        %v3891 = vld [vmem:[%s3876 + $0x38] sm:$0xf]
        %v3892 = vld [vmem:[%s3876 + $0x3c] sm:$0xf]
        %3894 = vst [vmem:[#allocation1] ss:$4 sm:$0xff] %v3863
        %s3896 = scalar_lea.vmem [#allocation1], 1
        %3897 = vst [vmem:[%s3896] ss:$4 sm:$0xff] %v3867
        %s3899 = scalar_lea.vmem [#allocation1], 2
        %3900 = vst [vmem:[%s3899] ss:$4 sm:$0xff] %v3871
        %s3902 = scalar_lea.vmem [#allocation1], 3
        %3903 = vst [vmem:[%s3902] ss:$4 sm:$0xff] %v3875
        %v3904 = vld.sshfl [vmem:[#allocation1] sm:$0xff pattern:$0x73625140]
        %v3922 = vunpack.c.l.b16 %v3877
        %v3923 = vunpack.c.l.b16 %v3878
        %v3924 = vunpack.c.l.b16 %v3879
        %v3925 = vunpack.c.l.b16 %v3880
        %v3926 = vunpack.c.l.b16 %v3881
        %v3927 = vunpack.c.l.b16 %v3882
        %v3928 = vunpack.c.l.b16 %v3883
        %v3929 = vunpack.c.l.b16 %v3884
        %v3930 = vunpack.c.l.b16 %v3885
        %v3931 = vunpack.c.l.b16 %v3886
        %v3932 = vunpack.c.l.b16 %v3887
        %v3933 = vunpack.c.l.b16 %v3888
        %v3934 = vunpack.c.l.b16 %v3889
        %v3935 = vunpack.c.l.b16 %v3890
        %v3936 = vunpack.c.l.b16 %v3891
        %v3937 = vunpack.c.l.b16 %v3892
        %v3938 = vpack.c.b16 %v3923, %v3922
        %v3939 = vpack.c.b16 %v3925, %v3924
        %v3940 = vpack.c.b16 %v3927, %v3926
        %v3941 = vpack.c.b16 %v3929, %v3928
        %v3942 = vpack.c.b16 %v3931, %v3930
        %v3943 = vpack.c.b16 %v3933, %v3932
        %v3944 = vpack.c.b16 %v3935, %v3934
        %v3945 = vpack.c.b16 %v3937, %v3936
        %3954 = vmatpush.bf16.msra.mxu0 %v3945
        %3955 = vmatpush.bf16.msra.mxu0 %v3944
        %3956 = vmatpush.bf16.msra.mxu0 %v3943
        %3957 = vmatpush.bf16.msra.mxu0 %v3942
        %3958 = vmatpush.bf16.msra.mxu0 %v3941
        %3959 = vmatpush.bf16.msra.mxu0 %v3940
        %3960 = vmatpush.bf16.msra.mxu0 %v3939
        %3961 = vmatpush.bf16.msra.mxu0 %v3938
        %3962 = vmatmul.bf16.gmra.mxu0 %v3904
        %v3963 = vpop.f32.mrf.mxu0
        %v3964 = vadd.f32 0.0, %v3963
        %v3965 = vpop.f32.mrf.mxu0
        %v3966 = vadd.f32 0.0, %v3965
        %3967 = vdwg.mxu0
        %v3968 = vadd.f32 %v3818, %v3964
        %v3969 = vadd.f32 %v3819, %v3966
        %s3970 = scalar_lea.vmem [#allocation2], 8
        %v3971 = vld [vmem:[%s3970] sm:$0x3]
        %v3972 = vld [vmem:[%s3970 + $0x4] sm:$0x3]
        %v3973 = vld [vmem:[%s3970 + $0x8] sm:$0x3]
        %v3974 = vld [vmem:[%s3970 + $0xc] sm:$0x3]
        %s3975 = scalar_lea.vmem [#allocation12], 384
        %v3976 = vld [vmem:[%s3975] sm:$0xf]
        %v3977 = vld [vmem:[%s3975 + $0x4] sm:$0xf]
        %v3978 = vld [vmem:[%s3975 + $0x8] sm:$0xf]
        %v3979 = vld [vmem:[%s3975 + $0xc] sm:$0xf]
        %v3980 = vld [vmem:[%s3975 + $0x10] sm:$0xf]
        %v3981 = vld [vmem:[%s3975 + $0x14] sm:$0xf]
        %v3982 = vld [vmem:[%s3975 + $0x18] sm:$0xf]
        %v3983 = vld [vmem:[%s3975 + $0x1c] sm:$0xf]
        %v3984 = vld [vmem:[%s3975 + $0x20] sm:$0xf]
        %v3985 = vld [vmem:[%s3975 + $0x24] sm:$0xf]
        %v3986 = vld [vmem:[%s3975 + $0x28] sm:$0xf]
        %v3987 = vld [vmem:[%s3975 + $0x2c] sm:$0xf]
        %v3988 = vld [vmem:[%s3975 + $0x30] sm:$0xf]
        %v3989 = vld [vmem:[%s3975 + $0x34] sm:$0xf]
        %v3990 = vld [vmem:[%s3975 + $0x38] sm:$0xf]
        %v3991 = vld [vmem:[%s3975 + $0x3c] sm:$0xf]
        %3993 = vst [vmem:[#allocation1] ss:$4 sm:$0xff] %v3971
        %s3995 = scalar_lea.vmem [#allocation1], 1
        %3996 = vst [vmem:[%s3995] ss:$4 sm:$0xff] %v3972
        %s3998 = scalar_lea.vmem [#allocation1], 2
        %3999 = vst [vmem:[%s3998] ss:$4 sm:$0xff] %v3973
        %s4001 = scalar_lea.vmem [#allocation1], 3
        %4002 = vst [vmem:[%s4001] ss:$4 sm:$0xff] %v3974
        %v4003 = vld.sshfl [vmem:[#allocation1] sm:$0xff pattern:$0x73625140]
        %v4021 = vunpack.c.l.b16 %v3976
        %v4022 = vunpack.c.l.b16 %v3977
        %v4023 = vunpack.c.l.b16 %v3978
        %v4024 = vunpack.c.l.b16 %v3979
        %v4025 = vunpack.c.l.b16 %v3980
        %v4026 = vunpack.c.l.b16 %v3981
        %v4027 = vunpack.c.l.b16 %v3982
        %v4028 = vunpack.c.l.b16 %v3983
        %v4029 = vunpack.c.l.b16 %v3984
        %v4030 = vunpack.c.l.b16 %v3985
        %v4031 = vunpack.c.l.b16 %v3986
        %v4032 = vunpack.c.l.b16 %v3987
        %v4033 = vunpack.c.l.b16 %v3988
        %v4034 = vunpack.c.l.b16 %v3989
        %v4035 = vunpack.c.l.b16 %v3990
        %v4036 = vunpack.c.l.b16 %v3991
        %v4037 = vpack.c.b16 %v4022, %v4021
        %v4038 = vpack.c.b16 %v4024, %v4023
        %v4039 = vpack.c.b16 %v4026, %v4025
        %v4040 = vpack.c.b16 %v4028, %v4027
        %v4041 = vpack.c.b16 %v4030, %v4029
        %v4042 = vpack.c.b16 %v4032, %v4031
        %v4043 = vpack.c.b16 %v4034, %v4033
        %v4044 = vpack.c.b16 %v4036, %v4035
        %4053 = vmatpush.bf16.msra.mxu0 %v4044
        %4054 = vmatpush.bf16.msra.mxu0 %v4043
        %4055 = vmatpush.bf16.msra.mxu0 %v4042
        %4056 = vmatpush.bf16.msra.mxu0 %v4041
        %4057 = vmatpush.bf16.msra.mxu0 %v4040
        %4058 = vmatpush.bf16.msra.mxu0 %v4039
        %4059 = vmatpush.bf16.msra.mxu0 %v4038
        %4060 = vmatpush.bf16.msra.mxu0 %v4037
        %4061 = vmatmul.bf16.gmra.mxu0 %v4003
        %v4062 = vpop.f32.mrf.mxu0
        %v4063 = vadd.f32 0.0, %v4062
        %v4064 = vpop.f32.mrf.mxu0
        %v4065 = vadd.f32 0.0, %v4064
        %4066 = vdwg.mxu0
        %v4067 = vadd.f32 %v3968, %v4063
        %v4068 = vadd.f32 %v3969, %v4065
        %v4069 = vld [vmem:[%s3970] sm:$0x7]
        %v4070 = vld [vmem:[%s3970 + $0x4] sm:$0x7]
        %v4071 = vld [vmem:[%s3970 + $0x8] sm:$0x7]
        %v4072 = vld [vmem:[%s3970 + $0xc] sm:$0x7]
        %v4077 = vrot.slane %v4069, 2
        %v4078 = vrot.slane %v4070, 2
        %v4079 = vrot.slane %v4071, 2
        %v4080 = vrot.slane %v4072, 2
        %v4083 = vsel %vm3133, %v4069, %v4077
        %v4084 = vsel %vm3137, %v4069, %v4077
        %v4086 = vrot.slane %v4084, 2
        %v4089 = vsel %vm3133, %v4070, %v4078
        %v4090 = vsel %vm3137, %v4070, %v4078
        %v4092 = vrot.slane %v4090, 2
        %v4095 = vsel %vm3133, %v4071, %v4079
        %v4096 = vsel %vm3137, %v4071, %v4079
        %v4098 = vrot.slane %v4096, 2
        %v4101 = vsel %vm3133, %v4072, %v4080
        %v4102 = vsel %vm3137, %v4072, %v4080
        %v4104 = vrot.slane %v4102, 2
        %v4105 = vshrl.u32 %v4083, 16
        %v4107 = vrot.slane %v4105, 6
        %v4108 = vshll.u32 %v4083, 16
        %v4110 = vrot.slane %v4108, 7
        %v4111 = vor.u32 %v4107, %v4110
        %v4112 = vrot.slane %v4111, 2
        %v4114 = vshll.u32 %v4086, 16
        %v4116 = vrot.slane %v4114, 7
        %v4117 = vsel %vm3165, %v4112, %v4116
        %v4118 = vshrl.u32 %v4089, 16
        %v4120 = vrot.slane %v4118, 6
        %v4121 = vshll.u32 %v4089, 16
        %v4123 = vrot.slane %v4121, 7
        %v4124 = vor.u32 %v4120, %v4123
        %v4125 = vrot.slane %v4124, 2
        %v4127 = vshll.u32 %v4092, 16
        %v4129 = vrot.slane %v4127, 7
        %v4130 = vsel %vm3165, %v4125, %v4129
        %v4131 = vshrl.u32 %v4095, 16
        %v4133 = vrot.slane %v4131, 6
        %v4134 = vshll.u32 %v4095, 16
        %v4136 = vrot.slane %v4134, 7
        %v4137 = vor.u32 %v4133, %v4136
        %v4138 = vrot.slane %v4137, 2
        %v4140 = vshll.u32 %v4098, 16
        %v4142 = vrot.slane %v4140, 7
        %v4143 = vsel %vm3165, %v4138, %v4142
        %v4144 = vshrl.u32 %v4101, 16
        %v4146 = vrot.slane %v4144, 6
        %v4147 = vshll.u32 %v4101, 16
        %v4149 = vrot.slane %v4147, 7
        %v4150 = vor.u32 %v4146, %v4149
        %v4151 = vrot.slane %v4150, 2
        %v4153 = vshll.u32 %v4104, 16
        %v4155 = vrot.slane %v4153, 7
        %v4156 = vsel %vm3165, %v4151, %v4155
        %s4157 = scalar_lea.vmem [#allocation12], 448
        %v4158 = vld [vmem:[%s4157] sm:$0xf]
        %v4159 = vld [vmem:[%s4157 + $0x4] sm:$0xf]
        %v4160 = vld [vmem:[%s4157 + $0x8] sm:$0xf]
        %v4161 = vld [vmem:[%s4157 + $0xc] sm:$0xf]
        %v4162 = vld [vmem:[%s4157 + $0x10] sm:$0xf]
        %v4163 = vld [vmem:[%s4157 + $0x14] sm:$0xf]
        %v4164 = vld [vmem:[%s4157 + $0x18] sm:$0xf]
        %v4165 = vld [vmem:[%s4157 + $0x1c] sm:$0xf]
        %v4166 = vld [vmem:[%s4157 + $0x20] sm:$0xf]
        %v4167 = vld [vmem:[%s4157 + $0x24] sm:$0xf]
        %v4168 = vld [vmem:[%s4157 + $0x28] sm:$0xf]
        %v4169 = vld [vmem:[%s4157 + $0x2c] sm:$0xf]
        %v4170 = vld [vmem:[%s4157 + $0x30] sm:$0xf]
        %v4171 = vld [vmem:[%s4157 + $0x34] sm:$0xf]
        %v4172 = vld [vmem:[%s4157 + $0x38] sm:$0xf]
        %v4173 = vld [vmem:[%s4157 + $0x3c] sm:$0xf]
        %4175 = vst [vmem:[#allocation1] ss:$4 sm:$0xff] %v4117
        %s4177 = scalar_lea.vmem [#allocation1], 1
        %4178 = vst [vmem:[%s4177] ss:$4 sm:$0xff] %v4130
        %s4180 = scalar_lea.vmem [#allocation1], 2
        %4181 = vst [vmem:[%s4180] ss:$4 sm:$0xff] %v4143
        %s4183 = scalar_lea.vmem [#allocation1], 3
        %4184 = vst [vmem:[%s4183] ss:$4 sm:$0xff] %v4156
        %v4185 = vld.sshfl [vmem:[#allocation1] sm:$0xff pattern:$0x73625140]
        %v4203 = vunpack.c.l.b16 %v4158
        %v4204 = vunpack.c.l.b16 %v4159
        %v4205 = vunpack.c.l.b16 %v4160
        %v4206 = vunpack.c.l.b16 %v4161
        %v4207 = vunpack.c.l.b16 %v4162
        %v4208 = vunpack.c.l.b16 %v4163
        %v4209 = vunpack.c.l.b16 %v4164
        %v4210 = vunpack.c.l.b16 %v4165
        %v4211 = vunpack.c.l.b16 %v4166
        %v4212 = vunpack.c.l.b16 %v4167
        %v4213 = vunpack.c.l.b16 %v4168
        %v4214 = vunpack.c.l.b16 %v4169
        %v4215 = vunpack.c.l.b16 %v4170
        %v4216 = vunpack.c.l.b16 %v4171
        %v4217 = vunpack.c.l.b16 %v4172
        %v4218 = vunpack.c.l.b16 %v4173
        %v4219 = vpack.c.b16 %v4204, %v4203
        %v4220 = vpack.c.b16 %v4206, %v4205
        %v4221 = vpack.c.b16 %v4208, %v4207
        %v4222 = vpack.c.b16 %v4210, %v4209
        %v4223 = vpack.c.b16 %v4212, %v4211
        %v4224 = vpack.c.b16 %v4214, %v4213
        %v4225 = vpack.c.b16 %v4216, %v4215
        %v4226 = vpack.c.b16 %v4218, %v4217
        %4235 = vmatpush.bf16.msra.mxu0 %v4226
        %4236 = vmatpush.bf16.msra.mxu0 %v4225
        %4237 = vmatpush.bf16.msra.mxu0 %v4224
        %4238 = vmatpush.bf16.msra.mxu0 %v4223
        %4239 = vmatpush.bf16.msra.mxu0 %v4222
        %4240 = vmatpush.bf16.msra.mxu0 %v4221
        %4241 = vmatpush.bf16.msra.mxu0 %v4220
        %4242 = vmatpush.bf16.msra.mxu0 %v4219
        %4243 = vmatmul.bf16.gmra.mxu0 %v4185
        %v4244 = vpop.f32.mrf.mxu0
        %v4245 = vadd.f32 0.0, %v4244
        %v4246 = vpop.f32.mrf.mxu0
        %v4247 = vadd.f32 0.0, %v4246
        %4248 = vdwg.mxu0
        %v4249 = vadd.f32 %v4067, %v4245
        %v4250 = vadd.f32 %v4068, %v4247
        %v4251 = vld [vmem:[%s3970] sm:$0x6]
        %v4252 = vld [vmem:[%s3970 + $0x4] sm:$0x6]
        %v4253 = vld [vmem:[%s3970 + $0x8] sm:$0x6]
        %v4254 = vld [vmem:[%s3970 + $0xc] sm:$0x6]
        %v4259 = vrot.slane %v4251, 2
        %v4260 = vrot.slane %v4252, 2
        %v4261 = vrot.slane %v4253, 2
        %v4262 = vrot.slane %v4254, 2
        %v4265 = vsel %vm3133, %v4251, %v4259
        %v4267 = vsel %vm3137, %v4251, %v4259
        %v4269 = vrot.slane %v4267, 2
        %v4272 = vsel %vm3133, %v4252, %v4260
        %v4274 = vsel %vm3137, %v4252, %v4260
        %v4276 = vrot.slane %v4274, 2
        %v4279 = vsel %vm3133, %v4253, %v4261
        %v4281 = vsel %vm3137, %v4253, %v4261
        %v4283 = vrot.slane %v4281, 2
        %v4286 = vsel %vm3133, %v4254, %v4262
        %v4288 = vsel %vm3137, %v4254, %v4262
        %v4290 = vrot.slane %v4288, 2
        %v4291 = vrot.slane %v4265, 7
        %v4292 = vrot.slane %v4291, 2
        %v4293 = vrot.slane %v4269, 7
        %v4294 = vsel %vm3429, %v4292, %v4293
        %v4295 = vrot.slane %v4272, 7
        %v4296 = vrot.slane %v4295, 2
        %v4297 = vrot.slane %v4276, 7
        %v4298 = vsel %vm3429, %v4296, %v4297
        %v4299 = vrot.slane %v4279, 7
        %v4300 = vrot.slane %v4299, 2
        %v4301 = vrot.slane %v4283, 7
        %v4302 = vsel %vm3429, %v4300, %v4301
        %v4303 = vrot.slane %v4286, 7
        %v4304 = vrot.slane %v4303, 2
        %v4305 = vrot.slane %v4290, 7
        %v4306 = vsel %vm3429, %v4304, %v4305
        %s4307 = scalar_lea.vmem [#allocation12], 512
        %v4308 = vld [vmem:[%s4307] sm:$0xf]
        %v4309 = vld [vmem:[%s4307 + $0x4] sm:$0xf]
        %v4310 = vld [vmem:[%s4307 + $0x8] sm:$0xf]
        %v4311 = vld [vmem:[%s4307 + $0xc] sm:$0xf]
        %v4312 = vld [vmem:[%s4307 + $0x10] sm:$0xf]
        %v4313 = vld [vmem:[%s4307 + $0x14] sm:$0xf]
        %v4314 = vld [vmem:[%s4307 + $0x18] sm:$0xf]
        %v4315 = vld [vmem:[%s4307 + $0x1c] sm:$0xf]
        %v4316 = vld [vmem:[%s4307 + $0x20] sm:$0xf]
        %v4317 = vld [vmem:[%s4307 + $0x24] sm:$0xf]
        %v4318 = vld [vmem:[%s4307 + $0x28] sm:$0xf]
        %v4319 = vld [vmem:[%s4307 + $0x2c] sm:$0xf]
        %v4320 = vld [vmem:[%s4307 + $0x30] sm:$0xf]
        %v4321 = vld [vmem:[%s4307 + $0x34] sm:$0xf]
        %v4322 = vld [vmem:[%s4307 + $0x38] sm:$0xf]
        %v4323 = vld [vmem:[%s4307 + $0x3c] sm:$0xf]
        %4325 = vst [vmem:[#allocation1] ss:$4 sm:$0xff] %v4294
        %s4327 = scalar_lea.vmem [#allocation1], 1
        %4328 = vst [vmem:[%s4327] ss:$4 sm:$0xff] %v4298
        %s4330 = scalar_lea.vmem [#allocation1], 2
        %4331 = vst [vmem:[%s4330] ss:$4 sm:$0xff] %v4302
        %s4333 = scalar_lea.vmem [#allocation1], 3
        %4334 = vst [vmem:[%s4333] ss:$4 sm:$0xff] %v4306
        %v4335 = vld.sshfl [vmem:[#allocation1] sm:$0xff pattern:$0x73625140]
        %v4353 = vunpack.c.l.b16 %v4308
        %v4354 = vunpack.c.l.b16 %v4309
        %v4355 = vunpack.c.l.b16 %v4310
        %v4356 = vunpack.c.l.b16 %v4311
        %v4357 = vunpack.c.l.b16 %v4312
        %v4358 = vunpack.c.l.b16 %v4313
        %v4359 = vunpack.c.l.b16 %v4314
        %v4360 = vunpack.c.l.b16 %v4315
        %v4361 = vunpack.c.l.b16 %v4316
        %v4362 = vunpack.c.l.b16 %v4317
        %v4363 = vunpack.c.l.b16 %v4318
        %v4364 = vunpack.c.l.b16 %v4319
        %v4365 = vunpack.c.l.b16 %v4320
        %v4366 = vunpack.c.l.b16 %v4321
        %v4367 = vunpack.c.l.b16 %v4322
        %v4368 = vunpack.c.l.b16 %v4323
        %v4369 = vpack.c.b16 %v4354, %v4353
        %v4370 = vpack.c.b16 %v4356, %v4355
        %v4371 = vpack.c.b16 %v4358, %v4357
        %v4372 = vpack.c.b16 %v4360, %v4359
        %v4373 = vpack.c.b16 %v4362, %v4361
        %v4374 = vpack.c.b16 %v4364, %v4363
        %v4375 = vpack.c.b16 %v4366, %v4365
        %v4376 = vpack.c.b16 %v4368, %v4367
        %4385 = vmatpush.bf16.msra.mxu0 %v4376
        %4386 = vmatpush.bf16.msra.mxu0 %v4375
        %4387 = vmatpush.bf16.msra.mxu0 %v4374
        %4388 = vmatpush.bf16.msra.mxu0 %v4373
        %4389 = vmatpush.bf16.msra.mxu0 %v4372
        %4390 = vmatpush.bf16.msra.mxu0 %v4371
        %4391 = vmatpush.bf16.msra.mxu0 %v4370
        %4392 = vmatpush.bf16.msra.mxu0 %v4369
        %4393 = vmatmul.bf16.gmra.mxu0 %v4335
        %v4394 = vpop.f32.mrf.mxu0
        %v4395 = vadd.f32 0.0, %v4394
        %v4396 = vpop.f32.mrf.mxu0
        %v4397 = vadd.f32 0.0, %v4396
        %4398 = vdwg.mxu0
        %v4399 = vadd.f32 %v4249, %v4395
        %v4400 = vadd.f32 %v4250, %v4397
        %v4401 = vld [vmem:[%s5] sm:$0x3]
        %v4402 = vperm.slane %v4401, 0
        %v4403 = vmul.f32 %v4399, %v4402
        %v4404 = vmul.f32 %v4400, %v4402
        %v4405 = vperm.slane %v4401, 1
        %v4406 = vadd.f32 %v4403, %v4405
        %v4407 = vadd.f32 %v4404, %v4405
        %v4408 = vmax.f32 %v4406, 0.0
        %v4409 = vmax.f32 %v4407, 0.0
        %v4410 = vpack.c.bf16 %v4409, %v4408
        %4411 = vmatpush.bf16.msra.mxu0 0
        %4412 = vmatpush.bf16.msra.mxu0 0
        %4413 = vmatpush.bf16.msra.mxu0 0
        %4414 = vmatpush.bf16.msra.mxu0 0
        %4415 = vmatpush.bf16.msra.mxu0 0
        %4416 = vmatpush.bf16.msra.mxu0 0
        %4417 = vmatpush.bf16.msra.mxu0 0
        %4418 = vmatpush.bf16.msra.mxu0 %v4410
        %4419 = vmatmul.bf16.gmra.mxu0 %v2946
        %v4420 = vpop.f32.mrf.mxu0
        %v4421 = vadd.f32 0.0, %v4420
        %v4422 = vpop.f32.mrf.mxu0
        %4423 = vdwg.mxu0
        %v4424 = vmul.f32 %v4421, 0.0625
        %v4425 = vpack.c.bf16 %v4424, %v4424
        %v4426 = vld [vmem:[#allocation14] sm:$0xf]
        %v4427 = vld [vmem:[#allocation14 + $0x4] sm:$0xf]
        %v4428 = vld [vmem:[#allocation14 + $0x8] sm:$0xf]
        %v4429 = vld [vmem:[#allocation14 + $0xc] sm:$0xf]
        %v4430 = vld [vmem:[#allocation14 + $0x10] sm:$0xf]
        %v4431 = vld [vmem:[#allocation14 + $0x14] sm:$0xf]
        %v4432 = vld [vmem:[#allocation14 + $0x18] sm:$0xf]
        %v4433 = vld [vmem:[#allocation14 + $0x1c] sm:$0xf]
        %v4434 = vld [vmem:[#allocation14 + $0x20] sm:$0xf]
        %v4435 = vld [vmem:[#allocation14 + $0x24] sm:$0xf]
        %v4436 = vld [vmem:[#allocation14 + $0x28] sm:$0xf]
        %v4437 = vld [vmem:[#allocation14 + $0x2c] sm:$0xf]
        %v4438 = vld [vmem:[#allocation14 + $0x30] sm:$0xf]
        %v4439 = vld [vmem:[#allocation14 + $0x34] sm:$0xf]
        %v4440 = vld [vmem:[#allocation14 + $0x38] sm:$0xf]
        %v4441 = vld [vmem:[#allocation14 + $0x3c] sm:$0xf]
        %v4458 = vunpack.c.l.b16 %v4426
        %v4459 = vunpack.c.l.b16 %v4427
        %v4460 = vunpack.c.l.b16 %v4428
        %v4461 = vunpack.c.l.b16 %v4429
        %v4462 = vunpack.c.l.b16 %v4430
        %v4463 = vunpack.c.l.b16 %v4431
        %v4464 = vunpack.c.l.b16 %v4432
        %v4465 = vunpack.c.l.b16 %v4433
        %v4466 = vunpack.c.l.b16 %v4434
        %v4467 = vunpack.c.l.b16 %v4435
        %v4468 = vunpack.c.l.b16 %v4436
        %v4469 = vunpack.c.l.b16 %v4437
        %v4470 = vunpack.c.l.b16 %v4438
        %v4471 = vunpack.c.l.b16 %v4439
        %v4472 = vunpack.c.l.b16 %v4440
        %v4473 = vunpack.c.l.b16 %v4441
        %v4474 = vpack.c.b16 %v4459, %v4458
        %v4475 = vpack.c.b16 %v4461, %v4460
        %v4476 = vpack.c.b16 %v4463, %v4462
        %v4477 = vpack.c.b16 %v4465, %v4464
        %v4478 = vpack.c.b16 %v4467, %v4466
        %v4479 = vpack.c.b16 %v4469, %v4468
        %v4480 = vpack.c.b16 %v4471, %v4470
        %v4481 = vpack.c.b16 %v4473, %v4472
        %4490 = vmatpush.bf16.msra.mxu0 %v4481
        %4491 = vmatpush.bf16.msra.mxu0 %v4480
        %4492 = vmatpush.bf16.msra.mxu0 %v4479
        %4493 = vmatpush.bf16.msra.mxu0 %v4478
        %4494 = vmatpush.bf16.msra.mxu0 %v4477
        %4495 = vmatpush.bf16.msra.mxu0 %v4476
        %4496 = vmatpush.bf16.msra.mxu0 %v4475
        %4497 = vmatpush.bf16.msra.mxu0 %v4474
        %4498 = vmatmul.bf16.gmra.mxu0 %v4425
        %v4499 = vpop.f32.mrf.mxu0
        %v4500 = vadd.f32 0.0, %v4499
        %v4501 = vpop.f32.mrf.mxu0
        %4502 = vdwg.mxu0
        %v4503 = vld [vmem:[%s7] sm:$0x3]
        %v4504 = vmul.f32 %v4500, %v4503
        %v4506 = vrot.slane %v4503, 1
        %v4508 = vadd.f32 %v4504, %v4506
        %v4509 = vsub.f32 0.0, %v4508
        %v4510 = vmul.f32 %v4509, 1.442695
        %v4511 = vpow.pop %v4510
        %v4512 = vadd.f32 %v4511, 1.0
        %v4513 = vrcp.pop %v4512
        %v4514 = vmul.f32 %v4512, %v4513
        %v4515 = vsub.f32 1.0, %v4514
        %v4516 = vmul.f32 %v4513, %v4515
        %v4517 = vadd.f32 %v4513, %v4516
        %vm4518 = vweird.f32 %v4512
        %vm4519 = vweird.f32 %v4513
        %vm4520 = vmor %vm4518, %vm4519
        %v4521 = vsel %vm4520, %v4513, %v4517
        %v4522 = vand.u32 2147483647, %v4512
        %vm4523 = vcmp.eq.f32.partialorder %v4522, 8.507059e+37
        %v4524 = vand.u32 %v4512, 2147483648
        %v4525 = vor.u32 1.1754944e-38, %v4524
        %v4526 = vsel %vm4523, %v4525, %v4521
        %v4527 = vmul.f32 1.0, %v4526
        %v4528 = vperm.slane %v4527, 0
        %v4529 = vmul.f32 %v4408, %v4528
        %v4530 = vmul.f32 %v4409, %v4528
        %v4531 = vperm.slane %v3046, 0
        %v4532 = vadd.f32 %v4529, %v4531
        %v4533 = vadd.f32 %v4530, %v4531
        %v4534 = vpack.c.bf16 %v4532, %v4532
        %v4535 = vpack.c.bf16 %v4533, %v4533
        %v4538 = vrot.slane %v4534, 3
        %v4539 = vrot.slane %v4535, 3
        %vm4540 = vcmask 1040384
        %v4543 = vsel %vm4540, %v4534, %v4538
        %vm4545 = vcmask 1041409
        %v4546 = vsel %vm4545, %v4534, %v4538
        %v4548 = vrot.slane %v4546, 1
        %vm4549 = vcmask 1042434
        %v4550 = vsel %vm4549, %v4534, %v4538
        %v4552 = vrot.slane %v4550, 2
        %vm4553 = vcmask 1043459
        %v4554 = vsel %vm4553, %v4534, %v4538
        %v4556 = vrot.slane %v4554, 3
        %v4559 = vsel %vm4540, %v4535, %v4539
        %v4561 = vsel %vm4545, %v4535, %v4539
        %v4563 = vrot.slane %v4561, 1
        %v4564 = vsel %vm4549, %v4535, %v4539
        %v4566 = vrot.slane %v4564, 2
        %v4567 = vsel %vm4553, %v4535, %v4539
        %v4569 = vrot.slane %v4567, 3
        %v4570 = vunpack.i.l.s16 %v4543
        %v4571 = vunpack.i.h.s16 %v4543
        %v4572 = vunpack.i.l.s16 %v4548
        %v4573 = vunpack.i.h.s16 %v4548
        %v4574 = vunpack.i.l.s16 %v4552
        %v4575 = vunpack.i.h.s16 %v4552
        %v4576 = vunpack.i.l.s16 %v4556
        %v4577 = vunpack.i.h.s16 %v4556
        %v4578 = vunpack.i.l.s16 %v4559
        %v4579 = vunpack.i.h.s16 %v4559
        %v4580 = vunpack.i.l.s16 %v4563
        %v4581 = vunpack.i.h.s16 %v4563
        %v4582 = vunpack.i.l.s16 %v4566
        %v4583 = vunpack.i.h.s16 %v4566
        %v4584 = vunpack.i.l.s16 %v4569
        %v4585 = vunpack.i.h.s16 %v4569
        %v4586 = vpack.i.b16 %v4570, %v4570
        %v4587 = vpack.i.b16 %v4571, %v4571
        %v4588 = vpack.i.b16 %v4572, %v4572
        %v4589 = vpack.i.b16 %v4573, %v4573
        %v4590 = vpack.i.b16 %v4574, %v4574
        %v4591 = vpack.i.b16 %v4575, %v4575
        %v4592 = vpack.i.b16 %v4576, %v4576
        %v4593 = vpack.i.b16 %v4577, %v4577
        %v4594 = vpack.i.b16 %v4578, %v4578
        %v4595 = vpack.i.b16 %v4579, %v4579
        %v4596 = vpack.i.b16 %v4580, %v4580
        %v4597 = vpack.i.b16 %v4581, %v4581
        %v4598 = vpack.i.b16 %v4582, %v4582
        %v4599 = vpack.i.b16 %v4583, %v4583
        %v4600 = vpack.i.b16 %v4584, %v4584
        %v4601 = vpack.i.b16 %v4585, %v4585
        %v4602 = vperm.slane %v4586, 0
        %v4603 = vperm.slane %v4587, 0
        %v4604 = vperm.slane %v4588, 0
        %v4605 = vperm.slane %v4589, 0
        %v4606 = vperm.slane %v4590, 0
        %v4607 = vperm.slane %v4591, 0
        %v4608 = vperm.slane %v4592, 0
        %v4609 = vperm.slane %v4593, 0
        %v4610 = vperm.slane %v4594, 0
        %v4611 = vperm.slane %v4595, 0
        %v4612 = vperm.slane %v4596, 0
        %v4613 = vperm.slane %v4597, 0
        %v4614 = vperm.slane %v4598, 0
        %v4615 = vperm.slane %v4599, 0
        %v4616 = vperm.slane %v4600, 0
        %v4617 = vperm.slane %v4601, 0
        %v4619 = vpack.i.b16 %v4602, %v4602
        %v4621 = vperm.slane %v4619, 0
        %v4623 = vpack.i.b16 %v4603, %v4603
        %v4625 = vperm.slane %v4623, 0
        %v4627 = vpack.i.b16 %v4604, %v4604
        %v4629 = vperm.slane %v4627, 0
        %v4631 = vpack.i.b16 %v4605, %v4605
        %v4633 = vperm.slane %v4631, 0
        %v4635 = vpack.i.b16 %v4606, %v4606
        %v4637 = vperm.slane %v4635, 0
        %v4639 = vpack.i.b16 %v4607, %v4607
        %v4641 = vperm.slane %v4639, 0
        %v4643 = vpack.i.b16 %v4608, %v4608
        %v4645 = vperm.slane %v4643, 0
        %v4647 = vpack.i.b16 %v4609, %v4609
        %v4649 = vperm.slane %v4647, 0
        %v4651 = vpack.i.b16 %v4610, %v4610
        %v4653 = vperm.slane %v4651, 0
        %v4655 = vpack.i.b16 %v4611, %v4611
        %v4657 = vperm.slane %v4655, 0
        %v4659 = vpack.i.b16 %v4612, %v4612
        %v4661 = vperm.slane %v4659, 0
        %v4663 = vpack.i.b16 %v4613, %v4613
        %v4665 = vperm.slane %v4663, 0
        %v4667 = vpack.i.b16 %v4614, %v4614
        %v4669 = vperm.slane %v4667, 0
        %v4671 = vpack.i.b16 %v4615, %v4615
        %v4673 = vperm.slane %v4671, 0
        %v4675 = vpack.i.b16 %v4616, %v4616
        %v4677 = vperm.slane %v4675, 0
        %v4679 = vpack.i.b16 %v4617, %v4617
        %v4681 = vperm.slane %v4679, 0
        %4683 = vst [vmem:[#allocation1] ss:$4 sm:$0xff] %v4621
        %s4685 = scalar_lea.vmem [#allocation1], 1
        %4686 = vst [vmem:[%s4685] ss:$4 sm:$0xff] %v4625
        %s4688 = scalar_lea.vmem [#allocation1], 2
        %4689 = vst [vmem:[%s4688] ss:$4 sm:$0xff] %v4629
        %s4691 = scalar_lea.vmem [#allocation1], 3
        %4692 = vst [vmem:[%s4691] ss:$4 sm:$0xff] %v4633
        %v4693 = vld [vmem:[#allocation1] sm:$0xff]
        %s4694 = scalar_lea.vmem [#allocation1], 32
        %4695 = vst [vmem:[%s4694] ss:$4 sm:$0xff] %v4621
        %s4696 = scalar_lea.vmem [#allocation1], 33
        %4697 = vst [vmem:[%s4696] ss:$4 sm:$0xff] %v4625
        %s4698 = scalar_lea.vmem [#allocation1], 34
        %4699 = vst [vmem:[%s4698] ss:$4 sm:$0xff] %v4629
        %s4700 = scalar_lea.vmem [#allocation1], 35
        %4701 = vst [vmem:[%s4700] ss:$4 sm:$0xff] %v4633
        %v4702 = vld [vmem:[#allocation1 + $0x20] sm:$0xff]
        %4704 = vst [vmem:[#allocation1] ss:$4 sm:$0xff] %v4637
        %4706 = vst [vmem:[%s4685] ss:$4 sm:$0xff] %v4641
        %4708 = vst [vmem:[%s4688] ss:$4 sm:$0xff] %v4645
        %4710 = vst [vmem:[%s4691] ss:$4 sm:$0xff] %v4649
        %v4711 = vld [vmem:[#allocation1] sm:$0xff]
        %4712 = vst [vmem:[%s4694] ss:$4 sm:$0xff] %v4637
        %4713 = vst [vmem:[%s4696] ss:$4 sm:$0xff] %v4641
        %4714 = vst [vmem:[%s4698] ss:$4 sm:$0xff] %v4645
        %4715 = vst [vmem:[%s4700] ss:$4 sm:$0xff] %v4649
        %v4716 = vld [vmem:[#allocation1 + $0x20] sm:$0xff]
        %4718 = vst [vmem:[#allocation1] ss:$4 sm:$0xff] %v4653
        %4720 = vst [vmem:[%s4685] ss:$4 sm:$0xff] %v4657
        %4722 = vst [vmem:[%s4688] ss:$4 sm:$0xff] %v4661
        %4724 = vst [vmem:[%s4691] ss:$4 sm:$0xff] %v4665
        %v4725 = vld [vmem:[#allocation1] sm:$0xff]
        %4726 = vst [vmem:[%s4694] ss:$4 sm:$0xff] %v4653
        %4727 = vst [vmem:[%s4696] ss:$4 sm:$0xff] %v4657
        %4728 = vst [vmem:[%s4698] ss:$4 sm:$0xff] %v4661
        %4729 = vst [vmem:[%s4700] ss:$4 sm:$0xff] %v4665
        %v4730 = vld [vmem:[#allocation1 + $0x20] sm:$0xff]
        %4732 = vst [vmem:[#allocation1] ss:$4 sm:$0xff] %v4669
        %4734 = vst [vmem:[%s4685] ss:$4 sm:$0xff] %v4673
        %4736 = vst [vmem:[%s4688] ss:$4 sm:$0xff] %v4677
        %4738 = vst [vmem:[%s4691] ss:$4 sm:$0xff] %v4681
        %v4739 = vld [vmem:[#allocation1] sm:$0xff]
        %4740 = vst [vmem:[%s4694] ss:$4 sm:$0xff] %v4669
        %4741 = vst [vmem:[%s4696] ss:$4 sm:$0xff] %v4673
        %4742 = vst [vmem:[%s4698] ss:$4 sm:$0xff] %v4677
        %4743 = vst [vmem:[%s4700] ss:$4 sm:$0xff] %v4681
        %v4744 = vld [vmem:[#allocation1 + $0x20] sm:$0xff]
        %v4745 = vshrl.u32 %v4693, 16
        %v4747 = vrot.slane %v4745, 7
        %v4748 = vshll.u32 %v4693, 16
        %v4750 = vor.u32 %v4747, %v4748
        %v4751 = vrot.slane %v4747, 4
        %v4752 = vshrl.u32 %v4702, 16
        %v4754 = vrot.slane %v4752, 7
        %v4755 = vshll.u32 %v4702, 16
        %v4757 = vor.u32 %v4754, %v4755
        %v4758 = vrot.slane %v4754, 4
        %v4759 = vshrl.u32 %v4711, 16
        %v4761 = vrot.slane %v4759, 7
        %v4762 = vshll.u32 %v4711, 16
        %v4764 = vor.u32 %v4761, %v4762
        %v4765 = vrot.slane %v4761, 4
        %v4766 = vshrl.u32 %v4716, 16
        %v4768 = vrot.slane %v4766, 7
        %v4769 = vshll.u32 %v4716, 16
        %v4771 = vor.u32 %v4768, %v4769
        %v4772 = vrot.slane %v4768, 4
        %v4773 = vshrl.u32 %v4725, 16
        %v4775 = vrot.slane %v4773, 7
        %v4776 = vshll.u32 %v4725, 16
        %v4778 = vor.u32 %v4775, %v4776
        %v4779 = vrot.slane %v4775, 4
        %v4780 = vshrl.u32 %v4730, 16
        %v4782 = vrot.slane %v4780, 7
        %v4783 = vshll.u32 %v4730, 16
        %v4785 = vor.u32 %v4782, %v4783
        %v4786 = vrot.slane %v4782, 4
        %v4787 = vshrl.u32 %v4739, 16
        %v4789 = vrot.slane %v4787, 7
        %v4790 = vshll.u32 %v4739, 16
        %v4792 = vor.u32 %v4789, %v4790
        %v4793 = vrot.slane %v4789, 4
        %v4794 = vshrl.u32 %v4744, 16
        %v4796 = vrot.slane %v4794, 7
        %v4797 = vshll.u32 %v4744, 16
        %v4799 = vor.u32 %v4796, %v4797
        %v4800 = vrot.slane %v4796, 4
        %s4817 = scalar_lea.vmem [#allocation4], 8
        %v4818 = vld [vmem:[%s4817] sm:$0xf]
        %v4819 = vsel %vm1083, %v4750, %v4818
        %4820 = vst [vmem:[%s4817] sm:$0xf] %v4819
        %v4821 = vld [vmem:[%s4817 + $0x4] sm:$0x1]
        %v4822 = vsel %vm706, %v4751, %v4821
        %4823 = vst [vmem:[%s4817 + $0x4] sm:$0x1] %v4822
        %v4824 = vld [vmem:[%s4817 + $0x8] sm:$0xf]
        %v4825 = vsel %vm1083, %v4757, %v4824
        %4826 = vst [vmem:[%s4817 + $0x8] sm:$0xf] %v4825
        %v4827 = vld [vmem:[%s4817 + $0xc] sm:$0x1]
        %v4828 = vsel %vm706, %v4758, %v4827
        %4829 = vst [vmem:[%s4817 + $0xc] sm:$0x1] %v4828
        %v4830 = vld [vmem:[%s4817 + $0x10] sm:$0xf]
        %v4831 = vsel %vm1083, %v4764, %v4830
        %4832 = vst [vmem:[%s4817 + $0x10] sm:$0xf] %v4831
        %v4833 = vld [vmem:[%s4817 + $0x14] sm:$0x1]
        %v4834 = vsel %vm706, %v4765, %v4833
        %4835 = vst [vmem:[%s4817 + $0x14] sm:$0x1] %v4834
        %v4836 = vld [vmem:[%s4817 + $0x18] sm:$0xf]
        %v4837 = vsel %vm1083, %v4771, %v4836
        %4838 = vst [vmem:[%s4817 + $0x18] sm:$0xf] %v4837
        %v4839 = vld [vmem:[%s4817 + $0x1c] sm:$0x1]
        %v4840 = vsel %vm706, %v4772, %v4839
        %4841 = vst [vmem:[%s4817 + $0x1c] sm:$0x1] %v4840
        %v4842 = vld [vmem:[%s4817 + $0x20] sm:$0xf]
        %v4843 = vsel %vm1083, %v4778, %v4842
        %4844 = vst [vmem:[%s4817 + $0x20] sm:$0xf] %v4843
        %v4845 = vld [vmem:[%s4817 + $0x24] sm:$0x1]
        %v4846 = vsel %vm706, %v4779, %v4845
        %4847 = vst [vmem:[%s4817 + $0x24] sm:$0x1] %v4846
        %v4848 = vld [vmem:[%s4817 + $0x28] sm:$0xf]
        %v4849 = vsel %vm1083, %v4785, %v4848
        %4850 = vst [vmem:[%s4817 + $0x28] sm:$0xf] %v4849
        %v4851 = vld [vmem:[%s4817 + $0x2c] sm:$0x1]
        %v4852 = vsel %vm706, %v4786, %v4851
        %4853 = vst [vmem:[%s4817 + $0x2c] sm:$0x1] %v4852
        %v4854 = vld [vmem:[%s4817 + $0x30] sm:$0xf]
        %v4855 = vsel %vm1083, %v4792, %v4854
        %4856 = vst [vmem:[%s4817 + $0x30] sm:$0xf] %v4855
        %v4857 = vld [vmem:[%s4817 + $0x34] sm:$0x1]
        %v4858 = vsel %vm706, %v4793, %v4857
        %4859 = vst [vmem:[%s4817 + $0x34] sm:$0x1] %v4858
        %v4860 = vld [vmem:[%s4817 + $0x38] sm:$0xf]
        %v4861 = vsel %vm1083, %v4799, %v4860
        %4862 = vst [vmem:[%s4817 + $0x38] sm:$0xf] %v4861
        %v4863 = vld [vmem:[%s4817 + $0x3c] sm:$0x1]
        %v4864 = vsel %vm706, %v4800, %v4863
        %4865 = vst [vmem:[%s4817 + $0x3c] sm:$0x1] %v4864
        %v4866 = vld [vmem:[#allocation4] sm:$0xf]
        %v4867 = vld [vmem:[#allocation4 + $0x8] sm:$0xf]
        %v4868 = vld [vmem:[#allocation4 + $0x10] sm:$0xf]
        %v4869 = vld [vmem:[#allocation4 + $0x18] sm:$0xf]
        %v4870 = vld [vmem:[#allocation4 + $0x20] sm:$0xf]
        %v4871 = vld [vmem:[#allocation4 + $0x28] sm:$0xf]
        %v4872 = vld [vmem:[#allocation4 + $0x30] sm:$0xf]
        %v4873 = vld [vmem:[#allocation4 + $0x38] sm:$0xf]
        %v4874 = vld [vmem:[#allocation15] sm:$0xf]
        %v4875 = vld [vmem:[#allocation15 + $0x4] sm:$0xf]
        %v4876 = vld [vmem:[#allocation15 + $0x8] sm:$0xf]
        %v4877 = vld [vmem:[#allocation15 + $0xc] sm:$0xf]
        %v4878 = vld [vmem:[#allocation15 + $0x10] sm:$0xf]
        %v4879 = vld [vmem:[#allocation15 + $0x14] sm:$0xf]
        %v4880 = vld [vmem:[#allocation15 + $0x18] sm:$0xf]
        %v4881 = vld [vmem:[#allocation15 + $0x1c] sm:$0xf]
        %v4882 = vld [vmem:[#allocation15 + $0x20] sm:$0xf]
        %v4883 = vld [vmem:[#allocation15 + $0x24] sm:$0xf]
        %v4884 = vld [vmem:[#allocation15 + $0x28] sm:$0xf]
        %v4885 = vld [vmem:[#allocation15 + $0x2c] sm:$0xf]
        %v4886 = vld [vmem:[#allocation15 + $0x30] sm:$0xf]
        %v4887 = vld [vmem:[#allocation15 + $0x34] sm:$0xf]
        %v4888 = vld [vmem:[#allocation15 + $0x38] sm:$0xf]
        %v4889 = vld [vmem:[#allocation15 + $0x3c] sm:$0xf]
        %v4890 = vld [vmem:[#allocation4 + $0x4] sm:$0x1]
        %v4891 = vld [vmem:[#allocation4 + $0xc] sm:$0x1]
        %v4892 = vld [vmem:[#allocation4 + $0x14] sm:$0x1]
        %v4893 = vld [vmem:[#allocation4 + $0x1c] sm:$0x1]
        %v4894 = vld [vmem:[#allocation4 + $0x24] sm:$0x1]
        %v4895 = vld [vmem:[#allocation4 + $0x2c] sm:$0x1]
        %v4896 = vld [vmem:[#allocation4 + $0x34] sm:$0x1]
        %v4897 = vld [vmem:[#allocation4 + $0x3c] sm:$0x1]
        %v4899 = vshrl.u32 %v4866, 16
        %v4901 = vrot.slane %v4899, 4
        %v4902 = vshll.u32 %v4866, 16
        %v4904 = vrot.slane %v4902, 5
        %v4905 = vor.u32 %v4901, %v4904
        %v4906 = vrot.slane %v4905, 4
        %v4908 = vshll.u32 %v4890, 16
        %v4910 = vrot.slane %v4908, 5
        %v4911 = vsel %vm1166, %v4906, %v4910
        %v4913 = vshrl.u32 %v4867, 16
        %v4915 = vrot.slane %v4913, 4
        %v4916 = vshll.u32 %v4867, 16
        %v4918 = vrot.slane %v4916, 5
        %v4919 = vor.u32 %v4915, %v4918
        %v4920 = vrot.slane %v4919, 4
        %v4922 = vshll.u32 %v4891, 16
        %v4924 = vrot.slane %v4922, 5
        %v4925 = vsel %vm1166, %v4920, %v4924
        %v4927 = vshrl.u32 %v4868, 16
        %v4929 = vrot.slane %v4927, 4
        %v4930 = vshll.u32 %v4868, 16
        %v4932 = vrot.slane %v4930, 5
        %v4933 = vor.u32 %v4929, %v4932
        %v4934 = vrot.slane %v4933, 4
        %v4936 = vshll.u32 %v4892, 16
        %v4938 = vrot.slane %v4936, 5
        %v4939 = vsel %vm1166, %v4934, %v4938
        %v4941 = vshrl.u32 %v4869, 16
        %v4943 = vrot.slane %v4941, 4
        %v4944 = vshll.u32 %v4869, 16
        %v4946 = vrot.slane %v4944, 5
        %v4947 = vor.u32 %v4943, %v4946
        %v4948 = vrot.slane %v4947, 4
        %v4950 = vshll.u32 %v4893, 16
        %v4952 = vrot.slane %v4950, 5
        %v4953 = vsel %vm1166, %v4948, %v4952
        %v4955 = vshrl.u32 %v4870, 16
        %v4957 = vrot.slane %v4955, 4
        %v4958 = vshll.u32 %v4870, 16
        %v4960 = vrot.slane %v4958, 5
        %v4961 = vor.u32 %v4957, %v4960
        %v4962 = vrot.slane %v4961, 4
        %v4964 = vshll.u32 %v4894, 16
        %v4966 = vrot.slane %v4964, 5
        %v4967 = vsel %vm1166, %v4962, %v4966
        %v4969 = vshrl.u32 %v4871, 16
        %v4971 = vrot.slane %v4969, 4
        %v4972 = vshll.u32 %v4871, 16
        %v4974 = vrot.slane %v4972, 5
        %v4975 = vor.u32 %v4971, %v4974
        %v4976 = vrot.slane %v4975, 4
        %v4978 = vshll.u32 %v4895, 16
        %v4980 = vrot.slane %v4978, 5
        %v4981 = vsel %vm1166, %v4976, %v4980
        %v4983 = vshrl.u32 %v4872, 16
        %v4985 = vrot.slane %v4983, 4
        %v4986 = vshll.u32 %v4872, 16
        %v4988 = vrot.slane %v4986, 5
        %v4989 = vor.u32 %v4985, %v4988
        %v4990 = vrot.slane %v4989, 4
        %v4992 = vshll.u32 %v4896, 16
        %v4994 = vrot.slane %v4992, 5
        %v4995 = vsel %vm1166, %v4990, %v4994
        %v4997 = vshrl.u32 %v4873, 16
        %v4999 = vrot.slane %v4997, 4
        %v5000 = vshll.u32 %v4873, 16
        %v5002 = vrot.slane %v5000, 5
        %v5003 = vor.u32 %v4999, %v5002
        %v5004 = vrot.slane %v5003, 4
        %v5006 = vshll.u32 %v4897, 16
        %v5008 = vrot.slane %v5006, 5
        %v5009 = vsel %vm1166, %v5004, %v5008
        %s5010 = scalar_lea.vmem [#allocation15], 64
        %v5011 = vld [vmem:[%s5010] sm:$0xf]
        %v5012 = vld [vmem:[%s5010 + $0x4] sm:$0xf]
        %v5013 = vld [vmem:[%s5010 + $0x8] sm:$0xf]
        %v5014 = vld [vmem:[%s5010 + $0xc] sm:$0xf]
        %v5015 = vld [vmem:[%s5010 + $0x10] sm:$0xf]
        %v5016 = vld [vmem:[%s5010 + $0x14] sm:$0xf]
        %v5017 = vld [vmem:[%s5010 + $0x18] sm:$0xf]
        %v5018 = vld [vmem:[%s5010 + $0x1c] sm:$0xf]
        %v5019 = vld [vmem:[%s5010 + $0x20] sm:$0xf]
        %v5020 = vld [vmem:[%s5010 + $0x24] sm:$0xf]
        %v5021 = vld [vmem:[%s5010 + $0x28] sm:$0xf]
        %v5022 = vld [vmem:[%s5010 + $0x2c] sm:$0xf]
        %v5023 = vld [vmem:[%s5010 + $0x30] sm:$0xf]
        %v5024 = vld [vmem:[%s5010 + $0x34] sm:$0xf]
        %v5025 = vld [vmem:[%s5010 + $0x38] sm:$0xf]
        %v5026 = vld [vmem:[%s5010 + $0x3c] sm:$0xf]
        %v5027 = vunpack.c.l.b16 %v4911
        %v5028 = vunpack.c.l.b16 %v4925
        %v5029 = vunpack.c.l.b16 %v4939
        %v5030 = vunpack.c.l.b16 %v4953
        %v5031 = vunpack.c.l.b16 %v4967
        %v5032 = vunpack.c.l.b16 %v4981
        %v5033 = vunpack.c.l.b16 %v4995
        %v5034 = vunpack.c.l.b16 %v5009
        %v5035 = vpack.c.b16 %v5028, %v5027
        %v5036 = vpack.c.b16 %v5030, %v5029
        %v5037 = vpack.c.b16 %v5032, %v5031
        %v5038 = vpack.c.b16 %v5034, %v5033
        %v5059 = vunpack.c.l.b16 %v5011
        %v5060 = vunpack.c.l.b16 %v5012
        %v5061 = vunpack.c.l.b16 %v5013
        %v5062 = vunpack.c.l.b16 %v5014
        %v5063 = vunpack.c.l.b16 %v5015
        %v5064 = vunpack.c.l.b16 %v5016
        %v5065 = vunpack.c.l.b16 %v5017
        %v5066 = vunpack.c.l.b16 %v5018
        %v5067 = vunpack.c.l.b16 %v5019
        %v5068 = vunpack.c.l.b16 %v5020
        %v5069 = vunpack.c.l.b16 %v5021
        %v5070 = vunpack.c.l.b16 %v5022
        %v5071 = vunpack.c.l.b16 %v5023
        %v5072 = vunpack.c.l.b16 %v5024
        %v5073 = vunpack.c.l.b16 %v5025
        %v5074 = vunpack.c.l.b16 %v5026
        %v5075 = vpack.c.b16 %v5060, %v5059
        %v5076 = vpack.c.b16 %v5062, %v5061
        %v5077 = vpack.c.b16 %v5064, %v5063
        %v5078 = vpack.c.b16 %v5066, %v5065
        %v5079 = vpack.c.b16 %v5068, %v5067
        %v5080 = vpack.c.b16 %v5070, %v5069
        %v5081 = vpack.c.b16 %v5072, %v5071
        %v5082 = vpack.c.b16 %v5074, %v5073
        %5091 = vmatpush.bf16.msra.mxu0 %v5082
        %5092 = vmatpush.bf16.msra.mxu0 %v5081
        %5093 = vmatpush.bf16.msra.mxu0 %v5080
        %5094 = vmatpush.bf16.msra.mxu0 %v5079
        %5095 = vmatpush.bf16.msra.mxu0 %v5078
        %5096 = vmatpush.bf16.msra.mxu0 %v5077
        %5097 = vmatpush.bf16.msra.mxu0 %v5076
        %5098 = vmatpush.bf16.msra.mxu0 %v5075
        %5099 = vmatmul.bf16.gmra.mxu0 %v5035
        %v5100 = vpop.f32.mrf.mxu0
        %v5101 = vadd.f32 0.0, %v5100
        %v5102 = vpop.f32.mrf.mxu0
        %v5103 = vadd.f32 0.0, %v5102
        %5104 = vmatmul.bf16.gmra.mxu0 %v5036
        %v5105 = vpop.f32.mrf.mxu0
        %v5106 = vadd.f32 0.0, %v5105
        %v5107 = vpop.f32.mrf.mxu0
        %v5108 = vadd.f32 0.0, %v5107
        %5109 = vmatmul.bf16.gmra.mxu0 %v5037
        %v5110 = vpop.f32.mrf.mxu0
        %v5111 = vadd.f32 0.0, %v5110
        %v5112 = vpop.f32.mrf.mxu0
        %v5113 = vadd.f32 0.0, %v5112
        %5114 = vmatmul.bf16.gmra.mxu0 %v5038
        %v5115 = vpop.f32.mrf.mxu0
        %v5116 = vadd.f32 0.0, %v5115
        %v5117 = vpop.f32.mrf.mxu0
        %v5118 = vadd.f32 0.0, %v5117
        %5119 = vdwg.mxu0
        %v5128 = vunpack.c.l.b16 %v4866
        %v5129 = vunpack.c.l.b16 %v4867
        %v5130 = vunpack.c.l.b16 %v4868
        %v5131 = vunpack.c.l.b16 %v4869
        %v5132 = vunpack.c.l.b16 %v4870
        %v5133 = vunpack.c.l.b16 %v4871
        %v5134 = vunpack.c.l.b16 %v4872
        %v5135 = vunpack.c.l.b16 %v4873
        %v5136 = vpack.c.b16 %v5129, %v5128
        %v5137 = vpack.c.b16 %v5131, %v5130
        %v5138 = vpack.c.b16 %v5133, %v5132
        %v5139 = vpack.c.b16 %v5135, %v5134
        %v5160 = vunpack.c.l.b16 %v4874
        %v5161 = vunpack.c.l.b16 %v4875
        %v5162 = vunpack.c.l.b16 %v4876
        %v5163 = vunpack.c.l.b16 %v4877
        %v5164 = vunpack.c.l.b16 %v4878
        %v5165 = vunpack.c.l.b16 %v4879
        %v5166 = vunpack.c.l.b16 %v4880
        %v5167 = vunpack.c.l.b16 %v4881
        %v5168 = vunpack.c.l.b16 %v4882
        %v5169 = vunpack.c.l.b16 %v4883
        %v5170 = vunpack.c.l.b16 %v4884
        %v5171 = vunpack.c.l.b16 %v4885
        %v5172 = vunpack.c.l.b16 %v4886
        %v5173 = vunpack.c.l.b16 %v4887
        %v5174 = vunpack.c.l.b16 %v4888
        %v5175 = vunpack.c.l.b16 %v4889
        %v5176 = vpack.c.b16 %v5161, %v5160
        %v5177 = vpack.c.b16 %v5163, %v5162
        %v5178 = vpack.c.b16 %v5165, %v5164
        %v5179 = vpack.c.b16 %v5167, %v5166
        %v5180 = vpack.c.b16 %v5169, %v5168
        %v5181 = vpack.c.b16 %v5171, %v5170
        %v5182 = vpack.c.b16 %v5173, %v5172
        %v5183 = vpack.c.b16 %v5175, %v5174
        %5192 = vmatpush.bf16.msra.mxu0 %v5183
        %5193 = vmatpush.bf16.msra.mxu0 %v5182
        %5194 = vmatpush.bf16.msra.mxu0 %v5181
        %5195 = vmatpush.bf16.msra.mxu0 %v5180
        %5196 = vmatpush.bf16.msra.mxu0 %v5179
        %5197 = vmatpush.bf16.msra.mxu0 %v5178
        %5198 = vmatpush.bf16.msra.mxu0 %v5177
        %5199 = vmatpush.bf16.msra.mxu0 %v5176
        %5200 = vmatmul.bf16.gmra.mxu0 %v5136
        %v5201 = vpop.f32.mrf.mxu0
        %v5202 = vadd.f32 %v5101, %v5201
        %v5203 = vpop.f32.mrf.mxu0
        %v5204 = vadd.f32 %v5103, %v5203
        %5205 = vmatmul.bf16.gmra.mxu0 %v5137
        %v5206 = vpop.f32.mrf.mxu0
        %v5207 = vadd.f32 %v5106, %v5206
        %v5208 = vpop.f32.mrf.mxu0
        %v5209 = vadd.f32 %v5108, %v5208
        %5210 = vmatmul.bf16.gmra.mxu0 %v5138
        %v5211 = vpop.f32.mrf.mxu0
        %v5212 = vadd.f32 %v5111, %v5211
        %v5213 = vpop.f32.mrf.mxu0
        %v5214 = vadd.f32 %v5113, %v5213
        %5215 = vmatmul.bf16.gmra.mxu0 %v5139
        %v5216 = vpop.f32.mrf.mxu0
        %v5217 = vadd.f32 %v5116, %v5216
        %v5218 = vpop.f32.mrf.mxu0
        %v5219 = vadd.f32 %v5118, %v5218
        %5220 = vdwg.mxu0
        %v5221 = vld [vmem:[#allocation4] sm:$0xe]
        %v5222 = vld [vmem:[#allocation4 + $0x8] sm:$0xe]
        %v5223 = vld [vmem:[#allocation4 + $0x10] sm:$0xe]
        %v5224 = vld [vmem:[#allocation4 + $0x18] sm:$0xe]
        %v5225 = vld [vmem:[#allocation4 + $0x20] sm:$0xe]
        %v5226 = vld [vmem:[#allocation4 + $0x28] sm:$0xe]
        %v5227 = vld [vmem:[#allocation4 + $0x30] sm:$0xe]
        %v5228 = vld [vmem:[#allocation4 + $0x38] sm:$0xe]
        %v5245 = vrot.slane %v5221, 5
        %v5246 = vrot.slane %v5245, 4
        %v5247 = vrot.slane %v4890, 5
        %v5248 = vsel %vm1516, %v5246, %v5247
        %v5249 = vrot.slane %v5222, 5
        %v5250 = vrot.slane %v5249, 4
        %v5251 = vrot.slane %v4891, 5
        %v5252 = vsel %vm1516, %v5250, %v5251
        %v5253 = vrot.slane %v5223, 5
        %v5254 = vrot.slane %v5253, 4
        %v5255 = vrot.slane %v4892, 5
        %v5256 = vsel %vm1516, %v5254, %v5255
        %v5257 = vrot.slane %v5224, 5
        %v5258 = vrot.slane %v5257, 4
        %v5259 = vrot.slane %v4893, 5
        %v5260 = vsel %vm1516, %v5258, %v5259
        %v5261 = vrot.slane %v5225, 5
        %v5262 = vrot.slane %v5261, 4
        %v5263 = vrot.slane %v4894, 5
        %v5264 = vsel %vm1516, %v5262, %v5263
        %v5265 = vrot.slane %v5226, 5
        %v5266 = vrot.slane %v5265, 4
        %v5267 = vrot.slane %v4895, 5
        %v5268 = vsel %vm1516, %v5266, %v5267
        %v5269 = vrot.slane %v5227, 5
        %v5270 = vrot.slane %v5269, 4
        %v5271 = vrot.slane %v4896, 5
        %v5272 = vsel %vm1516, %v5270, %v5271
        %v5273 = vrot.slane %v5228, 5
        %v5274 = vrot.slane %v5273, 4
        %v5275 = vrot.slane %v4897, 5
        %v5276 = vsel %vm1516, %v5274, %v5275
        %s5277 = scalar_lea.vmem [#allocation15], 128
        %v5278 = vld [vmem:[%s5277] sm:$0xf]
        %v5279 = vld [vmem:[%s5277 + $0x4] sm:$0xf]
        %v5280 = vld [vmem:[%s5277 + $0x8] sm:$0xf]
        %v5281 = vld [vmem:[%s5277 + $0xc] sm:$0xf]
        %v5282 = vld [vmem:[%s5277 + $0x10] sm:$0xf]
        %v5283 = vld [vmem:[%s5277 + $0x14] sm:$0xf]
        %v5284 = vld [vmem:[%s5277 + $0x18] sm:$0xf]
        %v5285 = vld [vmem:[%s5277 + $0x1c] sm:$0xf]
        %v5286 = vld [vmem:[%s5277 + $0x20] sm:$0xf]
        %v5287 = vld [vmem:[%s5277 + $0x24] sm:$0xf]
        %v5288 = vld [vmem:[%s5277 + $0x28] sm:$0xf]
        %v5289 = vld [vmem:[%s5277 + $0x2c] sm:$0xf]
        %v5290 = vld [vmem:[%s5277 + $0x30] sm:$0xf]
        %v5291 = vld [vmem:[%s5277 + $0x34] sm:$0xf]
        %v5292 = vld [vmem:[%s5277 + $0x38] sm:$0xf]
        %v5293 = vld [vmem:[%s5277 + $0x3c] sm:$0xf]
        %v5294 = vunpack.c.l.b16 %v5248
        %v5295 = vunpack.c.l.b16 %v5252
        %v5296 = vunpack.c.l.b16 %v5256
        %v5297 = vunpack.c.l.b16 %v5260
        %v5298 = vunpack.c.l.b16 %v5264
        %v5299 = vunpack.c.l.b16 %v5268
        %v5300 = vunpack.c.l.b16 %v5272
        %v5301 = vunpack.c.l.b16 %v5276
        %v5302 = vpack.c.b16 %v5295, %v5294
        %v5303 = vpack.c.b16 %v5297, %v5296
        %v5304 = vpack.c.b16 %v5299, %v5298
        %v5305 = vpack.c.b16 %v5301, %v5300
        %v5326 = vunpack.c.l.b16 %v5278
        %v5327 = vunpack.c.l.b16 %v5279
        %v5328 = vunpack.c.l.b16 %v5280
        %v5329 = vunpack.c.l.b16 %v5281
        %v5330 = vunpack.c.l.b16 %v5282
        %v5331 = vunpack.c.l.b16 %v5283
        %v5332 = vunpack.c.l.b16 %v5284
        %v5333 = vunpack.c.l.b16 %v5285
        %v5334 = vunpack.c.l.b16 %v5286
        %v5335 = vunpack.c.l.b16 %v5287
        %v5336 = vunpack.c.l.b16 %v5288
        %v5337 = vunpack.c.l.b16 %v5289
        %v5338 = vunpack.c.l.b16 %v5290
        %v5339 = vunpack.c.l.b16 %v5291
        %v5340 = vunpack.c.l.b16 %v5292
        %v5341 = vunpack.c.l.b16 %v5293
        %v5342 = vpack.c.b16 %v5327, %v5326
        %v5343 = vpack.c.b16 %v5329, %v5328
        %v5344 = vpack.c.b16 %v5331, %v5330
        %v5345 = vpack.c.b16 %v5333, %v5332
        %v5346 = vpack.c.b16 %v5335, %v5334
        %v5347 = vpack.c.b16 %v5337, %v5336
        %v5348 = vpack.c.b16 %v5339, %v5338
        %v5349 = vpack.c.b16 %v5341, %v5340
        %5358 = vmatpush.bf16.msra.mxu0 %v5349
        %5359 = vmatpush.bf16.msra.mxu0 %v5348
        %5360 = vmatpush.bf16.msra.mxu0 %v5347
        %5361 = vmatpush.bf16.msra.mxu0 %v5346
        %5362 = vmatpush.bf16.msra.mxu0 %v5345
        %5363 = vmatpush.bf16.msra.mxu0 %v5344
        %5364 = vmatpush.bf16.msra.mxu0 %v5343
        %5365 = vmatpush.bf16.msra.mxu0 %v5342
        %5366 = vmatmul.bf16.gmra.mxu0 %v5302
        %v5367 = vpop.f32.mrf.mxu0
        %v5368 = vadd.f32 0.0, %v5367
        %v5369 = vpop.f32.mrf.mxu0
        %v5370 = vadd.f32 0.0, %v5369
        %5371 = vmatmul.bf16.gmra.mxu0 %v5303
        %v5372 = vpop.f32.mrf.mxu0
        %v5373 = vadd.f32 0.0, %v5372
        %v5374 = vpop.f32.mrf.mxu0
        %v5375 = vadd.f32 0.0, %v5374
        %5376 = vmatmul.bf16.gmra.mxu0 %v5304
        %v5377 = vpop.f32.mrf.mxu0
        %v5378 = vadd.f32 0.0, %v5377
        %v5379 = vpop.f32.mrf.mxu0
        %v5380 = vadd.f32 0.0, %v5379
        %5381 = vmatmul.bf16.gmra.mxu0 %v5305
        %v5382 = vpop.f32.mrf.mxu0
        %v5383 = vadd.f32 0.0, %v5382
        %v5384 = vpop.f32.mrf.mxu0
        %v5385 = vadd.f32 0.0, %v5384
        %5386 = vdwg.mxu0
        %v5387 = vadd.f32 %v5202, %v5368
        %v5388 = vadd.f32 %v5204, %v5370
        %v5389 = vadd.f32 %v5207, %v5373
        %v5390 = vadd.f32 %v5209, %v5375
        %v5391 = vadd.f32 %v5212, %v5378
        %v5392 = vadd.f32 %v5214, %v5380
        %v5393 = vadd.f32 %v5217, %v5383
        %v5394 = vadd.f32 %v5219, %v5385
        %v5395 = vld [vmem:[%s4817] sm:$0xf]
        %v5396 = vld [vmem:[%s4817 + $0x8] sm:$0xf]
        %v5397 = vld [vmem:[%s4817 + $0x10] sm:$0xf]
        %v5398 = vld [vmem:[%s4817 + $0x18] sm:$0xf]
        %v5399 = vld [vmem:[%s4817 + $0x20] sm:$0xf]
        %v5400 = vld [vmem:[%s4817 + $0x28] sm:$0xf]
        %v5401 = vld [vmem:[%s4817 + $0x30] sm:$0xf]
        %v5402 = vld [vmem:[%s4817 + $0x38] sm:$0xf]
        %s5403 = scalar_lea.vmem [#allocation15], 192
        %v5404 = vld [vmem:[%s5403] sm:$0xf]
        %v5405 = vld [vmem:[%s5403 + $0x4] sm:$0xf]
        %v5406 = vld [vmem:[%s5403 + $0x8] sm:$0xf]
        %v5407 = vld [vmem:[%s5403 + $0xc] sm:$0xf]
        %v5408 = vld [vmem:[%s5403 + $0x10] sm:$0xf]
        %v5409 = vld [vmem:[%s5403 + $0x14] sm:$0xf]
        %v5410 = vld [vmem:[%s5403 + $0x18] sm:$0xf]
        %v5411 = vld [vmem:[%s5403 + $0x1c] sm:$0xf]
        %v5412 = vld [vmem:[%s5403 + $0x20] sm:$0xf]
        %v5413 = vld [vmem:[%s5403 + $0x24] sm:$0xf]
        %v5414 = vld [vmem:[%s5403 + $0x28] sm:$0xf]
        %v5415 = vld [vmem:[%s5403 + $0x2c] sm:$0xf]
        %v5416 = vld [vmem:[%s5403 + $0x30] sm:$0xf]
        %v5417 = vld [vmem:[%s5403 + $0x34] sm:$0xf]
        %v5418 = vld [vmem:[%s5403 + $0x38] sm:$0xf]
        %v5419 = vld [vmem:[%s5403 + $0x3c] sm:$0xf]
        %v5428 = vunpack.c.l.b16 %v5395
        %v5429 = vunpack.c.l.b16 %v5396
        %v5430 = vunpack.c.l.b16 %v5397
        %v5431 = vunpack.c.l.b16 %v5398
        %v5432 = vunpack.c.l.b16 %v5399
        %v5433 = vunpack.c.l.b16 %v5400
        %v5434 = vunpack.c.l.b16 %v5401
        %v5435 = vunpack.c.l.b16 %v5402
        %v5436 = vpack.c.b16 %v5429, %v5428
        %v5437 = vpack.c.b16 %v5431, %v5430
        %v5438 = vpack.c.b16 %v5433, %v5432
        %v5439 = vpack.c.b16 %v5435, %v5434
        %v5460 = vunpack.c.l.b16 %v5404
        %v5461 = vunpack.c.l.b16 %v5405
        %v5462 = vunpack.c.l.b16 %v5406
        %v5463 = vunpack.c.l.b16 %v5407
        %v5464 = vunpack.c.l.b16 %v5408
        %v5465 = vunpack.c.l.b16 %v5409
        %v5466 = vunpack.c.l.b16 %v5410
        %v5467 = vunpack.c.l.b16 %v5411
        %v5468 = vunpack.c.l.b16 %v5412
        %v5469 = vunpack.c.l.b16 %v5413
        %v5470 = vunpack.c.l.b16 %v5414
        %v5471 = vunpack.c.l.b16 %v5415
        %v5472 = vunpack.c.l.b16 %v5416
        %v5473 = vunpack.c.l.b16 %v5417
        %v5474 = vunpack.c.l.b16 %v5418
        %v5475 = vunpack.c.l.b16 %v5419
        %v5476 = vpack.c.b16 %v5461, %v5460
        %v5477 = vpack.c.b16 %v5463, %v5462
        %v5478 = vpack.c.b16 %v5465, %v5464
        %v5479 = vpack.c.b16 %v5467, %v5466
        %v5480 = vpack.c.b16 %v5469, %v5468
        %v5481 = vpack.c.b16 %v5471, %v5470
        %v5482 = vpack.c.b16 %v5473, %v5472
        %v5483 = vpack.c.b16 %v5475, %v5474
        %5492 = vmatpush.bf16.msra.mxu0 %v5483
        %5493 = vmatpush.bf16.msra.mxu0 %v5482
        %5494 = vmatpush.bf16.msra.mxu0 %v5481
        %5495 = vmatpush.bf16.msra.mxu0 %v5480
        %5496 = vmatpush.bf16.msra.mxu0 %v5479
        %5497 = vmatpush.bf16.msra.mxu0 %v5478
        %5498 = vmatpush.bf16.msra.mxu0 %v5477
        %5499 = vmatpush.bf16.msra.mxu0 %v5476
        %5500 = vmatmul.bf16.gmra.mxu0 %v5436
        %v5501 = vpop.f32.mrf.mxu0
        %v5502 = vadd.f32 0.0, %v5501
        %v5503 = vpop.f32.mrf.mxu0
        %v5504 = vadd.f32 0.0, %v5503
        %5505 = vmatmul.bf16.gmra.mxu0 %v5437
        %v5506 = vpop.f32.mrf.mxu0
        %v5507 = vadd.f32 0.0, %v5506
        %v5508 = vpop.f32.mrf.mxu0
        %v5509 = vadd.f32 0.0, %v5508
        %5510 = vmatmul.bf16.gmra.mxu0 %v5438
        %v5511 = vpop.f32.mrf.mxu0
        %v5512 = vadd.f32 0.0, %v5511
        %v5513 = vpop.f32.mrf.mxu0
        %v5514 = vadd.f32 0.0, %v5513
        %5515 = vmatmul.bf16.gmra.mxu0 %v5439
        %v5516 = vpop.f32.mrf.mxu0
        %v5517 = vadd.f32 0.0, %v5516
        %v5518 = vpop.f32.mrf.mxu0
        %v5519 = vadd.f32 0.0, %v5518
        %5520 = vdwg.mxu0
        %v5521 = vadd.f32 %v5387, %v5502
        %v5522 = vadd.f32 %v5388, %v5504
        %v5523 = vadd.f32 %v5389, %v5507
        %v5524 = vadd.f32 %v5390, %v5509
        %v5525 = vadd.f32 %v5391, %v5512
        %v5526 = vadd.f32 %v5392, %v5514
        %v5527 = vadd.f32 %v5393, %v5517
        %v5528 = vadd.f32 %v5394, %v5519
        %v5529 = vld [vmem:[%s4817] sm:$0xf]
        %v5530 = vld [vmem:[%s4817 + $0x4] sm:$0x1]
        %v5531 = vld [vmem:[%s4817 + $0x8] sm:$0xf]
        %v5532 = vld [vmem:[%s4817 + $0xc] sm:$0x1]
        %v5533 = vld [vmem:[%s4817 + $0x10] sm:$0xf]
        %v5534 = vld [vmem:[%s4817 + $0x14] sm:$0x1]
        %v5535 = vld [vmem:[%s4817 + $0x18] sm:$0xf]
        %v5536 = vld [vmem:[%s4817 + $0x1c] sm:$0x1]
        %v5537 = vld [vmem:[%s4817 + $0x20] sm:$0xf]
        %v5538 = vld [vmem:[%s4817 + $0x24] sm:$0x1]
        %v5539 = vld [vmem:[%s4817 + $0x28] sm:$0xf]
        %v5540 = vld [vmem:[%s4817 + $0x2c] sm:$0x1]
        %v5541 = vld [vmem:[%s4817 + $0x30] sm:$0xf]
        %v5542 = vld [vmem:[%s4817 + $0x34] sm:$0x1]
        %v5543 = vld [vmem:[%s4817 + $0x38] sm:$0xf]
        %v5544 = vld [vmem:[%s4817 + $0x3c] sm:$0x1]
        %v5546 = vshrl.u32 %v5529, 16
        %v5548 = vrot.slane %v5546, 4
        %v5549 = vshll.u32 %v5529, 16
        %v5551 = vrot.slane %v5549, 5
        %v5552 = vor.u32 %v5548, %v5551
        %v5553 = vrot.slane %v5552, 4
        %v5555 = vshll.u32 %v5530, 16
        %v5557 = vrot.slane %v5555, 5
        %v5558 = vsel %vm1166, %v5553, %v5557
        %v5560 = vshrl.u32 %v5531, 16
        %v5562 = vrot.slane %v5560, 4
        %v5563 = vshll.u32 %v5531, 16
        %v5565 = vrot.slane %v5563, 5
        %v5566 = vor.u32 %v5562, %v5565
        %v5567 = vrot.slane %v5566, 4
        %v5569 = vshll.u32 %v5532, 16
        %v5571 = vrot.slane %v5569, 5
        %v5572 = vsel %vm1166, %v5567, %v5571
        %v5574 = vshrl.u32 %v5533, 16
        %v5576 = vrot.slane %v5574, 4
        %v5577 = vshll.u32 %v5533, 16
        %v5579 = vrot.slane %v5577, 5
        %v5580 = vor.u32 %v5576, %v5579
        %v5581 = vrot.slane %v5580, 4
        %v5583 = vshll.u32 %v5534, 16
        %v5585 = vrot.slane %v5583, 5
        %v5586 = vsel %vm1166, %v5581, %v5585
        %v5588 = vshrl.u32 %v5535, 16
        %v5590 = vrot.slane %v5588, 4
        %v5591 = vshll.u32 %v5535, 16
        %v5593 = vrot.slane %v5591, 5
        %v5594 = vor.u32 %v5590, %v5593
        %v5595 = vrot.slane %v5594, 4
        %v5597 = vshll.u32 %v5536, 16
        %v5599 = vrot.slane %v5597, 5
        %v5600 = vsel %vm1166, %v5595, %v5599
        %v5602 = vshrl.u32 %v5537, 16
        %v5604 = vrot.slane %v5602, 4
        %v5605 = vshll.u32 %v5537, 16
        %v5607 = vrot.slane %v5605, 5
        %v5608 = vor.u32 %v5604, %v5607
        %v5609 = vrot.slane %v5608, 4
        %v5611 = vshll.u32 %v5538, 16
        %v5613 = vrot.slane %v5611, 5
        %v5614 = vsel %vm1166, %v5609, %v5613
        %v5616 = vshrl.u32 %v5539, 16
        %v5618 = vrot.slane %v5616, 4
        %v5619 = vshll.u32 %v5539, 16
        %v5621 = vrot.slane %v5619, 5
        %v5622 = vor.u32 %v5618, %v5621
        %v5623 = vrot.slane %v5622, 4
        %v5625 = vshll.u32 %v5540, 16
        %v5627 = vrot.slane %v5625, 5
        %v5628 = vsel %vm1166, %v5623, %v5627
        %v5630 = vshrl.u32 %v5541, 16
        %v5632 = vrot.slane %v5630, 4
        %v5633 = vshll.u32 %v5541, 16
        %v5635 = vrot.slane %v5633, 5
        %v5636 = vor.u32 %v5632, %v5635
        %v5637 = vrot.slane %v5636, 4
        %v5639 = vshll.u32 %v5542, 16
        %v5641 = vrot.slane %v5639, 5
        %v5642 = vsel %vm1166, %v5637, %v5641
        %v5644 = vshrl.u32 %v5543, 16
        %v5646 = vrot.slane %v5644, 4
        %v5647 = vshll.u32 %v5543, 16
        %v5649 = vrot.slane %v5647, 5
        %v5650 = vor.u32 %v5646, %v5649
        %v5651 = vrot.slane %v5650, 4
        %v5653 = vshll.u32 %v5544, 16
        %v5655 = vrot.slane %v5653, 5
        %v5656 = vsel %vm1166, %v5651, %v5655
        %s5657 = scalar_lea.vmem [#allocation15], 256
        %v5658 = vld [vmem:[%s5657] sm:$0xf]
        %v5659 = vld [vmem:[%s5657 + $0x4] sm:$0xf]
        %v5660 = vld [vmem:[%s5657 + $0x8] sm:$0xf]
        %v5661 = vld [vmem:[%s5657 + $0xc] sm:$0xf]
        %v5662 = vld [vmem:[%s5657 + $0x10] sm:$0xf]
        %v5663 = vld [vmem:[%s5657 + $0x14] sm:$0xf]
        %v5664 = vld [vmem:[%s5657 + $0x18] sm:$0xf]
        %v5665 = vld [vmem:[%s5657 + $0x1c] sm:$0xf]
        %v5666 = vld [vmem:[%s5657 + $0x20] sm:$0xf]
        %v5667 = vld [vmem:[%s5657 + $0x24] sm:$0xf]
        %v5668 = vld [vmem:[%s5657 + $0x28] sm:$0xf]
        %v5669 = vld [vmem:[%s5657 + $0x2c] sm:$0xf]
        %v5670 = vld [vmem:[%s5657 + $0x30] sm:$0xf]
        %v5671 = vld [vmem:[%s5657 + $0x34] sm:$0xf]
        %v5672 = vld [vmem:[%s5657 + $0x38] sm:$0xf]
        %v5673 = vld [vmem:[%s5657 + $0x3c] sm:$0xf]
        %v5674 = vunpack.c.l.b16 %v5558
        %v5675 = vunpack.c.l.b16 %v5572
        %v5676 = vunpack.c.l.b16 %v5586
        %v5677 = vunpack.c.l.b16 %v5600
        %v5678 = vunpack.c.l.b16 %v5614
        %v5679 = vunpack.c.l.b16 %v5628
        %v5680 = vunpack.c.l.b16 %v5642
        %v5681 = vunpack.c.l.b16 %v5656
        %v5682 = vpack.c.b16 %v5675, %v5674
        %v5683 = vpack.c.b16 %v5677, %v5676
        %v5684 = vpack.c.b16 %v5679, %v5678
        %v5685 = vpack.c.b16 %v5681, %v5680
        %v5706 = vunpack.c.l.b16 %v5658
        %v5707 = vunpack.c.l.b16 %v5659
        %v5708 = vunpack.c.l.b16 %v5660
        %v5709 = vunpack.c.l.b16 %v5661
        %v5710 = vunpack.c.l.b16 %v5662
        %v5711 = vunpack.c.l.b16 %v5663
        %v5712 = vunpack.c.l.b16 %v5664
        %v5713 = vunpack.c.l.b16 %v5665
        %v5714 = vunpack.c.l.b16 %v5666
        %v5715 = vunpack.c.l.b16 %v5667
        %v5716 = vunpack.c.l.b16 %v5668
        %v5717 = vunpack.c.l.b16 %v5669
        %v5718 = vunpack.c.l.b16 %v5670
        %v5719 = vunpack.c.l.b16 %v5671
        %v5720 = vunpack.c.l.b16 %v5672
        %v5721 = vunpack.c.l.b16 %v5673
        %v5722 = vpack.c.b16 %v5707, %v5706
        %v5723 = vpack.c.b16 %v5709, %v5708
        %v5724 = vpack.c.b16 %v5711, %v5710
        %v5725 = vpack.c.b16 %v5713, %v5712
        %v5726 = vpack.c.b16 %v5715, %v5714
        %v5727 = vpack.c.b16 %v5717, %v5716
        %v5728 = vpack.c.b16 %v5719, %v5718
        %v5729 = vpack.c.b16 %v5721, %v5720
        %5738 = vmatpush.bf16.msra.mxu0 %v5729
        %5739 = vmatpush.bf16.msra.mxu0 %v5728
        %5740 = vmatpush.bf16.msra.mxu0 %v5727
        %5741 = vmatpush.bf16.msra.mxu0 %v5726
        %5742 = vmatpush.bf16.msra.mxu0 %v5725
        %5743 = vmatpush.bf16.msra.mxu0 %v5724
        %5744 = vmatpush.bf16.msra.mxu0 %v5723
        %5745 = vmatpush.bf16.msra.mxu0 %v5722
        %5746 = vmatmul.bf16.gmra.mxu0 %v5682
        %v5747 = vpop.f32.mrf.mxu0
        %v5748 = vadd.f32 0.0, %v5747
        %v5749 = vpop.f32.mrf.mxu0
        %v5750 = vadd.f32 0.0, %v5749
        %5751 = vmatmul.bf16.gmra.mxu0 %v5683
        %v5752 = vpop.f32.mrf.mxu0
        %v5753 = vadd.f32 0.0, %v5752
        %v5754 = vpop.f32.mrf.mxu0
        %v5755 = vadd.f32 0.0, %v5754
        %5756 = vmatmul.bf16.gmra.mxu0 %v5684
        %v5757 = vpop.f32.mrf.mxu0
        %v5758 = vadd.f32 0.0, %v5757
        %v5759 = vpop.f32.mrf.mxu0
        %v5760 = vadd.f32 0.0, %v5759
        %5761 = vmatmul.bf16.gmra.mxu0 %v5685
        %v5762 = vpop.f32.mrf.mxu0
        %v5763 = vadd.f32 0.0, %v5762
        %v5764 = vpop.f32.mrf.mxu0
        %v5765 = vadd.f32 0.0, %v5764
        %5766 = vdwg.mxu0
        %v5767 = vadd.f32 %v5521, %v5748
        %v5768 = vadd.f32 %v5522, %v5750
        %v5769 = vadd.f32 %v5523, %v5753
        %v5770 = vadd.f32 %v5524, %v5755
        %v5771 = vadd.f32 %v5525, %v5758
        %v5772 = vadd.f32 %v5526, %v5760
        %v5773 = vadd.f32 %v5527, %v5763
        %v5774 = vadd.f32 %v5528, %v5765
        %v5775 = vld [vmem:[%s4817] sm:$0xe]
        %v5776 = vld [vmem:[%s4817 + $0x8] sm:$0xe]
        %v5777 = vld [vmem:[%s4817 + $0x10] sm:$0xe]
        %v5778 = vld [vmem:[%s4817 + $0x18] sm:$0xe]
        %v5779 = vld [vmem:[%s4817 + $0x20] sm:$0xe]
        %v5780 = vld [vmem:[%s4817 + $0x28] sm:$0xe]
        %v5781 = vld [vmem:[%s4817 + $0x30] sm:$0xe]
        %v5782 = vld [vmem:[%s4817 + $0x38] sm:$0xe]
        %v5799 = vrot.slane %v5775, 5
        %v5800 = vrot.slane %v5799, 4
        %v5801 = vrot.slane %v5530, 5
        %v5802 = vsel %vm1516, %v5800, %v5801
        %v5803 = vrot.slane %v5776, 5
        %v5804 = vrot.slane %v5803, 4
        %v5805 = vrot.slane %v5532, 5
        %v5806 = vsel %vm1516, %v5804, %v5805
        %v5807 = vrot.slane %v5777, 5
        %v5808 = vrot.slane %v5807, 4
        %v5809 = vrot.slane %v5534, 5
        %v5810 = vsel %vm1516, %v5808, %v5809
        %v5811 = vrot.slane %v5778, 5
        %v5812 = vrot.slane %v5811, 4
        %v5813 = vrot.slane %v5536, 5
        %v5814 = vsel %vm1516, %v5812, %v5813
        %v5815 = vrot.slane %v5779, 5
        %v5816 = vrot.slane %v5815, 4
        %v5817 = vrot.slane %v5538, 5
        %v5818 = vsel %vm1516, %v5816, %v5817
        %v5819 = vrot.slane %v5780, 5
        %v5820 = vrot.slane %v5819, 4
        %v5821 = vrot.slane %v5540, 5
        %v5822 = vsel %vm1516, %v5820, %v5821
        %v5823 = vrot.slane %v5781, 5
        %v5824 = vrot.slane %v5823, 4
        %v5825 = vrot.slane %v5542, 5
        %v5826 = vsel %vm1516, %v5824, %v5825
        %v5827 = vrot.slane %v5782, 5
        %v5828 = vrot.slane %v5827, 4
        %v5829 = vrot.slane %v5544, 5
        %v5830 = vsel %vm1516, %v5828, %v5829
        %s5831 = scalar_lea.vmem [#allocation15], 320
        %v5832 = vld [vmem:[%s5831] sm:$0xf]
        %v5833 = vld [vmem:[%s5831 + $0x4] sm:$0xf]
        %v5834 = vld [vmem:[%s5831 + $0x8] sm:$0xf]
        %v5835 = vld [vmem:[%s5831 + $0xc] sm:$0xf]
        %v5836 = vld [vmem:[%s5831 + $0x10] sm:$0xf]
        %v5837 = vld [vmem:[%s5831 + $0x14] sm:$0xf]
        %v5838 = vld [vmem:[%s5831 + $0x18] sm:$0xf]
        %v5839 = vld [vmem:[%s5831 + $0x1c] sm:$0xf]
        %v5840 = vld [vmem:[%s5831 + $0x20] sm:$0xf]
        %v5841 = vld [vmem:[%s5831 + $0x24] sm:$0xf]
        %v5842 = vld [vmem:[%s5831 + $0x28] sm:$0xf]
        %v5843 = vld [vmem:[%s5831 + $0x2c] sm:$0xf]
        %v5844 = vld [vmem:[%s5831 + $0x30] sm:$0xf]
        %v5845 = vld [vmem:[%s5831 + $0x34] sm:$0xf]
        %v5846 = vld [vmem:[%s5831 + $0x38] sm:$0xf]
        %v5847 = vld [vmem:[%s5831 + $0x3c] sm:$0xf]
        %v5848 = vunpack.c.l.b16 %v5802
        %v5849 = vunpack.c.l.b16 %v5806
        %v5850 = vunpack.c.l.b16 %v5810
        %v5851 = vunpack.c.l.b16 %v5814
        %v5852 = vunpack.c.l.b16 %v5818
        %v5853 = vunpack.c.l.b16 %v5822
        %v5854 = vunpack.c.l.b16 %v5826
        %v5855 = vunpack.c.l.b16 %v5830
        %v5856 = vpack.c.b16 %v5849, %v5848
        %v5857 = vpack.c.b16 %v5851, %v5850
        %v5858 = vpack.c.b16 %v5853, %v5852
        %v5859 = vpack.c.b16 %v5855, %v5854
        %v5880 = vunpack.c.l.b16 %v5832
        %v5881 = vunpack.c.l.b16 %v5833
        %v5882 = vunpack.c.l.b16 %v5834
        %v5883 = vunpack.c.l.b16 %v5835
        %v5884 = vunpack.c.l.b16 %v5836
        %v5885 = vunpack.c.l.b16 %v5837
        %v5886 = vunpack.c.l.b16 %v5838
        %v5887 = vunpack.c.l.b16 %v5839
        %v5888 = vunpack.c.l.b16 %v5840
        %v5889 = vunpack.c.l.b16 %v5841
        %v5890 = vunpack.c.l.b16 %v5842
        %v5891 = vunpack.c.l.b16 %v5843
        %v5892 = vunpack.c.l.b16 %v5844
        %v5893 = vunpack.c.l.b16 %v5845
        %v5894 = vunpack.c.l.b16 %v5846
        %v5895 = vunpack.c.l.b16 %v5847
        %v5896 = vpack.c.b16 %v5881, %v5880
        %v5897 = vpack.c.b16 %v5883, %v5882
        %v5898 = vpack.c.b16 %v5885, %v5884
        %v5899 = vpack.c.b16 %v5887, %v5886
        %v5900 = vpack.c.b16 %v5889, %v5888
        %v5901 = vpack.c.b16 %v5891, %v5890
        %v5902 = vpack.c.b16 %v5893, %v5892
        %v5903 = vpack.c.b16 %v5895, %v5894
        %5912 = vmatpush.bf16.msra.mxu0 %v5903
        %5913 = vmatpush.bf16.msra.mxu0 %v5902
        %5914 = vmatpush.bf16.msra.mxu0 %v5901
        %5915 = vmatpush.bf16.msra.mxu0 %v5900
        %5916 = vmatpush.bf16.msra.mxu0 %v5899
        %5917 = vmatpush.bf16.msra.mxu0 %v5898
        %5918 = vmatpush.bf16.msra.mxu0 %v5897
        %5919 = vmatpush.bf16.msra.mxu0 %v5896
        %5920 = vmatmul.bf16.gmra.mxu0 %v5856
        %v5921 = vpop.f32.mrf.mxu0
        %v5922 = vadd.f32 0.0, %v5921
        %v5923 = vpop.f32.mrf.mxu0
        %v5924 = vadd.f32 0.0, %v5923
        %5925 = vmatmul.bf16.gmra.mxu0 %v5857
        %v5926 = vpop.f32.mrf.mxu0
        %v5927 = vadd.f32 0.0, %v5926
        %v5928 = vpop.f32.mrf.mxu0
        %v5929 = vadd.f32 0.0, %v5928
        %5930 = vmatmul.bf16.gmra.mxu0 %v5858
        %v5931 = vpop.f32.mrf.mxu0
        %v5932 = vadd.f32 0.0, %v5931
        %v5933 = vpop.f32.mrf.mxu0
        %v5934 = vadd.f32 0.0, %v5933
        %5935 = vmatmul.bf16.gmra.mxu0 %v5859
        %v5936 = vpop.f32.mrf.mxu0
        %v5937 = vadd.f32 0.0, %v5936
        %v5938 = vpop.f32.mrf.mxu0
        %v5939 = vadd.f32 0.0, %v5938
        %5940 = vdwg.mxu0
        %v5941 = vadd.f32 %v5767, %v5922
        %v5942 = vadd.f32 %v5768, %v5924
        %v5943 = vadd.f32 %v5769, %v5927
        %v5944 = vadd.f32 %v5770, %v5929
        %v5945 = vadd.f32 %v5771, %v5932
        %v5946 = vadd.f32 %v5772, %v5934
        %v5947 = vadd.f32 %v5773, %v5937
        %v5948 = vadd.f32 %v5774, %v5939
        %s5949 = scalar_lea.vmem [#allocation4], 16
        %v5950 = vld [vmem:[%s5949] sm:$0xf]
        %v5951 = vld [vmem:[%s5949 + $0x8] sm:$0xf]
        %v5952 = vld [vmem:[%s5949 + $0x10] sm:$0xf]
        %v5953 = vld [vmem:[%s5949 + $0x18] sm:$0xf]
        %v5954 = vld [vmem:[%s5949 + $0x20] sm:$0xf]
        %v5955 = vld [vmem:[%s5949 + $0x28] sm:$0xf]
        %v5956 = vld [vmem:[%s5949 + $0x30] sm:$0xf]
        %v5957 = vld [vmem:[%s5949 + $0x38] sm:$0xf]
        %s5958 = scalar_lea.vmem [#allocation15], 384
        %v5959 = vld [vmem:[%s5958] sm:$0xf]
        %v5960 = vld [vmem:[%s5958 + $0x4] sm:$0xf]
        %v5961 = vld [vmem:[%s5958 + $0x8] sm:$0xf]
        %v5962 = vld [vmem:[%s5958 + $0xc] sm:$0xf]
        %v5963 = vld [vmem:[%s5958 + $0x10] sm:$0xf]
        %v5964 = vld [vmem:[%s5958 + $0x14] sm:$0xf]
        %v5965 = vld [vmem:[%s5958 + $0x18] sm:$0xf]
        %v5966 = vld [vmem:[%s5958 + $0x1c] sm:$0xf]
        %v5967 = vld [vmem:[%s5958 + $0x20] sm:$0xf]
        %v5968 = vld [vmem:[%s5958 + $0x24] sm:$0xf]
        %v5969 = vld [vmem:[%s5958 + $0x28] sm:$0xf]
        %v5970 = vld [vmem:[%s5958 + $0x2c] sm:$0xf]
        %v5971 = vld [vmem:[%s5958 + $0x30] sm:$0xf]
        %v5972 = vld [vmem:[%s5958 + $0x34] sm:$0xf]
        %v5973 = vld [vmem:[%s5958 + $0x38] sm:$0xf]
        %v5974 = vld [vmem:[%s5958 + $0x3c] sm:$0xf]
        %v5983 = vunpack.c.l.b16 %v5950
        %v5984 = vunpack.c.l.b16 %v5951
        %v5985 = vunpack.c.l.b16 %v5952
        %v5986 = vunpack.c.l.b16 %v5953
        %v5987 = vunpack.c.l.b16 %v5954
        %v5988 = vunpack.c.l.b16 %v5955
        %v5989 = vunpack.c.l.b16 %v5956
        %v5990 = vunpack.c.l.b16 %v5957
        %v5991 = vpack.c.b16 %v5984, %v5983
        %v5992 = vpack.c.b16 %v5986, %v5985
        %v5993 = vpack.c.b16 %v5988, %v5987
        %v5994 = vpack.c.b16 %v5990, %v5989
        %v6015 = vunpack.c.l.b16 %v5959
        %v6016 = vunpack.c.l.b16 %v5960
        %v6017 = vunpack.c.l.b16 %v5961
        %v6018 = vunpack.c.l.b16 %v5962
        %v6019 = vunpack.c.l.b16 %v5963
        %v6020 = vunpack.c.l.b16 %v5964
        %v6021 = vunpack.c.l.b16 %v5965
        %v6022 = vunpack.c.l.b16 %v5966
        %v6023 = vunpack.c.l.b16 %v5967
        %v6024 = vunpack.c.l.b16 %v5968
        %v6025 = vunpack.c.l.b16 %v5969
        %v6026 = vunpack.c.l.b16 %v5970
        %v6027 = vunpack.c.l.b16 %v5971
        %v6028 = vunpack.c.l.b16 %v5972
        %v6029 = vunpack.c.l.b16 %v5973
        %v6030 = vunpack.c.l.b16 %v5974
        %v6031 = vpack.c.b16 %v6016, %v6015
        %v6032 = vpack.c.b16 %v6018, %v6017
        %v6033 = vpack.c.b16 %v6020, %v6019
        %v6034 = vpack.c.b16 %v6022, %v6021
        %v6035 = vpack.c.b16 %v6024, %v6023
        %v6036 = vpack.c.b16 %v6026, %v6025
        %v6037 = vpack.c.b16 %v6028, %v6027
        %v6038 = vpack.c.b16 %v6030, %v6029
        %6047 = vmatpush.bf16.msra.mxu0 %v6038
        %6048 = vmatpush.bf16.msra.mxu0 %v6037
        %6049 = vmatpush.bf16.msra.mxu0 %v6036
        %6050 = vmatpush.bf16.msra.mxu0 %v6035
        %6051 = vmatpush.bf16.msra.mxu0 %v6034
        %6052 = vmatpush.bf16.msra.mxu0 %v6033
        %6053 = vmatpush.bf16.msra.mxu0 %v6032
        %6054 = vmatpush.bf16.msra.mxu0 %v6031
        %6055 = vmatmul.bf16.gmra.mxu0 %v5991
        %v6056 = vpop.f32.mrf.mxu0
        %v6057 = vadd.f32 0.0, %v6056
        %v6058 = vpop.f32.mrf.mxu0
        %v6059 = vadd.f32 0.0, %v6058
        %6060 = vmatmul.bf16.gmra.mxu0 %v5992
        %v6061 = vpop.f32.mrf.mxu0
        %v6062 = vadd.f32 0.0, %v6061
        %v6063 = vpop.f32.mrf.mxu0
        %v6064 = vadd.f32 0.0, %v6063
        %6065 = vmatmul.bf16.gmra.mxu0 %v5993
        %v6066 = vpop.f32.mrf.mxu0
        %v6067 = vadd.f32 0.0, %v6066
        %v6068 = vpop.f32.mrf.mxu0
        %v6069 = vadd.f32 0.0, %v6068
        %6070 = vmatmul.bf16.gmra.mxu0 %v5994
        %v6071 = vpop.f32.mrf.mxu0
        %v6072 = vadd.f32 0.0, %v6071
        %v6073 = vpop.f32.mrf.mxu0
        %v6074 = vadd.f32 0.0, %v6073
        %6075 = vdwg.mxu0
        %v6076 = vadd.f32 %v5941, %v6057
        %v6077 = vadd.f32 %v5942, %v6059
        %v6078 = vadd.f32 %v5943, %v6062
        %v6079 = vadd.f32 %v5944, %v6064
        %v6080 = vadd.f32 %v5945, %v6067
        %v6081 = vadd.f32 %v5946, %v6069
        %v6082 = vadd.f32 %v5947, %v6072
        %v6083 = vadd.f32 %v5948, %v6074
        %v6084 = vld [vmem:[%s5949] sm:$0xf]
        %v6085 = vld [vmem:[%s5949 + $0x4] sm:$0x1]
        %v6086 = vld [vmem:[%s5949 + $0x8] sm:$0xf]
        %v6087 = vld [vmem:[%s5949 + $0xc] sm:$0x1]
        %v6088 = vld [vmem:[%s5949 + $0x10] sm:$0xf]
        %v6089 = vld [vmem:[%s5949 + $0x14] sm:$0x1]
        %v6090 = vld [vmem:[%s5949 + $0x18] sm:$0xf]
        %v6091 = vld [vmem:[%s5949 + $0x1c] sm:$0x1]
        %v6092 = vld [vmem:[%s5949 + $0x20] sm:$0xf]
        %v6093 = vld [vmem:[%s5949 + $0x24] sm:$0x1]
        %v6094 = vld [vmem:[%s5949 + $0x28] sm:$0xf]
        %v6095 = vld [vmem:[%s5949 + $0x2c] sm:$0x1]
        %v6096 = vld [vmem:[%s5949 + $0x30] sm:$0xf]
        %v6097 = vld [vmem:[%s5949 + $0x34] sm:$0x1]
        %v6098 = vld [vmem:[%s5949 + $0x38] sm:$0xf]
        %v6099 = vld [vmem:[%s5949 + $0x3c] sm:$0x1]
        %v6101 = vshrl.u32 %v6084, 16
        %v6103 = vrot.slane %v6101, 4
        %v6104 = vshll.u32 %v6084, 16
        %v6106 = vrot.slane %v6104, 5
        %v6107 = vor.u32 %v6103, %v6106
        %v6108 = vrot.slane %v6107, 4
        %v6110 = vshll.u32 %v6085, 16
        %v6112 = vrot.slane %v6110, 5
        %v6113 = vsel %vm1166, %v6108, %v6112
        %v6115 = vshrl.u32 %v6086, 16
        %v6117 = vrot.slane %v6115, 4
        %v6118 = vshll.u32 %v6086, 16
        %v6120 = vrot.slane %v6118, 5
        %v6121 = vor.u32 %v6117, %v6120
        %v6122 = vrot.slane %v6121, 4
        %v6124 = vshll.u32 %v6087, 16
        %v6126 = vrot.slane %v6124, 5
        %v6127 = vsel %vm1166, %v6122, %v6126
        %v6129 = vshrl.u32 %v6088, 16
        %v6131 = vrot.slane %v6129, 4
        %v6132 = vshll.u32 %v6088, 16
        %v6134 = vrot.slane %v6132, 5
        %v6135 = vor.u32 %v6131, %v6134
        %v6136 = vrot.slane %v6135, 4
        %v6138 = vshll.u32 %v6089, 16
        %v6140 = vrot.slane %v6138, 5
        %v6141 = vsel %vm1166, %v6136, %v6140
        %v6143 = vshrl.u32 %v6090, 16
        %v6145 = vrot.slane %v6143, 4
        %v6146 = vshll.u32 %v6090, 16
        %v6148 = vrot.slane %v6146, 5
        %v6149 = vor.u32 %v6145, %v6148
        %v6150 = vrot.slane %v6149, 4
        %v6152 = vshll.u32 %v6091, 16
        %v6154 = vrot.slane %v6152, 5
        %v6155 = vsel %vm1166, %v6150, %v6154
        %v6157 = vshrl.u32 %v6092, 16
        %v6159 = vrot.slane %v6157, 4
        %v6160 = vshll.u32 %v6092, 16
        %v6162 = vrot.slane %v6160, 5
        %v6163 = vor.u32 %v6159, %v6162
        %v6164 = vrot.slane %v6163, 4
        %v6166 = vshll.u32 %v6093, 16
        %v6168 = vrot.slane %v6166, 5
        %v6169 = vsel %vm1166, %v6164, %v6168
        %v6171 = vshrl.u32 %v6094, 16
        %v6173 = vrot.slane %v6171, 4
        %v6174 = vshll.u32 %v6094, 16
        %v6176 = vrot.slane %v6174, 5
        %v6177 = vor.u32 %v6173, %v6176
        %v6178 = vrot.slane %v6177, 4
        %v6180 = vshll.u32 %v6095, 16
        %v6182 = vrot.slane %v6180, 5
        %v6183 = vsel %vm1166, %v6178, %v6182
        %v6185 = vshrl.u32 %v6096, 16
        %v6187 = vrot.slane %v6185, 4
        %v6188 = vshll.u32 %v6096, 16
        %v6190 = vrot.slane %v6188, 5
        %v6191 = vor.u32 %v6187, %v6190
        %v6192 = vrot.slane %v6191, 4
        %v6194 = vshll.u32 %v6097, 16
        %v6196 = vrot.slane %v6194, 5
        %v6197 = vsel %vm1166, %v6192, %v6196
        %v6199 = vshrl.u32 %v6098, 16
        %v6201 = vrot.slane %v6199, 4
        %v6202 = vshll.u32 %v6098, 16
        %v6204 = vrot.slane %v6202, 5
        %v6205 = vor.u32 %v6201, %v6204
        %v6206 = vrot.slane %v6205, 4
        %v6208 = vshll.u32 %v6099, 16
        %v6210 = vrot.slane %v6208, 5
        %v6211 = vsel %vm1166, %v6206, %v6210
        %s6212 = scalar_lea.vmem [#allocation15], 448
        %v6213 = vld [vmem:[%s6212] sm:$0xf]
        %v6214 = vld [vmem:[%s6212 + $0x4] sm:$0xf]
        %v6215 = vld [vmem:[%s6212 + $0x8] sm:$0xf]
        %v6216 = vld [vmem:[%s6212 + $0xc] sm:$0xf]
        %v6217 = vld [vmem:[%s6212 + $0x10] sm:$0xf]
        %v6218 = vld [vmem:[%s6212 + $0x14] sm:$0xf]
        %v6219 = vld [vmem:[%s6212 + $0x18] sm:$0xf]
        %v6220 = vld [vmem:[%s6212 + $0x1c] sm:$0xf]
        %v6221 = vld [vmem:[%s6212 + $0x20] sm:$0xf]
        %v6222 = vld [vmem:[%s6212 + $0x24] sm:$0xf]
        %v6223 = vld [vmem:[%s6212 + $0x28] sm:$0xf]
        %v6224 = vld [vmem:[%s6212 + $0x2c] sm:$0xf]
        %v6225 = vld [vmem:[%s6212 + $0x30] sm:$0xf]
        %v6226 = vld [vmem:[%s6212 + $0x34] sm:$0xf]
        %v6227 = vld [vmem:[%s6212 + $0x38] sm:$0xf]
        %v6228 = vld [vmem:[%s6212 + $0x3c] sm:$0xf]
        %v6229 = vunpack.c.l.b16 %v6113
        %v6230 = vunpack.c.l.b16 %v6127
        %v6231 = vunpack.c.l.b16 %v6141
        %v6232 = vunpack.c.l.b16 %v6155
        %v6233 = vunpack.c.l.b16 %v6169
        %v6234 = vunpack.c.l.b16 %v6183
        %v6235 = vunpack.c.l.b16 %v6197
        %v6236 = vunpack.c.l.b16 %v6211
        %v6237 = vpack.c.b16 %v6230, %v6229
        %v6238 = vpack.c.b16 %v6232, %v6231
        %v6239 = vpack.c.b16 %v6234, %v6233
        %v6240 = vpack.c.b16 %v6236, %v6235
        %v6261 = vunpack.c.l.b16 %v6213
        %v6262 = vunpack.c.l.b16 %v6214
        %v6263 = vunpack.c.l.b16 %v6215
        %v6264 = vunpack.c.l.b16 %v6216
        %v6265 = vunpack.c.l.b16 %v6217
        %v6266 = vunpack.c.l.b16 %v6218
        %v6267 = vunpack.c.l.b16 %v6219
        %v6268 = vunpack.c.l.b16 %v6220
        %v6269 = vunpack.c.l.b16 %v6221
        %v6270 = vunpack.c.l.b16 %v6222
        %v6271 = vunpack.c.l.b16 %v6223
        %v6272 = vunpack.c.l.b16 %v6224
        %v6273 = vunpack.c.l.b16 %v6225
        %v6274 = vunpack.c.l.b16 %v6226
        %v6275 = vunpack.c.l.b16 %v6227
        %v6276 = vunpack.c.l.b16 %v6228
        %v6277 = vpack.c.b16 %v6262, %v6261
        %v6278 = vpack.c.b16 %v6264, %v6263
        %v6279 = vpack.c.b16 %v6266, %v6265
        %v6280 = vpack.c.b16 %v6268, %v6267
        %v6281 = vpack.c.b16 %v6270, %v6269
        %v6282 = vpack.c.b16 %v6272, %v6271
        %v6283 = vpack.c.b16 %v6274, %v6273
        %v6284 = vpack.c.b16 %v6276, %v6275
        %6293 = vmatpush.bf16.msra.mxu0 %v6284
        %6294 = vmatpush.bf16.msra.mxu0 %v6283
        %6295 = vmatpush.bf16.msra.mxu0 %v6282
        %6296 = vmatpush.bf16.msra.mxu0 %v6281
        %6297 = vmatpush.bf16.msra.mxu0 %v6280
        %6298 = vmatpush.bf16.msra.mxu0 %v6279
        %6299 = vmatpush.bf16.msra.mxu0 %v6278
        %6300 = vmatpush.bf16.msra.mxu0 %v6277
        %6301 = vmatmul.bf16.gmra.mxu0 %v6237
        %v6302 = vpop.f32.mrf.mxu0
        %v6303 = vadd.f32 0.0, %v6302
        %v6304 = vpop.f32.mrf.mxu0
        %v6305 = vadd.f32 0.0, %v6304
        %6306 = vmatmul.bf16.gmra.mxu0 %v6238
        %v6307 = vpop.f32.mrf.mxu0
        %v6308 = vadd.f32 0.0, %v6307
        %v6309 = vpop.f32.mrf.mxu0
        %v6310 = vadd.f32 0.0, %v6309
        %6311 = vmatmul.bf16.gmra.mxu0 %v6239
        %v6312 = vpop.f32.mrf.mxu0
        %v6313 = vadd.f32 0.0, %v6312
        %v6314 = vpop.f32.mrf.mxu0
        %v6315 = vadd.f32 0.0, %v6314
        %6316 = vmatmul.bf16.gmra.mxu0 %v6240
        %v6317 = vpop.f32.mrf.mxu0
        %v6318 = vadd.f32 0.0, %v6317
        %v6319 = vpop.f32.mrf.mxu0
        %v6320 = vadd.f32 0.0, %v6319
        %6321 = vdwg.mxu0
        %v6322 = vadd.f32 %v6076, %v6303
        %v6323 = vadd.f32 %v6077, %v6305
        %v6324 = vadd.f32 %v6078, %v6308
        %v6325 = vadd.f32 %v6079, %v6310
        %v6326 = vadd.f32 %v6080, %v6313
        %v6327 = vadd.f32 %v6081, %v6315
        %v6328 = vadd.f32 %v6082, %v6318
        %v6329 = vadd.f32 %v6083, %v6320
        %v6330 = vld [vmem:[%s5949] sm:$0xe]
        %v6331 = vld [vmem:[%s5949 + $0x8] sm:$0xe]
        %v6332 = vld [vmem:[%s5949 + $0x10] sm:$0xe]
        %v6333 = vld [vmem:[%s5949 + $0x18] sm:$0xe]
        %v6334 = vld [vmem:[%s5949 + $0x20] sm:$0xe]
        %v6335 = vld [vmem:[%s5949 + $0x28] sm:$0xe]
        %v6336 = vld [vmem:[%s5949 + $0x30] sm:$0xe]
        %v6337 = vld [vmem:[%s5949 + $0x38] sm:$0xe]
        %v6354 = vrot.slane %v6330, 5
        %v6355 = vrot.slane %v6354, 4
        %v6356 = vrot.slane %v6085, 5
        %v6357 = vsel %vm1516, %v6355, %v6356
        %v6358 = vrot.slane %v6331, 5
        %v6359 = vrot.slane %v6358, 4
        %v6360 = vrot.slane %v6087, 5
        %v6361 = vsel %vm1516, %v6359, %v6360
        %v6362 = vrot.slane %v6332, 5
        %v6363 = vrot.slane %v6362, 4
        %v6364 = vrot.slane %v6089, 5
        %v6365 = vsel %vm1516, %v6363, %v6364
        %v6366 = vrot.slane %v6333, 5
        %v6367 = vrot.slane %v6366, 4
        %v6368 = vrot.slane %v6091, 5
        %v6369 = vsel %vm1516, %v6367, %v6368
        %v6370 = vrot.slane %v6334, 5
        %v6371 = vrot.slane %v6370, 4
        %v6372 = vrot.slane %v6093, 5
        %v6373 = vsel %vm1516, %v6371, %v6372
        %v6374 = vrot.slane %v6335, 5
        %v6375 = vrot.slane %v6374, 4
        %v6376 = vrot.slane %v6095, 5
        %v6377 = vsel %vm1516, %v6375, %v6376
        %v6378 = vrot.slane %v6336, 5
        %v6379 = vrot.slane %v6378, 4
        %v6380 = vrot.slane %v6097, 5
        %v6381 = vsel %vm1516, %v6379, %v6380
        %v6382 = vrot.slane %v6337, 5
        %v6383 = vrot.slane %v6382, 4
        %v6384 = vrot.slane %v6099, 5
        %v6385 = vsel %vm1516, %v6383, %v6384
        %s6386 = scalar_lea.vmem [#allocation15], 512
        %v6387 = vld [vmem:[%s6386] sm:$0xf]
        %v6388 = vld [vmem:[%s6386 + $0x4] sm:$0xf]
        %v6389 = vld [vmem:[%s6386 + $0x8] sm:$0xf]
        %v6390 = vld [vmem:[%s6386 + $0xc] sm:$0xf]
        %v6391 = vld [vmem:[%s6386 + $0x10] sm:$0xf]
        %v6392 = vld [vmem:[%s6386 + $0x14] sm:$0xf]
        %v6393 = vld [vmem:[%s6386 + $0x18] sm:$0xf]
        %v6394 = vld [vmem:[%s6386 + $0x1c] sm:$0xf]
        %v6395 = vld [vmem:[%s6386 + $0x20] sm:$0xf]
        %v6396 = vld [vmem:[%s6386 + $0x24] sm:$0xf]
        %v6397 = vld [vmem:[%s6386 + $0x28] sm:$0xf]
        %v6398 = vld [vmem:[%s6386 + $0x2c] sm:$0xf]
        %v6399 = vld [vmem:[%s6386 + $0x30] sm:$0xf]
        %v6400 = vld [vmem:[%s6386 + $0x34] sm:$0xf]
        %v6401 = vld [vmem:[%s6386 + $0x38] sm:$0xf]
        %v6402 = vld [vmem:[%s6386 + $0x3c] sm:$0xf]
        %v6403 = vunpack.c.l.b16 %v6357
        %v6404 = vunpack.c.l.b16 %v6361
        %v6405 = vunpack.c.l.b16 %v6365
        %v6406 = vunpack.c.l.b16 %v6369
        %v6407 = vunpack.c.l.b16 %v6373
        %v6408 = vunpack.c.l.b16 %v6377
        %v6409 = vunpack.c.l.b16 %v6381
        %v6410 = vunpack.c.l.b16 %v6385
        %v6411 = vpack.c.b16 %v6404, %v6403
        %v6412 = vpack.c.b16 %v6406, %v6405
        %v6413 = vpack.c.b16 %v6408, %v6407
        %v6414 = vpack.c.b16 %v6410, %v6409
        %v6435 = vunpack.c.l.b16 %v6387
        %v6436 = vunpack.c.l.b16 %v6388
        %v6437 = vunpack.c.l.b16 %v6389
        %v6438 = vunpack.c.l.b16 %v6390
        %v6439 = vunpack.c.l.b16 %v6391
        %v6440 = vunpack.c.l.b16 %v6392
        %v6441 = vunpack.c.l.b16 %v6393
        %v6442 = vunpack.c.l.b16 %v6394
        %v6443 = vunpack.c.l.b16 %v6395
        %v6444 = vunpack.c.l.b16 %v6396
        %v6445 = vunpack.c.l.b16 %v6397
        %v6446 = vunpack.c.l.b16 %v6398
        %v6447 = vunpack.c.l.b16 %v6399
        %v6448 = vunpack.c.l.b16 %v6400
        %v6449 = vunpack.c.l.b16 %v6401
        %v6450 = vunpack.c.l.b16 %v6402
        %v6451 = vpack.c.b16 %v6436, %v6435
        %v6452 = vpack.c.b16 %v6438, %v6437
        %v6453 = vpack.c.b16 %v6440, %v6439
        %v6454 = vpack.c.b16 %v6442, %v6441
        %v6455 = vpack.c.b16 %v6444, %v6443
        %v6456 = vpack.c.b16 %v6446, %v6445
        %v6457 = vpack.c.b16 %v6448, %v6447
        %v6458 = vpack.c.b16 %v6450, %v6449
        %6467 = vmatpush.bf16.msra.mxu0 %v6458
        %6468 = vmatpush.bf16.msra.mxu0 %v6457
        %6469 = vmatpush.bf16.msra.mxu0 %v6456
        %6470 = vmatpush.bf16.msra.mxu0 %v6455
        %6471 = vmatpush.bf16.msra.mxu0 %v6454
        %6472 = vmatpush.bf16.msra.mxu0 %v6453
        %6473 = vmatpush.bf16.msra.mxu0 %v6452
        %6474 = vmatpush.bf16.msra.mxu0 %v6451
        %6475 = vmatmul.bf16.gmra.mxu0 %v6411
        %v6476 = vpop.f32.mrf.mxu0
        %v6477 = vadd.f32 0.0, %v6476
        %v6478 = vpop.f32.mrf.mxu0
        %v6479 = vadd.f32 0.0, %v6478
        %6480 = vmatmul.bf16.gmra.mxu0 %v6412
        %v6481 = vpop.f32.mrf.mxu0
        %v6482 = vadd.f32 0.0, %v6481
        %v6483 = vpop.f32.mrf.mxu0
        %v6484 = vadd.f32 0.0, %v6483
        %6485 = vmatmul.bf16.gmra.mxu0 %v6413
        %v6486 = vpop.f32.mrf.mxu0
        %v6487 = vadd.f32 0.0, %v6486
        %v6488 = vpop.f32.mrf.mxu0
        %v6489 = vadd.f32 0.0, %v6488
        %6490 = vmatmul.bf16.gmra.mxu0 %v6414
        %v6491 = vpop.f32.mrf.mxu0
        %v6492 = vadd.f32 0.0, %v6491
        %v6493 = vpop.f32.mrf.mxu0
        %v6494 = vadd.f32 0.0, %v6493
        %6495 = vdwg.mxu0
        %v6496 = vadd.f32 %v6322, %v6477
        %v6497 = vadd.f32 %v6323, %v6479
        %v6498 = vadd.f32 %v6324, %v6482
        %v6499 = vadd.f32 %v6325, %v6484
        %v6500 = vadd.f32 %v6326, %v6487
        %v6501 = vadd.f32 %v6327, %v6489
        %v6502 = vadd.f32 %v6328, %v6492
        %v6503 = vadd.f32 %v6329, %v6494
        %v6504 = vld [vmem:[%s9] sm:$0x3]
        %v6505 = vperm.slane %v6504, 0
        %v6506 = vmul.f32 %v6496, %v6505
        %v6507 = vmul.f32 %v6497, %v6505
        %v6508 = vmul.f32 %v6498, %v6505
        %v6509 = vmul.f32 %v6499, %v6505
        %v6510 = vmul.f32 %v6500, %v6505
        %v6511 = vmul.f32 %v6501, %v6505
        %v6512 = vmul.f32 %v6502, %v6505
        %v6513 = vmul.f32 %v6503, %v6505
        %v6514 = vperm.slane %v6504, 1
        %v6515 = vadd.f32 %v6506, %v6514
        %v6516 = vadd.f32 %v6507, %v6514
        %v6517 = vadd.f32 %v6508, %v6514
        %v6518 = vadd.f32 %v6509, %v6514
        %v6519 = vadd.f32 %v6510, %v6514
        %v6520 = vadd.f32 %v6511, %v6514
        %v6521 = vadd.f32 %v6512, %v6514
        %v6522 = vadd.f32 %v6513, %v6514
        %v6523 = vmax.f32 %v6515, 0.0
        %v6524 = vmax.f32 %v6516, 0.0
        %v6525 = vmax.f32 %v6517, 0.0
        %v6526 = vmax.f32 %v6518, 0.0
        %v6527 = vmax.f32 %v6519, 0.0
        %v6528 = vmax.f32 %v6520, 0.0
        %v6529 = vmax.f32 %v6521, 0.0
        %v6530 = vmax.f32 %v6522, 0.0
        %v6531 = vperm.slane %v2927, 0
        %v6532 = vmul.f32 %v2795, %v6531
        %v6533 = vmul.f32 %v2796, %v6531
        %v6534 = vmul.f32 %v2797, %v6531
        %v6535 = vmul.f32 %v2798, %v6531
        %v6536 = vmul.f32 %v2799, %v6531
        %v6537 = vmul.f32 %v2800, %v6531
        %v6538 = vmul.f32 %v2801, %v6531
        %v6539 = vmul.f32 %v2802, %v6531
        %v6540 = vadd.f32 %v6532, %v6523
        %v6541 = vadd.f32 %v6533, %v6524
        %v6542 = vadd.f32 %v6534, %v6525
        %v6543 = vadd.f32 %v6535, %v6526
        %v6544 = vadd.f32 %v6536, %v6527
        %v6545 = vadd.f32 %v6537, %v6528
        %v6546 = vadd.f32 %v6538, %v6529
        %v6547 = vadd.f32 %v6539, %v6530
        %v6548 = vpack.c.bf16 %v6540, %v6540
        %v6549 = vpack.c.bf16 %v6541, %v6541
        %v6550 = vpack.c.bf16 %v6542, %v6542
        %v6551 = vpack.c.bf16 %v6543, %v6543
        %v6552 = vpack.c.bf16 %v6544, %v6544
        %v6553 = vpack.c.bf16 %v6545, %v6545
        %v6554 = vpack.c.bf16 %v6546, %v6546
        %v6555 = vpack.c.bf16 %v6547, %v6547
        %v6564 = vrot.slane %v6548, 3
        %v6565 = vrot.slane %v6549, 3
        %v6566 = vrot.slane %v6550, 3
        %v6567 = vrot.slane %v6551, 3
        %v6568 = vrot.slane %v6552, 3
        %v6569 = vrot.slane %v6553, 3
        %v6570 = vrot.slane %v6554, 3
        %v6571 = vrot.slane %v6555, 3
        %v6574 = vsel %vm4540, %v6548, %v6564
        %v6576 = vsel %vm4545, %v6548, %v6564
        %v6578 = vrot.slane %v6576, 1
        %v6579 = vsel %vm4549, %v6548, %v6564
        %v6581 = vrot.slane %v6579, 2
        %v6582 = vsel %vm4553, %v6548, %v6564
        %v6584 = vrot.slane %v6582, 3
        %v6587 = vsel %vm4540, %v6549, %v6565
        %v6589 = vsel %vm4545, %v6549, %v6565
        %v6591 = vrot.slane %v6589, 1
        %v6592 = vsel %vm4549, %v6549, %v6565
        %v6594 = vrot.slane %v6592, 2
        %v6595 = vsel %vm4553, %v6549, %v6565
        %v6597 = vrot.slane %v6595, 3
        %v6600 = vsel %vm4540, %v6550, %v6566
        %v6602 = vsel %vm4545, %v6550, %v6566
        %v6604 = vrot.slane %v6602, 1
        %v6605 = vsel %vm4549, %v6550, %v6566
        %v6607 = vrot.slane %v6605, 2
        %v6608 = vsel %vm4553, %v6550, %v6566
        %v6610 = vrot.slane %v6608, 3
        %v6613 = vsel %vm4540, %v6551, %v6567
        %v6615 = vsel %vm4545, %v6551, %v6567
        %v6617 = vrot.slane %v6615, 1
        %v6618 = vsel %vm4549, %v6551, %v6567
        %v6620 = vrot.slane %v6618, 2
        %v6621 = vsel %vm4553, %v6551, %v6567
        %v6623 = vrot.slane %v6621, 3
        %v6626 = vsel %vm4540, %v6552, %v6568
        %v6628 = vsel %vm4545, %v6552, %v6568
        %v6630 = vrot.slane %v6628, 1
        %v6631 = vsel %vm4549, %v6552, %v6568
        %v6633 = vrot.slane %v6631, 2
        %v6634 = vsel %vm4553, %v6552, %v6568
        %v6636 = vrot.slane %v6634, 3
        %v6639 = vsel %vm4540, %v6553, %v6569
        %v6641 = vsel %vm4545, %v6553, %v6569
        %v6643 = vrot.slane %v6641, 1
        %v6644 = vsel %vm4549, %v6553, %v6569
        %v6646 = vrot.slane %v6644, 2
        %v6647 = vsel %vm4553, %v6553, %v6569
        %v6649 = vrot.slane %v6647, 3
        %v6652 = vsel %vm4540, %v6554, %v6570
        %v6654 = vsel %vm4545, %v6554, %v6570
        %v6656 = vrot.slane %v6654, 1
        %v6657 = vsel %vm4549, %v6554, %v6570
        %v6659 = vrot.slane %v6657, 2
        %v6660 = vsel %vm4553, %v6554, %v6570
        %v6662 = vrot.slane %v6660, 3
        %v6665 = vsel %vm4540, %v6555, %v6571
        %v6667 = vsel %vm4545, %v6555, %v6571
        %v6669 = vrot.slane %v6667, 1
        %v6670 = vsel %vm4549, %v6555, %v6571
        %v6672 = vrot.slane %v6670, 2
        %v6673 = vsel %vm4553, %v6555, %v6571
        %v6675 = vrot.slane %v6673, 3
        %v6676 = vunpack.i.l.s16 %v6574
        %v6677 = vunpack.i.h.s16 %v6574
        %v6678 = vunpack.i.l.s16 %v6578
        %v6679 = vunpack.i.h.s16 %v6578
        %v6680 = vunpack.i.l.s16 %v6581
        %v6681 = vunpack.i.h.s16 %v6581
        %v6682 = vunpack.i.l.s16 %v6584
        %v6683 = vunpack.i.h.s16 %v6584
        %v6684 = vunpack.i.l.s16 %v6587
        %v6685 = vunpack.i.h.s16 %v6587
        %v6686 = vunpack.i.l.s16 %v6591
        %v6687 = vunpack.i.h.s16 %v6591
        %v6688 = vunpack.i.l.s16 %v6594
        %v6689 = vunpack.i.h.s16 %v6594
        %v6690 = vunpack.i.l.s16 %v6597
        %v6691 = vunpack.i.h.s16 %v6597
        %v6692 = vunpack.i.l.s16 %v6600
        %v6693 = vunpack.i.h.s16 %v6600
        %v6694 = vunpack.i.l.s16 %v6604
        %v6695 = vunpack.i.h.s16 %v6604
        %v6696 = vunpack.i.l.s16 %v6607
        %v6697 = vunpack.i.h.s16 %v6607
        %v6698 = vunpack.i.l.s16 %v6610
        %v6699 = vunpack.i.h.s16 %v6610
        %v6700 = vunpack.i.l.s16 %v6613
        %v6701 = vunpack.i.h.s16 %v6613
        %v6702 = vunpack.i.l.s16 %v6617
        %v6703 = vunpack.i.h.s16 %v6617
        %v6704 = vunpack.i.l.s16 %v6620
        %v6705 = vunpack.i.h.s16 %v6620
        %v6706 = vunpack.i.l.s16 %v6623
        %v6707 = vunpack.i.h.s16 %v6623
        %v6708 = vunpack.i.l.s16 %v6626
        %v6709 = vunpack.i.h.s16 %v6626
        %v6710 = vunpack.i.l.s16 %v6630
        %v6711 = vunpack.i.h.s16 %v6630
        %v6712 = vunpack.i.l.s16 %v6633
        %v6713 = vunpack.i.h.s16 %v6633
        %v6714 = vunpack.i.l.s16 %v6636
        %v6715 = vunpack.i.h.s16 %v6636
        %v6716 = vunpack.i.l.s16 %v6639
        %v6717 = vunpack.i.h.s16 %v6639
        %v6718 = vunpack.i.l.s16 %v6643
        %v6719 = vunpack.i.h.s16 %v6643
        %v6720 = vunpack.i.l.s16 %v6646
        %v6721 = vunpack.i.h.s16 %v6646
        %v6722 = vunpack.i.l.s16 %v6649
        %v6723 = vunpack.i.h.s16 %v6649
        %v6724 = vunpack.i.l.s16 %v6652
        %v6725 = vunpack.i.h.s16 %v6652
        %v6726 = vunpack.i.l.s16 %v6656
        %v6727 = vunpack.i.h.s16 %v6656
        %v6728 = vunpack.i.l.s16 %v6659
        %v6729 = vunpack.i.h.s16 %v6659
        %v6730 = vunpack.i.l.s16 %v6662
        %v6731 = vunpack.i.h.s16 %v6662
        %v6732 = vunpack.i.l.s16 %v6665
        %v6733 = vunpack.i.h.s16 %v6665
        %v6734 = vunpack.i.l.s16 %v6669
        %v6735 = vunpack.i.h.s16 %v6669
        %v6736 = vunpack.i.l.s16 %v6672
        %v6737 = vunpack.i.h.s16 %v6672
        %v6738 = vunpack.i.l.s16 %v6675
        %v6739 = vunpack.i.h.s16 %v6675
        %v6740 = vpack.i.b16 %v6676, %v6676
        %v6741 = vpack.i.b16 %v6677, %v6677
        %v6742 = vpack.i.b16 %v6678, %v6678
        %v6743 = vpack.i.b16 %v6679, %v6679
        %v6744 = vpack.i.b16 %v6680, %v6680
        %v6745 = vpack.i.b16 %v6681, %v6681
        %v6746 = vpack.i.b16 %v6682, %v6682
        %v6747 = vpack.i.b16 %v6683, %v6683
        %v6748 = vpack.i.b16 %v6684, %v6684
        %v6749 = vpack.i.b16 %v6685, %v6685
        %v6750 = vpack.i.b16 %v6686, %v6686
        %v6751 = vpack.i.b16 %v6687, %v6687
        %v6752 = vpack.i.b16 %v6688, %v6688
        %v6753 = vpack.i.b16 %v6689, %v6689
        %v6754 = vpack.i.b16 %v6690, %v6690
        %v6755 = vpack.i.b16 %v6691, %v6691
        %v6756 = vpack.i.b16 %v6692, %v6692
        %v6757 = vpack.i.b16 %v6693, %v6693
        %v6758 = vpack.i.b16 %v6694, %v6694
        %v6759 = vpack.i.b16 %v6695, %v6695
        %v6760 = vpack.i.b16 %v6696, %v6696
        %v6761 = vpack.i.b16 %v6697, %v6697
        %v6762 = vpack.i.b16 %v6698, %v6698
        %v6763 = vpack.i.b16 %v6699, %v6699
        %v6764 = vpack.i.b16 %v6700, %v6700
        %v6765 = vpack.i.b16 %v6701, %v6701
        %v6766 = vpack.i.b16 %v6702, %v6702
        %v6767 = vpack.i.b16 %v6703, %v6703
        %v6768 = vpack.i.b16 %v6704, %v6704
        %v6769 = vpack.i.b16 %v6705, %v6705
        %v6770 = vpack.i.b16 %v6706, %v6706
        %v6771 = vpack.i.b16 %v6707, %v6707
        %v6772 = vpack.i.b16 %v6708, %v6708
        %v6773 = vpack.i.b16 %v6709, %v6709
        %v6774 = vpack.i.b16 %v6710, %v6710
        %v6775 = vpack.i.b16 %v6711, %v6711
        %v6776 = vpack.i.b16 %v6712, %v6712
        %v6777 = vpack.i.b16 %v6713, %v6713
        %v6778 = vpack.i.b16 %v6714, %v6714
        %v6779 = vpack.i.b16 %v6715, %v6715
        %v6780 = vpack.i.b16 %v6716, %v6716
        %v6781 = vpack.i.b16 %v6717, %v6717
        %v6782 = vpack.i.b16 %v6718, %v6718
        %v6783 = vpack.i.b16 %v6719, %v6719
        %v6784 = vpack.i.b16 %v6720, %v6720
        %v6785 = vpack.i.b16 %v6721, %v6721
        %v6786 = vpack.i.b16 %v6722, %v6722
        %v6787 = vpack.i.b16 %v6723, %v6723
        %v6788 = vpack.i.b16 %v6724, %v6724
        %v6789 = vpack.i.b16 %v6725, %v6725
        %v6790 = vpack.i.b16 %v6726, %v6726
        %v6791 = vpack.i.b16 %v6727, %v6727
        %v6792 = vpack.i.b16 %v6728, %v6728
        %v6793 = vpack.i.b16 %v6729, %v6729
        %v6794 = vpack.i.b16 %v6730, %v6730
        %v6795 = vpack.i.b16 %v6731, %v6731
        %v6796 = vpack.i.b16 %v6732, %v6732
        %v6797 = vpack.i.b16 %v6733, %v6733
        %v6798 = vpack.i.b16 %v6734, %v6734
        %v6799 = vpack.i.b16 %v6735, %v6735
        %v6800 = vpack.i.b16 %v6736, %v6736
        %v6801 = vpack.i.b16 %v6737, %v6737
        %v6802 = vpack.i.b16 %v6738, %v6738
        %v6803 = vpack.i.b16 %v6739, %v6739
        %v6804 = vperm.slane %v6740, 0
        %v6805 = vperm.slane %v6741, 0
        %v6806 = vperm.slane %v6742, 0
        %v6807 = vperm.slane %v6743, 0
        %v6808 = vperm.slane %v6744, 0
        %v6809 = vperm.slane %v6745, 0
        %v6810 = vperm.slane %v6746, 0
        %v6811 = vperm.slane %v6747, 0
        %v6812 = vperm.slane %v6748, 0
        %v6813 = vperm.slane %v6749, 0
        %v6814 = vperm.slane %v6750, 0
        %v6815 = vperm.slane %v6751, 0
        %v6816 = vperm.slane %v6752, 0
        %v6817 = vperm.slane %v6753, 0
        %v6818 = vperm.slane %v6754, 0
        %v6819 = vperm.slane %v6755, 0
        %v6820 = vperm.slane %v6756, 0
        %v6821 = vperm.slane %v6757, 0
        %v6822 = vperm.slane %v6758, 0
        %v6823 = vperm.slane %v6759, 0
        %v6824 = vperm.slane %v6760, 0
        %v6825 = vperm.slane %v6761, 0
        %v6826 = vperm.slane %v6762, 0
        %v6827 = vperm.slane %v6763, 0
        %v6828 = vperm.slane %v6764, 0
        %v6829 = vperm.slane %v6765, 0
        %v6830 = vperm.slane %v6766, 0
        %v6831 = vperm.slane %v6767, 0
        %v6832 = vperm.slane %v6768, 0
        %v6833 = vperm.slane %v6769, 0
        %v6834 = vperm.slane %v6770, 0
        %v6835 = vperm.slane %v6771, 0
        %v6836 = vperm.slane %v6772, 0
        %v6837 = vperm.slane %v6773, 0
        %v6838 = vperm.slane %v6774, 0
        %v6839 = vperm.slane %v6775, 0
        %v6840 = vperm.slane %v6776, 0
        %v6841 = vperm.slane %v6777, 0
        %v6842 = vperm.slane %v6778, 0
        %v6843 = vperm.slane %v6779, 0
        %v6844 = vperm.slane %v6780, 0
        %v6845 = vperm.slane %v6781, 0
        %v6846 = vperm.slane %v6782, 0
        %v6847 = vperm.slane %v6783, 0
        %v6848 = vperm.slane %v6784, 0
        %v6849 = vperm.slane %v6785, 0
        %v6850 = vperm.slane %v6786, 0
        %v6851 = vperm.slane %v6787, 0
        %v6852 = vperm.slane %v6788, 0
        %v6853 = vperm.slane %v6789, 0
        %v6854 = vperm.slane %v6790, 0
        %v6855 = vperm.slane %v6791, 0
        %v6856 = vperm.slane %v6792, 0
        %v6857 = vperm.slane %v6793, 0
        %v6858 = vperm.slane %v6794, 0
        %v6859 = vperm.slane %v6795, 0
        %v6860 = vperm.slane %v6796, 0
        %v6861 = vperm.slane %v6797, 0
        %v6862 = vperm.slane %v6798, 0
        %v6863 = vperm.slane %v6799, 0
        %v6864 = vperm.slane %v6800, 0
        %v6865 = vperm.slane %v6801, 0
        %v6866 = vperm.slane %v6802, 0
        %v6867 = vperm.slane %v6803, 0
        %v6869 = vpack.i.b16 %v6804, %v6804
        %v6871 = vperm.slane %v6869, 0
        %v6873 = vpack.i.b16 %v6805, %v6805
        %v6875 = vperm.slane %v6873, 0
        %v6877 = vpack.i.b16 %v6806, %v6806
        %v6879 = vperm.slane %v6877, 0
        %v6881 = vpack.i.b16 %v6807, %v6807
        %v6883 = vperm.slane %v6881, 0
        %v6885 = vpack.i.b16 %v6808, %v6808
        %v6887 = vperm.slane %v6885, 0
        %v6889 = vpack.i.b16 %v6809, %v6809
        %v6891 = vperm.slane %v6889, 0
        %v6893 = vpack.i.b16 %v6810, %v6810
        %v6895 = vperm.slane %v6893, 0
        %v6897 = vpack.i.b16 %v6811, %v6811
        %v6899 = vperm.slane %v6897, 0
        %v6901 = vpack.i.b16 %v6812, %v6812
        %v6903 = vperm.slane %v6901, 0
        %v6905 = vpack.i.b16 %v6813, %v6813
        %v6907 = vperm.slane %v6905, 0
        %v6909 = vpack.i.b16 %v6814, %v6814
        %v6911 = vperm.slane %v6909, 0
        %v6913 = vpack.i.b16 %v6815, %v6815
        %v6915 = vperm.slane %v6913, 0
        %v6917 = vpack.i.b16 %v6816, %v6816
        %v6919 = vperm.slane %v6917, 0
        %v6921 = vpack.i.b16 %v6817, %v6817
        %v6923 = vperm.slane %v6921, 0
        %v6925 = vpack.i.b16 %v6818, %v6818
        %v6927 = vperm.slane %v6925, 0
        %v6929 = vpack.i.b16 %v6819, %v6819
        %v6931 = vperm.slane %v6929, 0
        %v6933 = vpack.i.b16 %v6820, %v6820
        %v6935 = vperm.slane %v6933, 0
        %v6937 = vpack.i.b16 %v6821, %v6821
        %v6939 = vperm.slane %v6937, 0
        %v6941 = vpack.i.b16 %v6822, %v6822
        %v6943 = vperm.slane %v6941, 0
        %v6945 = vpack.i.b16 %v6823, %v6823
        %v6947 = vperm.slane %v6945, 0
        %v6949 = vpack.i.b16 %v6824, %v6824
        %v6951 = vperm.slane %v6949, 0
        %v6953 = vpack.i.b16 %v6825, %v6825
        %v6955 = vperm.slane %v6953, 0
        %v6957 = vpack.i.b16 %v6826, %v6826
        %v6959 = vperm.slane %v6957, 0
        %v6961 = vpack.i.b16 %v6827, %v6827
        %v6963 = vperm.slane %v6961, 0
        %v6965 = vpack.i.b16 %v6828, %v6828
        %v6967 = vperm.slane %v6965, 0
        %v6969 = vpack.i.b16 %v6829, %v6829
        %v6971 = vperm.slane %v6969, 0
        %v6973 = vpack.i.b16 %v6830, %v6830
        %v6975 = vperm.slane %v6973, 0
        %v6977 = vpack.i.b16 %v6831, %v6831
        %v6979 = vperm.slane %v6977, 0
        %v6981 = vpack.i.b16 %v6832, %v6832
        %v6983 = vperm.slane %v6981, 0
        %v6985 = vpack.i.b16 %v6833, %v6833
        %v6987 = vperm.slane %v6985, 0
        %v6989 = vpack.i.b16 %v6834, %v6834
        %v6991 = vperm.slane %v6989, 0
        %v6993 = vpack.i.b16 %v6835, %v6835
        %v6995 = vperm.slane %v6993, 0
        %v6997 = vpack.i.b16 %v6836, %v6836
        %v6999 = vperm.slane %v6997, 0
        %v7001 = vpack.i.b16 %v6837, %v6837
        %v7003 = vperm.slane %v7001, 0
        %v7005 = vpack.i.b16 %v6838, %v6838
        %v7007 = vperm.slane %v7005, 0
        %v7009 = vpack.i.b16 %v6839, %v6839
        %v7011 = vperm.slane %v7009, 0
        %v7013 = vpack.i.b16 %v6840, %v6840
        %v7015 = vperm.slane %v7013, 0
        %v7017 = vpack.i.b16 %v6841, %v6841
        %v7019 = vperm.slane %v7017, 0
        %v7021 = vpack.i.b16 %v6842, %v6842
        %v7023 = vperm.slane %v7021, 0
        %v7025 = vpack.i.b16 %v6843, %v6843
        %v7027 = vperm.slane %v7025, 0
        %v7029 = vpack.i.b16 %v6844, %v6844
        %v7031 = vperm.slane %v7029, 0
        %v7033 = vpack.i.b16 %v6845, %v6845
        %v7035 = vperm.slane %v7033, 0
        %v7037 = vpack.i.b16 %v6846, %v6846
        %v7039 = vperm.slane %v7037, 0
        %v7041 = vpack.i.b16 %v6847, %v6847
        %v7043 = vperm.slane %v7041, 0
        %v7045 = vpack.i.b16 %v6848, %v6848
        %v7047 = vperm.slane %v7045, 0
        %v7049 = vpack.i.b16 %v6849, %v6849
        %v7051 = vperm.slane %v7049, 0
        %v7053 = vpack.i.b16 %v6850, %v6850
        %v7055 = vperm.slane %v7053, 0
        %v7057 = vpack.i.b16 %v6851, %v6851
        %v7059 = vperm.slane %v7057, 0
        %v7061 = vpack.i.b16 %v6852, %v6852
        %v7063 = vperm.slane %v7061, 0
        %v7065 = vpack.i.b16 %v6853, %v6853
        %v7067 = vperm.slane %v7065, 0
        %v7069 = vpack.i.b16 %v6854, %v6854
        %v7071 = vperm.slane %v7069, 0
        %v7073 = vpack.i.b16 %v6855, %v6855
        %v7075 = vperm.slane %v7073, 0
        %v7077 = vpack.i.b16 %v6856, %v6856
        %v7079 = vperm.slane %v7077, 0
        %v7081 = vpack.i.b16 %v6857, %v6857
        %v7083 = vperm.slane %v7081, 0
        %v7085 = vpack.i.b16 %v6858, %v6858
        %v7087 = vperm.slane %v7085, 0
        %v7089 = vpack.i.b16 %v6859, %v6859
        %v7091 = vperm.slane %v7089, 0
        %v7093 = vpack.i.b16 %v6860, %v6860
        %v7095 = vperm.slane %v7093, 0
        %v7097 = vpack.i.b16 %v6861, %v6861
        %v7099 = vperm.slane %v7097, 0
        %v7101 = vpack.i.b16 %v6862, %v6862
        %v7103 = vperm.slane %v7101, 0
        %v7105 = vpack.i.b16 %v6863, %v6863
        %v7107 = vperm.slane %v7105, 0
        %v7109 = vpack.i.b16 %v6864, %v6864
        %v7111 = vperm.slane %v7109, 0
        %v7113 = vpack.i.b16 %v6865, %v6865
        %v7115 = vperm.slane %v7113, 0
        %v7117 = vpack.i.b16 %v6866, %v6866
        %v7119 = vperm.slane %v7117, 0
        %v7121 = vpack.i.b16 %v6867, %v6867
        %v7123 = vperm.slane %v7121, 0
        %7125 = vst [vmem:[#allocation1] ss:$4 sm:$0xff] %v6871
        %s7127 = scalar_lea.vmem [#allocation1], 1
        %7128 = vst [vmem:[%s7127] ss:$4 sm:$0xff] %v6875
        %s7130 = scalar_lea.vmem [#allocation1], 2
        %7131 = vst [vmem:[%s7130] ss:$4 sm:$0xff] %v6879
        %s7133 = scalar_lea.vmem [#allocation1], 3
        %7134 = vst [vmem:[%s7133] ss:$4 sm:$0xff] %v6883
        %s7136 = scalar_lea.vmem [#allocation1], 32
        %7137 = vst [vmem:[%s7136] ss:$4 sm:$0xff] %v6887
        %s7139 = scalar_lea.vmem [#allocation1], 33
        %7140 = vst [vmem:[%s7139] ss:$4 sm:$0xff] %v6891
        %s7142 = scalar_lea.vmem [#allocation1], 34
        %7143 = vst [vmem:[%s7142] ss:$4 sm:$0xff] %v6895
        %s7145 = scalar_lea.vmem [#allocation1], 35
        %7146 = vst [vmem:[%s7145] ss:$4 sm:$0xff] %v6899
        %v7147 = vld [vmem:[#allocation1] sm:$0xff]
        %v7148 = vld [vmem:[#allocation1 + $0x20] sm:$0xff]
        %7149 = vst [vmem:[#allocation1] ss:$4 sm:$0xff] %v6871
        %7150 = vst [vmem:[%s7127] ss:$4 sm:$0xff] %v6875
        %7151 = vst [vmem:[%s7130] ss:$4 sm:$0xff] %v6879
        %7152 = vst [vmem:[%s7133] ss:$4 sm:$0xff] %v6883
        %7153 = vst [vmem:[%s7136] ss:$4 sm:$0xff] %v6887
        %7154 = vst [vmem:[%s7139] ss:$4 sm:$0xff] %v6891
        %7155 = vst [vmem:[%s7142] ss:$4 sm:$0xff] %v6895
        %7156 = vst [vmem:[%s7145] ss:$4 sm:$0xff] %v6899
        %v7157 = vld [vmem:[#allocation1] sm:$0xff]
        %v7158 = vld [vmem:[#allocation1 + $0x20] sm:$0xff]
        %7160 = vst [vmem:[#allocation1] ss:$4 sm:$0xff] %v6903
        %7162 = vst [vmem:[%s7127] ss:$4 sm:$0xff] %v6907
        %7164 = vst [vmem:[%s7130] ss:$4 sm:$0xff] %v6911
        %7166 = vst [vmem:[%s7133] ss:$4 sm:$0xff] %v6915
        %7168 = vst [vmem:[%s7136] ss:$4 sm:$0xff] %v6919
        %7170 = vst [vmem:[%s7139] ss:$4 sm:$0xff] %v6923
        %7172 = vst [vmem:[%s7142] ss:$4 sm:$0xff] %v6927
        %7174 = vst [vmem:[%s7145] ss:$4 sm:$0xff] %v6931
        %v7175 = vld [vmem:[#allocation1] sm:$0xff]
        %v7176 = vld [vmem:[#allocation1 + $0x20] sm:$0xff]
        %7177 = vst [vmem:[#allocation1] ss:$4 sm:$0xff] %v6903
        %7178 = vst [vmem:[%s7127] ss:$4 sm:$0xff] %v6907
        %7179 = vst [vmem:[%s7130] ss:$4 sm:$0xff] %v6911
        %7180 = vst [vmem:[%s7133] ss:$4 sm:$0xff] %v6915
        %7181 = vst [vmem:[%s7136] ss:$4 sm:$0xff] %v6919
        %7182 = vst [vmem:[%s7139] ss:$4 sm:$0xff] %v6923
        %7183 = vst [vmem:[%s7142] ss:$4 sm:$0xff] %v6927
        %7184 = vst [vmem:[%s7145] ss:$4 sm:$0xff] %v6931
        %v7185 = vld [vmem:[#allocation1] sm:$0xff]
        %v7186 = vld [vmem:[#allocation1 + $0x20] sm:$0xff]
        %7188 = vst [vmem:[#allocation1] ss:$4 sm:$0xff] %v6935
        %7190 = vst [vmem:[%s7127] ss:$4 sm:$0xff] %v6939
        %7192 = vst [vmem:[%s7130] ss:$4 sm:$0xff] %v6943
        %7194 = vst [vmem:[%s7133] ss:$4 sm:$0xff] %v6947
        %7196 = vst [vmem:[%s7136] ss:$4 sm:$0xff] %v6951
        %7198 = vst [vmem:[%s7139] ss:$4 sm:$0xff] %v6955
        %7200 = vst [vmem:[%s7142] ss:$4 sm:$0xff] %v6959
        %7202 = vst [vmem:[%s7145] ss:$4 sm:$0xff] %v6963
        %v7203 = vld [vmem:[#allocation1] sm:$0xff]
        %v7204 = vld [vmem:[#allocation1 + $0x20] sm:$0xff]
        %7205 = vst [vmem:[#allocation1] ss:$4 sm:$0xff] %v6935
        %7206 = vst [vmem:[%s7127] ss:$4 sm:$0xff] %v6939
        %7207 = vst [vmem:[%s7130] ss:$4 sm:$0xff] %v6943
        %7208 = vst [vmem:[%s7133] ss:$4 sm:$0xff] %v6947
        %7209 = vst [vmem:[%s7136] ss:$4 sm:$0xff] %v6951
        %7210 = vst [vmem:[%s7139] ss:$4 sm:$0xff] %v6955
        %7211 = vst [vmem:[%s7142] ss:$4 sm:$0xff] %v6959
        %7212 = vst [vmem:[%s7145] ss:$4 sm:$0xff] %v6963
        %v7213 = vld [vmem:[#allocation1] sm:$0xff]
        %v7214 = vld [vmem:[#allocation1 + $0x20] sm:$0xff]
        %7216 = vst [vmem:[#allocation1] ss:$4 sm:$0xff] %v6967
        %7218 = vst [vmem:[%s7127] ss:$4 sm:$0xff] %v6971
        %7220 = vst [vmem:[%s7130] ss:$4 sm:$0xff] %v6975
        %7222 = vst [vmem:[%s7133] ss:$4 sm:$0xff] %v6979
        %7224 = vst [vmem:[%s7136] ss:$4 sm:$0xff] %v6983
        %7226 = vst [vmem:[%s7139] ss:$4 sm:$0xff] %v6987
        %7228 = vst [vmem:[%s7142] ss:$4 sm:$0xff] %v6991
        %7230 = vst [vmem:[%s7145] ss:$4 sm:$0xff] %v6995
        %v7231 = vld [vmem:[#allocation1] sm:$0xff]
        %v7232 = vld [vmem:[#allocation1 + $0x20] sm:$0xff]
        %7233 = vst [vmem:[#allocation1] ss:$4 sm:$0xff] %v6967
        %7234 = vst [vmem:[%s7127] ss:$4 sm:$0xff] %v6971
        %7235 = vst [vmem:[%s7130] ss:$4 sm:$0xff] %v6975
        %7236 = vst [vmem:[%s7133] ss:$4 sm:$0xff] %v6979
        %7237 = vst [vmem:[%s7136] ss:$4 sm:$0xff] %v6983
        %7238 = vst [vmem:[%s7139] ss:$4 sm:$0xff] %v6987
        %7239 = vst [vmem:[%s7142] ss:$4 sm:$0xff] %v6991
        %7240 = vst [vmem:[%s7145] ss:$4 sm:$0xff] %v6995
        %v7241 = vld [vmem:[#allocation1] sm:$0xff]
        %v7242 = vld [vmem:[#allocation1 + $0x20] sm:$0xff]
        %7244 = vst [vmem:[#allocation1] ss:$4 sm:$0xff] %v6999
        %7246 = vst [vmem:[%s7127] ss:$4 sm:$0xff] %v7003
        %7248 = vst [vmem:[%s7130] ss:$4 sm:$0xff] %v7007
        %7250 = vst [vmem:[%s7133] ss:$4 sm:$0xff] %v7011
        %7252 = vst [vmem:[%s7136] ss:$4 sm:$0xff] %v7015
        %7254 = vst [vmem:[%s7139] ss:$4 sm:$0xff] %v7019
        %7256 = vst [vmem:[%s7142] ss:$4 sm:$0xff] %v7023
        %7258 = vst [vmem:[%s7145] ss:$4 sm:$0xff] %v7027
        %v7259 = vld [vmem:[#allocation1] sm:$0xff]
        %v7260 = vld [vmem:[#allocation1 + $0x20] sm:$0xff]
        %7261 = vst [vmem:[#allocation1] ss:$4 sm:$0xff] %v6999
        %7262 = vst [vmem:[%s7127] ss:$4 sm:$0xff] %v7003
        %7263 = vst [vmem:[%s7130] ss:$4 sm:$0xff] %v7007
        %7264 = vst [vmem:[%s7133] ss:$4 sm:$0xff] %v7011
        %7265 = vst [vmem:[%s7136] ss:$4 sm:$0xff] %v7015
        %7266 = vst [vmem:[%s7139] ss:$4 sm:$0xff] %v7019
        %7267 = vst [vmem:[%s7142] ss:$4 sm:$0xff] %v7023
        %7268 = vst [vmem:[%s7145] ss:$4 sm:$0xff] %v7027
        %v7269 = vld [vmem:[#allocation1] sm:$0xff]
        %v7270 = vld [vmem:[#allocation1 + $0x20] sm:$0xff]
        %7272 = vst [vmem:[#allocation1] ss:$4 sm:$0xff] %v7031
        %7274 = vst [vmem:[%s7127] ss:$4 sm:$0xff] %v7035
        %7276 = vst [vmem:[%s7130] ss:$4 sm:$0xff] %v7039
        %7278 = vst [vmem:[%s7133] ss:$4 sm:$0xff] %v7043
        %7280 = vst [vmem:[%s7136] ss:$4 sm:$0xff] %v7047
        %7282 = vst [vmem:[%s7139] ss:$4 sm:$0xff] %v7051
        %7284 = vst [vmem:[%s7142] ss:$4 sm:$0xff] %v7055
        %7286 = vst [vmem:[%s7145] ss:$4 sm:$0xff] %v7059
        %v7287 = vld [vmem:[#allocation1] sm:$0xff]
        %v7288 = vld [vmem:[#allocation1 + $0x20] sm:$0xff]
        %7289 = vst [vmem:[#allocation1] ss:$4 sm:$0xff] %v7031
        %7290 = vst [vmem:[%s7127] ss:$4 sm:$0xff] %v7035
        %7291 = vst [vmem:[%s7130] ss:$4 sm:$0xff] %v7039
        %7292 = vst [vmem:[%s7133] ss:$4 sm:$0xff] %v7043
        %7293 = vst [vmem:[%s7136] ss:$4 sm:$0xff] %v7047
        %7294 = vst [vmem:[%s7139] ss:$4 sm:$0xff] %v7051
        %7295 = vst [vmem:[%s7142] ss:$4 sm:$0xff] %v7055
        %7296 = vst [vmem:[%s7145] ss:$4 sm:$0xff] %v7059
        %v7297 = vld [vmem:[#allocation1] sm:$0xff]
        %v7298 = vld [vmem:[#allocation1 + $0x20] sm:$0xff]
        %7300 = vst [vmem:[#allocation1] ss:$4 sm:$0xff] %v7063
        %7302 = vst [vmem:[%s7127] ss:$4 sm:$0xff] %v7067
        %7304 = vst [vmem:[%s7130] ss:$4 sm:$0xff] %v7071
        %7306 = vst [vmem:[%s7133] ss:$4 sm:$0xff] %v7075
        %7308 = vst [vmem:[%s7136] ss:$4 sm:$0xff] %v7079
        %7310 = vst [vmem:[%s7139] ss:$4 sm:$0xff] %v7083
        %7312 = vst [vmem:[%s7142] ss:$4 sm:$0xff] %v7087
        %7314 = vst [vmem:[%s7145] ss:$4 sm:$0xff] %v7091
        %v7315 = vld [vmem:[#allocation1] sm:$0xff]
        %v7316 = vld [vmem:[#allocation1 + $0x20] sm:$0xff]
        %7317 = vst [vmem:[#allocation1] ss:$4 sm:$0xff] %v7063
        %7318 = vst [vmem:[%s7127] ss:$4 sm:$0xff] %v7067
        %7319 = vst [vmem:[%s7130] ss:$4 sm:$0xff] %v7071
        %7320 = vst [vmem:[%s7133] ss:$4 sm:$0xff] %v7075
        %7321 = vst [vmem:[%s7136] ss:$4 sm:$0xff] %v7079
        %7322 = vst [vmem:[%s7139] ss:$4 sm:$0xff] %v7083
        %7323 = vst [vmem:[%s7142] ss:$4 sm:$0xff] %v7087
        %7324 = vst [vmem:[%s7145] ss:$4 sm:$0xff] %v7091
        %v7325 = vld [vmem:[#allocation1] sm:$0xff]
        %v7326 = vld [vmem:[#allocation1 + $0x20] sm:$0xff]
        %7328 = vst [vmem:[#allocation1] ss:$4 sm:$0xff] %v7095
        %7330 = vst [vmem:[%s7127] ss:$4 sm:$0xff] %v7099
        %7332 = vst [vmem:[%s7130] ss:$4 sm:$0xff] %v7103
        %7334 = vst [vmem:[%s7133] ss:$4 sm:$0xff] %v7107
        %7336 = vst [vmem:[%s7136] ss:$4 sm:$0xff] %v7111
        %7338 = vst [vmem:[%s7139] ss:$4 sm:$0xff] %v7115
        %7340 = vst [vmem:[%s7142] ss:$4 sm:$0xff] %v7119
        %7342 = vst [vmem:[%s7145] ss:$4 sm:$0xff] %v7123
        %v7343 = vld [vmem:[#allocation1] sm:$0xff]
        %v7344 = vld [vmem:[#allocation1 + $0x20] sm:$0xff]
        %7345 = vst [vmem:[#allocation1] ss:$4 sm:$0xff] %v7095
        %7346 = vst [vmem:[%s7127] ss:$4 sm:$0xff] %v7099
        %7347 = vst [vmem:[%s7130] ss:$4 sm:$0xff] %v7103
        %7348 = vst [vmem:[%s7133] ss:$4 sm:$0xff] %v7107
        %7349 = vst [vmem:[%s7136] ss:$4 sm:$0xff] %v7111
        %7350 = vst [vmem:[%s7139] ss:$4 sm:$0xff] %v7115
        %7351 = vst [vmem:[%s7142] ss:$4 sm:$0xff] %v7119
        %7352 = vst [vmem:[%s7145] ss:$4 sm:$0xff] %v7123
        %v7353 = vld [vmem:[#allocation1] sm:$0xff]
        %v7354 = vld [vmem:[#allocation1 + $0x20] sm:$0xff]
        %vm7355 = vsmask.f32 4368
        %vm7356 = vmor %vm705, %vm7355
        %v7357 = vshrl.u32 %v7147, 16
        %v7359 = vrot.slane %v7357, 7
        %v7360 = vshll.u32 %v7147, 16
        %v7362 = vor.u32 %v7359, %v7360
        %v7363 = vrot.slane %v7359, 4
        %v7364 = vshrl.u32 %v7148, 16
        %v7366 = vrot.slane %v7364, 7
        %v7367 = vshll.u32 %v7148, 16
        %v7369 = vor.u32 %v7366, %v7367
        %v7370 = vsel %vm7356, %v7363, %v7369
        %v7371 = vrot.slane %v7366, 4
        %v7372 = vshrl.u32 %v7157, 16
        %v7374 = vrot.slane %v7372, 7
        %v7375 = vshll.u32 %v7157, 16
        %v7377 = vor.u32 %v7374, %v7375
        %v7378 = vrot.slane %v7374, 4
        %v7379 = vshrl.u32 %v7158, 16
        %v7381 = vrot.slane %v7379, 7
        %v7382 = vshll.u32 %v7158, 16
        %v7384 = vor.u32 %v7381, %v7382
        %v7385 = vsel %vm7356, %v7378, %v7384
        %v7386 = vrot.slane %v7381, 4
        %v7387 = vshrl.u32 %v7175, 16
        %v7389 = vrot.slane %v7387, 7
        %v7390 = vshll.u32 %v7175, 16
        %v7392 = vor.u32 %v7389, %v7390
        %v7393 = vrot.slane %v7389, 4
        %v7394 = vshrl.u32 %v7176, 16
        %v7396 = vrot.slane %v7394, 7
        %v7397 = vshll.u32 %v7176, 16
        %v7399 = vor.u32 %v7396, %v7397
        %v7400 = vsel %vm7356, %v7393, %v7399
        %v7401 = vrot.slane %v7396, 4
        %v7402 = vshrl.u32 %v7185, 16
        %v7404 = vrot.slane %v7402, 7
        %v7405 = vshll.u32 %v7185, 16
        %v7407 = vor.u32 %v7404, %v7405
        %v7408 = vrot.slane %v7404, 4
        %v7409 = vshrl.u32 %v7186, 16
        %v7411 = vrot.slane %v7409, 7
        %v7412 = vshll.u32 %v7186, 16
        %v7414 = vor.u32 %v7411, %v7412
        %v7415 = vsel %vm7356, %v7408, %v7414
        %v7416 = vrot.slane %v7411, 4
        %v7417 = vshrl.u32 %v7203, 16
        %v7419 = vrot.slane %v7417, 7
        %v7420 = vshll.u32 %v7203, 16
        %v7422 = vor.u32 %v7419, %v7420
        %v7423 = vrot.slane %v7419, 4
        %v7424 = vshrl.u32 %v7204, 16
        %v7426 = vrot.slane %v7424, 7
        %v7427 = vshll.u32 %v7204, 16
        %v7429 = vor.u32 %v7426, %v7427
        %v7430 = vsel %vm7356, %v7423, %v7429
        %v7431 = vrot.slane %v7426, 4
        %v7432 = vshrl.u32 %v7213, 16
        %v7434 = vrot.slane %v7432, 7
        %v7435 = vshll.u32 %v7213, 16
        %v7437 = vor.u32 %v7434, %v7435
        %v7438 = vrot.slane %v7434, 4
        %v7439 = vshrl.u32 %v7214, 16
        %v7441 = vrot.slane %v7439, 7
        %v7442 = vshll.u32 %v7214, 16
        %v7444 = vor.u32 %v7441, %v7442
        %v7445 = vsel %vm7356, %v7438, %v7444
        %v7446 = vrot.slane %v7441, 4
        %v7447 = vshrl.u32 %v7231, 16
        %v7449 = vrot.slane %v7447, 7
        %v7450 = vshll.u32 %v7231, 16
        %v7452 = vor.u32 %v7449, %v7450
        %v7453 = vrot.slane %v7449, 4
        %v7454 = vshrl.u32 %v7232, 16
        %v7456 = vrot.slane %v7454, 7
        %v7457 = vshll.u32 %v7232, 16
        %v7459 = vor.u32 %v7456, %v7457
        %v7460 = vsel %vm7356, %v7453, %v7459
        %v7461 = vrot.slane %v7456, 4
        %v7462 = vshrl.u32 %v7241, 16
        %v7464 = vrot.slane %v7462, 7
        %v7465 = vshll.u32 %v7241, 16
        %v7467 = vor.u32 %v7464, %v7465
        %v7468 = vrot.slane %v7464, 4
        %v7469 = vshrl.u32 %v7242, 16
        %v7471 = vrot.slane %v7469, 7
        %v7472 = vshll.u32 %v7242, 16
        %v7474 = vor.u32 %v7471, %v7472
        %v7475 = vsel %vm7356, %v7468, %v7474
        %v7476 = vrot.slane %v7471, 4
        %v7477 = vshrl.u32 %v7259, 16
        %v7479 = vrot.slane %v7477, 7
        %v7480 = vshll.u32 %v7259, 16
        %v7482 = vor.u32 %v7479, %v7480
        %v7483 = vrot.slane %v7479, 4
        %v7484 = vshrl.u32 %v7260, 16
        %v7486 = vrot.slane %v7484, 7
        %v7487 = vshll.u32 %v7260, 16
        %v7489 = vor.u32 %v7486, %v7487
        %v7490 = vsel %vm7356, %v7483, %v7489
        %v7491 = vrot.slane %v7486, 4
        %v7492 = vshrl.u32 %v7269, 16
        %v7494 = vrot.slane %v7492, 7
        %v7495 = vshll.u32 %v7269, 16
        %v7497 = vor.u32 %v7494, %v7495
        %v7498 = vrot.slane %v7494, 4
        %v7499 = vshrl.u32 %v7270, 16
        %v7501 = vrot.slane %v7499, 7
        %v7502 = vshll.u32 %v7270, 16
        %v7504 = vor.u32 %v7501, %v7502
        %v7505 = vsel %vm7356, %v7498, %v7504
        %v7506 = vrot.slane %v7501, 4
        %v7507 = vshrl.u32 %v7287, 16
        %v7509 = vrot.slane %v7507, 7
        %v7510 = vshll.u32 %v7287, 16
        %v7512 = vor.u32 %v7509, %v7510
        %v7513 = vrot.slane %v7509, 4
        %v7514 = vshrl.u32 %v7288, 16
        %v7516 = vrot.slane %v7514, 7
        %v7517 = vshll.u32 %v7288, 16
        %v7519 = vor.u32 %v7516, %v7517
        %v7520 = vsel %vm7356, %v7513, %v7519
        %v7521 = vrot.slane %v7516, 4
        %v7522 = vshrl.u32 %v7297, 16
        %v7524 = vrot.slane %v7522, 7
        %v7525 = vshll.u32 %v7297, 16
        %v7527 = vor.u32 %v7524, %v7525
        %v7528 = vrot.slane %v7524, 4
        %v7529 = vshrl.u32 %v7298, 16
        %v7531 = vrot.slane %v7529, 7
        %v7532 = vshll.u32 %v7298, 16
        %v7534 = vor.u32 %v7531, %v7532
        %v7535 = vsel %vm7356, %v7528, %v7534
        %v7536 = vrot.slane %v7531, 4
        %v7537 = vshrl.u32 %v7315, 16
        %v7539 = vrot.slane %v7537, 7
        %v7540 = vshll.u32 %v7315, 16
        %v7542 = vor.u32 %v7539, %v7540
        %v7543 = vrot.slane %v7539, 4
        %v7544 = vshrl.u32 %v7316, 16
        %v7546 = vrot.slane %v7544, 7
        %v7547 = vshll.u32 %v7316, 16
        %v7549 = vor.u32 %v7546, %v7547
        %v7550 = vsel %vm7356, %v7543, %v7549
        %v7551 = vrot.slane %v7546, 4
        %v7552 = vshrl.u32 %v7325, 16
        %v7554 = vrot.slane %v7552, 7
        %v7555 = vshll.u32 %v7325, 16
        %v7557 = vor.u32 %v7554, %v7555
        %v7558 = vrot.slane %v7554, 4
        %v7559 = vshrl.u32 %v7326, 16
        %v7561 = vrot.slane %v7559, 7
        %v7562 = vshll.u32 %v7326, 16
        %v7564 = vor.u32 %v7561, %v7562
        %v7565 = vsel %vm7356, %v7558, %v7564
        %v7566 = vrot.slane %v7561, 4
        %v7567 = vshrl.u32 %v7343, 16
        %v7569 = vrot.slane %v7567, 7
        %v7570 = vshll.u32 %v7343, 16
        %v7572 = vor.u32 %v7569, %v7570
        %v7573 = vrot.slane %v7569, 4
        %v7574 = vshrl.u32 %v7344, 16
        %v7576 = vrot.slane %v7574, 7
        %v7577 = vshll.u32 %v7344, 16
        %v7579 = vor.u32 %v7576, %v7577
        %v7580 = vsel %vm7356, %v7573, %v7579
        %v7581 = vrot.slane %v7576, 4
        %v7582 = vshrl.u32 %v7353, 16
        %v7584 = vrot.slane %v7582, 7
        %v7585 = vshll.u32 %v7353, 16
        %v7587 = vor.u32 %v7584, %v7585
        %v7588 = vrot.slane %v7584, 4
        %v7589 = vshrl.u32 %v7354, 16
        %v7591 = vrot.slane %v7589, 7
        %v7592 = vshll.u32 %v7354, 16
        %v7594 = vor.u32 %v7591, %v7592
        %v7595 = vsel %vm7356, %v7588, %v7594
        %v7596 = vrot.slane %v7591, 4
        %s7645 = scalar_lea.vmem [#allocation5], 12
        %v7646 = vld [vmem:[%s7645] sm:$0xf]
        %v7647 = vsel %vm1083, %v7362, %v7646
        %7648 = vst [vmem:[%s7645] sm:$0xf] %v7647
        %7649 = vst [vmem:[%s7645 + $0x4] sm:$0xf] %v7370
        %v7650 = vld [vmem:[%s7645 + $0x8] sm:$0x1]
        %v7651 = vsel %vm706, %v7371, %v7650
        %7652 = vst [vmem:[%s7645 + $0x8] sm:$0x1] %v7651
        %v7653 = vld [vmem:[%s7645 + $0xc] sm:$0xf]
        %v7654 = vsel %vm1083, %v7377, %v7653
        %7655 = vst [vmem:[%s7645 + $0xc] sm:$0xf] %v7654
        %7656 = vst [vmem:[%s7645 + $0x10] sm:$0xf] %v7385
        %v7657 = vld [vmem:[%s7645 + $0x14] sm:$0x1]
        %v7658 = vsel %vm706, %v7386, %v7657
        %7659 = vst [vmem:[%s7645 + $0x14] sm:$0x1] %v7658
        %v7660 = vld [vmem:[%s7645 + $0x18] sm:$0xf]
        %v7661 = vsel %vm1083, %v7392, %v7660
        %7662 = vst [vmem:[%s7645 + $0x18] sm:$0xf] %v7661
        %7663 = vst [vmem:[%s7645 + $0x1c] sm:$0xf] %v7400
        %v7664 = vld [vmem:[%s7645 + $0x20] sm:$0x1]
        %v7665 = vsel %vm706, %v7401, %v7664
        %7666 = vst [vmem:[%s7645 + $0x20] sm:$0x1] %v7665
        %v7667 = vld [vmem:[%s7645 + $0x24] sm:$0xf]
        %v7668 = vsel %vm1083, %v7407, %v7667
        %7669 = vst [vmem:[%s7645 + $0x24] sm:$0xf] %v7668
        %7670 = vst [vmem:[%s7645 + $0x28] sm:$0xf] %v7415
        %v7671 = vld [vmem:[%s7645 + $0x2c] sm:$0x1]
        %v7672 = vsel %vm706, %v7416, %v7671
        %7673 = vst [vmem:[%s7645 + $0x2c] sm:$0x1] %v7672
        %v7674 = vld [vmem:[%s7645 + $0x30] sm:$0xf]
        %v7675 = vsel %vm1083, %v7422, %v7674
        %7676 = vst [vmem:[%s7645 + $0x30] sm:$0xf] %v7675
        %7677 = vst [vmem:[%s7645 + $0x34] sm:$0xf] %v7430
        %v7678 = vld [vmem:[%s7645 + $0x38] sm:$0x1]
        %v7679 = vsel %vm706, %v7431, %v7678
        %7680 = vst [vmem:[%s7645 + $0x38] sm:$0x1] %v7679
        %v7681 = vld [vmem:[%s7645 + $0x3c] sm:$0xf]
        %v7682 = vsel %vm1083, %v7437, %v7681
        %7683 = vst [vmem:[%s7645 + $0x3c] sm:$0xf] %v7682
        %7684 = vst [vmem:[%s7645 + $0x40] sm:$0xf] %v7445
        %v7685 = vld [vmem:[%s7645 + $0x44] sm:$0x1]
        %v7686 = vsel %vm706, %v7446, %v7685
        %7687 = vst [vmem:[%s7645 + $0x44] sm:$0x1] %v7686
        %v7688 = vld [vmem:[%s7645 + $0x48] sm:$0xf]
        %v7689 = vsel %vm1083, %v7452, %v7688
        %7690 = vst [vmem:[%s7645 + $0x48] sm:$0xf] %v7689
        %7691 = vst [vmem:[%s7645 + $0x4c] sm:$0xf] %v7460
        %v7692 = vld [vmem:[%s7645 + $0x50] sm:$0x1]
        %v7693 = vsel %vm706, %v7461, %v7692
        %7694 = vst [vmem:[%s7645 + $0x50] sm:$0x1] %v7693
        %v7695 = vld [vmem:[%s7645 + $0x54] sm:$0xf]
        %v7696 = vsel %vm1083, %v7467, %v7695
        %7697 = vst [vmem:[%s7645 + $0x54] sm:$0xf] %v7696
        %7698 = vst [vmem:[%s7645 + $0x58] sm:$0xf] %v7475
        %v7699 = vld [vmem:[%s7645 + $0x5c] sm:$0x1]
        %v7700 = vsel %vm706, %v7476, %v7699
        %7701 = vst [vmem:[%s7645 + $0x5c] sm:$0x1] %v7700
        %v7702 = vld [vmem:[%s7645 + $0x60] sm:$0xf]
        %v7703 = vsel %vm1083, %v7482, %v7702
        %7704 = vst [vmem:[%s7645 + $0x60] sm:$0xf] %v7703
        %7705 = vst [vmem:[%s7645 + $0x64] sm:$0xf] %v7490
        %v7706 = vld [vmem:[%s7645 + $0x68] sm:$0x1]
        %v7707 = vsel %vm706, %v7491, %v7706
        %7708 = vst [vmem:[%s7645 + $0x68] sm:$0x1] %v7707
        %v7709 = vld [vmem:[%s7645 + $0x6c] sm:$0xf]
        %v7710 = vsel %vm1083, %v7497, %v7709
        %7711 = vst [vmem:[%s7645 + $0x6c] sm:$0xf] %v7710
        %7712 = vst [vmem:[%s7645 + $0x70] sm:$0xf] %v7505
        %v7713 = vld [vmem:[%s7645 + $0x74] sm:$0x1]
        %v7714 = vsel %vm706, %v7506, %v7713
        %7715 = vst [vmem:[%s7645 + $0x74] sm:$0x1] %v7714
        %v7716 = vld [vmem:[%s7645 + $0x78] sm:$0xf]
        %v7717 = vsel %vm1083, %v7512, %v7716
        %7718 = vst [vmem:[%s7645 + $0x78] sm:$0xf] %v7717
        %7719 = vst [vmem:[%s7645 + $0x7c] sm:$0xf] %v7520
        %v7720 = vld [vmem:[%s7645 + $0x80] sm:$0x1]
        %v7721 = vsel %vm706, %v7521, %v7720
        %7722 = vst [vmem:[%s7645 + $0x80] sm:$0x1] %v7721
        %v7723 = vld [vmem:[%s7645 + $0x84] sm:$0xf]
        %v7724 = vsel %vm1083, %v7527, %v7723
        %7725 = vst [vmem:[%s7645 + $0x84] sm:$0xf] %v7724
        %7726 = vst [vmem:[%s7645 + $0x88] sm:$0xf] %v7535
        %v7727 = vld [vmem:[%s7645 + $0x8c] sm:$0x1]
        %v7728 = vsel %vm706, %v7536, %v7727
        %7729 = vst [vmem:[%s7645 + $0x8c] sm:$0x1] %v7728
        %v7730 = vld [vmem:[%s7645 + $0x90] sm:$0xf]
        %v7731 = vsel %vm1083, %v7542, %v7730
        %7732 = vst [vmem:[%s7645 + $0x90] sm:$0xf] %v7731
        %7733 = vst [vmem:[%s7645 + $0x94] sm:$0xf] %v7550
        %v7734 = vld [vmem:[%s7645 + $0x98] sm:$0x1]
        %v7735 = vsel %vm706, %v7551, %v7734
        %7736 = vst [vmem:[%s7645 + $0x98] sm:$0x1] %v7735
        %v7737 = vld [vmem:[%s7645 + $0x9c] sm:$0xf]
        %v7738 = vsel %vm1083, %v7557, %v7737
        %7739 = vst [vmem:[%s7645 + $0x9c] sm:$0xf] %v7738
        %7740 = vst [vmem:[%s7645 + $0xa0] sm:$0xf] %v7565
        %v7741 = vld [vmem:[%s7645 + $0xa4] sm:$0x1]
        %v7742 = vsel %vm706, %v7566, %v7741
        %7743 = vst [vmem:[%s7645 + $0xa4] sm:$0x1] %v7742
        %v7744 = vld [vmem:[%s7645 + $0xa8] sm:$0xf]
        %v7745 = vsel %vm1083, %v7572, %v7744
        %7746 = vst [vmem:[%s7645 + $0xa8] sm:$0xf] %v7745
        %7747 = vst [vmem:[%s7645 + $0xac] sm:$0xf] %v7580
        %v7748 = vld [vmem:[%s7645 + $0xb0] sm:$0x1]
        %v7749 = vsel %vm706, %v7581, %v7748
        %7750 = vst [vmem:[%s7645 + $0xb0] sm:$0x1] %v7749
        %v7751 = vld [vmem:[%s7645 + $0xb4] sm:$0xf]
        %v7752 = vsel %vm1083, %v7587, %v7751
        %7753 = vst [vmem:[%s7645 + $0xb4] sm:$0xf] %v7752
        %7754 = vst [vmem:[%s7645 + $0xb8] sm:$0xf] %v7595
        %v7755 = vld [vmem:[%s7645 + $0xbc] sm:$0x1]
        %v7756 = vsel %vm706, %v7596, %v7755
        %7757 = vst [vmem:[%s7645 + $0xbc] sm:$0x1] %v7756
        %v7758 = vld [vmem:[#allocation5] sm:$0xf]
        %v7759 = vld [vmem:[#allocation5 + $0x4] sm:$0xf]
        %v7760 = vld [vmem:[#allocation5 + $0xc] sm:$0xf]
        %v7761 = vld [vmem:[#allocation5 + $0x10] sm:$0xf]
        %v7762 = vld [vmem:[#allocation5 + $0x18] sm:$0xf]
        %v7763 = vld [vmem:[#allocation5 + $0x1c] sm:$0xf]
        %v7764 = vld [vmem:[#allocation5 + $0x24] sm:$0xf]
        %v7765 = vld [vmem:[#allocation5 + $0x28] sm:$0xf]
        %v7766 = vld [vmem:[#allocation5 + $0x30] sm:$0xf]
        %v7767 = vld [vmem:[#allocation5 + $0x34] sm:$0xf]
        %v7768 = vld [vmem:[#allocation5 + $0x3c] sm:$0xf]
        %v7769 = vld [vmem:[#allocation5 + $0x40] sm:$0xf]
        %v7770 = vld [vmem:[#allocation5 + $0x48] sm:$0xf]
        %v7771 = vld [vmem:[#allocation5 + $0x4c] sm:$0xf]
        %v7772 = vld [vmem:[#allocation5 + $0x54] sm:$0xf]
        %v7773 = vld [vmem:[#allocation5 + $0x58] sm:$0xf]
        %v7774 = vld [vmem:[#allocation5 + $0x60] sm:$0xf]
        %v7775 = vld [vmem:[#allocation5 + $0x64] sm:$0xf]
        %v7776 = vld [vmem:[#allocation5 + $0x6c] sm:$0xf]
        %v7777 = vld [vmem:[#allocation5 + $0x70] sm:$0xf]
        %v7778 = vld [vmem:[#allocation5 + $0x78] sm:$0xf]
        %v7779 = vld [vmem:[#allocation5 + $0x7c] sm:$0xf]
        %v7780 = vld [vmem:[#allocation5 + $0x84] sm:$0xf]
        %v7781 = vld [vmem:[#allocation5 + $0x88] sm:$0xf]
        %v7782 = vld [vmem:[#allocation5 + $0x90] sm:$0xf]
        %v7783 = vld [vmem:[#allocation5 + $0x94] sm:$0xf]
        %v7784 = vld [vmem:[#allocation5 + $0x9c] sm:$0xf]
        %v7785 = vld [vmem:[#allocation5 + $0xa0] sm:$0xf]
        %v7786 = vld [vmem:[#allocation5 + $0xa8] sm:$0xf]
        %v7787 = vld [vmem:[#allocation5 + $0xac] sm:$0xf]
        %v7788 = vld [vmem:[#allocation5 + $0xb4] sm:$0xf]
        %v7789 = vld [vmem:[#allocation5 + $0xb8] sm:$0xf]
        %v7790 = vld [vmem:[#allocation20] sm:$0xf]
        %v7791 = vld [vmem:[#allocation20 + $0x4] sm:$0xf]
        %v7792 = vld [vmem:[#allocation20 + $0x8] sm:$0xf]
        %v7793 = vld [vmem:[#allocation20 + $0xc] sm:$0xf]
        %v7794 = vld [vmem:[#allocation20 + $0x10] sm:$0xf]
        %v7795 = vld [vmem:[#allocation20 + $0x14] sm:$0xf]
        %v7796 = vld [vmem:[#allocation20 + $0x18] sm:$0xf]
        %v7797 = vld [vmem:[#allocation20 + $0x1c] sm:$0xf]
        %v7798 = vld [vmem:[#allocation20 + $0x20] sm:$0xf]
        %v7799 = vld [vmem:[#allocation20 + $0x24] sm:$0xf]
        %v7800 = vld [vmem:[#allocation20 + $0x28] sm:$0xf]
        %v7801 = vld [vmem:[#allocation20 + $0x2c] sm:$0xf]
        %v7802 = vld [vmem:[#allocation20 + $0x30] sm:$0xf]
        %v7803 = vld [vmem:[#allocation20 + $0x34] sm:$0xf]
        %v7804 = vld [vmem:[#allocation20 + $0x38] sm:$0xf]
        %v7805 = vld [vmem:[#allocation20 + $0x3c] sm:$0xf]
        %v7806 = vld [vmem:[#allocation5 + $0x8] sm:$0x1]
        %v7807 = vld [vmem:[#allocation5 + $0x14] sm:$0x1]
        %v7808 = vld [vmem:[#allocation5 + $0x20] sm:$0x1]
        %v7809 = vld [vmem:[#allocation5 + $0x2c] sm:$0x1]
        %v7810 = vld [vmem:[#allocation5 + $0x38] sm:$0x1]
        %v7811 = vld [vmem:[#allocation5 + $0x44] sm:$0x1]
        %v7812 = vld [vmem:[#allocation5 + $0x50] sm:$0x1]
        %v7813 = vld [vmem:[#allocation5 + $0x5c] sm:$0x1]
        %v7814 = vld [vmem:[#allocation5 + $0x68] sm:$0x1]
        %v7815 = vld [vmem:[#allocation5 + $0x74] sm:$0x1]
        %v7816 = vld [vmem:[#allocation5 + $0x80] sm:$0x1]
        %v7817 = vld [vmem:[#allocation5 + $0x8c] sm:$0x1]
        %v7818 = vld [vmem:[#allocation5 + $0x98] sm:$0x1]
        %v7819 = vld [vmem:[#allocation5 + $0xa4] sm:$0x1]
        %v7820 = vld [vmem:[#allocation5 + $0xb0] sm:$0x1]
        %v7821 = vld [vmem:[#allocation5 + $0xbc] sm:$0x1]
        %v7823 = vshrl.u32 %v7758, 16
        %v7825 = vrot.slane %v7823, 4
        %v7826 = vshll.u32 %v7758, 16
        %v7828 = vrot.slane %v7826, 5
        %v7829 = vor.u32 %v7825, %v7828
        %v7830 = vrot.slane %v7829, 4
        %v7832 = vshll.u32 %v7759, 16
        %v7834 = vrot.slane %v7832, 5
        %v7835 = vsel %vm1166, %v7830, %v7834
        %v7836 = vshrl.u32 %v7759, 16
        %v7838 = vrot.slane %v7836, 4
        %v7839 = vor.u32 %v7838, %v7834
        %v7840 = vrot.slane %v7839, 4
        %v7842 = vshll.u32 %v7806, 16
        %v7844 = vrot.slane %v7842, 5
        %v7845 = vsel %vm1166, %v7840, %v7844
        %v7847 = vshrl.u32 %v7760, 16
        %v7849 = vrot.slane %v7847, 4
        %v7850 = vshll.u32 %v7760, 16
        %v7852 = vrot.slane %v7850, 5
        %v7853 = vor.u32 %v7849, %v7852
        %v7854 = vrot.slane %v7853, 4
        %v7856 = vshll.u32 %v7761, 16
        %v7858 = vrot.slane %v7856, 5
        %v7859 = vsel %vm1166, %v7854, %v7858
        %v7860 = vshrl.u32 %v7761, 16
        %v7862 = vrot.slane %v7860, 4
        %v7863 = vor.u32 %v7862, %v7858
        %v7864 = vrot.slane %v7863, 4
        %v7866 = vshll.u32 %v7807, 16
        %v7868 = vrot.slane %v7866, 5
        %v7869 = vsel %vm1166, %v7864, %v7868
        %v7871 = vshrl.u32 %v7762, 16
        %v7873 = vrot.slane %v7871, 4
        %v7874 = vshll.u32 %v7762, 16
        %v7876 = vrot.slane %v7874, 5
        %v7877 = vor.u32 %v7873, %v7876
        %v7878 = vrot.slane %v7877, 4
        %v7880 = vshll.u32 %v7763, 16
        %v7882 = vrot.slane %v7880, 5
        %v7883 = vsel %vm1166, %v7878, %v7882
        %v7884 = vshrl.u32 %v7763, 16
        %v7886 = vrot.slane %v7884, 4
        %v7887 = vor.u32 %v7886, %v7882
        %v7888 = vrot.slane %v7887, 4
        %v7890 = vshll.u32 %v7808, 16
        %v7892 = vrot.slane %v7890, 5
        %v7893 = vsel %vm1166, %v7888, %v7892
        %v7895 = vshrl.u32 %v7764, 16
        %v7897 = vrot.slane %v7895, 4
        %v7898 = vshll.u32 %v7764, 16
        %v7900 = vrot.slane %v7898, 5
        %v7901 = vor.u32 %v7897, %v7900
        %v7902 = vrot.slane %v7901, 4
        %v7904 = vshll.u32 %v7765, 16
        %v7906 = vrot.slane %v7904, 5
        %v7907 = vsel %vm1166, %v7902, %v7906
        %v7908 = vshrl.u32 %v7765, 16
        %v7910 = vrot.slane %v7908, 4
        %v7911 = vor.u32 %v7910, %v7906
        %v7912 = vrot.slane %v7911, 4
        %v7914 = vshll.u32 %v7809, 16
        %v7916 = vrot.slane %v7914, 5
        %v7917 = vsel %vm1166, %v7912, %v7916
        %v7919 = vshrl.u32 %v7766, 16
        %v7921 = vrot.slane %v7919, 4
        %v7922 = vshll.u32 %v7766, 16
        %v7924 = vrot.slane %v7922, 5
        %v7925 = vor.u32 %v7921, %v7924
        %v7926 = vrot.slane %v7925, 4
        %v7928 = vshll.u32 %v7767, 16
        %v7930 = vrot.slane %v7928, 5
        %v7931 = vsel %vm1166, %v7926, %v7930
        %v7932 = vshrl.u32 %v7767, 16
        %v7934 = vrot.slane %v7932, 4
        %v7935 = vor.u32 %v7934, %v7930
        %v7936 = vrot.slane %v7935, 4
        %v7938 = vshll.u32 %v7810, 16
        %v7940 = vrot.slane %v7938, 5
        %v7941 = vsel %vm1166, %v7936, %v7940
        %v7943 = vshrl.u32 %v7768, 16
        %v7945 = vrot.slane %v7943, 4
        %v7946 = vshll.u32 %v7768, 16
        %v7948 = vrot.slane %v7946, 5
        %v7949 = vor.u32 %v7945, %v7948
        %v7950 = vrot.slane %v7949, 4
        %v7952 = vshll.u32 %v7769, 16
        %v7954 = vrot.slane %v7952, 5
        %v7955 = vsel %vm1166, %v7950, %v7954
        %v7956 = vshrl.u32 %v7769, 16
        %v7958 = vrot.slane %v7956, 4
        %v7959 = vor.u32 %v7958, %v7954
        %v7960 = vrot.slane %v7959, 4
        %v7962 = vshll.u32 %v7811, 16
        %v7964 = vrot.slane %v7962, 5
        %v7965 = vsel %vm1166, %v7960, %v7964
        %v7967 = vshrl.u32 %v7770, 16
        %v7969 = vrot.slane %v7967, 4
        %v7970 = vshll.u32 %v7770, 16
        %v7972 = vrot.slane %v7970, 5
        %v7973 = vor.u32 %v7969, %v7972
        %v7974 = vrot.slane %v7973, 4
        %v7976 = vshll.u32 %v7771, 16
        %v7978 = vrot.slane %v7976, 5
        %v7979 = vsel %vm1166, %v7974, %v7978
        %v7980 = vshrl.u32 %v7771, 16
        %v7982 = vrot.slane %v7980, 4
        %v7983 = vor.u32 %v7982, %v7978
        %v7984 = vrot.slane %v7983, 4
        %v7986 = vshll.u32 %v7812, 16
        %v7988 = vrot.slane %v7986, 5
        %v7989 = vsel %vm1166, %v7984, %v7988
        %v7991 = vshrl.u32 %v7772, 16
        %v7993 = vrot.slane %v7991, 4
        %v7994 = vshll.u32 %v7772, 16
        %v7996 = vrot.slane %v7994, 5
        %v7997 = vor.u32 %v7993, %v7996
        %v7998 = vrot.slane %v7997, 4
        %v8000 = vshll.u32 %v7773, 16
        %v8002 = vrot.slane %v8000, 5
        %v8003 = vsel %vm1166, %v7998, %v8002
        %v8004 = vshrl.u32 %v7773, 16
        %v8006 = vrot.slane %v8004, 4
        %v8007 = vor.u32 %v8006, %v8002
        %v8008 = vrot.slane %v8007, 4
        %v8010 = vshll.u32 %v7813, 16
        %v8012 = vrot.slane %v8010, 5
        %v8013 = vsel %vm1166, %v8008, %v8012
        %v8015 = vshrl.u32 %v7774, 16
        %v8017 = vrot.slane %v8015, 4
        %v8018 = vshll.u32 %v7774, 16
        %v8020 = vrot.slane %v8018, 5
        %v8021 = vor.u32 %v8017, %v8020
        %v8022 = vrot.slane %v8021, 4
        %v8024 = vshll.u32 %v7775, 16
        %v8026 = vrot.slane %v8024, 5
        %v8027 = vsel %vm1166, %v8022, %v8026
        %v8028 = vshrl.u32 %v7775, 16
        %v8030 = vrot.slane %v8028, 4
        %v8031 = vor.u32 %v8030, %v8026
        %v8032 = vrot.slane %v8031, 4
        %v8034 = vshll.u32 %v7814, 16
        %v8036 = vrot.slane %v8034, 5
        %v8037 = vsel %vm1166, %v8032, %v8036
        %v8039 = vshrl.u32 %v7776, 16
        %v8041 = vrot.slane %v8039, 4
        %v8042 = vshll.u32 %v7776, 16
        %v8044 = vrot.slane %v8042, 5
        %v8045 = vor.u32 %v8041, %v8044
        %v8046 = vrot.slane %v8045, 4
        %v8048 = vshll.u32 %v7777, 16
        %v8050 = vrot.slane %v8048, 5
        %v8051 = vsel %vm1166, %v8046, %v8050
        %v8052 = vshrl.u32 %v7777, 16
        %v8054 = vrot.slane %v8052, 4
        %v8055 = vor.u32 %v8054, %v8050
        %v8056 = vrot.slane %v8055, 4
        %v8058 = vshll.u32 %v7815, 16
        %v8060 = vrot.slane %v8058, 5
        %v8061 = vsel %vm1166, %v8056, %v8060
        %v8063 = vshrl.u32 %v7778, 16
        %v8065 = vrot.slane %v8063, 4
        %v8066 = vshll.u32 %v7778, 16
        %v8068 = vrot.slane %v8066, 5
        %v8069 = vor.u32 %v8065, %v8068
        %v8070 = vrot.slane %v8069, 4
        %v8072 = vshll.u32 %v7779, 16
        %v8074 = vrot.slane %v8072, 5
        %v8075 = vsel %vm1166, %v8070, %v8074
        %v8076 = vshrl.u32 %v7779, 16
        %v8078 = vrot.slane %v8076, 4
        %v8079 = vor.u32 %v8078, %v8074
        %v8080 = vrot.slane %v8079, 4
        %v8082 = vshll.u32 %v7816, 16
        %v8084 = vrot.slane %v8082, 5
        %v8085 = vsel %vm1166, %v8080, %v8084
        %v8087 = vshrl.u32 %v7780, 16
        %v8089 = vrot.slane %v8087, 4
        %v8090 = vshll.u32 %v7780, 16
        %v8092 = vrot.slane %v8090, 5
        %v8093 = vor.u32 %v8089, %v8092
        %v8094 = vrot.slane %v8093, 4
        %v8096 = vshll.u32 %v7781, 16
        %v8098 = vrot.slane %v8096, 5
        %v8099 = vsel %vm1166, %v8094, %v8098
        %v8100 = vshrl.u32 %v7781, 16
        %v8102 = vrot.slane %v8100, 4
        %v8103 = vor.u32 %v8102, %v8098
        %v8104 = vrot.slane %v8103, 4
        %v8106 = vshll.u32 %v7817, 16
        %v8108 = vrot.slane %v8106, 5
        %v8109 = vsel %vm1166, %v8104, %v8108
        %v8111 = vshrl.u32 %v7782, 16
        %v8113 = vrot.slane %v8111, 4
        %v8114 = vshll.u32 %v7782, 16
        %v8116 = vrot.slane %v8114, 5
        %v8117 = vor.u32 %v8113, %v8116
        %v8118 = vrot.slane %v8117, 4
        %v8120 = vshll.u32 %v7783, 16
        %v8122 = vrot.slane %v8120, 5
        %v8123 = vsel %vm1166, %v8118, %v8122
        %v8124 = vshrl.u32 %v7783, 16
        %v8126 = vrot.slane %v8124, 4
        %v8127 = vor.u32 %v8126, %v8122
        %v8128 = vrot.slane %v8127, 4
        %v8130 = vshll.u32 %v7818, 16
        %v8132 = vrot.slane %v8130, 5
        %v8133 = vsel %vm1166, %v8128, %v8132
        %v8135 = vshrl.u32 %v7784, 16
        %v8137 = vrot.slane %v8135, 4
        %v8138 = vshll.u32 %v7784, 16
        %v8140 = vrot.slane %v8138, 5
        %v8141 = vor.u32 %v8137, %v8140
        %v8142 = vrot.slane %v8141, 4
        %v8144 = vshll.u32 %v7785, 16
        %v8146 = vrot.slane %v8144, 5
        %v8147 = vsel %vm1166, %v8142, %v8146
        %v8148 = vshrl.u32 %v7785, 16
        %v8150 = vrot.slane %v8148, 4
        %v8151 = vor.u32 %v8150, %v8146
        %v8152 = vrot.slane %v8151, 4
        %v8154 = vshll.u32 %v7819, 16
        %v8156 = vrot.slane %v8154, 5
        %v8157 = vsel %vm1166, %v8152, %v8156
        %v8159 = vshrl.u32 %v7786, 16
        %v8161 = vrot.slane %v8159, 4
        %v8162 = vshll.u32 %v7786, 16
        %v8164 = vrot.slane %v8162, 5
        %v8165 = vor.u32 %v8161, %v8164
        %v8166 = vrot.slane %v8165, 4
        %v8168 = vshll.u32 %v7787, 16
        %v8170 = vrot.slane %v8168, 5
        %v8171 = vsel %vm1166, %v8166, %v8170
        %v8172 = vshrl.u32 %v7787, 16
        %v8174 = vrot.slane %v8172, 4
        %v8175 = vor.u32 %v8174, %v8170
        %v8176 = vrot.slane %v8175, 4
        %v8178 = vshll.u32 %v7820, 16
        %v8180 = vrot.slane %v8178, 5
        %v8181 = vsel %vm1166, %v8176, %v8180
        %v8183 = vshrl.u32 %v7788, 16
        %v8185 = vrot.slane %v8183, 4
        %v8186 = vshll.u32 %v7788, 16
        %v8188 = vrot.slane %v8186, 5
        %v8189 = vor.u32 %v8185, %v8188
        %v8190 = vrot.slane %v8189, 4
        %v8192 = vshll.u32 %v7789, 16
        %v8194 = vrot.slane %v8192, 5
        %v8195 = vsel %vm1166, %v8190, %v8194
        %v8196 = vshrl.u32 %v7789, 16
        %v8198 = vrot.slane %v8196, 4
        %v8199 = vor.u32 %v8198, %v8194
        %v8200 = vrot.slane %v8199, 4
        %v8202 = vshll.u32 %v7821, 16
        %v8204 = vrot.slane %v8202, 5
        %v8205 = vsel %vm1166, %v8200, %v8204
        %s8206 = scalar_lea.vmem [#allocation20], 64
        %v8207 = vld [vmem:[%s8206] sm:$0xf]
        %v8208 = vld [vmem:[%s8206 + $0x4] sm:$0xf]
        %v8209 = vld [vmem:[%s8206 + $0x8] sm:$0xf]
        %v8210 = vld [vmem:[%s8206 + $0xc] sm:$0xf]
        %v8211 = vld [vmem:[%s8206 + $0x10] sm:$0xf]
        %v8212 = vld [vmem:[%s8206 + $0x14] sm:$0xf]
        %v8213 = vld [vmem:[%s8206 + $0x18] sm:$0xf]
        %v8214 = vld [vmem:[%s8206 + $0x1c] sm:$0xf]
        %v8215 = vld [vmem:[%s8206 + $0x20] sm:$0xf]
        %v8216 = vld [vmem:[%s8206 + $0x24] sm:$0xf]
        %v8217 = vld [vmem:[%s8206 + $0x28] sm:$0xf]
        %v8218 = vld [vmem:[%s8206 + $0x2c] sm:$0xf]
        %v8219 = vld [vmem:[%s8206 + $0x30] sm:$0xf]
        %v8220 = vld [vmem:[%s8206 + $0x34] sm:$0xf]
        %v8221 = vld [vmem:[%s8206 + $0x38] sm:$0xf]
        %v8222 = vld [vmem:[%s8206 + $0x3c] sm:$0xf]
        %v8223 = vunpack.c.l.b16 %v7835
        %v8224 = vunpack.c.l.b16 %v7845
        %v8225 = vunpack.c.l.b16 %v7859
        %v8226 = vunpack.c.l.b16 %v7869
        %v8227 = vunpack.c.l.b16 %v7883
        %v8228 = vunpack.c.l.b16 %v7893
        %v8229 = vunpack.c.l.b16 %v7907
        %v8230 = vunpack.c.l.b16 %v7917
        %v8231 = vunpack.c.l.b16 %v7931
        %v8232 = vunpack.c.l.b16 %v7941
        %v8233 = vunpack.c.l.b16 %v7955
        %v8234 = vunpack.c.l.b16 %v7965
        %v8235 = vunpack.c.l.b16 %v7979
        %v8236 = vunpack.c.l.b16 %v7989
        %v8237 = vunpack.c.l.b16 %v8003
        %v8238 = vunpack.c.l.b16 %v8013
        %v8239 = vunpack.c.l.b16 %v8027
        %v8240 = vunpack.c.l.b16 %v8037
        %v8241 = vunpack.c.l.b16 %v8051
        %v8242 = vunpack.c.l.b16 %v8061
        %v8243 = vunpack.c.l.b16 %v8075
        %v8244 = vunpack.c.l.b16 %v8085
        %v8245 = vunpack.c.l.b16 %v8099
        %v8246 = vunpack.c.l.b16 %v8109
        %v8247 = vunpack.c.l.b16 %v8123
        %v8248 = vunpack.c.l.b16 %v8133
        %v8249 = vunpack.c.l.b16 %v8147
        %v8250 = vunpack.c.l.b16 %v8157
        %v8251 = vunpack.c.l.b16 %v8171
        %v8252 = vunpack.c.l.b16 %v8181
        %v8253 = vunpack.c.l.b16 %v8195
        %v8254 = vunpack.c.l.b16 %v8205
        %v8255 = vpack.c.b16 %v8224, %v8223
        %v8256 = vpack.c.b16 %v8226, %v8225
        %v8257 = vpack.c.b16 %v8228, %v8227
        %v8258 = vpack.c.b16 %v8230, %v8229
        %v8259 = vpack.c.b16 %v8232, %v8231
        %v8260 = vpack.c.b16 %v8234, %v8233
        %v8261 = vpack.c.b16 %v8236, %v8235
        %v8262 = vpack.c.b16 %v8238, %v8237
        %v8263 = vpack.c.b16 %v8240, %v8239
        %v8264 = vpack.c.b16 %v8242, %v8241
        %v8265 = vpack.c.b16 %v8244, %v8243
        %v8266 = vpack.c.b16 %v8246, %v8245
        %v8267 = vpack.c.b16 %v8248, %v8247
        %v8268 = vpack.c.b16 %v8250, %v8249
        %v8269 = vpack.c.b16 %v8252, %v8251
        %v8270 = vpack.c.b16 %v8254, %v8253
        %v8303 = vunpack.c.l.b16 %v8207
        %v8304 = vunpack.c.l.b16 %v8208
        %v8305 = vunpack.c.l.b16 %v8209
        %v8306 = vunpack.c.l.b16 %v8210
        %v8307 = vunpack.c.l.b16 %v8211
        %v8308 = vunpack.c.l.b16 %v8212
        %v8309 = vunpack.c.l.b16 %v8213
        %v8310 = vunpack.c.l.b16 %v8214
        %v8311 = vunpack.c.l.b16 %v8215
        %v8312 = vunpack.c.l.b16 %v8216
        %v8313 = vunpack.c.l.b16 %v8217
        %v8314 = vunpack.c.l.b16 %v8218
        %v8315 = vunpack.c.l.b16 %v8219
        %v8316 = vunpack.c.l.b16 %v8220
        %v8317 = vunpack.c.l.b16 %v8221
        %v8318 = vunpack.c.l.b16 %v8222
        %v8319 = vpack.c.b16 %v8304, %v8303
        %v8320 = vpack.c.b16 %v8306, %v8305
        %v8321 = vpack.c.b16 %v8308, %v8307
        %v8322 = vpack.c.b16 %v8310, %v8309
        %v8323 = vpack.c.b16 %v8312, %v8311
        %v8324 = vpack.c.b16 %v8314, %v8313
        %v8325 = vpack.c.b16 %v8316, %v8315
        %v8326 = vpack.c.b16 %v8318, %v8317
        %8335 = vmatpush.bf16.msra.mxu0 %v8326
        %8336 = vmatpush.bf16.msra.mxu0 %v8325
        %8337 = vmatpush.bf16.msra.mxu0 %v8324
        %8338 = vmatpush.bf16.msra.mxu0 %v8323
        %8339 = vmatpush.bf16.msra.mxu0 %v8322
        %8340 = vmatpush.bf16.msra.mxu0 %v8321
        %8341 = vmatpush.bf16.msra.mxu0 %v8320
        %8342 = vmatpush.bf16.msra.mxu0 %v8319
        %8343 = vmatmul.bf16.gmra.mxu0 %v8255
        %v8344 = vpop.f32.mrf.mxu0
        %v8345 = vadd.f32 0.0, %v8344
        %v8346 = vpop.f32.mrf.mxu0
        %v8347 = vadd.f32 0.0, %v8346
        %8348 = vmatmul.bf16.gmra.mxu0 %v8256
        %v8349 = vpop.f32.mrf.mxu0
        %v8350 = vadd.f32 0.0, %v8349
        %v8351 = vpop.f32.mrf.mxu0
        %v8352 = vadd.f32 0.0, %v8351
        %8353 = vmatmul.bf16.gmra.mxu0 %v8257
        %v8354 = vpop.f32.mrf.mxu0
        %v8355 = vadd.f32 0.0, %v8354
        %v8356 = vpop.f32.mrf.mxu0
        %v8357 = vadd.f32 0.0, %v8356
        %8358 = vmatmul.bf16.gmra.mxu0 %v8258
        %v8359 = vpop.f32.mrf.mxu0
        %v8360 = vadd.f32 0.0, %v8359
        %v8361 = vpop.f32.mrf.mxu0
        %v8362 = vadd.f32 0.0, %v8361
        %8363 = vmatmul.bf16.gmra.mxu0 %v8259
        %v8364 = vpop.f32.mrf.mxu0
        %v8365 = vadd.f32 0.0, %v8364
        %v8366 = vpop.f32.mrf.mxu0
        %v8367 = vadd.f32 0.0, %v8366
        %8368 = vmatmul.bf16.gmra.mxu0 %v8260
        %v8369 = vpop.f32.mrf.mxu0
        %v8370 = vadd.f32 0.0, %v8369
        %v8371 = vpop.f32.mrf.mxu0
        %v8372 = vadd.f32 0.0, %v8371
        %8373 = vmatmul.bf16.gmra.mxu0 %v8261
        %v8374 = vpop.f32.mrf.mxu0
        %v8375 = vadd.f32 0.0, %v8374
        %v8376 = vpop.f32.mrf.mxu0
        %v8377 = vadd.f32 0.0, %v8376
        %8378 = vmatmul.bf16.gmra.mxu0 %v8262
        %v8379 = vpop.f32.mrf.mxu0
        %v8380 = vadd.f32 0.0, %v8379
        %v8381 = vpop.f32.mrf.mxu0
        %v8382 = vadd.f32 0.0, %v8381
        %8383 = vmatmul.bf16.gmra.mxu0 %v8263
        %v8384 = vpop.f32.mrf.mxu0
        %v8385 = vadd.f32 0.0, %v8384
        %v8386 = vpop.f32.mrf.mxu0
        %v8387 = vadd.f32 0.0, %v8386
        %8388 = vmatmul.bf16.gmra.mxu0 %v8264
        %v8389 = vpop.f32.mrf.mxu0
        %v8390 = vadd.f32 0.0, %v8389
        %v8391 = vpop.f32.mrf.mxu0
        %v8392 = vadd.f32 0.0, %v8391
        %8393 = vmatmul.bf16.gmra.mxu0 %v8265
        %v8394 = vpop.f32.mrf.mxu0
        %v8395 = vadd.f32 0.0, %v8394
        %v8396 = vpop.f32.mrf.mxu0
        %v8397 = vadd.f32 0.0, %v8396
        %8398 = vmatmul.bf16.gmra.mxu0 %v8266
        %v8399 = vpop.f32.mrf.mxu0
        %v8400 = vadd.f32 0.0, %v8399
        %v8401 = vpop.f32.mrf.mxu0
        %v8402 = vadd.f32 0.0, %v8401
        %8403 = vmatmul.bf16.gmra.mxu0 %v8267
        %v8404 = vpop.f32.mrf.mxu0
        %v8405 = vadd.f32 0.0, %v8404
        %v8406 = vpop.f32.mrf.mxu0
        %v8407 = vadd.f32 0.0, %v8406
        %8408 = vmatmul.bf16.gmra.mxu0 %v8268
        %v8409 = vpop.f32.mrf.mxu0
        %v8410 = vadd.f32 0.0, %v8409
        %v8411 = vpop.f32.mrf.mxu0
        %v8412 = vadd.f32 0.0, %v8411
        %8413 = vmatmul.bf16.gmra.mxu0 %v8269
        %v8414 = vpop.f32.mrf.mxu0
        %v8415 = vadd.f32 0.0, %v8414
        %v8416 = vpop.f32.mrf.mxu0
        %v8417 = vadd.f32 0.0, %v8416
        %8418 = vmatmul.bf16.gmra.mxu0 %v8270
        %v8419 = vpop.f32.mrf.mxu0
        %v8420 = vadd.f32 0.0, %v8419
        %v8421 = vpop.f32.mrf.mxu0
        %v8422 = vadd.f32 0.0, %v8421
        %8423 = vdwg.mxu0
        %v8456 = vunpack.c.l.b16 %v7758
        %v8457 = vunpack.c.l.b16 %v7759
        %v8458 = vunpack.c.l.b16 %v7760
        %v8459 = vunpack.c.l.b16 %v7761
        %v8460 = vunpack.c.l.b16 %v7762
        %v8461 = vunpack.c.l.b16 %v7763
        %v8462 = vunpack.c.l.b16 %v7764
        %v8463 = vunpack.c.l.b16 %v7765
        %v8464 = vunpack.c.l.b16 %v7766
        %v8465 = vunpack.c.l.b16 %v7767
        %v8466 = vunpack.c.l.b16 %v7768
        %v8467 = vunpack.c.l.b16 %v7769
        %v8468 = vunpack.c.l.b16 %v7770
        %v8469 = vunpack.c.l.b16 %v7771
        %v8470 = vunpack.c.l.b16 %v7772
        %v8471 = vunpack.c.l.b16 %v7773
        %v8472 = vunpack.c.l.b16 %v7774
        %v8473 = vunpack.c.l.b16 %v7775
        %v8474 = vunpack.c.l.b16 %v7776
        %v8475 = vunpack.c.l.b16 %v7777
        %v8476 = vunpack.c.l.b16 %v7778
        %v8477 = vunpack.c.l.b16 %v7779
        %v8478 = vunpack.c.l.b16 %v7780
        %v8479 = vunpack.c.l.b16 %v7781
        %v8480 = vunpack.c.l.b16 %v7782
        %v8481 = vunpack.c.l.b16 %v7783
        %v8482 = vunpack.c.l.b16 %v7784
        %v8483 = vunpack.c.l.b16 %v7785
        %v8484 = vunpack.c.l.b16 %v7786
        %v8485 = vunpack.c.l.b16 %v7787
        %v8486 = vunpack.c.l.b16 %v7788
        %v8487 = vunpack.c.l.b16 %v7789
        %v8488 = vpack.c.b16 %v8457, %v8456
        %v8489 = vpack.c.b16 %v8459, %v8458
        %v8490 = vpack.c.b16 %v8461, %v8460
        %v8491 = vpack.c.b16 %v8463, %v8462
        %v8492 = vpack.c.b16 %v8465, %v8464
        %v8493 = vpack.c.b16 %v8467, %v8466
        %v8494 = vpack.c.b16 %v8469, %v8468
        %v8495 = vpack.c.b16 %v8471, %v8470
        %v8496 = vpack.c.b16 %v8473, %v8472
        %v8497 = vpack.c.b16 %v8475, %v8474
        %v8498 = vpack.c.b16 %v8477, %v8476
        %v8499 = vpack.c.b16 %v8479, %v8478
        %v8500 = vpack.c.b16 %v8481, %v8480
        %v8501 = vpack.c.b16 %v8483, %v8482
        %v8502 = vpack.c.b16 %v8485, %v8484
        %v8503 = vpack.c.b16 %v8487, %v8486
        %v8536 = vunpack.c.l.b16 %v7790
        %v8537 = vunpack.c.l.b16 %v7791
        %v8538 = vunpack.c.l.b16 %v7792
        %v8539 = vunpack.c.l.b16 %v7793
        %v8540 = vunpack.c.l.b16 %v7794
        %v8541 = vunpack.c.l.b16 %v7795
        %v8542 = vunpack.c.l.b16 %v7796
        %v8543 = vunpack.c.l.b16 %v7797
        %v8544 = vunpack.c.l.b16 %v7798
        %v8545 = vunpack.c.l.b16 %v7799
        %v8546 = vunpack.c.l.b16 %v7800
        %v8547 = vunpack.c.l.b16 %v7801
        %v8548 = vunpack.c.l.b16 %v7802
        %v8549 = vunpack.c.l.b16 %v7803
        %v8550 = vunpack.c.l.b16 %v7804
        %v8551 = vunpack.c.l.b16 %v7805
        %v8552 = vpack.c.b16 %v8537, %v8536
        %v8553 = vpack.c.b16 %v8539, %v8538
        %v8554 = vpack.c.b16 %v8541, %v8540
        %v8555 = vpack.c.b16 %v8543, %v8542
        %v8556 = vpack.c.b16 %v8545, %v8544
        %v8557 = vpack.c.b16 %v8547, %v8546
        %v8558 = vpack.c.b16 %v8549, %v8548
        %v8559 = vpack.c.b16 %v8551, %v8550
        %8568 = vmatpush.bf16.msra.mxu0 %v8559
        %8569 = vmatpush.bf16.msra.mxu0 %v8558
        %8570 = vmatpush.bf16.msra.mxu0 %v8557
        %8571 = vmatpush.bf16.msra.mxu0 %v8556
        %8572 = vmatpush.bf16.msra.mxu0 %v8555
        %8573 = vmatpush.bf16.msra.mxu0 %v8554
        %8574 = vmatpush.bf16.msra.mxu0 %v8553
        %8575 = vmatpush.bf16.msra.mxu0 %v8552
        %8576 = vmatmul.bf16.gmra.mxu0 %v8488
        %v8577 = vpop.f32.mrf.mxu0
        %v8578 = vadd.f32 %v8345, %v8577
        %v8579 = vpop.f32.mrf.mxu0
        %v8580 = vadd.f32 %v8347, %v8579
        %8581 = vmatmul.bf16.gmra.mxu0 %v8489
        %v8582 = vpop.f32.mrf.mxu0
        %v8583 = vadd.f32 %v8350, %v8582
        %v8584 = vpop.f32.mrf.mxu0
        %v8585 = vadd.f32 %v8352, %v8584
        %8586 = vmatmul.bf16.gmra.mxu0 %v8490
        %v8587 = vpop.f32.mrf.mxu0
        %v8588 = vadd.f32 %v8355, %v8587
        %v8589 = vpop.f32.mrf.mxu0
        %v8590 = vadd.f32 %v8357, %v8589
        %8591 = vmatmul.bf16.gmra.mxu0 %v8491
        %v8592 = vpop.f32.mrf.mxu0
        %v8593 = vadd.f32 %v8360, %v8592
        %v8594 = vpop.f32.mrf.mxu0
        %v8595 = vadd.f32 %v8362, %v8594
        %8596 = vmatmul.bf16.gmra.mxu0 %v8492
        %v8597 = vpop.f32.mrf.mxu0
        %v8598 = vadd.f32 %v8365, %v8597
        %v8599 = vpop.f32.mrf.mxu0
        %v8600 = vadd.f32 %v8367, %v8599
        %8601 = vmatmul.bf16.gmra.mxu0 %v8493
        %v8602 = vpop.f32.mrf.mxu0
        %v8603 = vadd.f32 %v8370, %v8602
        %v8604 = vpop.f32.mrf.mxu0
        %v8605 = vadd.f32 %v8372, %v8604
        %8606 = vmatmul.bf16.gmra.mxu0 %v8494
        %v8607 = vpop.f32.mrf.mxu0
        %v8608 = vadd.f32 %v8375, %v8607
        %v8609 = vpop.f32.mrf.mxu0
        %v8610 = vadd.f32 %v8377, %v8609
        %8611 = vmatmul.bf16.gmra.mxu0 %v8495
        %v8612 = vpop.f32.mrf.mxu0
        %v8613 = vadd.f32 %v8380, %v8612
        %v8614 = vpop.f32.mrf.mxu0
        %v8615 = vadd.f32 %v8382, %v8614
        %8616 = vmatmul.bf16.gmra.mxu0 %v8496
        %v8617 = vpop.f32.mrf.mxu0
        %v8618 = vadd.f32 %v8385, %v8617
        %v8619 = vpop.f32.mrf.mxu0
        %v8620 = vadd.f32 %v8387, %v8619
        %8621 = vmatmul.bf16.gmra.mxu0 %v8497
        %v8622 = vpop.f32.mrf.mxu0
        %v8623 = vadd.f32 %v8390, %v8622
        %v8624 = vpop.f32.mrf.mxu0
        %v8625 = vadd.f32 %v8392, %v8624
        %8626 = vmatmul.bf16.gmra.mxu0 %v8498
        %v8627 = vpop.f32.mrf.mxu0
        %v8628 = vadd.f32 %v8395, %v8627
        %v8629 = vpop.f32.mrf.mxu0
        %v8630 = vadd.f32 %v8397, %v8629
        %8631 = vmatmul.bf16.gmra.mxu0 %v8499
        %v8632 = vpop.f32.mrf.mxu0
        %v8633 = vadd.f32 %v8400, %v8632
        %v8634 = vpop.f32.mrf.mxu0
        %v8635 = vadd.f32 %v8402, %v8634
        %8636 = vmatmul.bf16.gmra.mxu0 %v8500
        %v8637 = vpop.f32.mrf.mxu0
        %v8638 = vadd.f32 %v8405, %v8637
        %v8639 = vpop.f32.mrf.mxu0
        %v8640 = vadd.f32 %v8407, %v8639
        %8641 = vmatmul.bf16.gmra.mxu0 %v8501
        %v8642 = vpop.f32.mrf.mxu0
        %v8643 = vadd.f32 %v8410, %v8642
        %v8644 = vpop.f32.mrf.mxu0
        %v8645 = vadd.f32 %v8412, %v8644
        %8646 = vmatmul.bf16.gmra.mxu0 %v8502
        %v8647 = vpop.f32.mrf.mxu0
        %v8648 = vadd.f32 %v8415, %v8647
        %v8649 = vpop.f32.mrf.mxu0
        %v8650 = vadd.f32 %v8417, %v8649
        %8651 = vmatmul.bf16.gmra.mxu0 %v8503
        %v8652 = vpop.f32.mrf.mxu0
        %v8653 = vadd.f32 %v8420, %v8652
        %v8654 = vpop.f32.mrf.mxu0
        %v8655 = vadd.f32 %v8422, %v8654
        %8656 = vdwg.mxu0
        %v8657 = vld [vmem:[#allocation5] sm:$0xe]
        %v8658 = vld [vmem:[#allocation5 + $0xc] sm:$0xe]
        %v8659 = vld [vmem:[#allocation5 + $0x18] sm:$0xe]
        %v8660 = vld [vmem:[#allocation5 + $0x24] sm:$0xe]
        %v8661 = vld [vmem:[#allocation5 + $0x30] sm:$0xe]
        %v8662 = vld [vmem:[#allocation5 + $0x3c] sm:$0xe]
        %v8663 = vld [vmem:[#allocation5 + $0x48] sm:$0xe]
        %v8664 = vld [vmem:[#allocation5 + $0x54] sm:$0xe]
        %v8665 = vld [vmem:[#allocation5 + $0x60] sm:$0xe]
        %v8666 = vld [vmem:[#allocation5 + $0x6c] sm:$0xe]
        %v8667 = vld [vmem:[#allocation5 + $0x78] sm:$0xe]
        %v8668 = vld [vmem:[#allocation5 + $0x84] sm:$0xe]
        %v8669 = vld [vmem:[#allocation5 + $0x90] sm:$0xe]
        %v8670 = vld [vmem:[#allocation5 + $0x9c] sm:$0xe]
        %v8671 = vld [vmem:[#allocation5 + $0xa8] sm:$0xe]
        %v8672 = vld [vmem:[#allocation5 + $0xb4] sm:$0xe]
        %v8705 = vrot.slane %v8657, 5
        %v8706 = vrot.slane %v8705, 4
        %v8707 = vrot.slane %v7759, 5
        %v8708 = vsel %vm1516, %v8706, %v8707
        %v8709 = vrot.slane %v8707, 4
        %v8710 = vrot.slane %v7806, 5
        %v8711 = vsel %vm1516, %v8709, %v8710
        %v8712 = vrot.slane %v8658, 5
        %v8713 = vrot.slane %v8712, 4
        %v8714 = vrot.slane %v7761, 5
        %v8715 = vsel %vm1516, %v8713, %v8714
        %v8716 = vrot.slane %v8714, 4
        %v8717 = vrot.slane %v7807, 5
        %v8718 = vsel %vm1516, %v8716, %v8717
        %v8719 = vrot.slane %v8659, 5
        %v8720 = vrot.slane %v8719, 4
        %v8721 = vrot.slane %v7763, 5
        %v8722 = vsel %vm1516, %v8720, %v8721
        %v8723 = vrot.slane %v8721, 4
        %v8724 = vrot.slane %v7808, 5
        %v8725 = vsel %vm1516, %v8723, %v8724
        %v8726 = vrot.slane %v8660, 5
        %v8727 = vrot.slane %v8726, 4
        %v8728 = vrot.slane %v7765, 5
        %v8729 = vsel %vm1516, %v8727, %v8728
        %v8730 = vrot.slane %v8728, 4
        %v8731 = vrot.slane %v7809, 5
        %v8732 = vsel %vm1516, %v8730, %v8731
        %v8733 = vrot.slane %v8661, 5
        %v8734 = vrot.slane %v8733, 4
        %v8735 = vrot.slane %v7767, 5
        %v8736 = vsel %vm1516, %v8734, %v8735
        %v8737 = vrot.slane %v8735, 4
        %v8738 = vrot.slane %v7810, 5
        %v8739 = vsel %vm1516, %v8737, %v8738
        %v8740 = vrot.slane %v8662, 5
        %v8741 = vrot.slane %v8740, 4
        %v8742 = vrot.slane %v7769, 5
        %v8743 = vsel %vm1516, %v8741, %v8742
        %v8744 = vrot.slane %v8742, 4
        %v8745 = vrot.slane %v7811, 5
        %v8746 = vsel %vm1516, %v8744, %v8745
        %v8747 = vrot.slane %v8663, 5
        %v8748 = vrot.slane %v8747, 4
        %v8749 = vrot.slane %v7771, 5
        %v8750 = vsel %vm1516, %v8748, %v8749
        %v8751 = vrot.slane %v8749, 4
        %v8752 = vrot.slane %v7812, 5
        %v8753 = vsel %vm1516, %v8751, %v8752
        %v8754 = vrot.slane %v8664, 5
        %v8755 = vrot.slane %v8754, 4
        %v8756 = vrot.slane %v7773, 5
        %v8757 = vsel %vm1516, %v8755, %v8756
        %v8758 = vrot.slane %v8756, 4
        %v8759 = vrot.slane %v7813, 5
        %v8760 = vsel %vm1516, %v8758, %v8759
        %v8761 = vrot.slane %v8665, 5
        %v8762 = vrot.slane %v8761, 4
        %v8763 = vrot.slane %v7775, 5
        %v8764 = vsel %vm1516, %v8762, %v8763
        %v8765 = vrot.slane %v8763, 4
        %v8766 = vrot.slane %v7814, 5
        %v8767 = vsel %vm1516, %v8765, %v8766
        %v8768 = vrot.slane %v8666, 5
        %v8769 = vrot.slane %v8768, 4
        %v8770 = vrot.slane %v7777, 5
        %v8771 = vsel %vm1516, %v8769, %v8770
        %v8772 = vrot.slane %v8770, 4
        %v8773 = vrot.slane %v7815, 5
        %v8774 = vsel %vm1516, %v8772, %v8773
        %v8775 = vrot.slane %v8667, 5
        %v8776 = vrot.slane %v8775, 4
        %v8777 = vrot.slane %v7779, 5
        %v8778 = vsel %vm1516, %v8776, %v8777
        %v8779 = vrot.slane %v8777, 4
        %v8780 = vrot.slane %v7816, 5
        %v8781 = vsel %vm1516, %v8779, %v8780
        %v8782 = vrot.slane %v8668, 5
        %v8783 = vrot.slane %v8782, 4
        %v8784 = vrot.slane %v7781, 5
        %v8785 = vsel %vm1516, %v8783, %v8784
        %v8786 = vrot.slane %v8784, 4
        %v8787 = vrot.slane %v7817, 5
        %v8788 = vsel %vm1516, %v8786, %v8787
        %v8789 = vrot.slane %v8669, 5
        %v8790 = vrot.slane %v8789, 4
        %v8791 = vrot.slane %v7783, 5
        %v8792 = vsel %vm1516, %v8790, %v8791
        %v8793 = vrot.slane %v8791, 4
        %v8794 = vrot.slane %v7818, 5
        %v8795 = vsel %vm1516, %v8793, %v8794
        %v8796 = vrot.slane %v8670, 5
        %v8797 = vrot.slane %v8796, 4
        %v8798 = vrot.slane %v7785, 5
        %v8799 = vsel %vm1516, %v8797, %v8798
        %v8800 = vrot.slane %v8798, 4
        %v8801 = vrot.slane %v7819, 5
        %v8802 = vsel %vm1516, %v8800, %v8801
        %v8803 = vrot.slane %v8671, 5
        %v8804 = vrot.slane %v8803, 4
        %v8805 = vrot.slane %v7787, 5
        %v8806 = vsel %vm1516, %v8804, %v8805
        %v8807 = vrot.slane %v8805, 4
        %v8808 = vrot.slane %v7820, 5
        %v8809 = vsel %vm1516, %v8807, %v8808
        %v8810 = vrot.slane %v8672, 5
        %v8811 = vrot.slane %v8810, 4
        %v8812 = vrot.slane %v7789, 5
        %v8813 = vsel %vm1516, %v8811, %v8812
        %v8814 = vrot.slane %v8812, 4
        %v8815 = vrot.slane %v7821, 5
        %v8816 = vsel %vm1516, %v8814, %v8815
        %s8817 = scalar_lea.vmem [#allocation20], 128
        %v8818 = vld [vmem:[%s8817] sm:$0xf]
        %v8819 = vld [vmem:[%s8817 + $0x4] sm:$0xf]
        %v8820 = vld [vmem:[%s8817 + $0x8] sm:$0xf]
        %v8821 = vld [vmem:[%s8817 + $0xc] sm:$0xf]
        %v8822 = vld [vmem:[%s8817 + $0x10] sm:$0xf]
        %v8823 = vld [vmem:[%s8817 + $0x14] sm:$0xf]
        %v8824 = vld [vmem:[%s8817 + $0x18] sm:$0xf]
        %v8825 = vld [vmem:[%s8817 + $0x1c] sm:$0xf]
        %v8826 = vld [vmem:[%s8817 + $0x20] sm:$0xf]
        %v8827 = vld [vmem:[%s8817 + $0x24] sm:$0xf]
        %v8828 = vld [vmem:[%s8817 + $0x28] sm:$0xf]
        %v8829 = vld [vmem:[%s8817 + $0x2c] sm:$0xf]
        %v8830 = vld [vmem:[%s8817 + $0x30] sm:$0xf]
        %v8831 = vld [vmem:[%s8817 + $0x34] sm:$0xf]
        %v8832 = vld [vmem:[%s8817 + $0x38] sm:$0xf]
        %v8833 = vld [vmem:[%s8817 + $0x3c] sm:$0xf]
        %v8834 = vunpack.c.l.b16 %v8708
        %v8835 = vunpack.c.l.b16 %v8711
        %v8836 = vunpack.c.l.b16 %v8715
        %v8837 = vunpack.c.l.b16 %v8718
        %v8838 = vunpack.c.l.b16 %v8722
        %v8839 = vunpack.c.l.b16 %v8725
        %v8840 = vunpack.c.l.b16 %v8729
        %v8841 = vunpack.c.l.b16 %v8732
        %v8842 = vunpack.c.l.b16 %v8736
        %v8843 = vunpack.c.l.b16 %v8739
        %v8844 = vunpack.c.l.b16 %v8743
        %v8845 = vunpack.c.l.b16 %v8746
        %v8846 = vunpack.c.l.b16 %v8750
        %v8847 = vunpack.c.l.b16 %v8753
        %v8848 = vunpack.c.l.b16 %v8757
        %v8849 = vunpack.c.l.b16 %v8760
        %v8850 = vunpack.c.l.b16 %v8764
        %v8851 = vunpack.c.l.b16 %v8767
        %v8852 = vunpack.c.l.b16 %v8771
        %v8853 = vunpack.c.l.b16 %v8774
        %v8854 = vunpack.c.l.b16 %v8778
        %v8855 = vunpack.c.l.b16 %v8781
        %v8856 = vunpack.c.l.b16 %v8785
        %v8857 = vunpack.c.l.b16 %v8788
        %v8858 = vunpack.c.l.b16 %v8792
        %v8859 = vunpack.c.l.b16 %v8795
        %v8860 = vunpack.c.l.b16 %v8799
        %v8861 = vunpack.c.l.b16 %v8802
        %v8862 = vunpack.c.l.b16 %v8806
        %v8863 = vunpack.c.l.b16 %v8809
        %v8864 = vunpack.c.l.b16 %v8813
        %v8865 = vunpack.c.l.b16 %v8816
        %v8866 = vpack.c.b16 %v8835, %v8834
        %v8867 = vpack.c.b16 %v8837, %v8836
        %v8868 = vpack.c.b16 %v8839, %v8838
        %v8869 = vpack.c.b16 %v8841, %v8840
        %v8870 = vpack.c.b16 %v8843, %v8842
        %v8871 = vpack.c.b16 %v8845, %v8844
        %v8872 = vpack.c.b16 %v8847, %v8846
        %v8873 = vpack.c.b16 %v8849, %v8848
        %v8874 = vpack.c.b16 %v8851, %v8850
        %v8875 = vpack.c.b16 %v8853, %v8852
        %v8876 = vpack.c.b16 %v8855, %v8854
        %v8877 = vpack.c.b16 %v8857, %v8856
        %v8878 = vpack.c.b16 %v8859, %v8858
        %v8879 = vpack.c.b16 %v8861, %v8860
        %v8880 = vpack.c.b16 %v8863, %v8862
        %v8881 = vpack.c.b16 %v8865, %v8864
        %v8914 = vunpack.c.l.b16 %v8818
        %v8915 = vunpack.c.l.b16 %v8819
        %v8916 = vunpack.c.l.b16 %v8820
        %v8917 = vunpack.c.l.b16 %v8821
        %v8918 = vunpack.c.l.b16 %v8822
        %v8919 = vunpack.c.l.b16 %v8823
        %v8920 = vunpack.c.l.b16 %v8824
        %v8921 = vunpack.c.l.b16 %v8825
        %v8922 = vunpack.c.l.b16 %v8826
        %v8923 = vunpack.c.l.b16 %v8827
        %v8924 = vunpack.c.l.b16 %v8828
        %v8925 = vunpack.c.l.b16 %v8829
        %v8926 = vunpack.c.l.b16 %v8830
        %v8927 = vunpack.c.l.b16 %v8831
        %v8928 = vunpack.c.l.b16 %v8832
        %v8929 = vunpack.c.l.b16 %v8833
        %v8930 = vpack.c.b16 %v8915, %v8914
        %v8931 = vpack.c.b16 %v8917, %v8916
        %v8932 = vpack.c.b16 %v8919, %v8918
        %v8933 = vpack.c.b16 %v8921, %v8920
        %v8934 = vpack.c.b16 %v8923, %v8922
        %v8935 = vpack.c.b16 %v8925, %v8924
        %v8936 = vpack.c.b16 %v8927, %v8926
        %v8937 = vpack.c.b16 %v8929, %v8928
        %8946 = vmatpush.bf16.msra.mxu0 %v8937
        %8947 = vmatpush.bf16.msra.mxu0 %v8936
        %8948 = vmatpush.bf16.msra.mxu0 %v8935
        %8949 = vmatpush.bf16.msra.mxu0 %v8934
        %8950 = vmatpush.bf16.msra.mxu0 %v8933
        %8951 = vmatpush.bf16.msra.mxu0 %v8932
        %8952 = vmatpush.bf16.msra.mxu0 %v8931
        %8953 = vmatpush.bf16.msra.mxu0 %v8930
        %8954 = vmatmul.bf16.gmra.mxu0 %v8866
        %v8955 = vpop.f32.mrf.mxu0
        %v8956 = vadd.f32 0.0, %v8955
        %v8957 = vpop.f32.mrf.mxu0
        %v8958 = vadd.f32 0.0, %v8957
        %8959 = vmatmul.bf16.gmra.mxu0 %v8867
        %v8960 = vpop.f32.mrf.mxu0
        %v8961 = vadd.f32 0.0, %v8960
        %v8962 = vpop.f32.mrf.mxu0
        %v8963 = vadd.f32 0.0, %v8962
        %8964 = vmatmul.bf16.gmra.mxu0 %v8868
        %v8965 = vpop.f32.mrf.mxu0
        %v8966 = vadd.f32 0.0, %v8965
        %v8967 = vpop.f32.mrf.mxu0
        %v8968 = vadd.f32 0.0, %v8967
        %8969 = vmatmul.bf16.gmra.mxu0 %v8869
        %v8970 = vpop.f32.mrf.mxu0
        %v8971 = vadd.f32 0.0, %v8970
        %v8972 = vpop.f32.mrf.mxu0
        %v8973 = vadd.f32 0.0, %v8972
        %8974 = vmatmul.bf16.gmra.mxu0 %v8870
        %v8975 = vpop.f32.mrf.mxu0
        %v8976 = vadd.f32 0.0, %v8975
        %v8977 = vpop.f32.mrf.mxu0
        %v8978 = vadd.f32 0.0, %v8977
        %8979 = vmatmul.bf16.gmra.mxu0 %v8871
        %v8980 = vpop.f32.mrf.mxu0
        %v8981 = vadd.f32 0.0, %v8980
        %v8982 = vpop.f32.mrf.mxu0
        %v8983 = vadd.f32 0.0, %v8982
        %8984 = vmatmul.bf16.gmra.mxu0 %v8872
        %v8985 = vpop.f32.mrf.mxu0
        %v8986 = vadd.f32 0.0, %v8985
        %v8987 = vpop.f32.mrf.mxu0
        %v8988 = vadd.f32 0.0, %v8987
        %8989 = vmatmul.bf16.gmra.mxu0 %v8873
        %v8990 = vpop.f32.mrf.mxu0
        %v8991 = vadd.f32 0.0, %v8990
        %v8992 = vpop.f32.mrf.mxu0
        %v8993 = vadd.f32 0.0, %v8992
        %8994 = vmatmul.bf16.gmra.mxu0 %v8874
        %v8995 = vpop.f32.mrf.mxu0
        %v8996 = vadd.f32 0.0, %v8995
        %v8997 = vpop.f32.mrf.mxu0
        %v8998 = vadd.f32 0.0, %v8997
        %8999 = vmatmul.bf16.gmra.mxu0 %v8875
        %v9000 = vpop.f32.mrf.mxu0
        %v9001 = vadd.f32 0.0, %v9000
        %v9002 = vpop.f32.mrf.mxu0
        %v9003 = vadd.f32 0.0, %v9002
        %9004 = vmatmul.bf16.gmra.mxu0 %v8876
        %v9005 = vpop.f32.mrf.mxu0
        %v9006 = vadd.f32 0.0, %v9005
        %v9007 = vpop.f32.mrf.mxu0
        %v9008 = vadd.f32 0.0, %v9007
        %9009 = vmatmul.bf16.gmra.mxu0 %v8877
        %v9010 = vpop.f32.mrf.mxu0
        %v9011 = vadd.f32 0.0, %v9010
        %v9012 = vpop.f32.mrf.mxu0
        %v9013 = vadd.f32 0.0, %v9012
        %9014 = vmatmul.bf16.gmra.mxu0 %v8878
        %v9015 = vpop.f32.mrf.mxu0
        %v9016 = vadd.f32 0.0, %v9015
        %v9017 = vpop.f32.mrf.mxu0
        %v9018 = vadd.f32 0.0, %v9017
        %9019 = vmatmul.bf16.gmra.mxu0 %v8879
        %v9020 = vpop.f32.mrf.mxu0
        %v9021 = vadd.f32 0.0, %v9020
        %v9022 = vpop.f32.mrf.mxu0
        %v9023 = vadd.f32 0.0, %v9022
        %9024 = vmatmul.bf16.gmra.mxu0 %v8880
        %v9025 = vpop.f32.mrf.mxu0
        %v9026 = vadd.f32 0.0, %v9025
        %v9027 = vpop.f32.mrf.mxu0
        %v9028 = vadd.f32 0.0, %v9027
        %9029 = vmatmul.bf16.gmra.mxu0 %v8881
        %v9030 = vpop.f32.mrf.mxu0
        %v9031 = vadd.f32 0.0, %v9030
        %v9032 = vpop.f32.mrf.mxu0
        %v9033 = vadd.f32 0.0, %v9032
        %9034 = vdwg.mxu0
        %v9035 = vadd.f32 %v8578, %v8956
        %v9036 = vadd.f32 %v8580, %v8958
        %v9037 = vadd.f32 %v8583, %v8961
        %v9038 = vadd.f32 %v8585, %v8963
        %v9039 = vadd.f32 %v8588, %v8966
        %v9040 = vadd.f32 %v8590, %v8968
        %v9041 = vadd.f32 %v8593, %v8971
        %v9042 = vadd.f32 %v8595, %v8973
        %v9043 = vadd.f32 %v8598, %v8976
        %v9044 = vadd.f32 %v8600, %v8978
        %v9045 = vadd.f32 %v8603, %v8981
        %v9046 = vadd.f32 %v8605, %v8983
        %v9047 = vadd.f32 %v8608, %v8986
        %v9048 = vadd.f32 %v8610, %v8988
        %v9049 = vadd.f32 %v8613, %v8991
        %v9050 = vadd.f32 %v8615, %v8993
        %v9051 = vadd.f32 %v8618, %v8996
        %v9052 = vadd.f32 %v8620, %v8998
        %v9053 = vadd.f32 %v8623, %v9001
        %v9054 = vadd.f32 %v8625, %v9003
        %v9055 = vadd.f32 %v8628, %v9006
        %v9056 = vadd.f32 %v8630, %v9008
        %v9057 = vadd.f32 %v8633, %v9011
        %v9058 = vadd.f32 %v8635, %v9013
        %v9059 = vadd.f32 %v8638, %v9016
        %v9060 = vadd.f32 %v8640, %v9018
        %v9061 = vadd.f32 %v8643, %v9021
        %v9062 = vadd.f32 %v8645, %v9023
        %v9063 = vadd.f32 %v8648, %v9026
        %v9064 = vadd.f32 %v8650, %v9028
        %v9065 = vadd.f32 %v8653, %v9031
        %v9066 = vadd.f32 %v8655, %v9033
        %v9067 = vld [vmem:[%s7645] sm:$0xf]
        %v9068 = vld [vmem:[%s7645 + $0x4] sm:$0xf]
        %v9069 = vld [vmem:[%s7645 + $0xc] sm:$0xf]
        %v9070 = vld [vmem:[%s7645 + $0x10] sm:$0xf]
        %v9071 = vld [vmem:[%s7645 + $0x18] sm:$0xf]
        %v9072 = vld [vmem:[%s7645 + $0x1c] sm:$0xf]
        %v9073 = vld [vmem:[%s7645 + $0x24] sm:$0xf]
        %v9074 = vld [vmem:[%s7645 + $0x28] sm:$0xf]
        %v9075 = vld [vmem:[%s7645 + $0x30] sm:$0xf]
        %v9076 = vld [vmem:[%s7645 + $0x34] sm:$0xf]
        %v9077 = vld [vmem:[%s7645 + $0x3c] sm:$0xf]
        %v9078 = vld [vmem:[%s7645 + $0x40] sm:$0xf]
        %v9079 = vld [vmem:[%s7645 + $0x48] sm:$0xf]
        %v9080 = vld [vmem:[%s7645 + $0x4c] sm:$0xf]
        %v9081 = vld [vmem:[%s7645 + $0x54] sm:$0xf]
        %v9082 = vld [vmem:[%s7645 + $0x58] sm:$0xf]
        %v9083 = vld [vmem:[%s7645 + $0x60] sm:$0xf]
        %v9084 = vld [vmem:[%s7645 + $0x64] sm:$0xf]
        %v9085 = vld [vmem:[%s7645 + $0x6c] sm:$0xf]
        %v9086 = vld [vmem:[%s7645 + $0x70] sm:$0xf]
        %v9087 = vld [vmem:[%s7645 + $0x78] sm:$0xf]
        %v9088 = vld [vmem:[%s7645 + $0x7c] sm:$0xf]
        %v9089 = vld [vmem:[%s7645 + $0x84] sm:$0xf]
        %v9090 = vld [vmem:[%s7645 + $0x88] sm:$0xf]
        %v9091 = vld [vmem:[%s7645 + $0x90] sm:$0xf]
        %v9092 = vld [vmem:[%s7645 + $0x94] sm:$0xf]
        %v9093 = vld [vmem:[%s7645 + $0x9c] sm:$0xf]
        %v9094 = vld [vmem:[%s7645 + $0xa0] sm:$0xf]
        %v9095 = vld [vmem:[%s7645 + $0xa8] sm:$0xf]
        %v9096 = vld [vmem:[%s7645 + $0xac] sm:$0xf]
        %v9097 = vld [vmem:[%s7645 + $0xb4] sm:$0xf]
        %v9098 = vld [vmem:[%s7645 + $0xb8] sm:$0xf]
        %s9099 = scalar_lea.vmem [#allocation20], 192
        %v9100 = vld [vmem:[%s9099] sm:$0xf]
        %v9101 = vld [vmem:[%s9099 + $0x4] sm:$0xf]
        %v9102 = vld [vmem:[%s9099 + $0x8] sm:$0xf]
        %v9103 = vld [vmem:[%s9099 + $0xc] sm:$0xf]
        %v9104 = vld [vmem:[%s9099 + $0x10] sm:$0xf]
        %v9105 = vld [vmem:[%s9099 + $0x14] sm:$0xf]
        %v9106 = vld [vmem:[%s9099 + $0x18] sm:$0xf]
        %v9107 = vld [vmem:[%s9099 + $0x1c] sm:$0xf]
        %v9108 = vld [vmem:[%s9099 + $0x20] sm:$0xf]
        %v9109 = vld [vmem:[%s9099 + $0x24] sm:$0xf]
        %v9110 = vld [vmem:[%s9099 + $0x28] sm:$0xf]
        %v9111 = vld [vmem:[%s9099 + $0x2c] sm:$0xf]
        %v9112 = vld [vmem:[%s9099 + $0x30] sm:$0xf]
        %v9113 = vld [vmem:[%s9099 + $0x34] sm:$0xf]
        %v9114 = vld [vmem:[%s9099 + $0x38] sm:$0xf]
        %v9115 = vld [vmem:[%s9099 + $0x3c] sm:$0xf]
        %v9148 = vunpack.c.l.b16 %v9067
        %v9149 = vunpack.c.l.b16 %v9068
        %v9150 = vunpack.c.l.b16 %v9069
        %v9151 = vunpack.c.l.b16 %v9070
        %v9152 = vunpack.c.l.b16 %v9071
        %v9153 = vunpack.c.l.b16 %v9072
        %v9154 = vunpack.c.l.b16 %v9073
        %v9155 = vunpack.c.l.b16 %v9074
        %v9156 = vunpack.c.l.b16 %v9075
        %v9157 = vunpack.c.l.b16 %v9076
        %v9158 = vunpack.c.l.b16 %v9077
        %v9159 = vunpack.c.l.b16 %v9078
        %v9160 = vunpack.c.l.b16 %v9079
        %v9161 = vunpack.c.l.b16 %v9080
        %v9162 = vunpack.c.l.b16 %v9081
        %v9163 = vunpack.c.l.b16 %v9082
        %v9164 = vunpack.c.l.b16 %v9083
        %v9165 = vunpack.c.l.b16 %v9084
        %v9166 = vunpack.c.l.b16 %v9085
        %v9167 = vunpack.c.l.b16 %v9086
        %v9168 = vunpack.c.l.b16 %v9087
        %v9169 = vunpack.c.l.b16 %v9088
        %v9170 = vunpack.c.l.b16 %v9089
        %v9171 = vunpack.c.l.b16 %v9090
        %v9172 = vunpack.c.l.b16 %v9091
        %v9173 = vunpack.c.l.b16 %v9092
        %v9174 = vunpack.c.l.b16 %v9093
        %v9175 = vunpack.c.l.b16 %v9094
        %v9176 = vunpack.c.l.b16 %v9095
        %v9177 = vunpack.c.l.b16 %v9096
        %v9178 = vunpack.c.l.b16 %v9097
        %v9179 = vunpack.c.l.b16 %v9098
        %v9180 = vpack.c.b16 %v9149, %v9148
        %v9181 = vpack.c.b16 %v9151, %v9150
        %v9182 = vpack.c.b16 %v9153, %v9152
        %v9183 = vpack.c.b16 %v9155, %v9154
        %v9184 = vpack.c.b16 %v9157, %v9156
        %v9185 = vpack.c.b16 %v9159, %v9158
        %v9186 = vpack.c.b16 %v9161, %v9160
        %v9187 = vpack.c.b16 %v9163, %v9162
        %v9188 = vpack.c.b16 %v9165, %v9164
        %v9189 = vpack.c.b16 %v9167, %v9166
        %v9190 = vpack.c.b16 %v9169, %v9168
        %v9191 = vpack.c.b16 %v9171, %v9170
        %v9192 = vpack.c.b16 %v9173, %v9172
        %v9193 = vpack.c.b16 %v9175, %v9174
        %v9194 = vpack.c.b16 %v9177, %v9176
        %v9195 = vpack.c.b16 %v9179, %v9178
        %v9228 = vunpack.c.l.b16 %v9100
        %v9229 = vunpack.c.l.b16 %v9101
        %v9230 = vunpack.c.l.b16 %v9102
        %v9231 = vunpack.c.l.b16 %v9103
        %v9232 = vunpack.c.l.b16 %v9104
        %v9233 = vunpack.c.l.b16 %v9105
        %v9234 = vunpack.c.l.b16 %v9106
        %v9235 = vunpack.c.l.b16 %v9107
        %v9236 = vunpack.c.l.b16 %v9108
        %v9237 = vunpack.c.l.b16 %v9109
        %v9238 = vunpack.c.l.b16 %v9110
        %v9239 = vunpack.c.l.b16 %v9111
        %v9240 = vunpack.c.l.b16 %v9112
        %v9241 = vunpack.c.l.b16 %v9113
        %v9242 = vunpack.c.l.b16 %v9114
        %v9243 = vunpack.c.l.b16 %v9115
        %v9244 = vpack.c.b16 %v9229, %v9228
        %v9245 = vpack.c.b16 %v9231, %v9230
        %v9246 = vpack.c.b16 %v9233, %v9232
        %v9247 = vpack.c.b16 %v9235, %v9234
        %v9248 = vpack.c.b16 %v9237, %v9236
        %v9249 = vpack.c.b16 %v9239, %v9238
        %v9250 = vpack.c.b16 %v9241, %v9240
        %v9251 = vpack.c.b16 %v9243, %v9242
        %9260 = vmatpush.bf16.msra.mxu0 %v9251
        %9261 = vmatpush.bf16.msra.mxu0 %v9250
        %9262 = vmatpush.bf16.msra.mxu0 %v9249
        %9263 = vmatpush.bf16.msra.mxu0 %v9248
        %9264 = vmatpush.bf16.msra.mxu0 %v9247
        %9265 = vmatpush.bf16.msra.mxu0 %v9246
        %9266 = vmatpush.bf16.msra.mxu0 %v9245
        %9267 = vmatpush.bf16.msra.mxu0 %v9244
        %9268 = vmatmul.bf16.gmra.mxu0 %v9180
        %v9269 = vpop.f32.mrf.mxu0
        %v9270 = vadd.f32 0.0, %v9269
        %v9271 = vpop.f32.mrf.mxu0
        %v9272 = vadd.f32 0.0, %v9271
        %9273 = vmatmul.bf16.gmra.mxu0 %v9181
        %v9274 = vpop.f32.mrf.mxu0
        %v9275 = vadd.f32 0.0, %v9274
        %v9276 = vpop.f32.mrf.mxu0
        %v9277 = vadd.f32 0.0, %v9276
        %9278 = vmatmul.bf16.gmra.mxu0 %v9182
        %v9279 = vpop.f32.mrf.mxu0
        %v9280 = vadd.f32 0.0, %v9279
        %v9281 = vpop.f32.mrf.mxu0
        %v9282 = vadd.f32 0.0, %v9281
        %9283 = vmatmul.bf16.gmra.mxu0 %v9183
        %v9284 = vpop.f32.mrf.mxu0
        %v9285 = vadd.f32 0.0, %v9284
        %v9286 = vpop.f32.mrf.mxu0
        %v9287 = vadd.f32 0.0, %v9286
        %9288 = vmatmul.bf16.gmra.mxu0 %v9184
        %v9289 = vpop.f32.mrf.mxu0
        %v9290 = vadd.f32 0.0, %v9289
        %v9291 = vpop.f32.mrf.mxu0
        %v9292 = vadd.f32 0.0, %v9291
        %9293 = vmatmul.bf16.gmra.mxu0 %v9185
        %v9294 = vpop.f32.mrf.mxu0
        %v9295 = vadd.f32 0.0, %v9294
        %v9296 = vpop.f32.mrf.mxu0
        %v9297 = vadd.f32 0.0, %v9296
        %9298 = vmatmul.bf16.gmra.mxu0 %v9186
        %v9299 = vpop.f32.mrf.mxu0
        %v9300 = vadd.f32 0.0, %v9299
        %v9301 = vpop.f32.mrf.mxu0
        %v9302 = vadd.f32 0.0, %v9301
        %9303 = vmatmul.bf16.gmra.mxu0 %v9187
        %v9304 = vpop.f32.mrf.mxu0
        %v9305 = vadd.f32 0.0, %v9304
        %v9306 = vpop.f32.mrf.mxu0
        %v9307 = vadd.f32 0.0, %v9306
        %9308 = vmatmul.bf16.gmra.mxu0 %v9188
        %v9309 = vpop.f32.mrf.mxu0
        %v9310 = vadd.f32 0.0, %v9309
        %v9311 = vpop.f32.mrf.mxu0
        %v9312 = vadd.f32 0.0, %v9311
        %9313 = vmatmul.bf16.gmra.mxu0 %v9189
        %v9314 = vpop.f32.mrf.mxu0
        %v9315 = vadd.f32 0.0, %v9314
        %v9316 = vpop.f32.mrf.mxu0
        %v9317 = vadd.f32 0.0, %v9316
        %9318 = vmatmul.bf16.gmra.mxu0 %v9190
        %v9319 = vpop.f32.mrf.mxu0
        %v9320 = vadd.f32 0.0, %v9319
        %v9321 = vpop.f32.mrf.mxu0
        %v9322 = vadd.f32 0.0, %v9321
        %9323 = vmatmul.bf16.gmra.mxu0 %v9191
        %v9324 = vpop.f32.mrf.mxu0
        %v9325 = vadd.f32 0.0, %v9324
        %v9326 = vpop.f32.mrf.mxu0
        %v9327 = vadd.f32 0.0, %v9326
        %9328 = vmatmul.bf16.gmra.mxu0 %v9192
        %v9329 = vpop.f32.mrf.mxu0
        %v9330 = vadd.f32 0.0, %v9329
        %v9331 = vpop.f32.mrf.mxu0
        %v9332 = vadd.f32 0.0, %v9331
        %9333 = vmatmul.bf16.gmra.mxu0 %v9193
        %v9334 = vpop.f32.mrf.mxu0
        %v9335 = vadd.f32 0.0, %v9334
        %v9336 = vpop.f32.mrf.mxu0
        %v9337 = vadd.f32 0.0, %v9336
        %9338 = vmatmul.bf16.gmra.mxu0 %v9194
        %v9339 = vpop.f32.mrf.mxu0
        %v9340 = vadd.f32 0.0, %v9339
        %v9341 = vpop.f32.mrf.mxu0
        %v9342 = vadd.f32 0.0, %v9341
        %9343 = vmatmul.bf16.gmra.mxu0 %v9195
        %v9344 = vpop.f32.mrf.mxu0
        %v9345 = vadd.f32 0.0, %v9344
        %v9346 = vpop.f32.mrf.mxu0
        %v9347 = vadd.f32 0.0, %v9346
        %9348 = vdwg.mxu0
        %v9349 = vadd.f32 %v9035, %v9270
        %v9350 = vadd.f32 %v9036, %v9272
        %v9351 = vadd.f32 %v9037, %v9275
        %v9352 = vadd.f32 %v9038, %v9277
        %v9353 = vadd.f32 %v9039, %v9280
        %v9354 = vadd.f32 %v9040, %v9282
        %v9355 = vadd.f32 %v9041, %v9285
        %v9356 = vadd.f32 %v9042, %v9287
        %v9357 = vadd.f32 %v9043, %v9290
        %v9358 = vadd.f32 %v9044, %v9292
        %v9359 = vadd.f32 %v9045, %v9295
        %v9360 = vadd.f32 %v9046, %v9297
        %v9361 = vadd.f32 %v9047, %v9300
        %v9362 = vadd.f32 %v9048, %v9302
        %v9363 = vadd.f32 %v9049, %v9305
        %v9364 = vadd.f32 %v9050, %v9307
        %v9365 = vadd.f32 %v9051, %v9310
        %v9366 = vadd.f32 %v9052, %v9312
        %v9367 = vadd.f32 %v9053, %v9315
        %v9368 = vadd.f32 %v9054, %v9317
        %v9369 = vadd.f32 %v9055, %v9320
        %v9370 = vadd.f32 %v9056, %v9322
        %v9371 = vadd.f32 %v9057, %v9325
        %v9372 = vadd.f32 %v9058, %v9327
        %v9373 = vadd.f32 %v9059, %v9330
        %v9374 = vadd.f32 %v9060, %v9332
        %v9375 = vadd.f32 %v9061, %v9335
        %v9376 = vadd.f32 %v9062, %v9337
        %v9377 = vadd.f32 %v9063, %v9340
        %v9378 = vadd.f32 %v9064, %v9342
        %v9379 = vadd.f32 %v9065, %v9345
        %v9380 = vadd.f32 %v9066, %v9347
        %v9381 = vld [vmem:[%s7645] sm:$0xf]
        %v9382 = vld [vmem:[%s7645 + $0x4] sm:$0xf]
        %v9383 = vld [vmem:[%s7645 + $0x8] sm:$0x1]
        %v9384 = vld [vmem:[%s7645 + $0xc] sm:$0xf]
        %v9385 = vld [vmem:[%s7645 + $0x10] sm:$0xf]
        %v9386 = vld [vmem:[%s7645 + $0x14] sm:$0x1]
        %v9387 = vld [vmem:[%s7645 + $0x18] sm:$0xf]
        %v9388 = vld [vmem:[%s7645 + $0x1c] sm:$0xf]
        %v9389 = vld [vmem:[%s7645 + $0x20] sm:$0x1]
        %v9390 = vld [vmem:[%s7645 + $0x24] sm:$0xf]
        %v9391 = vld [vmem:[%s7645 + $0x28] sm:$0xf]
        %v9392 = vld [vmem:[%s7645 + $0x2c] sm:$0x1]
        %v9393 = vld [vmem:[%s7645 + $0x30] sm:$0xf]
        %v9394 = vld [vmem:[%s7645 + $0x34] sm:$0xf]
        %v9395 = vld [vmem:[%s7645 + $0x38] sm:$0x1]
        %v9396 = vld [vmem:[%s7645 + $0x3c] sm:$0xf]
        %v9397 = vld [vmem:[%s7645 + $0x40] sm:$0xf]
        %v9398 = vld [vmem:[%s7645 + $0x44] sm:$0x1]
        %v9399 = vld [vmem:[%s7645 + $0x48] sm:$0xf]
        %v9400 = vld [vmem:[%s7645 + $0x4c] sm:$0xf]
        %v9401 = vld [vmem:[%s7645 + $0x50] sm:$0x1]
        %v9402 = vld [vmem:[%s7645 + $0x54] sm:$0xf]
        %v9403 = vld [vmem:[%s7645 + $0x58] sm:$0xf]
        %v9404 = vld [vmem:[%s7645 + $0x5c] sm:$0x1]
        %v9405 = vld [vmem:[%s7645 + $0x60] sm:$0xf]
        %v9406 = vld [vmem:[%s7645 + $0x64] sm:$0xf]
        %v9407 = vld [vmem:[%s7645 + $0x68] sm:$0x1]
        %v9408 = vld [vmem:[%s7645 + $0x6c] sm:$0xf]
        %v9409 = vld [vmem:[%s7645 + $0x70] sm:$0xf]
        %v9410 = vld [vmem:[%s7645 + $0x74] sm:$0x1]
        %v9411 = vld [vmem:[%s7645 + $0x78] sm:$0xf]
        %v9412 = vld [vmem:[%s7645 + $0x7c] sm:$0xf]
        %v9413 = vld [vmem:[%s7645 + $0x80] sm:$0x1]
        %v9414 = vld [vmem:[%s7645 + $0x84] sm:$0xf]
        %v9415 = vld [vmem:[%s7645 + $0x88] sm:$0xf]
        %v9416 = vld [vmem:[%s7645 + $0x8c] sm:$0x1]
        %v9417 = vld [vmem:[%s7645 + $0x90] sm:$0xf]
        %v9418 = vld [vmem:[%s7645 + $0x94] sm:$0xf]
        %v9419 = vld [vmem:[%s7645 + $0x98] sm:$0x1]
        %v9420 = vld [vmem:[%s7645 + $0x9c] sm:$0xf]
        %v9421 = vld [vmem:[%s7645 + $0xa0] sm:$0xf]
        %v9422 = vld [vmem:[%s7645 + $0xa4] sm:$0x1]
        %v9423 = vld [vmem:[%s7645 + $0xa8] sm:$0xf]
        %v9424 = vld [vmem:[%s7645 + $0xac] sm:$0xf]
        %v9425 = vld [vmem:[%s7645 + $0xb0] sm:$0x1]
        %v9426 = vld [vmem:[%s7645 + $0xb4] sm:$0xf]
        %v9427 = vld [vmem:[%s7645 + $0xb8] sm:$0xf]
        %v9428 = vld [vmem:[%s7645 + $0xbc] sm:$0x1]
        %v9430 = vshrl.u32 %v9381, 16
        %v9432 = vrot.slane %v9430, 4
        %v9433 = vshll.u32 %v9381, 16
        %v9435 = vrot.slane %v9433, 5
        %v9436 = vor.u32 %v9432, %v9435
        %v9437 = vrot.slane %v9436, 4
        %v9439 = vshll.u32 %v9382, 16
        %v9441 = vrot.slane %v9439, 5
        %v9442 = vsel %vm1166, %v9437, %v9441
        %v9443 = vshrl.u32 %v9382, 16
        %v9445 = vrot.slane %v9443, 4
        %v9446 = vor.u32 %v9445, %v9441
        %v9447 = vrot.slane %v9446, 4
        %v9449 = vshll.u32 %v9383, 16
        %v9451 = vrot.slane %v9449, 5
        %v9452 = vsel %vm1166, %v9447, %v9451
        %v9454 = vshrl.u32 %v9384, 16
        %v9456 = vrot.slane %v9454, 4
        %v9457 = vshll.u32 %v9384, 16
        %v9459 = vrot.slane %v9457, 5
        %v9460 = vor.u32 %v9456, %v9459
        %v9461 = vrot.slane %v9460, 4
        %v9463 = vshll.u32 %v9385, 16
        %v9465 = vrot.slane %v9463, 5
        %v9466 = vsel %vm1166, %v9461, %v9465
        %v9467 = vshrl.u32 %v9385, 16
        %v9469 = vrot.slane %v9467, 4
        %v9470 = vor.u32 %v9469, %v9465
        %v9471 = vrot.slane %v9470, 4
        %v9473 = vshll.u32 %v9386, 16
        %v9475 = vrot.slane %v9473, 5
        %v9476 = vsel %vm1166, %v9471, %v9475
        %v9478 = vshrl.u32 %v9387, 16
        %v9480 = vrot.slane %v9478, 4
        %v9481 = vshll.u32 %v9387, 16
        %v9483 = vrot.slane %v9481, 5
        %v9484 = vor.u32 %v9480, %v9483
        %v9485 = vrot.slane %v9484, 4
        %v9487 = vshll.u32 %v9388, 16
        %v9489 = vrot.slane %v9487, 5
        %v9490 = vsel %vm1166, %v9485, %v9489
        %v9491 = vshrl.u32 %v9388, 16
        %v9493 = vrot.slane %v9491, 4
        %v9494 = vor.u32 %v9493, %v9489
        %v9495 = vrot.slane %v9494, 4
        %v9497 = vshll.u32 %v9389, 16
        %v9499 = vrot.slane %v9497, 5
        %v9500 = vsel %vm1166, %v9495, %v9499
        %v9502 = vshrl.u32 %v9390, 16
        %v9504 = vrot.slane %v9502, 4
        %v9505 = vshll.u32 %v9390, 16
        %v9507 = vrot.slane %v9505, 5
        %v9508 = vor.u32 %v9504, %v9507
        %v9509 = vrot.slane %v9508, 4
        %v9511 = vshll.u32 %v9391, 16
        %v9513 = vrot.slane %v9511, 5
        %v9514 = vsel %vm1166, %v9509, %v9513
        %v9515 = vshrl.u32 %v9391, 16
        %v9517 = vrot.slane %v9515, 4
        %v9518 = vor.u32 %v9517, %v9513
        %v9519 = vrot.slane %v9518, 4
        %v9521 = vshll.u32 %v9392, 16
        %v9523 = vrot.slane %v9521, 5
        %v9524 = vsel %vm1166, %v9519, %v9523
        %v9526 = vshrl.u32 %v9393, 16
        %v9528 = vrot.slane %v9526, 4
        %v9529 = vshll.u32 %v9393, 16
        %v9531 = vrot.slane %v9529, 5
        %v9532 = vor.u32 %v9528, %v9531
        %v9533 = vrot.slane %v9532, 4
        %v9535 = vshll.u32 %v9394, 16
        %v9537 = vrot.slane %v9535, 5
        %v9538 = vsel %vm1166, %v9533, %v9537
        %v9539 = vshrl.u32 %v9394, 16
        %v9541 = vrot.slane %v9539, 4
        %v9542 = vor.u32 %v9541, %v9537
        %v9543 = vrot.slane %v9542, 4
        %v9545 = vshll.u32 %v9395, 16
        %v9547 = vrot.slane %v9545, 5
        %v9548 = vsel %vm1166, %v9543, %v9547
        %v9550 = vshrl.u32 %v9396, 16
        %v9552 = vrot.slane %v9550, 4
        %v9553 = vshll.u32 %v9396, 16
        %v9555 = vrot.slane %v9553, 5
        %v9556 = vor.u32 %v9552, %v9555
        %v9557 = vrot.slane %v9556, 4
        %v9559 = vshll.u32 %v9397, 16
        %v9561 = vrot.slane %v9559, 5
        %v9562 = vsel %vm1166, %v9557, %v9561
        %v9563 = vshrl.u32 %v9397, 16
        %v9565 = vrot.slane %v9563, 4
        %v9566 = vor.u32 %v9565, %v9561
        %v9567 = vrot.slane %v9566, 4
        %v9569 = vshll.u32 %v9398, 16
        %v9571 = vrot.slane %v9569, 5
        %v9572 = vsel %vm1166, %v9567, %v9571
        %v9574 = vshrl.u32 %v9399, 16
        %v9576 = vrot.slane %v9574, 4
        %v9577 = vshll.u32 %v9399, 16
        %v9579 = vrot.slane %v9577, 5
        %v9580 = vor.u32 %v9576, %v9579
        %v9581 = vrot.slane %v9580, 4
        %v9583 = vshll.u32 %v9400, 16
        %v9585 = vrot.slane %v9583, 5
        %v9586 = vsel %vm1166, %v9581, %v9585
        %v9587 = vshrl.u32 %v9400, 16
        %v9589 = vrot.slane %v9587, 4
        %v9590 = vor.u32 %v9589, %v9585
        %v9591 = vrot.slane %v9590, 4
        %v9593 = vshll.u32 %v9401, 16
        %v9595 = vrot.slane %v9593, 5
        %v9596 = vsel %vm1166, %v9591, %v9595
        %v9598 = vshrl.u32 %v9402, 16
        %v9600 = vrot.slane %v9598, 4
        %v9601 = vshll.u32 %v9402, 16
        %v9603 = vrot.slane %v9601, 5
        %v9604 = vor.u32 %v9600, %v9603
        %v9605 = vrot.slane %v9604, 4
        %v9607 = vshll.u32 %v9403, 16
        %v9609 = vrot.slane %v9607, 5
        %v9610 = vsel %vm1166, %v9605, %v9609
        %v9611 = vshrl.u32 %v9403, 16
        %v9613 = vrot.slane %v9611, 4
        %v9614 = vor.u32 %v9613, %v9609
        %v9615 = vrot.slane %v9614, 4
        %v9617 = vshll.u32 %v9404, 16
        %v9619 = vrot.slane %v9617, 5
        %v9620 = vsel %vm1166, %v9615, %v9619
        %v9622 = vshrl.u32 %v9405, 16
        %v9624 = vrot.slane %v9622, 4
        %v9625 = vshll.u32 %v9405, 16
        %v9627 = vrot.slane %v9625, 5
        %v9628 = vor.u32 %v9624, %v9627
        %v9629 = vrot.slane %v9628, 4
        %v9631 = vshll.u32 %v9406, 16
        %v9633 = vrot.slane %v9631, 5
        %v9634 = vsel %vm1166, %v9629, %v9633
        %v9635 = vshrl.u32 %v9406, 16
        %v9637 = vrot.slane %v9635, 4
        %v9638 = vor.u32 %v9637, %v9633
        %v9639 = vrot.slane %v9638, 4
        %v9641 = vshll.u32 %v9407, 16
        %v9643 = vrot.slane %v9641, 5
        %v9644 = vsel %vm1166, %v9639, %v9643
        %v9646 = vshrl.u32 %v9408, 16
        %v9648 = vrot.slane %v9646, 4
        %v9649 = vshll.u32 %v9408, 16
        %v9651 = vrot.slane %v9649, 5
        %v9652 = vor.u32 %v9648, %v9651
        %v9653 = vrot.slane %v9652, 4
        %v9655 = vshll.u32 %v9409, 16
        %v9657 = vrot.slane %v9655, 5
        %v9658 = vsel %vm1166, %v9653, %v9657
        %v9659 = vshrl.u32 %v9409, 16
        %v9661 = vrot.slane %v9659, 4
        %v9662 = vor.u32 %v9661, %v9657
        %v9663 = vrot.slane %v9662, 4
        %v9665 = vshll.u32 %v9410, 16
        %v9667 = vrot.slane %v9665, 5
        %v9668 = vsel %vm1166, %v9663, %v9667
        %v9670 = vshrl.u32 %v9411, 16
        %v9672 = vrot.slane %v9670, 4
        %v9673 = vshll.u32 %v9411, 16
        %v9675 = vrot.slane %v9673, 5
        %v9676 = vor.u32 %v9672, %v9675
        %v9677 = vrot.slane %v9676, 4
        %v9679 = vshll.u32 %v9412, 16
        %v9681 = vrot.slane %v9679, 5
        %v9682 = vsel %vm1166, %v9677, %v9681
        %v9683 = vshrl.u32 %v9412, 16
        %v9685 = vrot.slane %v9683, 4
        %v9686 = vor.u32 %v9685, %v9681
        %v9687 = vrot.slane %v9686, 4
        %v9689 = vshll.u32 %v9413, 16
        %v9691 = vrot.slane %v9689, 5
        %v9692 = vsel %vm1166, %v9687, %v9691
        %v9694 = vshrl.u32 %v9414, 16
        %v9696 = vrot.slane %v9694, 4
        %v9697 = vshll.u32 %v9414, 16
        %v9699 = vrot.slane %v9697, 5
        %v9700 = vor.u32 %v9696, %v9699
        %v9701 = vrot.slane %v9700, 4
        %v9703 = vshll.u32 %v9415, 16
        %v9705 = vrot.slane %v9703, 5
        %v9706 = vsel %vm1166, %v9701, %v9705
        %v9707 = vshrl.u32 %v9415, 16
        %v9709 = vrot.slane %v9707, 4
        %v9710 = vor.u32 %v9709, %v9705
        %v9711 = vrot.slane %v9710, 4
        %v9713 = vshll.u32 %v9416, 16
        %v9715 = vrot.slane %v9713, 5
        %v9716 = vsel %vm1166, %v9711, %v9715
        %v9718 = vshrl.u32 %v9417, 16
        %v9720 = vrot.slane %v9718, 4
        %v9721 = vshll.u32 %v9417, 16
        %v9723 = vrot.slane %v9721, 5
        %v9724 = vor.u32 %v9720, %v9723
        %v9725 = vrot.slane %v9724, 4
        %v9727 = vshll.u32 %v9418, 16
        %v9729 = vrot.slane %v9727, 5
        %v9730 = vsel %vm1166, %v9725, %v9729
        %v9731 = vshrl.u32 %v9418, 16
        %v9733 = vrot.slane %v9731, 4
        %v9734 = vor.u32 %v9733, %v9729
        %v9735 = vrot.slane %v9734, 4
        %v9737 = vshll.u32 %v9419, 16
        %v9739 = vrot.slane %v9737, 5
        %v9740 = vsel %vm1166, %v9735, %v9739
        %v9742 = vshrl.u32 %v9420, 16
        %v9744 = vrot.slane %v9742, 4
        %v9745 = vshll.u32 %v9420, 16
        %v9747 = vrot.slane %v9745, 5
        %v9748 = vor.u32 %v9744, %v9747
        %v9749 = vrot.slane %v9748, 4
        %v9751 = vshll.u32 %v9421, 16
        %v9753 = vrot.slane %v9751, 5
        %v9754 = vsel %vm1166, %v9749, %v9753
        %v9755 = vshrl.u32 %v9421, 16
        %v9757 = vrot.slane %v9755, 4
        %v9758 = vor.u32 %v9757, %v9753
        %v9759 = vrot.slane %v9758, 4
        %v9761 = vshll.u32 %v9422, 16
        %v9763 = vrot.slane %v9761, 5
        %v9764 = vsel %vm1166, %v9759, %v9763
        %v9766 = vshrl.u32 %v9423, 16
        %v9768 = vrot.slane %v9766, 4
        %v9769 = vshll.u32 %v9423, 16
        %v9771 = vrot.slane %v9769, 5
        %v9772 = vor.u32 %v9768, %v9771
        %v9773 = vrot.slane %v9772, 4
        %v9775 = vshll.u32 %v9424, 16
        %v9777 = vrot.slane %v9775, 5
        %v9778 = vsel %vm1166, %v9773, %v9777
        %v9779 = vshrl.u32 %v9424, 16
        %v9781 = vrot.slane %v9779, 4
        %v9782 = vor.u32 %v9781, %v9777
        %v9783 = vrot.slane %v9782, 4
        %v9785 = vshll.u32 %v9425, 16
        %v9787 = vrot.slane %v9785, 5
        %v9788 = vsel %vm1166, %v9783, %v9787
        %v9790 = vshrl.u32 %v9426, 16
        %v9792 = vrot.slane %v9790, 4
        %v9793 = vshll.u32 %v9426, 16
        %v9795 = vrot.slane %v9793, 5
        %v9796 = vor.u32 %v9792, %v9795
        %v9797 = vrot.slane %v9796, 4
        %v9799 = vshll.u32 %v9427, 16
        %v9801 = vrot.slane %v9799, 5
        %v9802 = vsel %vm1166, %v9797, %v9801
        %v9803 = vshrl.u32 %v9427, 16
        %v9805 = vrot.slane %v9803, 4
        %v9806 = vor.u32 %v9805, %v9801
        %v9807 = vrot.slane %v9806, 4
        %v9809 = vshll.u32 %v9428, 16
        %v9811 = vrot.slane %v9809, 5
        %v9812 = vsel %vm1166, %v9807, %v9811
        %s9813 = scalar_lea.vmem [#allocation20], 256
        %v9814 = vld [vmem:[%s9813] sm:$0xf]
        %v9815 = vld [vmem:[%s9813 + $0x4] sm:$0xf]
        %v9816 = vld [vmem:[%s9813 + $0x8] sm:$0xf]
        %v9817 = vld [vmem:[%s9813 + $0xc] sm:$0xf]
        %v9818 = vld [vmem:[%s9813 + $0x10] sm:$0xf]
        %v9819 = vld [vmem:[%s9813 + $0x14] sm:$0xf]
        %v9820 = vld [vmem:[%s9813 + $0x18] sm:$0xf]
        %v9821 = vld [vmem:[%s9813 + $0x1c] sm:$0xf]
        %v9822 = vld [vmem:[%s9813 + $0x20] sm:$0xf]
        %v9823 = vld [vmem:[%s9813 + $0x24] sm:$0xf]
        %v9824 = vld [vmem:[%s9813 + $0x28] sm:$0xf]
        %v9825 = vld [vmem:[%s9813 + $0x2c] sm:$0xf]
        %v9826 = vld [vmem:[%s9813 + $0x30] sm:$0xf]
        %v9827 = vld [vmem:[%s9813 + $0x34] sm:$0xf]
        %v9828 = vld [vmem:[%s9813 + $0x38] sm:$0xf]
        %v9829 = vld [vmem:[%s9813 + $0x3c] sm:$0xf]
        %v9830 = vunpack.c.l.b16 %v9442
        %v9831 = vunpack.c.l.b16 %v9452
        %v9832 = vunpack.c.l.b16 %v9466
        %v9833 = vunpack.c.l.b16 %v9476
        %v9834 = vunpack.c.l.b16 %v9490
        %v9835 = vunpack.c.l.b16 %v9500
        %v9836 = vunpack.c.l.b16 %v9514
        %v9837 = vunpack.c.l.b16 %v9524
        %v9838 = vunpack.c.l.b16 %v9538
        %v9839 = vunpack.c.l.b16 %v9548
        %v9840 = vunpack.c.l.b16 %v9562
        %v9841 = vunpack.c.l.b16 %v9572
        %v9842 = vunpack.c.l.b16 %v9586
        %v9843 = vunpack.c.l.b16 %v9596
        %v9844 = vunpack.c.l.b16 %v9610
        %v9845 = vunpack.c.l.b16 %v9620
        %v9846 = vunpack.c.l.b16 %v9634
        %v9847 = vunpack.c.l.b16 %v9644
        %v9848 = vunpack.c.l.b16 %v9658
        %v9849 = vunpack.c.l.b16 %v9668
        %v9850 = vunpack.c.l.b16 %v9682
        %v9851 = vunpack.c.l.b16 %v9692
        %v9852 = vunpack.c.l.b16 %v9706
        %v9853 = vunpack.c.l.b16 %v9716
        %v9854 = vunpack.c.l.b16 %v9730
        %v9855 = vunpack.c.l.b16 %v9740
        %v9856 = vunpack.c.l.b16 %v9754
        %v9857 = vunpack.c.l.b16 %v9764
        %v9858 = vunpack.c.l.b16 %v9778
        %v9859 = vunpack.c.l.b16 %v9788
        %v9860 = vunpack.c.l.b16 %v9802
        %v9861 = vunpack.c.l.b16 %v9812
        %v9862 = vpack.c.b16 %v9831, %v9830
        %v9863 = vpack.c.b16 %v9833, %v9832
        %v9864 = vpack.c.b16 %v9835, %v9834
        %v9865 = vpack.c.b16 %v9837, %v9836
        %v9866 = vpack.c.b16 %v9839, %v9838
        %v9867 = vpack.c.b16 %v9841, %v9840
        %v9868 = vpack.c.b16 %v9843, %v9842
        %v9869 = vpack.c.b16 %v9845, %v9844
        %v9870 = vpack.c.b16 %v9847, %v9846
        %v9871 = vpack.c.b16 %v9849, %v9848
        %v9872 = vpack.c.b16 %v9851, %v9850
        %v9873 = vpack.c.b16 %v9853, %v9852
        %v9874 = vpack.c.b16 %v9855, %v9854
        %v9875 = vpack.c.b16 %v9857, %v9856
        %v9876 = vpack.c.b16 %v9859, %v9858
        %v9877 = vpack.c.b16 %v9861, %v9860
        %v9910 = vunpack.c.l.b16 %v9814
        %v9911 = vunpack.c.l.b16 %v9815
        %v9912 = vunpack.c.l.b16 %v9816
        %v9913 = vunpack.c.l.b16 %v9817
        %v9914 = vunpack.c.l.b16 %v9818
        %v9915 = vunpack.c.l.b16 %v9819
        %v9916 = vunpack.c.l.b16 %v9820
        %v9917 = vunpack.c.l.b16 %v9821
        %v9918 = vunpack.c.l.b16 %v9822
        %v9919 = vunpack.c.l.b16 %v9823
        %v9920 = vunpack.c.l.b16 %v9824
        %v9921 = vunpack.c.l.b16 %v9825
        %v9922 = vunpack.c.l.b16 %v9826
        %v9923 = vunpack.c.l.b16 %v9827
        %v9924 = vunpack.c.l.b16 %v9828
        %v9925 = vunpack.c.l.b16 %v9829
        %v9926 = vpack.c.b16 %v9911, %v9910
        %v9927 = vpack.c.b16 %v9913, %v9912
        %v9928 = vpack.c.b16 %v9915, %v9914
        %v9929 = vpack.c.b16 %v9917, %v9916
        %v9930 = vpack.c.b16 %v9919, %v9918
        %v9931 = vpack.c.b16 %v9921, %v9920
        %v9932 = vpack.c.b16 %v9923, %v9922
        %v9933 = vpack.c.b16 %v9925, %v9924
        %9942 = vmatpush.bf16.msra.mxu0 %v9933
        %9943 = vmatpush.bf16.msra.mxu0 %v9932
        %9944 = vmatpush.bf16.msra.mxu0 %v9931
        %9945 = vmatpush.bf16.msra.mxu0 %v9930
        %9946 = vmatpush.bf16.msra.mxu0 %v9929
        %9947 = vmatpush.bf16.msra.mxu0 %v9928
        %9948 = vmatpush.bf16.msra.mxu0 %v9927
        %9949 = vmatpush.bf16.msra.mxu0 %v9926
        %9950 = vmatmul.bf16.gmra.mxu0 %v9862
        %v9951 = vpop.f32.mrf.mxu0
        %v9952 = vadd.f32 0.0, %v9951
        %v9953 = vpop.f32.mrf.mxu0
        %v9954 = vadd.f32 0.0, %v9953
        %9955 = vmatmul.bf16.gmra.mxu0 %v9863
        %v9956 = vpop.f32.mrf.mxu0
        %v9957 = vadd.f32 0.0, %v9956
        %v9958 = vpop.f32.mrf.mxu0
        %v9959 = vadd.f32 0.0, %v9958
        %9960 = vmatmul.bf16.gmra.mxu0 %v9864
        %v9961 = vpop.f32.mrf.mxu0
        %v9962 = vadd.f32 0.0, %v9961
        %v9963 = vpop.f32.mrf.mxu0
        %v9964 = vadd.f32 0.0, %v9963
        %9965 = vmatmul.bf16.gmra.mxu0 %v9865
        %v9966 = vpop.f32.mrf.mxu0
        %v9967 = vadd.f32 0.0, %v9966
        %v9968 = vpop.f32.mrf.mxu0
        %v9969 = vadd.f32 0.0, %v9968
        %9970 = vmatmul.bf16.gmra.mxu0 %v9866
        %v9971 = vpop.f32.mrf.mxu0
        %v9972 = vadd.f32 0.0, %v9971
        %v9973 = vpop.f32.mrf.mxu0
        %v9974 = vadd.f32 0.0, %v9973
        %9975 = vmatmul.bf16.gmra.mxu0 %v9867
        %v9976 = vpop.f32.mrf.mxu0
        %v9977 = vadd.f32 0.0, %v9976
        %v9978 = vpop.f32.mrf.mxu0
        %v9979 = vadd.f32 0.0, %v9978
        %9980 = vmatmul.bf16.gmra.mxu0 %v9868
        %v9981 = vpop.f32.mrf.mxu0
        %v9982 = vadd.f32 0.0, %v9981
        %v9983 = vpop.f32.mrf.mxu0
        %v9984 = vadd.f32 0.0, %v9983
        %9985 = vmatmul.bf16.gmra.mxu0 %v9869
        %v9986 = vpop.f32.mrf.mxu0
        %v9987 = vadd.f32 0.0, %v9986
        %v9988 = vpop.f32.mrf.mxu0
        %v9989 = vadd.f32 0.0, %v9988
        %9990 = vmatmul.bf16.gmra.mxu0 %v9870
        %v9991 = vpop.f32.mrf.mxu0
        %v9992 = vadd.f32 0.0, %v9991
        %v9993 = vpop.f32.mrf.mxu0
        %v9994 = vadd.f32 0.0, %v9993
        %9995 = vmatmul.bf16.gmra.mxu0 %v9871
        %v9996 = vpop.f32.mrf.mxu0
        %v9997 = vadd.f32 0.0, %v9996
        %v9998 = vpop.f32.mrf.mxu0
        %v9999 = vadd.f32 0.0, %v9998
        %10000 = vmatmul.bf16.gmra.mxu0 %v9872
        %v10001 = vpop.f32.mrf.mxu0
        %v10002 = vadd.f32 0.0, %v10001
        %v10003 = vpop.f32.mrf.mxu0
        %v10004 = vadd.f32 0.0, %v10003
        %10005 = vmatmul.bf16.gmra.mxu0 %v9873
        %v10006 = vpop.f32.mrf.mxu0
        %v10007 = vadd.f32 0.0, %v10006
        %v10008 = vpop.f32.mrf.mxu0
        %v10009 = vadd.f32 0.0, %v10008
        %10010 = vmatmul.bf16.gmra.mxu0 %v9874
        %v10011 = vpop.f32.mrf.mxu0
        %v10012 = vadd.f32 0.0, %v10011
        %v10013 = vpop.f32.mrf.mxu0
        %v10014 = vadd.f32 0.0, %v10013
        %10015 = vmatmul.bf16.gmra.mxu0 %v9875
        %v10016 = vpop.f32.mrf.mxu0
        %v10017 = vadd.f32 0.0, %v10016
        %v10018 = vpop.f32.mrf.mxu0
        %v10019 = vadd.f32 0.0, %v10018
        %10020 = vmatmul.bf16.gmra.mxu0 %v9876
        %v10021 = vpop.f32.mrf.mxu0
        %v10022 = vadd.f32 0.0, %v10021
        %v10023 = vpop.f32.mrf.mxu0
        %v10024 = vadd.f32 0.0, %v10023
        %10025 = vmatmul.bf16.gmra.mxu0 %v9877
        %v10026 = vpop.f32.mrf.mxu0
        %v10027 = vadd.f32 0.0, %v10026
        %v10028 = vpop.f32.mrf.mxu0
        %v10029 = vadd.f32 0.0, %v10028
        %10030 = vdwg.mxu0
        %v10031 = vadd.f32 %v9349, %v9952
        %v10032 = vadd.f32 %v9350, %v9954
        %v10033 = vadd.f32 %v9351, %v9957
        %v10034 = vadd.f32 %v9352, %v9959
        %v10035 = vadd.f32 %v9353, %v9962
        %v10036 = vadd.f32 %v9354, %v9964
        %v10037 = vadd.f32 %v9355, %v9967
        %v10038 = vadd.f32 %v9356, %v9969
        %v10039 = vadd.f32 %v9357, %v9972
        %v10040 = vadd.f32 %v9358, %v9974
        %v10041 = vadd.f32 %v9359, %v9977
        %v10042 = vadd.f32 %v9360, %v9979
        %v10043 = vadd.f32 %v9361, %v9982
        %v10044 = vadd.f32 %v9362, %v9984
        %v10045 = vadd.f32 %v9363, %v9987
        %v10046 = vadd.f32 %v9364, %v9989
        %v10047 = vadd.f32 %v9365, %v9992
        %v10048 = vadd.f32 %v9366, %v9994
        %v10049 = vadd.f32 %v9367, %v9997
        %v10050 = vadd.f32 %v9368, %v9999
        %v10051 = vadd.f32 %v9369, %v10002
        %v10052 = vadd.f32 %v9370, %v10004
        %v10053 = vadd.f32 %v9371, %v10007
        %v10054 = vadd.f32 %v9372, %v10009
        %v10055 = vadd.f32 %v9373, %v10012
        %v10056 = vadd.f32 %v9374, %v10014
        %v10057 = vadd.f32 %v9375, %v10017
        %v10058 = vadd.f32 %v9376, %v10019
        %v10059 = vadd.f32 %v9377, %v10022
        %v10060 = vadd.f32 %v9378, %v10024
        %v10061 = vadd.f32 %v9379, %v10027
        %v10062 = vadd.f32 %v9380, %v10029
        %v10063 = vld [vmem:[%s7645] sm:$0xe]
        %v10064 = vld [vmem:[%s7645 + $0xc] sm:$0xe]
        %v10065 = vld [vmem:[%s7645 + $0x18] sm:$0xe]
        %v10066 = vld [vmem:[%s7645 + $0x24] sm:$0xe]
        %v10067 = vld [vmem:[%s7645 + $0x30] sm:$0xe]
        %v10068 = vld [vmem:[%s7645 + $0x3c] sm:$0xe]
        %v10069 = vld [vmem:[%s7645 + $0x48] sm:$0xe]
        %v10070 = vld [vmem:[%s7645 + $0x54] sm:$0xe]
        %v10071 = vld [vmem:[%s7645 + $0x60] sm:$0xe]
        %v10072 = vld [vmem:[%s7645 + $0x6c] sm:$0xe]
        %v10073 = vld [vmem:[%s7645 + $0x78] sm:$0xe]
        %v10074 = vld [vmem:[%s7645 + $0x84] sm:$0xe]
        %v10075 = vld [vmem:[%s7645 + $0x90] sm:$0xe]
        %v10076 = vld [vmem:[%s7645 + $0x9c] sm:$0xe]
        %v10077 = vld [vmem:[%s7645 + $0xa8] sm:$0xe]
        %v10078 = vld [vmem:[%s7645 + $0xb4] sm:$0xe]
        %v10127 = vrot.slane %v10063, 5
        %v10128 = vrot.slane %v10127, 4
        %v10129 = vrot.slane %v9382, 5
        %v10130 = vsel %vm1516, %v10128, %v10129
        %v10131 = vrot.slane %v10129, 4
        %v10132 = vrot.slane %v9383, 5
        %v10133 = vsel %vm1516, %v10131, %v10132
        %v10134 = vrot.slane %v10064, 5
        %v10135 = vrot.slane %v10134, 4
        %v10136 = vrot.slane %v9385, 5
        %v10137 = vsel %vm1516, %v10135, %v10136
        %v10138 = vrot.slane %v10136, 4
        %v10139 = vrot.slane %v9386, 5
        %v10140 = vsel %vm1516, %v10138, %v10139
        %v10141 = vrot.slane %v10065, 5
        %v10142 = vrot.slane %v10141, 4
        %v10143 = vrot.slane %v9388, 5
        %v10144 = vsel %vm1516, %v10142, %v10143
        %v10145 = vrot.slane %v10143, 4
        %v10146 = vrot.slane %v9389, 5
        %v10147 = vsel %vm1516, %v10145, %v10146
        %v10148 = vrot.slane %v10066, 5
        %v10149 = vrot.slane %v10148, 4
        %v10150 = vrot.slane %v9391, 5
        %v10151 = vsel %vm1516, %v10149, %v10150
        %v10152 = vrot.slane %v10150, 4
        %v10153 = vrot.slane %v9392, 5
        %v10154 = vsel %vm1516, %v10152, %v10153
        %v10155 = vrot.slane %v10067, 5
        %v10156 = vrot.slane %v10155, 4
        %v10157 = vrot.slane %v9394, 5
        %v10158 = vsel %vm1516, %v10156, %v10157
        %v10159 = vrot.slane %v10157, 4
        %v10160 = vrot.slane %v9395, 5
        %v10161 = vsel %vm1516, %v10159, %v10160
        %v10162 = vrot.slane %v10068, 5
        %v10163 = vrot.slane %v10162, 4
        %v10164 = vrot.slane %v9397, 5
        %v10165 = vsel %vm1516, %v10163, %v10164
        %v10166 = vrot.slane %v10164, 4
        %v10167 = vrot.slane %v9398, 5
        %v10168 = vsel %vm1516, %v10166, %v10167
        %v10169 = vrot.slane %v10069, 5
        %v10170 = vrot.slane %v10169, 4
        %v10171 = vrot.slane %v9400, 5
        %v10172 = vsel %vm1516, %v10170, %v10171
        %v10173 = vrot.slane %v10171, 4
        %v10174 = vrot.slane %v9401, 5
        %v10175 = vsel %vm1516, %v10173, %v10174
        %v10176 = vrot.slane %v10070, 5
        %v10177 = vrot.slane %v10176, 4
        %v10178 = vrot.slane %v9403, 5
        %v10179 = vsel %vm1516, %v10177, %v10178
        %v10180 = vrot.slane %v10178, 4
        %v10181 = vrot.slane %v9404, 5
        %v10182 = vsel %vm1516, %v10180, %v10181
        %v10183 = vrot.slane %v10071, 5
        %v10184 = vrot.slane %v10183, 4
        %v10185 = vrot.slane %v9406, 5
        %v10186 = vsel %vm1516, %v10184, %v10185
        %v10187 = vrot.slane %v10185, 4
        %v10188 = vrot.slane %v9407, 5
        %v10189 = vsel %vm1516, %v10187, %v10188
        %v10190 = vrot.slane %v10072, 5
        %v10191 = vrot.slane %v10190, 4
        %v10192 = vrot.slane %v9409, 5
        %v10193 = vsel %vm1516, %v10191, %v10192
        %v10194 = vrot.slane %v10192, 4
        %v10195 = vrot.slane %v9410, 5
        %v10196 = vsel %vm1516, %v10194, %v10195
        %v10197 = vrot.slane %v10073, 5
        %v10198 = vrot.slane %v10197, 4
        %v10199 = vrot.slane %v9412, 5
        %v10200 = vsel %vm1516, %v10198, %v10199
        %v10201 = vrot.slane %v10199, 4
        %v10202 = vrot.slane %v9413, 5
        %v10203 = vsel %vm1516, %v10201, %v10202
        %v10204 = vrot.slane %v10074, 5
        %v10205 = vrot.slane %v10204, 4
        %v10206 = vrot.slane %v9415, 5
        %v10207 = vsel %vm1516, %v10205, %v10206
        %v10208 = vrot.slane %v10206, 4
        %v10209 = vrot.slane %v9416, 5
        %v10210 = vsel %vm1516, %v10208, %v10209
        %v10211 = vrot.slane %v10075, 5
        %v10212 = vrot.slane %v10211, 4
        %v10213 = vrot.slane %v9418, 5
        %v10214 = vsel %vm1516, %v10212, %v10213
        %v10215 = vrot.slane %v10213, 4
        %v10216 = vrot.slane %v9419, 5
        %v10217 = vsel %vm1516, %v10215, %v10216
        %v10218 = vrot.slane %v10076, 5
        %v10219 = vrot.slane %v10218, 4
        %v10220 = vrot.slane %v9421, 5
        %v10221 = vsel %vm1516, %v10219, %v10220
        %v10222 = vrot.slane %v10220, 4
        %v10223 = vrot.slane %v9422, 5
        %v10224 = vsel %vm1516, %v10222, %v10223
        %v10225 = vrot.slane %v10077, 5
        %v10226 = vrot.slane %v10225, 4
        %v10227 = vrot.slane %v9424, 5
        %v10228 = vsel %vm1516, %v10226, %v10227
        %v10229 = vrot.slane %v10227, 4
        %v10230 = vrot.slane %v9425, 5
        %v10231 = vsel %vm1516, %v10229, %v10230
        %v10232 = vrot.slane %v10078, 5
        %v10233 = vrot.slane %v10232, 4
        %v10234 = vrot.slane %v9427, 5
        %v10235 = vsel %vm1516, %v10233, %v10234
        %v10236 = vrot.slane %v10234, 4
        %v10237 = vrot.slane %v9428, 5
        %v10238 = vsel %vm1516, %v10236, %v10237
        %s10239 = scalar_lea.vmem [#allocation20], 320
        %v10240 = vld [vmem:[%s10239] sm:$0xf]
        %v10241 = vld [vmem:[%s10239 + $0x4] sm:$0xf]
        %v10242 = vld [vmem:[%s10239 + $0x8] sm:$0xf]
        %v10243 = vld [vmem:[%s10239 + $0xc] sm:$0xf]
        %v10244 = vld [vmem:[%s10239 + $0x10] sm:$0xf]
        %v10245 = vld [vmem:[%s10239 + $0x14] sm:$0xf]
        %v10246 = vld [vmem:[%s10239 + $0x18] sm:$0xf]
        %v10247 = vld [vmem:[%s10239 + $0x1c] sm:$0xf]
        %v10248 = vld [vmem:[%s10239 + $0x20] sm:$0xf]
        %v10249 = vld [vmem:[%s10239 + $0x24] sm:$0xf]
        %v10250 = vld [vmem:[%s10239 + $0x28] sm:$0xf]
        %v10251 = vld [vmem:[%s10239 + $0x2c] sm:$0xf]
        %v10252 = vld [vmem:[%s10239 + $0x30] sm:$0xf]
        %v10253 = vld [vmem:[%s10239 + $0x34] sm:$0xf]
        %v10254 = vld [vmem:[%s10239 + $0x38] sm:$0xf]
        %v10255 = vld [vmem:[%s10239 + $0x3c] sm:$0xf]
        %v10256 = vunpack.c.l.b16 %v10130
        %v10257 = vunpack.c.l.b16 %v10133
        %v10258 = vunpack.c.l.b16 %v10137
        %v10259 = vunpack.c.l.b16 %v10140
        %v10260 = vunpack.c.l.b16 %v10144
        %v10261 = vunpack.c.l.b16 %v10147
        %v10262 = vunpack.c.l.b16 %v10151
        %v10263 = vunpack.c.l.b16 %v10154
        %v10264 = vunpack.c.l.b16 %v10158
        %v10265 = vunpack.c.l.b16 %v10161
        %v10266 = vunpack.c.l.b16 %v10165
        %v10267 = vunpack.c.l.b16 %v10168
        %v10268 = vunpack.c.l.b16 %v10172
        %v10269 = vunpack.c.l.b16 %v10175
        %v10270 = vunpack.c.l.b16 %v10179
        %v10271 = vunpack.c.l.b16 %v10182
        %v10272 = vunpack.c.l.b16 %v10186
        %v10273 = vunpack.c.l.b16 %v10189
        %v10274 = vunpack.c.l.b16 %v10193
        %v10275 = vunpack.c.l.b16 %v10196
        %v10276 = vunpack.c.l.b16 %v10200
        %v10277 = vunpack.c.l.b16 %v10203
        %v10278 = vunpack.c.l.b16 %v10207
        %v10279 = vunpack.c.l.b16 %v10210
        %v10280 = vunpack.c.l.b16 %v10214
        %v10281 = vunpack.c.l.b16 %v10217
        %v10282 = vunpack.c.l.b16 %v10221
        %v10283 = vunpack.c.l.b16 %v10224
        %v10284 = vunpack.c.l.b16 %v10228
        %v10285 = vunpack.c.l.b16 %v10231
        %v10286 = vunpack.c.l.b16 %v10235
        %v10287 = vunpack.c.l.b16 %v10238
        %v10288 = vpack.c.b16 %v10257, %v10256
        %v10289 = vpack.c.b16 %v10259, %v10258
        %v10290 = vpack.c.b16 %v10261, %v10260
        %v10291 = vpack.c.b16 %v10263, %v10262
        %v10292 = vpack.c.b16 %v10265, %v10264
        %v10293 = vpack.c.b16 %v10267, %v10266
        %v10294 = vpack.c.b16 %v10269, %v10268
        %v10295 = vpack.c.b16 %v10271, %v10270
        %v10296 = vpack.c.b16 %v10273, %v10272
        %v10297 = vpack.c.b16 %v10275, %v10274
        %v10298 = vpack.c.b16 %v10277, %v10276
        %v10299 = vpack.c.b16 %v10279, %v10278
        %v10300 = vpack.c.b16 %v10281, %v10280
        %v10301 = vpack.c.b16 %v10283, %v10282
        %v10302 = vpack.c.b16 %v10285, %v10284
        %v10303 = vpack.c.b16 %v10287, %v10286
        %v10336 = vunpack.c.l.b16 %v10240
        %v10337 = vunpack.c.l.b16 %v10241
        %v10338 = vunpack.c.l.b16 %v10242
        %v10339 = vunpack.c.l.b16 %v10243
        %v10340 = vunpack.c.l.b16 %v10244
        %v10341 = vunpack.c.l.b16 %v10245
        %v10342 = vunpack.c.l.b16 %v10246
        %v10343 = vunpack.c.l.b16 %v10247
        %v10344 = vunpack.c.l.b16 %v10248
        %v10345 = vunpack.c.l.b16 %v10249
        %v10346 = vunpack.c.l.b16 %v10250
        %v10347 = vunpack.c.l.b16 %v10251
        %v10348 = vunpack.c.l.b16 %v10252
        %v10349 = vunpack.c.l.b16 %v10253
        %v10350 = vunpack.c.l.b16 %v10254
        %v10351 = vunpack.c.l.b16 %v10255
        %v10352 = vpack.c.b16 %v10337, %v10336
        %v10353 = vpack.c.b16 %v10339, %v10338
        %v10354 = vpack.c.b16 %v10341, %v10340
        %v10355 = vpack.c.b16 %v10343, %v10342
        %v10356 = vpack.c.b16 %v10345, %v10344
        %v10357 = vpack.c.b16 %v10347, %v10346
        %v10358 = vpack.c.b16 %v10349, %v10348
        %v10359 = vpack.c.b16 %v10351, %v10350
        %10368 = vmatpush.bf16.msra.mxu0 %v10359
        %10369 = vmatpush.bf16.msra.mxu0 %v10358
        %10370 = vmatpush.bf16.msra.mxu0 %v10357
        %10371 = vmatpush.bf16.msra.mxu0 %v10356
        %10372 = vmatpush.bf16.msra.mxu0 %v10355
        %10373 = vmatpush.bf16.msra.mxu0 %v10354
        %10374 = vmatpush.bf16.msra.mxu0 %v10353
        %10375 = vmatpush.bf16.msra.mxu0 %v10352
        %10376 = vmatmul.bf16.gmra.mxu0 %v10288
        %v10377 = vpop.f32.mrf.mxu0
        %v10378 = vadd.f32 0.0, %v10377
        %v10379 = vpop.f32.mrf.mxu0
        %v10380 = vadd.f32 0.0, %v10379
        %10381 = vmatmul.bf16.gmra.mxu0 %v10289
        %v10382 = vpop.f32.mrf.mxu0
        %v10383 = vadd.f32 0.0, %v10382
        %v10384 = vpop.f32.mrf.mxu0
        %v10385 = vadd.f32 0.0, %v10384
        %10386 = vmatmul.bf16.gmra.mxu0 %v10290
        %v10387 = vpop.f32.mrf.mxu0
        %v10388 = vadd.f32 0.0, %v10387
        %v10389 = vpop.f32.mrf.mxu0
        %v10390 = vadd.f32 0.0, %v10389
        %10391 = vmatmul.bf16.gmra.mxu0 %v10291
        %v10392 = vpop.f32.mrf.mxu0
        %v10393 = vadd.f32 0.0, %v10392
        %v10394 = vpop.f32.mrf.mxu0
        %v10395 = vadd.f32 0.0, %v10394
        %10396 = vmatmul.bf16.gmra.mxu0 %v10292
        %v10397 = vpop.f32.mrf.mxu0
        %v10398 = vadd.f32 0.0, %v10397
        %v10399 = vpop.f32.mrf.mxu0
        %v10400 = vadd.f32 0.0, %v10399
        %10401 = vmatmul.bf16.gmra.mxu0 %v10293
        %v10402 = vpop.f32.mrf.mxu0
        %v10403 = vadd.f32 0.0, %v10402
        %v10404 = vpop.f32.mrf.mxu0
        %v10405 = vadd.f32 0.0, %v10404
        %10406 = vmatmul.bf16.gmra.mxu0 %v10294
        %v10407 = vpop.f32.mrf.mxu0
        %v10408 = vadd.f32 0.0, %v10407
        %v10409 = vpop.f32.mrf.mxu0
        %v10410 = vadd.f32 0.0, %v10409
        %10411 = vmatmul.bf16.gmra.mxu0 %v10295
        %v10412 = vpop.f32.mrf.mxu0
        %v10413 = vadd.f32 0.0, %v10412
        %v10414 = vpop.f32.mrf.mxu0
        %v10415 = vadd.f32 0.0, %v10414
        %10416 = vmatmul.bf16.gmra.mxu0 %v10296
        %v10417 = vpop.f32.mrf.mxu0
        %v10418 = vadd.f32 0.0, %v10417
        %v10419 = vpop.f32.mrf.mxu0
        %v10420 = vadd.f32 0.0, %v10419
        %10421 = vmatmul.bf16.gmra.mxu0 %v10297
        %v10422 = vpop.f32.mrf.mxu0
        %v10423 = vadd.f32 0.0, %v10422
        %v10424 = vpop.f32.mrf.mxu0
        %v10425 = vadd.f32 0.0, %v10424
        %10426 = vmatmul.bf16.gmra.mxu0 %v10298
        %v10427 = vpop.f32.mrf.mxu0
        %v10428 = vadd.f32 0.0, %v10427
        %v10429 = vpop.f32.mrf.mxu0
        %v10430 = vadd.f32 0.0, %v10429
        %10431 = vmatmul.bf16.gmra.mxu0 %v10299
        %v10432 = vpop.f32.mrf.mxu0
        %v10433 = vadd.f32 0.0, %v10432
        %v10434 = vpop.f32.mrf.mxu0
        %v10435 = vadd.f32 0.0, %v10434
        %10436 = vmatmul.bf16.gmra.mxu0 %v10300
        %v10437 = vpop.f32.mrf.mxu0
        %v10438 = vadd.f32 0.0, %v10437
        %v10439 = vpop.f32.mrf.mxu0
        %v10440 = vadd.f32 0.0, %v10439
        %10441 = vmatmul.bf16.gmra.mxu0 %v10301
        %v10442 = vpop.f32.mrf.mxu0
        %v10443 = vadd.f32 0.0, %v10442
        %v10444 = vpop.f32.mrf.mxu0
        %v10445 = vadd.f32 0.0, %v10444
        %10446 = vmatmul.bf16.gmra.mxu0 %v10302
        %v10447 = vpop.f32.mrf.mxu0
        %v10448 = vadd.f32 0.0, %v10447
        %v10449 = vpop.f32.mrf.mxu0
        %v10450 = vadd.f32 0.0, %v10449
        %10451 = vmatmul.bf16.gmra.mxu0 %v10303
        %v10452 = vpop.f32.mrf.mxu0
        %v10453 = vadd.f32 0.0, %v10452
        %v10454 = vpop.f32.mrf.mxu0
        %v10455 = vadd.f32 0.0, %v10454
        %10456 = vdwg.mxu0
        %v10457 = vadd.f32 %v10031, %v10378
        %v10458 = vadd.f32 %v10032, %v10380
        %v10459 = vadd.f32 %v10033, %v10383
        %v10460 = vadd.f32 %v10034, %v10385
        %v10461 = vadd.f32 %v10035, %v10388
        %v10462 = vadd.f32 %v10036, %v10390
        %v10463 = vadd.f32 %v10037, %v10393
        %v10464 = vadd.f32 %v10038, %v10395
        %v10465 = vadd.f32 %v10039, %v10398
        %v10466 = vadd.f32 %v10040, %v10400
        %v10467 = vadd.f32 %v10041, %v10403
        %v10468 = vadd.f32 %v10042, %v10405
        %v10469 = vadd.f32 %v10043, %v10408
        %v10470 = vadd.f32 %v10044, %v10410
        %v10471 = vadd.f32 %v10045, %v10413
        %v10472 = vadd.f32 %v10046, %v10415
        %v10473 = vadd.f32 %v10047, %v10418
        %v10474 = vadd.f32 %v10048, %v10420
        %v10475 = vadd.f32 %v10049, %v10423
        %v10476 = vadd.f32 %v10050, %v10425
        %v10477 = vadd.f32 %v10051, %v10428
        %v10478 = vadd.f32 %v10052, %v10430
        %v10479 = vadd.f32 %v10053, %v10433
        %v10480 = vadd.f32 %v10054, %v10435
        %v10481 = vadd.f32 %v10055, %v10438
        %v10482 = vadd.f32 %v10056, %v10440
        %v10483 = vadd.f32 %v10057, %v10443
        %v10484 = vadd.f32 %v10058, %v10445
        %v10485 = vadd.f32 %v10059, %v10448
        %v10486 = vadd.f32 %v10060, %v10450
        %v10487 = vadd.f32 %v10061, %v10453
        %v10488 = vadd.f32 %v10062, %v10455
        %s10489 = scalar_lea.vmem [#allocation5], 24
        %v10490 = vld [vmem:[%s10489] sm:$0xf]
        %v10491 = vld [vmem:[%s10489 + $0x4] sm:$0xf]
        %v10492 = vld [vmem:[%s10489 + $0xc] sm:$0xf]
        %v10493 = vld [vmem:[%s10489 + $0x10] sm:$0xf]
        %v10494 = vld [vmem:[%s10489 + $0x18] sm:$0xf]
        %v10495 = vld [vmem:[%s10489 + $0x1c] sm:$0xf]
        %v10496 = vld [vmem:[%s10489 + $0x24] sm:$0xf]
        %v10497 = vld [vmem:[%s10489 + $0x28] sm:$0xf]
        %v10498 = vld [vmem:[%s10489 + $0x30] sm:$0xf]
        %v10499 = vld [vmem:[%s10489 + $0x34] sm:$0xf]
        %v10500 = vld [vmem:[%s10489 + $0x3c] sm:$0xf]
        %v10501 = vld [vmem:[%s10489 + $0x40] sm:$0xf]
        %v10502 = vld [vmem:[%s10489 + $0x48] sm:$0xf]
        %v10503 = vld [vmem:[%s10489 + $0x4c] sm:$0xf]
        %v10504 = vld [vmem:[%s10489 + $0x54] sm:$0xf]
        %v10505 = vld [vmem:[%s10489 + $0x58] sm:$0xf]
        %v10506 = vld [vmem:[%s10489 + $0x60] sm:$0xf]
        %v10507 = vld [vmem:[%s10489 + $0x64] sm:$0xf]
        %v10508 = vld [vmem:[%s10489 + $0x6c] sm:$0xf]
        %v10509 = vld [vmem:[%s10489 + $0x70] sm:$0xf]
        %v10510 = vld [vmem:[%s10489 + $0x78] sm:$0xf]
        %v10511 = vld [vmem:[%s10489 + $0x7c] sm:$0xf]
        %v10512 = vld [vmem:[%s10489 + $0x84] sm:$0xf]
        %v10513 = vld [vmem:[%s10489 + $0x88] sm:$0xf]
        %v10514 = vld [vmem:[%s10489 + $0x90] sm:$0xf]
        %v10515 = vld [vmem:[%s10489 + $0x94] sm:$0xf]
        %v10516 = vld [vmem:[%s10489 + $0x9c] sm:$0xf]
        %v10517 = vld [vmem:[%s10489 + $0xa0] sm:$0xf]
        %v10518 = vld [vmem:[%s10489 + $0xa8] sm:$0xf]
        %v10519 = vld [vmem:[%s10489 + $0xac] sm:$0xf]
        %v10520 = vld [vmem:[%s10489 + $0xb4] sm:$0xf]
        %v10521 = vld [vmem:[%s10489 + $0xb8] sm:$0xf]
        %s10522 = scalar_lea.vmem [#allocation20], 384
        %v10523 = vld [vmem:[%s10522] sm:$0xf]
        %v10524 = vld [vmem:[%s10522 + $0x4] sm:$0xf]
        %v10525 = vld [vmem:[%s10522 + $0x8] sm:$0xf]
        %v10526 = vld [vmem:[%s10522 + $0xc] sm:$0xf]
        %v10527 = vld [vmem:[%s10522 + $0x10] sm:$0xf]
        %v10528 = vld [vmem:[%s10522 + $0x14] sm:$0xf]
        %v10529 = vld [vmem:[%s10522 + $0x18] sm:$0xf]
        %v10530 = vld [vmem:[%s10522 + $0x1c] sm:$0xf]
        %v10531 = vld [vmem:[%s10522 + $0x20] sm:$0xf]
        %v10532 = vld [vmem:[%s10522 + $0x24] sm:$0xf]
        %v10533 = vld [vmem:[%s10522 + $0x28] sm:$0xf]
        %v10534 = vld [vmem:[%s10522 + $0x2c] sm:$0xf]
        %v10535 = vld [vmem:[%s10522 + $0x30] sm:$0xf]
        %v10536 = vld [vmem:[%s10522 + $0x34] sm:$0xf]
        %v10537 = vld [vmem:[%s10522 + $0x38] sm:$0xf]
        %v10538 = vld [vmem:[%s10522 + $0x3c] sm:$0xf]
        %v10571 = vunpack.c.l.b16 %v10490
        %v10572 = vunpack.c.l.b16 %v10491
        %v10573 = vunpack.c.l.b16 %v10492
        %v10574 = vunpack.c.l.b16 %v10493
        %v10575 = vunpack.c.l.b16 %v10494
        %v10576 = vunpack.c.l.b16 %v10495
        %v10577 = vunpack.c.l.b16 %v10496
        %v10578 = vunpack.c.l.b16 %v10497
        %v10579 = vunpack.c.l.b16 %v10498
        %v10580 = vunpack.c.l.b16 %v10499
        %v10581 = vunpack.c.l.b16 %v10500
        %v10582 = vunpack.c.l.b16 %v10501
        %v10583 = vunpack.c.l.b16 %v10502
        %v10584 = vunpack.c.l.b16 %v10503
        %v10585 = vunpack.c.l.b16 %v10504
        %v10586 = vunpack.c.l.b16 %v10505
        %v10587 = vunpack.c.l.b16 %v10506
        %v10588 = vunpack.c.l.b16 %v10507
        %v10589 = vunpack.c.l.b16 %v10508
        %v10590 = vunpack.c.l.b16 %v10509
        %v10591 = vunpack.c.l.b16 %v10510
        %v10592 = vunpack.c.l.b16 %v10511
        %v10593 = vunpack.c.l.b16 %v10512
        %v10594 = vunpack.c.l.b16 %v10513
        %v10595 = vunpack.c.l.b16 %v10514
        %v10596 = vunpack.c.l.b16 %v10515
        %v10597 = vunpack.c.l.b16 %v10516
        %v10598 = vunpack.c.l.b16 %v10517
        %v10599 = vunpack.c.l.b16 %v10518
        %v10600 = vunpack.c.l.b16 %v10519
        %v10601 = vunpack.c.l.b16 %v10520
        %v10602 = vunpack.c.l.b16 %v10521
        %v10603 = vpack.c.b16 %v10572, %v10571
        %v10604 = vpack.c.b16 %v10574, %v10573
        %v10605 = vpack.c.b16 %v10576, %v10575
        %v10606 = vpack.c.b16 %v10578, %v10577
        %v10607 = vpack.c.b16 %v10580, %v10579
        %v10608 = vpack.c.b16 %v10582, %v10581
        %v10609 = vpack.c.b16 %v10584, %v10583
        %v10610 = vpack.c.b16 %v10586, %v10585
        %v10611 = vpack.c.b16 %v10588, %v10587
        %v10612 = vpack.c.b16 %v10590, %v10589
        %v10613 = vpack.c.b16 %v10592, %v10591
        %v10614 = vpack.c.b16 %v10594, %v10593
        %v10615 = vpack.c.b16 %v10596, %v10595
        %v10616 = vpack.c.b16 %v10598, %v10597
        %v10617 = vpack.c.b16 %v10600, %v10599
        %v10618 = vpack.c.b16 %v10602, %v10601
        %v10651 = vunpack.c.l.b16 %v10523
        %v10652 = vunpack.c.l.b16 %v10524
        %v10653 = vunpack.c.l.b16 %v10525
        %v10654 = vunpack.c.l.b16 %v10526
        %v10655 = vunpack.c.l.b16 %v10527
        %v10656 = vunpack.c.l.b16 %v10528
        %v10657 = vunpack.c.l.b16 %v10529
        %v10658 = vunpack.c.l.b16 %v10530
        %v10659 = vunpack.c.l.b16 %v10531
        %v10660 = vunpack.c.l.b16 %v10532
        %v10661 = vunpack.c.l.b16 %v10533
        %v10662 = vunpack.c.l.b16 %v10534
        %v10663 = vunpack.c.l.b16 %v10535
        %v10664 = vunpack.c.l.b16 %v10536
        %v10665 = vunpack.c.l.b16 %v10537
        %v10666 = vunpack.c.l.b16 %v10538
        %v10667 = vpack.c.b16 %v10652, %v10651
        %v10668 = vpack.c.b16 %v10654, %v10653
        %v10669 = vpack.c.b16 %v10656, %v10655
        %v10670 = vpack.c.b16 %v10658, %v10657
        %v10671 = vpack.c.b16 %v10660, %v10659
        %v10672 = vpack.c.b16 %v10662, %v10661
        %v10673 = vpack.c.b16 %v10664, %v10663
        %v10674 = vpack.c.b16 %v10666, %v10665
        %10683 = vmatpush.bf16.msra.mxu0 %v10674
        %10684 = vmatpush.bf16.msra.mxu0 %v10673
        %10685 = vmatpush.bf16.msra.mxu0 %v10672
        %10686 = vmatpush.bf16.msra.mxu0 %v10671
        %10687 = vmatpush.bf16.msra.mxu0 %v10670
        %10688 = vmatpush.bf16.msra.mxu0 %v10669
        %10689 = vmatpush.bf16.msra.mxu0 %v10668
        %10690 = vmatpush.bf16.msra.mxu0 %v10667
        %10691 = vmatmul.bf16.gmra.mxu0 %v10603
        %v10692 = vpop.f32.mrf.mxu0
        %v10693 = vadd.f32 0.0, %v10692
        %v10694 = vpop.f32.mrf.mxu0
        %v10695 = vadd.f32 0.0, %v10694
        %10696 = vmatmul.bf16.gmra.mxu0 %v10604
        %v10697 = vpop.f32.mrf.mxu0
        %v10698 = vadd.f32 0.0, %v10697
        %v10699 = vpop.f32.mrf.mxu0
        %v10700 = vadd.f32 0.0, %v10699
        %10701 = vmatmul.bf16.gmra.mxu0 %v10605
        %v10702 = vpop.f32.mrf.mxu0
        %v10703 = vadd.f32 0.0, %v10702
        %v10704 = vpop.f32.mrf.mxu0
        %v10705 = vadd.f32 0.0, %v10704
        %10706 = vmatmul.bf16.gmra.mxu0 %v10606
        %v10707 = vpop.f32.mrf.mxu0
        %v10708 = vadd.f32 0.0, %v10707
        %v10709 = vpop.f32.mrf.mxu0
        %v10710 = vadd.f32 0.0, %v10709
        %10711 = vmatmul.bf16.gmra.mxu0 %v10607
        %v10712 = vpop.f32.mrf.mxu0
        %v10713 = vadd.f32 0.0, %v10712
        %v10714 = vpop.f32.mrf.mxu0
        %v10715 = vadd.f32 0.0, %v10714
        %10716 = vmatmul.bf16.gmra.mxu0 %v10608
        %v10717 = vpop.f32.mrf.mxu0
        %v10718 = vadd.f32 0.0, %v10717
        %v10719 = vpop.f32.mrf.mxu0
        %v10720 = vadd.f32 0.0, %v10719
        %10721 = vmatmul.bf16.gmra.mxu0 %v10609
        %v10722 = vpop.f32.mrf.mxu0
        %v10723 = vadd.f32 0.0, %v10722
        %v10724 = vpop.f32.mrf.mxu0
        %v10725 = vadd.f32 0.0, %v10724
        %10726 = vmatmul.bf16.gmra.mxu0 %v10610
        %v10727 = vpop.f32.mrf.mxu0
        %v10728 = vadd.f32 0.0, %v10727
        %v10729 = vpop.f32.mrf.mxu0
        %v10730 = vadd.f32 0.0, %v10729
        %10731 = vmatmul.bf16.gmra.mxu0 %v10611
        %v10732 = vpop.f32.mrf.mxu0
        %v10733 = vadd.f32 0.0, %v10732
        %v10734 = vpop.f32.mrf.mxu0
        %v10735 = vadd.f32 0.0, %v10734
        %10736 = vmatmul.bf16.gmra.mxu0 %v10612
        %v10737 = vpop.f32.mrf.mxu0
        %v10738 = vadd.f32 0.0, %v10737
        %v10739 = vpop.f32.mrf.mxu0
        %v10740 = vadd.f32 0.0, %v10739
        %10741 = vmatmul.bf16.gmra.mxu0 %v10613
        %v10742 = vpop.f32.mrf.mxu0
        %v10743 = vadd.f32 0.0, %v10742
        %v10744 = vpop.f32.mrf.mxu0
        %v10745 = vadd.f32 0.0, %v10744
        %10746 = vmatmul.bf16.gmra.mxu0 %v10614
        %v10747 = vpop.f32.mrf.mxu0
        %v10748 = vadd.f32 0.0, %v10747
        %v10749 = vpop.f32.mrf.mxu0
        %v10750 = vadd.f32 0.0, %v10749
        %10751 = vmatmul.bf16.gmra.mxu0 %v10615
        %v10752 = vpop.f32.mrf.mxu0
        %v10753 = vadd.f32 0.0, %v10752
        %v10754 = vpop.f32.mrf.mxu0
        %v10755 = vadd.f32 0.0, %v10754
        %10756 = vmatmul.bf16.gmra.mxu0 %v10616
        %v10757 = vpop.f32.mrf.mxu0
        %v10758 = vadd.f32 0.0, %v10757
        %v10759 = vpop.f32.mrf.mxu0
        %v10760 = vadd.f32 0.0, %v10759
        %10761 = vmatmul.bf16.gmra.mxu0 %v10617
        %v10762 = vpop.f32.mrf.mxu0
        %v10763 = vadd.f32 0.0, %v10762
        %v10764 = vpop.f32.mrf.mxu0
        %v10765 = vadd.f32 0.0, %v10764
        %10766 = vmatmul.bf16.gmra.mxu0 %v10618
        %v10767 = vpop.f32.mrf.mxu0
        %v10768 = vadd.f32 0.0, %v10767
        %v10769 = vpop.f32.mrf.mxu0
        %v10770 = vadd.f32 0.0, %v10769
        %10771 = vdwg.mxu0
        %v10772 = vadd.f32 %v10457, %v10693
        %v10773 = vadd.f32 %v10458, %v10695
        %v10774 = vadd.f32 %v10459, %v10698
        %v10775 = vadd.f32 %v10460, %v10700
        %v10776 = vadd.f32 %v10461, %v10703
        %v10777 = vadd.f32 %v10462, %v10705
        %v10778 = vadd.f32 %v10463, %v10708
        %v10779 = vadd.f32 %v10464, %v10710
        %v10780 = vadd.f32 %v10465, %v10713
        %v10781 = vadd.f32 %v10466, %v10715
        %v10782 = vadd.f32 %v10467, %v10718
        %v10783 = vadd.f32 %v10468, %v10720
        %v10784 = vadd.f32 %v10469, %v10723
        %v10785 = vadd.f32 %v10470, %v10725
        %v10786 = vadd.f32 %v10471, %v10728
        %v10787 = vadd.f32 %v10472, %v10730
        %v10788 = vadd.f32 %v10473, %v10733
        %v10789 = vadd.f32 %v10474, %v10735
        %v10790 = vadd.f32 %v10475, %v10738
        %v10791 = vadd.f32 %v10476, %v10740
        %v10792 = vadd.f32 %v10477, %v10743
        %v10793 = vadd.f32 %v10478, %v10745
        %v10794 = vadd.f32 %v10479, %v10748
        %v10795 = vadd.f32 %v10480, %v10750
        %v10796 = vadd.f32 %v10481, %v10753
        %v10797 = vadd.f32 %v10482, %v10755
        %v10798 = vadd.f32 %v10483, %v10758
        %v10799 = vadd.f32 %v10484, %v10760
        %v10800 = vadd.f32 %v10485, %v10763
        %v10801 = vadd.f32 %v10486, %v10765
        %v10802 = vadd.f32 %v10487, %v10768
        %v10803 = vadd.f32 %v10488, %v10770
        %v10804 = vld [vmem:[%s10489] sm:$0xf]
        %v10805 = vld [vmem:[%s10489 + $0x4] sm:$0xf]
        %v10806 = vld [vmem:[%s10489 + $0x8] sm:$0x1]
        %v10807 = vld [vmem:[%s10489 + $0xc] sm:$0xf]
        %v10808 = vld [vmem:[%s10489 + $0x10] sm:$0xf]
        %v10809 = vld [vmem:[%s10489 + $0x14] sm:$0x1]
        %v10810 = vld [vmem:[%s10489 + $0x18] sm:$0xf]
        %v10811 = vld [vmem:[%s10489 + $0x1c] sm:$0xf]
        %v10812 = vld [vmem:[%s10489 + $0x20] sm:$0x1]
        %v10813 = vld [vmem:[%s10489 + $0x24] sm:$0xf]
        %v10814 = vld [vmem:[%s10489 + $0x28] sm:$0xf]
        %v10815 = vld [vmem:[%s10489 + $0x2c] sm:$0x1]
        %v10816 = vld [vmem:[%s10489 + $0x30] sm:$0xf]
        %v10817 = vld [vmem:[%s10489 + $0x34] sm:$0xf]
        %v10818 = vld [vmem:[%s10489 + $0x38] sm:$0x1]
        %v10819 = vld [vmem:[%s10489 + $0x3c] sm:$0xf]
        %v10820 = vld [vmem:[%s10489 + $0x40] sm:$0xf]
        %v10821 = vld [vmem:[%s10489 + $0x44] sm:$0x1]
        %v10822 = vld [vmem:[%s10489 + $0x48] sm:$0xf]
        %v10823 = vld [vmem:[%s10489 + $0x4c] sm:$0xf]
        %v10824 = vld [vmem:[%s10489 + $0x50] sm:$0x1]
        %v10825 = vld [vmem:[%s10489 + $0x54] sm:$0xf]
        %v10826 = vld [vmem:[%s10489 + $0x58] sm:$0xf]
        %v10827 = vld [vmem:[%s10489 + $0x5c] sm:$0x1]
        %v10828 = vld [vmem:[%s10489 + $0x60] sm:$0xf]
        %v10829 = vld [vmem:[%s10489 + $0x64] sm:$0xf]
        %v10830 = vld [vmem:[%s10489 + $0x68] sm:$0x1]
        %v10831 = vld [vmem:[%s10489 + $0x6c] sm:$0xf]
        %v10832 = vld [vmem:[%s10489 + $0x70] sm:$0xf]
        %v10833 = vld [vmem:[%s10489 + $0x74] sm:$0x1]
        %v10834 = vld [vmem:[%s10489 + $0x78] sm:$0xf]
        %v10835 = vld [vmem:[%s10489 + $0x7c] sm:$0xf]
        %v10836 = vld [vmem:[%s10489 + $0x80] sm:$0x1]
        %v10837 = vld [vmem:[%s10489 + $0x84] sm:$0xf]
        %v10838 = vld [vmem:[%s10489 + $0x88] sm:$0xf]
        %v10839 = vld [vmem:[%s10489 + $0x8c] sm:$0x1]
        %v10840 = vld [vmem:[%s10489 + $0x90] sm:$0xf]
        %v10841 = vld [vmem:[%s10489 + $0x94] sm:$0xf]
        %v10842 = vld [vmem:[%s10489 + $0x98] sm:$0x1]
        %v10843 = vld [vmem:[%s10489 + $0x9c] sm:$0xf]
        %v10844 = vld [vmem:[%s10489 + $0xa0] sm:$0xf]
        %v10845 = vld [vmem:[%s10489 + $0xa4] sm:$0x1]
        %v10846 = vld [vmem:[%s10489 + $0xa8] sm:$0xf]
        %v10847 = vld [vmem:[%s10489 + $0xac] sm:$0xf]
        %v10848 = vld [vmem:[%s10489 + $0xb0] sm:$0x1]
        %v10849 = vld [vmem:[%s10489 + $0xb4] sm:$0xf]
        %v10850 = vld [vmem:[%s10489 + $0xb8] sm:$0xf]
        %v10851 = vld [vmem:[%s10489 + $0xbc] sm:$0x1]
        %v10853 = vshrl.u32 %v10804, 16
        %v10855 = vrot.slane %v10853, 4
        %v10856 = vshll.u32 %v10804, 16
        %v10858 = vrot.slane %v10856, 5
        %v10859 = vor.u32 %v10855, %v10858
        %v10860 = vrot.slane %v10859, 4
        %v10862 = vshll.u32 %v10805, 16
        %v10864 = vrot.slane %v10862, 5
        %v10865 = vsel %vm1166, %v10860, %v10864
        %v10866 = vshrl.u32 %v10805, 16
        %v10868 = vrot.slane %v10866, 4
        %v10869 = vor.u32 %v10868, %v10864
        %v10870 = vrot.slane %v10869, 4
        %v10872 = vshll.u32 %v10806, 16
        %v10874 = vrot.slane %v10872, 5
        %v10875 = vsel %vm1166, %v10870, %v10874
        %v10877 = vshrl.u32 %v10807, 16
        %v10879 = vrot.slane %v10877, 4
        %v10880 = vshll.u32 %v10807, 16
        %v10882 = vrot.slane %v10880, 5
        %v10883 = vor.u32 %v10879, %v10882
        %v10884 = vrot.slane %v10883, 4
        %v10886 = vshll.u32 %v10808, 16
        %v10888 = vrot.slane %v10886, 5
        %v10889 = vsel %vm1166, %v10884, %v10888
        %v10890 = vshrl.u32 %v10808, 16
        %v10892 = vrot.slane %v10890, 4
        %v10893 = vor.u32 %v10892, %v10888
        %v10894 = vrot.slane %v10893, 4
        %v10896 = vshll.u32 %v10809, 16
        %v10898 = vrot.slane %v10896, 5
        %v10899 = vsel %vm1166, %v10894, %v10898
        %v10901 = vshrl.u32 %v10810, 16
        %v10903 = vrot.slane %v10901, 4
        %v10904 = vshll.u32 %v10810, 16
        %v10906 = vrot.slane %v10904, 5
        %v10907 = vor.u32 %v10903, %v10906
        %v10908 = vrot.slane %v10907, 4
        %v10910 = vshll.u32 %v10811, 16
        %v10912 = vrot.slane %v10910, 5
        %v10913 = vsel %vm1166, %v10908, %v10912
        %v10914 = vshrl.u32 %v10811, 16
        %v10916 = vrot.slane %v10914, 4
        %v10917 = vor.u32 %v10916, %v10912
        %v10918 = vrot.slane %v10917, 4
        %v10920 = vshll.u32 %v10812, 16
        %v10922 = vrot.slane %v10920, 5
        %v10923 = vsel %vm1166, %v10918, %v10922
        %v10925 = vshrl.u32 %v10813, 16
        %v10927 = vrot.slane %v10925, 4
        %v10928 = vshll.u32 %v10813, 16
        %v10930 = vrot.slane %v10928, 5
        %v10931 = vor.u32 %v10927, %v10930
        %v10932 = vrot.slane %v10931, 4
        %v10934 = vshll.u32 %v10814, 16
        %v10936 = vrot.slane %v10934, 5
        %v10937 = vsel %vm1166, %v10932, %v10936
        %v10938 = vshrl.u32 %v10814, 16
        %v10940 = vrot.slane %v10938, 4
        %v10941 = vor.u32 %v10940, %v10936
        %v10942 = vrot.slane %v10941, 4
        %v10944 = vshll.u32 %v10815, 16
        %v10946 = vrot.slane %v10944, 5
        %v10947 = vsel %vm1166, %v10942, %v10946
        %v10949 = vshrl.u32 %v10816, 16
        %v10951 = vrot.slane %v10949, 4
        %v10952 = vshll.u32 %v10816, 16
        %v10954 = vrot.slane %v10952, 5
        %v10955 = vor.u32 %v10951, %v10954
        %v10956 = vrot.slane %v10955, 4
        %v10958 = vshll.u32 %v10817, 16
        %v10960 = vrot.slane %v10958, 5
        %v10961 = vsel %vm1166, %v10956, %v10960
        %v10962 = vshrl.u32 %v10817, 16
        %v10964 = vrot.slane %v10962, 4
        %v10965 = vor.u32 %v10964, %v10960
        %v10966 = vrot.slane %v10965, 4
        %v10968 = vshll.u32 %v10818, 16
        %v10970 = vrot.slane %v10968, 5
        %v10971 = vsel %vm1166, %v10966, %v10970
        %v10973 = vshrl.u32 %v10819, 16
        %v10975 = vrot.slane %v10973, 4
        %v10976 = vshll.u32 %v10819, 16
        %v10978 = vrot.slane %v10976, 5
        %v10979 = vor.u32 %v10975, %v10978
        %v10980 = vrot.slane %v10979, 4
        %v10982 = vshll.u32 %v10820, 16
        %v10984 = vrot.slane %v10982, 5
        %v10985 = vsel %vm1166, %v10980, %v10984
        %v10986 = vshrl.u32 %v10820, 16
        %v10988 = vrot.slane %v10986, 4
        %v10989 = vor.u32 %v10988, %v10984
        %v10990 = vrot.slane %v10989, 4
        %v10992 = vshll.u32 %v10821, 16
        %v10994 = vrot.slane %v10992, 5
        %v10995 = vsel %vm1166, %v10990, %v10994
        %v10997 = vshrl.u32 %v10822, 16
        %v10999 = vrot.slane %v10997, 4
        %v11000 = vshll.u32 %v10822, 16
        %v11002 = vrot.slane %v11000, 5
        %v11003 = vor.u32 %v10999, %v11002
        %v11004 = vrot.slane %v11003, 4
        %v11006 = vshll.u32 %v10823, 16
        %v11008 = vrot.slane %v11006, 5
        %v11009 = vsel %vm1166, %v11004, %v11008
        %v11010 = vshrl.u32 %v10823, 16
        %v11012 = vrot.slane %v11010, 4
        %v11013 = vor.u32 %v11012, %v11008
        %v11014 = vrot.slane %v11013, 4
        %v11016 = vshll.u32 %v10824, 16
        %v11018 = vrot.slane %v11016, 5
        %v11019 = vsel %vm1166, %v11014, %v11018
        %v11021 = vshrl.u32 %v10825, 16
        %v11023 = vrot.slane %v11021, 4
        %v11024 = vshll.u32 %v10825, 16
        %v11026 = vrot.slane %v11024, 5
        %v11027 = vor.u32 %v11023, %v11026
        %v11028 = vrot.slane %v11027, 4
        %v11030 = vshll.u32 %v10826, 16
        %v11032 = vrot.slane %v11030, 5
        %v11033 = vsel %vm1166, %v11028, %v11032
        %v11034 = vshrl.u32 %v10826, 16
        %v11036 = vrot.slane %v11034, 4
        %v11037 = vor.u32 %v11036, %v11032
        %v11038 = vrot.slane %v11037, 4
        %v11040 = vshll.u32 %v10827, 16
        %v11042 = vrot.slane %v11040, 5
        %v11043 = vsel %vm1166, %v11038, %v11042
        %v11045 = vshrl.u32 %v10828, 16
        %v11047 = vrot.slane %v11045, 4
        %v11048 = vshll.u32 %v10828, 16
        %v11050 = vrot.slane %v11048, 5
        %v11051 = vor.u32 %v11047, %v11050
        %v11052 = vrot.slane %v11051, 4
        %v11054 = vshll.u32 %v10829, 16
        %v11056 = vrot.slane %v11054, 5
        %v11057 = vsel %vm1166, %v11052, %v11056
        %v11058 = vshrl.u32 %v10829, 16
        %v11060 = vrot.slane %v11058, 4
        %v11061 = vor.u32 %v11060, %v11056
        %v11062 = vrot.slane %v11061, 4
        %v11064 = vshll.u32 %v10830, 16
        %v11066 = vrot.slane %v11064, 5
        %v11067 = vsel %vm1166, %v11062, %v11066
        %v11069 = vshrl.u32 %v10831, 16
        %v11071 = vrot.slane %v11069, 4
        %v11072 = vshll.u32 %v10831, 16
        %v11074 = vrot.slane %v11072, 5
        %v11075 = vor.u32 %v11071, %v11074
        %v11076 = vrot.slane %v11075, 4
        %v11078 = vshll.u32 %v10832, 16
        %v11080 = vrot.slane %v11078, 5
        %v11081 = vsel %vm1166, %v11076, %v11080
        %v11082 = vshrl.u32 %v10832, 16
        %v11084 = vrot.slane %v11082, 4
        %v11085 = vor.u32 %v11084, %v11080
        %v11086 = vrot.slane %v11085, 4
        %v11088 = vshll.u32 %v10833, 16
        %v11090 = vrot.slane %v11088, 5
        %v11091 = vsel %vm1166, %v11086, %v11090
        %v11093 = vshrl.u32 %v10834, 16
        %v11095 = vrot.slane %v11093, 4
        %v11096 = vshll.u32 %v10834, 16
        %v11098 = vrot.slane %v11096, 5
        %v11099 = vor.u32 %v11095, %v11098
        %v11100 = vrot.slane %v11099, 4
        %v11102 = vshll.u32 %v10835, 16
        %v11104 = vrot.slane %v11102, 5
        %v11105 = vsel %vm1166, %v11100, %v11104
        %v11106 = vshrl.u32 %v10835, 16
        %v11108 = vrot.slane %v11106, 4
        %v11109 = vor.u32 %v11108, %v11104
        %v11110 = vrot.slane %v11109, 4
        %v11112 = vshll.u32 %v10836, 16
        %v11114 = vrot.slane %v11112, 5
        %v11115 = vsel %vm1166, %v11110, %v11114
        %v11117 = vshrl.u32 %v10837, 16
        %v11119 = vrot.slane %v11117, 4
        %v11120 = vshll.u32 %v10837, 16
        %v11122 = vrot.slane %v11120, 5
        %v11123 = vor.u32 %v11119, %v11122
        %v11124 = vrot.slane %v11123, 4
        %v11126 = vshll.u32 %v10838, 16
        %v11128 = vrot.slane %v11126, 5
        %v11129 = vsel %vm1166, %v11124, %v11128
        %v11130 = vshrl.u32 %v10838, 16
        %v11132 = vrot.slane %v11130, 4
        %v11133 = vor.u32 %v11132, %v11128
        %v11134 = vrot.slane %v11133, 4
        %v11136 = vshll.u32 %v10839, 16
        %v11138 = vrot.slane %v11136, 5
        %v11139 = vsel %vm1166, %v11134, %v11138
        %v11141 = vshrl.u32 %v10840, 16
        %v11143 = vrot.slane %v11141, 4
        %v11144 = vshll.u32 %v10840, 16
        %v11146 = vrot.slane %v11144, 5
        %v11147 = vor.u32 %v11143, %v11146
        %v11148 = vrot.slane %v11147, 4
        %v11150 = vshll.u32 %v10841, 16
        %v11152 = vrot.slane %v11150, 5
        %v11153 = vsel %vm1166, %v11148, %v11152
        %v11154 = vshrl.u32 %v10841, 16
        %v11156 = vrot.slane %v11154, 4
        %v11157 = vor.u32 %v11156, %v11152
        %v11158 = vrot.slane %v11157, 4
        %v11160 = vshll.u32 %v10842, 16
        %v11162 = vrot.slane %v11160, 5
        %v11163 = vsel %vm1166, %v11158, %v11162
        %v11165 = vshrl.u32 %v10843, 16
        %v11167 = vrot.slane %v11165, 4
        %v11168 = vshll.u32 %v10843, 16
        %v11170 = vrot.slane %v11168, 5
        %v11171 = vor.u32 %v11167, %v11170
        %v11172 = vrot.slane %v11171, 4
        %v11174 = vshll.u32 %v10844, 16
        %v11176 = vrot.slane %v11174, 5
        %v11177 = vsel %vm1166, %v11172, %v11176
        %v11178 = vshrl.u32 %v10844, 16
        %v11180 = vrot.slane %v11178, 4
        %v11181 = vor.u32 %v11180, %v11176
        %v11182 = vrot.slane %v11181, 4
        %v11184 = vshll.u32 %v10845, 16
        %v11186 = vrot.slane %v11184, 5
        %v11187 = vsel %vm1166, %v11182, %v11186
        %v11189 = vshrl.u32 %v10846, 16
        %v11191 = vrot.slane %v11189, 4
        %v11192 = vshll.u32 %v10846, 16
        %v11194 = vrot.slane %v11192, 5
        %v11195 = vor.u32 %v11191, %v11194
        %v11196 = vrot.slane %v11195, 4
        %v11198 = vshll.u32 %v10847, 16
        %v11200 = vrot.slane %v11198, 5
        %v11201 = vsel %vm1166, %v11196, %v11200
        %v11202 = vshrl.u32 %v10847, 16
        %v11204 = vrot.slane %v11202, 4
        %v11205 = vor.u32 %v11204, %v11200
        %v11206 = vrot.slane %v11205, 4
        %v11208 = vshll.u32 %v10848, 16
        %v11210 = vrot.slane %v11208, 5
        %v11211 = vsel %vm1166, %v11206, %v11210
        %v11213 = vshrl.u32 %v10849, 16
        %v11215 = vrot.slane %v11213, 4
        %v11216 = vshll.u32 %v10849, 16
        %v11218 = vrot.slane %v11216, 5
        %v11219 = vor.u32 %v11215, %v11218
        %v11220 = vrot.slane %v11219, 4
        %v11222 = vshll.u32 %v10850, 16
        %v11224 = vrot.slane %v11222, 5
        %v11225 = vsel %vm1166, %v11220, %v11224
        %v11226 = vshrl.u32 %v10850, 16
        %v11228 = vrot.slane %v11226, 4
        %v11229 = vor.u32 %v11228, %v11224
        %v11230 = vrot.slane %v11229, 4
        %v11232 = vshll.u32 %v10851, 16
        %v11234 = vrot.slane %v11232, 5
        %v11235 = vsel %vm1166, %v11230, %v11234
        %s11236 = scalar_lea.vmem [#allocation20], 448
        %v11237 = vld [vmem:[%s11236] sm:$0xf]
        %v11238 = vld [vmem:[%s11236 + $0x4] sm:$0xf]
        %v11239 = vld [vmem:[%s11236 + $0x8] sm:$0xf]
        %v11240 = vld [vmem:[%s11236 + $0xc] sm:$0xf]
        %v11241 = vld [vmem:[%s11236 + $0x10] sm:$0xf]
        %v11242 = vld [vmem:[%s11236 + $0x14] sm:$0xf]
        %v11243 = vld [vmem:[%s11236 + $0x18] sm:$0xf]
        %v11244 = vld [vmem:[%s11236 + $0x1c] sm:$0xf]
        %v11245 = vld [vmem:[%s11236 + $0x20] sm:$0xf]
        %v11246 = vld [vmem:[%s11236 + $0x24] sm:$0xf]
        %v11247 = vld [vmem:[%s11236 + $0x28] sm:$0xf]
        %v11248 = vld [vmem:[%s11236 + $0x2c] sm:$0xf]
        %v11249 = vld [vmem:[%s11236 + $0x30] sm:$0xf]
        %v11250 = vld [vmem:[%s11236 + $0x34] sm:$0xf]
        %v11251 = vld [vmem:[%s11236 + $0x38] sm:$0xf]
        %v11252 = vld [vmem:[%s11236 + $0x3c] sm:$0xf]
        %v11253 = vunpack.c.l.b16 %v10865
        %v11254 = vunpack.c.l.b16 %v10875
        %v11255 = vunpack.c.l.b16 %v10889
        %v11256 = vunpack.c.l.b16 %v10899
        %v11257 = vunpack.c.l.b16 %v10913
        %v11258 = vunpack.c.l.b16 %v10923
        %v11259 = vunpack.c.l.b16 %v10937
        %v11260 = vunpack.c.l.b16 %v10947
        %v11261 = vunpack.c.l.b16 %v10961
        %v11262 = vunpack.c.l.b16 %v10971
        %v11263 = vunpack.c.l.b16 %v10985
        %v11264 = vunpack.c.l.b16 %v10995
        %v11265 = vunpack.c.l.b16 %v11009
        %v11266 = vunpack.c.l.b16 %v11019
        %v11267 = vunpack.c.l.b16 %v11033
        %v11268 = vunpack.c.l.b16 %v11043
        %v11269 = vunpack.c.l.b16 %v11057
        %v11270 = vunpack.c.l.b16 %v11067
        %v11271 = vunpack.c.l.b16 %v11081
        %v11272 = vunpack.c.l.b16 %v11091
        %v11273 = vunpack.c.l.b16 %v11105
        %v11274 = vunpack.c.l.b16 %v11115
        %v11275 = vunpack.c.l.b16 %v11129
        %v11276 = vunpack.c.l.b16 %v11139
        %v11277 = vunpack.c.l.b16 %v11153
        %v11278 = vunpack.c.l.b16 %v11163
        %v11279 = vunpack.c.l.b16 %v11177
        %v11280 = vunpack.c.l.b16 %v11187
        %v11281 = vunpack.c.l.b16 %v11201
        %v11282 = vunpack.c.l.b16 %v11211
        %v11283 = vunpack.c.l.b16 %v11225
        %v11284 = vunpack.c.l.b16 %v11235
        %v11285 = vpack.c.b16 %v11254, %v11253
        %v11286 = vpack.c.b16 %v11256, %v11255
        %v11287 = vpack.c.b16 %v11258, %v11257
        %v11288 = vpack.c.b16 %v11260, %v11259
        %v11289 = vpack.c.b16 %v11262, %v11261
        %v11290 = vpack.c.b16 %v11264, %v11263
        %v11291 = vpack.c.b16 %v11266, %v11265
        %v11292 = vpack.c.b16 %v11268, %v11267
        %v11293 = vpack.c.b16 %v11270, %v11269
        %v11294 = vpack.c.b16 %v11272, %v11271
        %v11295 = vpack.c.b16 %v11274, %v11273
        %v11296 = vpack.c.b16 %v11276, %v11275
        %v11297 = vpack.c.b16 %v11278, %v11277
        %v11298 = vpack.c.b16 %v11280, %v11279
        %v11299 = vpack.c.b16 %v11282, %v11281
        %v11300 = vpack.c.b16 %v11284, %v11283
        %v11333 = vunpack.c.l.b16 %v11237
        %v11334 = vunpack.c.l.b16 %v11238
        %v11335 = vunpack.c.l.b16 %v11239
        %v11336 = vunpack.c.l.b16 %v11240
        %v11337 = vunpack.c.l.b16 %v11241
        %v11338 = vunpack.c.l.b16 %v11242
        %v11339 = vunpack.c.l.b16 %v11243
        %v11340 = vunpack.c.l.b16 %v11244
        %v11341 = vunpack.c.l.b16 %v11245
        %v11342 = vunpack.c.l.b16 %v11246
        %v11343 = vunpack.c.l.b16 %v11247
        %v11344 = vunpack.c.l.b16 %v11248
        %v11345 = vunpack.c.l.b16 %v11249
        %v11346 = vunpack.c.l.b16 %v11250
        %v11347 = vunpack.c.l.b16 %v11251
        %v11348 = vunpack.c.l.b16 %v11252
        %v11349 = vpack.c.b16 %v11334, %v11333
        %v11350 = vpack.c.b16 %v11336, %v11335
        %v11351 = vpack.c.b16 %v11338, %v11337
        %v11352 = vpack.c.b16 %v11340, %v11339
        %v11353 = vpack.c.b16 %v11342, %v11341
        %v11354 = vpack.c.b16 %v11344, %v11343
        %v11355 = vpack.c.b16 %v11346, %v11345
        %v11356 = vpack.c.b16 %v11348, %v11347
        %11365 = vmatpush.bf16.msra.mxu0 %v11356
        %11366 = vmatpush.bf16.msra.mxu0 %v11355
        %11367 = vmatpush.bf16.msra.mxu0 %v11354
        %11368 = vmatpush.bf16.msra.mxu0 %v11353
        %11369 = vmatpush.bf16.msra.mxu0 %v11352
        %11370 = vmatpush.bf16.msra.mxu0 %v11351
        %11371 = vmatpush.bf16.msra.mxu0 %v11350
        %11372 = vmatpush.bf16.msra.mxu0 %v11349
        %11373 = vmatmul.bf16.gmra.mxu0 %v11285
        %v11374 = vpop.f32.mrf.mxu0
        %v11375 = vadd.f32 0.0, %v11374
        %v11376 = vpop.f32.mrf.mxu0
        %v11377 = vadd.f32 0.0, %v11376
        %11378 = vmatmul.bf16.gmra.mxu0 %v11286
        %v11379 = vpop.f32.mrf.mxu0
        %v11380 = vadd.f32 0.0, %v11379
        %v11381 = vpop.f32.mrf.mxu0
        %v11382 = vadd.f32 0.0, %v11381
        %11383 = vmatmul.bf16.gmra.mxu0 %v11287
        %v11384 = vpop.f32.mrf.mxu0
        %v11385 = vadd.f32 0.0, %v11384
        %v11386 = vpop.f32.mrf.mxu0
        %v11387 = vadd.f32 0.0, %v11386
        %11388 = vmatmul.bf16.gmra.mxu0 %v11288
        %v11389 = vpop.f32.mrf.mxu0
        %v11390 = vadd.f32 0.0, %v11389
        %v11391 = vpop.f32.mrf.mxu0
        %v11392 = vadd.f32 0.0, %v11391
        %11393 = vmatmul.bf16.gmra.mxu0 %v11289
        %v11394 = vpop.f32.mrf.mxu0
        %v11395 = vadd.f32 0.0, %v11394
        %v11396 = vpop.f32.mrf.mxu0
        %v11397 = vadd.f32 0.0, %v11396
        %11398 = vmatmul.bf16.gmra.mxu0 %v11290
        %v11399 = vpop.f32.mrf.mxu0
        %v11400 = vadd.f32 0.0, %v11399
        %v11401 = vpop.f32.mrf.mxu0
        %v11402 = vadd.f32 0.0, %v11401
        %11403 = vmatmul.bf16.gmra.mxu0 %v11291
        %v11404 = vpop.f32.mrf.mxu0
        %v11405 = vadd.f32 0.0, %v11404
        %v11406 = vpop.f32.mrf.mxu0
        %v11407 = vadd.f32 0.0, %v11406
        %11408 = vmatmul.bf16.gmra.mxu0 %v11292
        %v11409 = vpop.f32.mrf.mxu0
        %v11410 = vadd.f32 0.0, %v11409
        %v11411 = vpop.f32.mrf.mxu0
        %v11412 = vadd.f32 0.0, %v11411
        %11413 = vmatmul.bf16.gmra.mxu0 %v11293
        %v11414 = vpop.f32.mrf.mxu0
        %v11415 = vadd.f32 0.0, %v11414
        %v11416 = vpop.f32.mrf.mxu0
        %v11417 = vadd.f32 0.0, %v11416
        %11418 = vmatmul.bf16.gmra.mxu0 %v11294
        %v11419 = vpop.f32.mrf.mxu0
        %v11420 = vadd.f32 0.0, %v11419
        %v11421 = vpop.f32.mrf.mxu0
        %v11422 = vadd.f32 0.0, %v11421
        %11423 = vmatmul.bf16.gmra.mxu0 %v11295
        %v11424 = vpop.f32.mrf.mxu0
        %v11425 = vadd.f32 0.0, %v11424
        %v11426 = vpop.f32.mrf.mxu0
        %v11427 = vadd.f32 0.0, %v11426
        %11428 = vmatmul.bf16.gmra.mxu0 %v11296
        %v11429 = vpop.f32.mrf.mxu0
        %v11430 = vadd.f32 0.0, %v11429
        %v11431 = vpop.f32.mrf.mxu0
        %v11432 = vadd.f32 0.0, %v11431
        %11433 = vmatmul.bf16.gmra.mxu0 %v11297
        %v11434 = vpop.f32.mrf.mxu0
        %v11435 = vadd.f32 0.0, %v11434
        %v11436 = vpop.f32.mrf.mxu0
        %v11437 = vadd.f32 0.0, %v11436
        %11438 = vmatmul.bf16.gmra.mxu0 %v11298
        %v11439 = vpop.f32.mrf.mxu0
        %v11440 = vadd.f32 0.0, %v11439
        %v11441 = vpop.f32.mrf.mxu0
        %v11442 = vadd.f32 0.0, %v11441
        %11443 = vmatmul.bf16.gmra.mxu0 %v11299
        %v11444 = vpop.f32.mrf.mxu0
        %v11445 = vadd.f32 0.0, %v11444
        %v11446 = vpop.f32.mrf.mxu0
        %v11447 = vadd.f32 0.0, %v11446
        %11448 = vmatmul.bf16.gmra.mxu0 %v11300
        %v11449 = vpop.f32.mrf.mxu0
        %v11450 = vadd.f32 0.0, %v11449
        %v11451 = vpop.f32.mrf.mxu0
        %v11452 = vadd.f32 0.0, %v11451
        %11453 = vdwg.mxu0
        %v11454 = vadd.f32 %v10772, %v11375
        %v11455 = vadd.f32 %v10773, %v11377
        %v11456 = vadd.f32 %v10774, %v11380
        %v11457 = vadd.f32 %v10775, %v11382
        %v11458 = vadd.f32 %v10776, %v11385
        %v11459 = vadd.f32 %v10777, %v11387
        %v11460 = vadd.f32 %v10778, %v11390
        %v11461 = vadd.f32 %v10779, %v11392
        %v11462 = vadd.f32 %v10780, %v11395
        %v11463 = vadd.f32 %v10781, %v11397
        %v11464 = vadd.f32 %v10782, %v11400
        %v11465 = vadd.f32 %v10783, %v11402
        %v11466 = vadd.f32 %v10784, %v11405
        %v11467 = vadd.f32 %v10785, %v11407
        %v11468 = vadd.f32 %v10786, %v11410
        %v11469 = vadd.f32 %v10787, %v11412
        %v11470 = vadd.f32 %v10788, %v11415
        %v11471 = vadd.f32 %v10789, %v11417
        %v11472 = vadd.f32 %v10790, %v11420
        %v11473 = vadd.f32 %v10791, %v11422
        %v11474 = vadd.f32 %v10792, %v11425
        %v11475 = vadd.f32 %v10793, %v11427
        %v11476 = vadd.f32 %v10794, %v11430
        %v11477 = vadd.f32 %v10795, %v11432
        %v11478 = vadd.f32 %v10796, %v11435
        %v11479 = vadd.f32 %v10797, %v11437
        %v11480 = vadd.f32 %v10798, %v11440
        %v11481 = vadd.f32 %v10799, %v11442
        %v11482 = vadd.f32 %v10800, %v11445
        %v11483 = vadd.f32 %v10801, %v11447
        %v11484 = vadd.f32 %v10802, %v11450
        %v11485 = vadd.f32 %v10803, %v11452
        %v11486 = vld [vmem:[%s10489] sm:$0xe]
        %v11487 = vld [vmem:[%s10489 + $0xc] sm:$0xe]
        %v11488 = vld [vmem:[%s10489 + $0x18] sm:$0xe]
        %v11489 = vld [vmem:[%s10489 + $0x24] sm:$0xe]
        %v11490 = vld [vmem:[%s10489 + $0x30] sm:$0xe]
        %v11491 = vld [vmem:[%s10489 + $0x3c] sm:$0xe]
        %v11492 = vld [vmem:[%s10489 + $0x48] sm:$0xe]
        %v11493 = vld [vmem:[%s10489 + $0x54] sm:$0xe]
        %v11494 = vld [vmem:[%s10489 + $0x60] sm:$0xe]
        %v11495 = vld [vmem:[%s10489 + $0x6c] sm:$0xe]
        %v11496 = vld [vmem:[%s10489 + $0x78] sm:$0xe]
        %v11497 = vld [vmem:[%s10489 + $0x84] sm:$0xe]
        %v11498 = vld [vmem:[%s10489 + $0x90] sm:$0xe]
        %v11499 = vld [vmem:[%s10489 + $0x9c] sm:$0xe]
        %v11500 = vld [vmem:[%s10489 + $0xa8] sm:$0xe]
        %v11501 = vld [vmem:[%s10489 + $0xb4] sm:$0xe]
        %v11550 = vrot.slane %v11486, 5
        %v11551 = vrot.slane %v11550, 4
        %v11552 = vrot.slane %v10805, 5
        %v11553 = vsel %vm1516, %v11551, %v11552
        %v11554 = vrot.slane %v11552, 4
        %v11555 = vrot.slane %v10806, 5
        %v11556 = vsel %vm1516, %v11554, %v11555
        %v11557 = vrot.slane %v11487, 5
        %v11558 = vrot.slane %v11557, 4
        %v11559 = vrot.slane %v10808, 5
        %v11560 = vsel %vm1516, %v11558, %v11559
        %v11561 = vrot.slane %v11559, 4
        %v11562 = vrot.slane %v10809, 5
        %v11563 = vsel %vm1516, %v11561, %v11562
        %v11564 = vrot.slane %v11488, 5
        %v11565 = vrot.slane %v11564, 4
        %v11566 = vrot.slane %v10811, 5
        %v11567 = vsel %vm1516, %v11565, %v11566
        %v11568 = vrot.slane %v11566, 4
        %v11569 = vrot.slane %v10812, 5
        %v11570 = vsel %vm1516, %v11568, %v11569
        %v11571 = vrot.slane %v11489, 5
        %v11572 = vrot.slane %v11571, 4
        %v11573 = vrot.slane %v10814, 5
        %v11574 = vsel %vm1516, %v11572, %v11573
        %v11575 = vrot.slane %v11573, 4
        %v11576 = vrot.slane %v10815, 5
        %v11577 = vsel %vm1516, %v11575, %v11576
        %v11578 = vrot.slane %v11490, 5
        %v11579 = vrot.slane %v11578, 4
        %v11580 = vrot.slane %v10817, 5
        %v11581 = vsel %vm1516, %v11579, %v11580
        %v11582 = vrot.slane %v11580, 4
        %v11583 = vrot.slane %v10818, 5
        %v11584 = vsel %vm1516, %v11582, %v11583
        %v11585 = vrot.slane %v11491, 5
        %v11586 = vrot.slane %v11585, 4
        %v11587 = vrot.slane %v10820, 5
        %v11588 = vsel %vm1516, %v11586, %v11587
        %v11589 = vrot.slane %v11587, 4
        %v11590 = vrot.slane %v10821, 5
        %v11591 = vsel %vm1516, %v11589, %v11590
        %v11592 = vrot.slane %v11492, 5
        %v11593 = vrot.slane %v11592, 4
        %v11594 = vrot.slane %v10823, 5
        %v11595 = vsel %vm1516, %v11593, %v11594
        %v11596 = vrot.slane %v11594, 4
        %v11597 = vrot.slane %v10824, 5
        %v11598 = vsel %vm1516, %v11596, %v11597
        %v11599 = vrot.slane %v11493, 5
        %v11600 = vrot.slane %v11599, 4
        %v11601 = vrot.slane %v10826, 5
        %v11602 = vsel %vm1516, %v11600, %v11601
        %v11603 = vrot.slane %v11601, 4
        %v11604 = vrot.slane %v10827, 5
        %v11605 = vsel %vm1516, %v11603, %v11604
        %v11606 = vrot.slane %v11494, 5
        %v11607 = vrot.slane %v11606, 4
        %v11608 = vrot.slane %v10829, 5
        %v11609 = vsel %vm1516, %v11607, %v11608
        %v11610 = vrot.slane %v11608, 4
        %v11611 = vrot.slane %v10830, 5
        %v11612 = vsel %vm1516, %v11610, %v11611
        %v11613 = vrot.slane %v11495, 5
        %v11614 = vrot.slane %v11613, 4
        %v11615 = vrot.slane %v10832, 5
        %v11616 = vsel %vm1516, %v11614, %v11615
        %v11617 = vrot.slane %v11615, 4
        %v11618 = vrot.slane %v10833, 5
        %v11619 = vsel %vm1516, %v11617, %v11618
        %v11620 = vrot.slane %v11496, 5
        %v11621 = vrot.slane %v11620, 4
        %v11622 = vrot.slane %v10835, 5
        %v11623 = vsel %vm1516, %v11621, %v11622
        %v11624 = vrot.slane %v11622, 4
        %v11625 = vrot.slane %v10836, 5
        %v11626 = vsel %vm1516, %v11624, %v11625
        %v11627 = vrot.slane %v11497, 5
        %v11628 = vrot.slane %v11627, 4
        %v11629 = vrot.slane %v10838, 5
        %v11630 = vsel %vm1516, %v11628, %v11629
        %v11631 = vrot.slane %v11629, 4
        %v11632 = vrot.slane %v10839, 5
        %v11633 = vsel %vm1516, %v11631, %v11632
        %v11634 = vrot.slane %v11498, 5
        %v11635 = vrot.slane %v11634, 4
        %v11636 = vrot.slane %v10841, 5
        %v11637 = vsel %vm1516, %v11635, %v11636
        %v11638 = vrot.slane %v11636, 4
        %v11639 = vrot.slane %v10842, 5
        %v11640 = vsel %vm1516, %v11638, %v11639
        %v11641 = vrot.slane %v11499, 5
        %v11642 = vrot.slane %v11641, 4
        %v11643 = vrot.slane %v10844, 5
        %v11644 = vsel %vm1516, %v11642, %v11643
        %v11645 = vrot.slane %v11643, 4
        %v11646 = vrot.slane %v10845, 5
        %v11647 = vsel %vm1516, %v11645, %v11646
        %v11648 = vrot.slane %v11500, 5
        %v11649 = vrot.slane %v11648, 4
        %v11650 = vrot.slane %v10847, 5
        %v11651 = vsel %vm1516, %v11649, %v11650
        %v11652 = vrot.slane %v11650, 4
        %v11653 = vrot.slane %v10848, 5
        %v11654 = vsel %vm1516, %v11652, %v11653
        %v11655 = vrot.slane %v11501, 5
        %v11656 = vrot.slane %v11655, 4
        %v11657 = vrot.slane %v10850, 5
        %v11658 = vsel %vm1516, %v11656, %v11657
        %v11659 = vrot.slane %v11657, 4
        %v11660 = vrot.slane %v10851, 5
        %v11661 = vsel %vm1516, %v11659, %v11660
        %s11662 = scalar_lea.vmem [#allocation20], 512
        %v11663 = vld [vmem:[%s11662] sm:$0xf]
        %v11664 = vld [vmem:[%s11662 + $0x4] sm:$0xf]
        %v11665 = vld [vmem:[%s11662 + $0x8] sm:$0xf]
        %v11666 = vld [vmem:[%s11662 + $0xc] sm:$0xf]
        %v11667 = vld [vmem:[%s11662 + $0x10] sm:$0xf]
        %v11668 = vld [vmem:[%s11662 + $0x14] sm:$0xf]
        %v11669 = vld [vmem:[%s11662 + $0x18] sm:$0xf]
        %v11670 = vld [vmem:[%s11662 + $0x1c] sm:$0xf]
        %v11671 = vld [vmem:[%s11662 + $0x20] sm:$0xf]
        %v11672 = vld [vmem:[%s11662 + $0x24] sm:$0xf]
        %v11673 = vld [vmem:[%s11662 + $0x28] sm:$0xf]
        %v11674 = vld [vmem:[%s11662 + $0x2c] sm:$0xf]
        %v11675 = vld [vmem:[%s11662 + $0x30] sm:$0xf]
        %v11676 = vld [vmem:[%s11662 + $0x34] sm:$0xf]
        %v11677 = vld [vmem:[%s11662 + $0x38] sm:$0xf]
        %v11678 = vld [vmem:[%s11662 + $0x3c] sm:$0xf]
        %v11679 = vunpack.c.l.b16 %v11553
        %v11680 = vunpack.c.l.b16 %v11556
        %v11681 = vunpack.c.l.b16 %v11560
        %v11682 = vunpack.c.l.b16 %v11563
        %v11683 = vunpack.c.l.b16 %v11567
        %v11684 = vunpack.c.l.b16 %v11570
        %v11685 = vunpack.c.l.b16 %v11574
        %v11686 = vunpack.c.l.b16 %v11577
        %v11687 = vunpack.c.l.b16 %v11581
        %v11688 = vunpack.c.l.b16 %v11584
        %v11689 = vunpack.c.l.b16 %v11588
        %v11690 = vunpack.c.l.b16 %v11591
        %v11691 = vunpack.c.l.b16 %v11595
        %v11692 = vunpack.c.l.b16 %v11598
        %v11693 = vunpack.c.l.b16 %v11602
        %v11694 = vunpack.c.l.b16 %v11605
        %v11695 = vunpack.c.l.b16 %v11609
        %v11696 = vunpack.c.l.b16 %v11612
        %v11697 = vunpack.c.l.b16 %v11616
        %v11698 = vunpack.c.l.b16 %v11619
        %v11699 = vunpack.c.l.b16 %v11623
        %v11700 = vunpack.c.l.b16 %v11626
        %v11701 = vunpack.c.l.b16 %v11630
        %v11702 = vunpack.c.l.b16 %v11633
        %v11703 = vunpack.c.l.b16 %v11637
        %v11704 = vunpack.c.l.b16 %v11640
        %v11705 = vunpack.c.l.b16 %v11644
        %v11706 = vunpack.c.l.b16 %v11647
        %v11707 = vunpack.c.l.b16 %v11651
        %v11708 = vunpack.c.l.b16 %v11654
        %v11709 = vunpack.c.l.b16 %v11658
        %v11710 = vunpack.c.l.b16 %v11661
        %v11711 = vpack.c.b16 %v11680, %v11679
        %v11712 = vpack.c.b16 %v11682, %v11681
        %v11713 = vpack.c.b16 %v11684, %v11683
        %v11714 = vpack.c.b16 %v11686, %v11685
        %v11715 = vpack.c.b16 %v11688, %v11687
        %v11716 = vpack.c.b16 %v11690, %v11689
        %v11717 = vpack.c.b16 %v11692, %v11691
        %v11718 = vpack.c.b16 %v11694, %v11693
        %v11719 = vpack.c.b16 %v11696, %v11695
        %v11720 = vpack.c.b16 %v11698, %v11697
        %v11721 = vpack.c.b16 %v11700, %v11699
        %v11722 = vpack.c.b16 %v11702, %v11701
        %v11723 = vpack.c.b16 %v11704, %v11703
        %v11724 = vpack.c.b16 %v11706, %v11705
        %v11725 = vpack.c.b16 %v11708, %v11707
        %v11726 = vpack.c.b16 %v11710, %v11709
        %v11759 = vunpack.c.l.b16 %v11663
        %v11760 = vunpack.c.l.b16 %v11664
        %v11761 = vunpack.c.l.b16 %v11665
        %v11762 = vunpack.c.l.b16 %v11666
        %v11763 = vunpack.c.l.b16 %v11667
        %v11764 = vunpack.c.l.b16 %v11668
        %v11765 = vunpack.c.l.b16 %v11669
        %v11766 = vunpack.c.l.b16 %v11670
        %v11767 = vunpack.c.l.b16 %v11671
        %v11768 = vunpack.c.l.b16 %v11672
        %v11769 = vunpack.c.l.b16 %v11673
        %v11770 = vunpack.c.l.b16 %v11674
        %v11771 = vunpack.c.l.b16 %v11675
        %v11772 = vunpack.c.l.b16 %v11676
        %v11773 = vunpack.c.l.b16 %v11677
        %v11774 = vunpack.c.l.b16 %v11678
        %v11775 = vpack.c.b16 %v11760, %v11759
        %v11776 = vpack.c.b16 %v11762, %v11761
        %v11777 = vpack.c.b16 %v11764, %v11763
        %v11778 = vpack.c.b16 %v11766, %v11765
        %v11779 = vpack.c.b16 %v11768, %v11767
        %v11780 = vpack.c.b16 %v11770, %v11769
        %v11781 = vpack.c.b16 %v11772, %v11771
        %v11782 = vpack.c.b16 %v11774, %v11773
        %11791 = vmatpush.bf16.msra.mxu0 %v11782
        %11792 = vmatpush.bf16.msra.mxu0 %v11781
        %11793 = vmatpush.bf16.msra.mxu0 %v11780
        %11794 = vmatpush.bf16.msra.mxu0 %v11779
        %11795 = vmatpush.bf16.msra.mxu0 %v11778
        %11796 = vmatpush.bf16.msra.mxu0 %v11777
        %11797 = vmatpush.bf16.msra.mxu0 %v11776
        %11798 = vmatpush.bf16.msra.mxu0 %v11775
        %11799 = vmatmul.bf16.gmra.mxu0 %v11711
        %v11800 = vpop.f32.mrf.mxu0
        %v11801 = vadd.f32 0.0, %v11800
        %v11802 = vpop.f32.mrf.mxu0
        %v11803 = vadd.f32 0.0, %v11802
        %11804 = vmatmul.bf16.gmra.mxu0 %v11712
        %v11805 = vpop.f32.mrf.mxu0
        %v11806 = vadd.f32 0.0, %v11805
        %v11807 = vpop.f32.mrf.mxu0
        %v11808 = vadd.f32 0.0, %v11807
        %11809 = vmatmul.bf16.gmra.mxu0 %v11713
        %v11810 = vpop.f32.mrf.mxu0
        %v11811 = vadd.f32 0.0, %v11810
        %v11812 = vpop.f32.mrf.mxu0
        %v11813 = vadd.f32 0.0, %v11812
        %11814 = vmatmul.bf16.gmra.mxu0 %v11714
        %v11815 = vpop.f32.mrf.mxu0
        %v11816 = vadd.f32 0.0, %v11815
        %v11817 = vpop.f32.mrf.mxu0
        %v11818 = vadd.f32 0.0, %v11817
        %11819 = vmatmul.bf16.gmra.mxu0 %v11715
        %v11820 = vpop.f32.mrf.mxu0
        %v11821 = vadd.f32 0.0, %v11820
        %v11822 = vpop.f32.mrf.mxu0
        %v11823 = vadd.f32 0.0, %v11822
        %11824 = vmatmul.bf16.gmra.mxu0 %v11716
        %v11825 = vpop.f32.mrf.mxu0
        %v11826 = vadd.f32 0.0, %v11825
        %v11827 = vpop.f32.mrf.mxu0
        %v11828 = vadd.f32 0.0, %v11827
        %11829 = vmatmul.bf16.gmra.mxu0 %v11717
        %v11830 = vpop.f32.mrf.mxu0
        %v11831 = vadd.f32 0.0, %v11830
        %v11832 = vpop.f32.mrf.mxu0
        %v11833 = vadd.f32 0.0, %v11832
        %11834 = vmatmul.bf16.gmra.mxu0 %v11718
        %v11835 = vpop.f32.mrf.mxu0
        %v11836 = vadd.f32 0.0, %v11835
        %v11837 = vpop.f32.mrf.mxu0
        %v11838 = vadd.f32 0.0, %v11837
        %11839 = vmatmul.bf16.gmra.mxu0 %v11719
        %v11840 = vpop.f32.mrf.mxu0
        %v11841 = vadd.f32 0.0, %v11840
        %v11842 = vpop.f32.mrf.mxu0
        %v11843 = vadd.f32 0.0, %v11842
        %11844 = vmatmul.bf16.gmra.mxu0 %v11720
        %v11845 = vpop.f32.mrf.mxu0
        %v11846 = vadd.f32 0.0, %v11845
        %v11847 = vpop.f32.mrf.mxu0
        %v11848 = vadd.f32 0.0, %v11847
        %11849 = vmatmul.bf16.gmra.mxu0 %v11721
        %v11850 = vpop.f32.mrf.mxu0
        %v11851 = vadd.f32 0.0, %v11850
        %v11852 = vpop.f32.mrf.mxu0
        %v11853 = vadd.f32 0.0, %v11852
        %11854 = vmatmul.bf16.gmra.mxu0 %v11722
        %v11855 = vpop.f32.mrf.mxu0
        %v11856 = vadd.f32 0.0, %v11855
        %v11857 = vpop.f32.mrf.mxu0
        %v11858 = vadd.f32 0.0, %v11857
        %11859 = vmatmul.bf16.gmra.mxu0 %v11723
        %v11860 = vpop.f32.mrf.mxu0
        %v11861 = vadd.f32 0.0, %v11860
        %v11862 = vpop.f32.mrf.mxu0
        %v11863 = vadd.f32 0.0, %v11862
        %11864 = vmatmul.bf16.gmra.mxu0 %v11724
        %v11865 = vpop.f32.mrf.mxu0
        %v11866 = vadd.f32 0.0, %v11865
        %v11867 = vpop.f32.mrf.mxu0
        %v11868 = vadd.f32 0.0, %v11867
        %11869 = vmatmul.bf16.gmra.mxu0 %v11725
        %v11870 = vpop.f32.mrf.mxu0
        %v11871 = vadd.f32 0.0, %v11870
        %v11872 = vpop.f32.mrf.mxu0
        %v11873 = vadd.f32 0.0, %v11872
        %11874 = vmatmul.bf16.gmra.mxu0 %v11726
        %v11875 = vpop.f32.mrf.mxu0
        %v11876 = vadd.f32 0.0, %v11875
        %v11877 = vpop.f32.mrf.mxu0
        %v11878 = vadd.f32 0.0, %v11877
        %11879 = vdwg.mxu0
        %v11880 = vadd.f32 %v11454, %v11801
        %v11881 = vadd.f32 %v11455, %v11803
        %v11882 = vadd.f32 %v11456, %v11806
        %v11883 = vadd.f32 %v11457, %v11808
        %v11884 = vadd.f32 %v11458, %v11811
        %v11885 = vadd.f32 %v11459, %v11813
        %v11886 = vadd.f32 %v11460, %v11816
        %v11887 = vadd.f32 %v11461, %v11818
        %v11888 = vadd.f32 %v11462, %v11821
        %v11889 = vadd.f32 %v11463, %v11823
        %v11890 = vadd.f32 %v11464, %v11826
        %v11891 = vadd.f32 %v11465, %v11828
        %v11892 = vadd.f32 %v11466, %v11831
        %v11893 = vadd.f32 %v11467, %v11833
        %v11894 = vadd.f32 %v11468, %v11836
        %v11895 = vadd.f32 %v11469, %v11838
        %v11896 = vadd.f32 %v11470, %v11841
        %v11897 = vadd.f32 %v11471, %v11843
        %v11898 = vadd.f32 %v11472, %v11846
        %v11899 = vadd.f32 %v11473, %v11848
        %v11900 = vadd.f32 %v11474, %v11851
        %v11901 = vadd.f32 %v11475, %v11853
        %v11902 = vadd.f32 %v11476, %v11856
        %v11903 = vadd.f32 %v11477, %v11858
        %v11904 = vadd.f32 %v11478, %v11861
        %v11905 = vadd.f32 %v11479, %v11863
        %v11906 = vadd.f32 %v11480, %v11866
        %v11907 = vadd.f32 %v11481, %v11868
        %v11908 = vadd.f32 %v11482, %v11871
        %v11909 = vadd.f32 %v11483, %v11873
        %v11910 = vadd.f32 %v11484, %v11876
        %v11911 = vadd.f32 %v11485, %v11878
        %v11912 = vld [vmem:[%s15] sm:$0x3]
        %v11913 = vperm.slane %v11912, 0
        %v11914 = vmul.f32 %v11880, %v11913
        %v11915 = vmul.f32 %v11881, %v11913
        %v11916 = vmul.f32 %v11882, %v11913
        %v11917 = vmul.f32 %v11883, %v11913
        %v11918 = vmul.f32 %v11884, %v11913
        %v11919 = vmul.f32 %v11885, %v11913
        %v11920 = vmul.f32 %v11886, %v11913
        %v11921 = vmul.f32 %v11887, %v11913
        %v11922 = vmul.f32 %v11888, %v11913
        %v11923 = vmul.f32 %v11889, %v11913
        %v11924 = vmul.f32 %v11890, %v11913
        %v11925 = vmul.f32 %v11891, %v11913
        %v11926 = vmul.f32 %v11892, %v11913
        %v11927 = vmul.f32 %v11893, %v11913
        %v11928 = vmul.f32 %v11894, %v11913
        %v11929 = vmul.f32 %v11895, %v11913
        %v11930 = vmul.f32 %v11896, %v11913
        %v11931 = vmul.f32 %v11897, %v11913
        %v11932 = vmul.f32 %v11898, %v11913
        %v11933 = vmul.f32 %v11899, %v11913
        %v11934 = vmul.f32 %v11900, %v11913
        %v11935 = vmul.f32 %v11901, %v11913
        %v11936 = vmul.f32 %v11902, %v11913
        %v11937 = vmul.f32 %v11903, %v11913
        %v11938 = vmul.f32 %v11904, %v11913
        %v11939 = vmul.f32 %v11905, %v11913
        %v11940 = vmul.f32 %v11906, %v11913
        %v11941 = vmul.f32 %v11907, %v11913
        %v11942 = vmul.f32 %v11908, %v11913
        %v11943 = vmul.f32 %v11909, %v11913
        %v11944 = vmul.f32 %v11910, %v11913
        %v11945 = vmul.f32 %v11911, %v11913
        %v11946 = vperm.slane %v11912, 1
        %v11947 = vadd.f32 %v11914, %v11946
        %v11948 = vadd.f32 %v11915, %v11946
        %v11949 = vadd.f32 %v11916, %v11946
        %v11950 = vadd.f32 %v11917, %v11946
        %v11951 = vadd.f32 %v11918, %v11946
        %v11952 = vadd.f32 %v11919, %v11946
        %v11953 = vadd.f32 %v11920, %v11946
        %v11954 = vadd.f32 %v11921, %v11946
        %v11955 = vadd.f32 %v11922, %v11946
        %v11956 = vadd.f32 %v11923, %v11946
        %v11957 = vadd.f32 %v11924, %v11946
        %v11958 = vadd.f32 %v11925, %v11946
        %v11959 = vadd.f32 %v11926, %v11946
        %v11960 = vadd.f32 %v11927, %v11946
        %v11961 = vadd.f32 %v11928, %v11946
        %v11962 = vadd.f32 %v11929, %v11946
        %v11963 = vadd.f32 %v11930, %v11946
        %v11964 = vadd.f32 %v11931, %v11946
        %v11965 = vadd.f32 %v11932, %v11946
        %v11966 = vadd.f32 %v11933, %v11946
        %v11967 = vadd.f32 %v11934, %v11946
        %v11968 = vadd.f32 %v11935, %v11946
        %v11969 = vadd.f32 %v11936, %v11946
        %v11970 = vadd.f32 %v11937, %v11946
        %v11971 = vadd.f32 %v11938, %v11946
        %v11972 = vadd.f32 %v11939, %v11946
        %v11973 = vadd.f32 %v11940, %v11946
        %v11974 = vadd.f32 %v11941, %v11946
        %v11975 = vadd.f32 %v11942, %v11946
        %v11976 = vadd.f32 %v11943, %v11946
        %v11977 = vadd.f32 %v11944, %v11946
        %v11978 = vadd.f32 %v11945, %v11946
        %v11979 = vmax.f32 %v11947, 0.0
        %v11980 = vmax.f32 %v11948, 0.0
        %v11981 = vmax.f32 %v11949, 0.0
        %v11982 = vmax.f32 %v11950, 0.0
        %v11983 = vmax.f32 %v11951, 0.0
        %v11984 = vmax.f32 %v11952, 0.0
        %v11985 = vmax.f32 %v11953, 0.0
        %v11986 = vmax.f32 %v11954, 0.0
        %v11987 = vmax.f32 %v11955, 0.0
        %v11988 = vmax.f32 %v11956, 0.0
        %v11989 = vmax.f32 %v11957, 0.0
        %v11990 = vmax.f32 %v11958, 0.0
        %v11991 = vmax.f32 %v11959, 0.0
        %v11992 = vmax.f32 %v11960, 0.0
        %v11993 = vmax.f32 %v11961, 0.0
        %v11994 = vmax.f32 %v11962, 0.0
        %v11995 = vmax.f32 %v11963, 0.0
        %v11996 = vmax.f32 %v11964, 0.0
        %v11997 = vmax.f32 %v11965, 0.0
        %v11998 = vmax.f32 %v11966, 0.0
        %v11999 = vmax.f32 %v11967, 0.0
        %v12000 = vmax.f32 %v11968, 0.0
        %v12001 = vmax.f32 %v11969, 0.0
        %v12002 = vmax.f32 %v11970, 0.0
        %v12003 = vmax.f32 %v11971, 0.0
        %v12004 = vmax.f32 %v11972, 0.0
        %v12005 = vmax.f32 %v11973, 0.0
        %v12006 = vmax.f32 %v11974, 0.0
        %v12007 = vmax.f32 %v11975, 0.0
        %v12008 = vmax.f32 %v11976, 0.0
        %v12009 = vmax.f32 %v11977, 0.0
        %v12010 = vmax.f32 %v11978, 0.0
        %12011 = vst [vmem:[%s698] sm:$0xff] %v11979
        %12012 = vst [vmem:[%s698 + $0x8] sm:$0xff] %v11980
        %12013 = vst [vmem:[%s698 + $0x10] sm:$0xff] %v11981
        %12014 = vst [vmem:[%s698 + $0x18] sm:$0xff] %v11982
        %12015 = vst [vmem:[%s698 + $0x20] sm:$0xff] %v11983
        %12016 = vst [vmem:[%s698 + $0x28] sm:$0xff] %v11984
        %12017 = vst [vmem:[%s698 + $0x30] sm:$0xff] %v11985
        %12018 = vst [vmem:[%s698 + $0x38] sm:$0xff] %v11986
        %12019 = vst [vmem:[%s698 + $0x40] sm:$0xff] %v11987
        %12020 = vst [vmem:[%s698 + $0x48] sm:$0xff] %v11988
        %12021 = vst [vmem:[%s698 + $0x50] sm:$0xff] %v11989
        %12022 = vst [vmem:[%s698 + $0x58] sm:$0xff] %v11990
        %12023 = vst [vmem:[%s698 + $0x60] sm:$0xff] %v11991
        %12024 = vst [vmem:[%s698 + $0x68] sm:$0xff] %v11992
        %12025 = vst [vmem:[%s698 + $0x70] sm:$0xff] %v11993
        %12026 = vst [vmem:[%s698 + $0x78] sm:$0xff] %v11994
        %12027 = vst [vmem:[%s698 + $0x80] sm:$0xff] %v11995
        %12028 = vst [vmem:[%s698 + $0x88] sm:$0xff] %v11996
        %12029 = vst [vmem:[%s698 + $0x90] sm:$0xff] %v11997
        %12030 = vst [vmem:[%s698 + $0x98] sm:$0xff] %v11998
        %12031 = vst [vmem:[%s698 + $0xa0] sm:$0xff] %v11999
        %12032 = vst [vmem:[%s698 + $0xa8] sm:$0xff] %v12000
        %12033 = vst [vmem:[%s698 + $0xb0] sm:$0xff] %v12001
        %12034 = vst [vmem:[%s698 + $0xb8] sm:$0xff] %v12002
        %12035 = vst [vmem:[%s698 + $0xc0] sm:$0xff] %v12003
        %12036 = vst [vmem:[%s698 + $0xc8] sm:$0xff] %v12004
        %12037 = vst [vmem:[%s698 + $0xd0] sm:$0xff] %v12005
        %12038 = vst [vmem:[%s698 + $0xd8] sm:$0xff] %v12006
        %12039 = vst [vmem:[%s698 + $0xe0] sm:$0xff] %v12007
        %12040 = vst [vmem:[%s698 + $0xe8] sm:$0xff] %v12008
        %12041 = vst [vmem:[%s698 + $0xf0] sm:$0xff] %v12009
        %12042 = vst [vmem:[%s698 + $0xf8] sm:$0xff] %v12010
        %s12043 = sand.u32 %s393, 1
        %s12044 = scalar_lea.sflag [#allocation8], %s12043
        %s12045 = sand.u32 %s393, 1
        %s12046 = smul.addr %s12045, 256
        %s12047 = scalar_lea.vmem [#allocation21], %s12046
        // Predicated region
        $region121: #{tpu_custom_call.1} parent=83 // pred_check
          %p12048 = pneg %p403
        $region122: #{tpu_custom_call.1} parent=83 // pred_check_branch
          %12050 = sbr.rel (%p12048) target = $region124
        $region123: #{tpu_custom_call.1} parent=83 // pred_region
          %12052 = vsyncadd %s12044, 0
          %s12053 = smul.addr %s39, 32
          %s12054 = smul.addr %s12053, 8
          %s12055 = scalar_lea.hbm %s16, %s12054
          %s12056 = sshll.u32 %s12047, 4
          %s12057 = int_to_ptr.vmem [resolvable:$true] %s12056
          %s12058 = sshll.u32 %s12055, 4
          %s12059 = int_to_ptr.hbm [resolvable:$true] %s12058
          %12064 = dma.vmem_to_hbm [thread:$0]  %s12057, 4096, %s12059, %s12044, 128, 128, 8
        $region124: #{tpu_custom_call.1} parent=83 // pred_fallthru
          _
      $region84: #{tpu_custom_call.1} parent=5 // pred_fallthru
        _
      %p12065 = scmp.le.s32.totalorder 2, %s34
      // Predicated region
      $region125: #{tpu_custom_call.1} parent=5 // pred_check
        %p12066 = pneg %p12065
      $region126: #{tpu_custom_call.1} parent=5 // pred_check_branch
        %12068 = sbr.rel (%p12066) target = $region128
      $region127: #{tpu_custom_call.1} parent=5 // pred_region
        %s12069 = ssub.s32 %s34, 2
        // Predicated region
        $region129: #{tpu_custom_call.1} parent=127 // pred_check
          %p12070 = pneg %p409
        $region130: #{tpu_custom_call.1} parent=127 // pred_check_branch
          %12072 = sbr.rel (%p12070) target = $region132
        $region131: #{tpu_custom_call.1} parent=127 // pred_region
          %s12073 = sand.u32 %s394, 1
          %s12074 = scalar_lea.sflag [#allocation8], %s12073
          %s12075 = sand.u32 %s394, 1
          %s12076 = smul.addr %s12075, 256
          %s12077 = scalar_lea.vmem [#allocation21], %s12076
          %12079 = dma.done %s12074, 4096
        $region132: #{tpu_custom_call.1} parent=127 // pred_fallthru
          _
      $region128: #{tpu_custom_call.1} parent=5 // pred_fallthru
        _
    $region6: #{tpu_custom_call.1} parent=1 // loop_footer
      %s38 = sadd.s32 1, %s34
    $region7: #{tpu_custom_call.1} parent=1 // loop_footer_branch
      %33 = sbr.rel target = $region3
    $region8: #{tpu_custom_call.1} parent=1 // loop_exit
      _
    %12080 = vsyncpa [#allocation7], 1
    %s12081 = scalar_lea.sflag [#allocation7], 1
    %12082 = vsyncpa %s12081, 1
    %12083 = vsyncpa [#allocation10], 1
    %s12084 = scalar_lea.sflag [#allocation10], 1
    %12085 = vsyncpa %s12084, 1
    %12086 = vsyncpa [#allocation13], 1
    %12087 = vsyncpa [#allocation16], 1
    %12088 = vsyncpa [#allocation19], 1
    %12089 = vsyncpa [#allocation8], 1
    %s12090 = scalar_lea.sflag [#allocation8], 1
    %12091 = vsyncpa %s12090, 1

</llo_original>
